<compile_context>
chip_gen: v7x
topology: tpu7x:2x2x1
jax: 0.10.0
libtpu: 0.0.40
codegen_flags: <defaults>
</compile_context>

<pallas_src>
import math

import jax
import jax.numpy as jnp
from jax import lax
from jax.experimental import pallas as pl
from jax.experimental.pallas import tpu as pltpu

# ----------------------------- model config ---------------------------------
B = 2
C = 4
H = W = 16
PATCH = 4
GRID_SIZE = (H // PATCH, W // PATCH)          # (4, 4)
NUM_PATCHES = GRID_SIZE[0] * GRID_SIZE[1]     # 16
SEQ = NUM_PATCHES + 1                         # 17 (CLS + patches)
SEQ_PAD = 24                                  # padded to an 8-sublane multiple
PATCH_DIM = C * PATCH * PATCH                 # 64
WIDTH = 32                                    # trunk.embed_dim
NUM_HEADS = 4
HEAD_DIM = WIDTH // NUM_HEADS                 # 8
MLP_HIDDEN = 4 * WIDTH                        # 128
N_BLOCKS = 4
PROJ_DIM = 32                                 # CLIP head output dim
EPS = 1e-6

# Hooks: blocks [n//i - 1 for i in 1..4] = [3,1,0,0]; the reference stores them
# in a dict (duplicate layer_1 overwrites), then sorts keys -> blocks [0,1,3].
HOOKED_BLOCKS = sorted({N_BLOCKS // i - 1 for i in range(1, 5)})  # [0, 1, 3]
N_HOOKED = len(HOOKED_BLOCKS)                                     # 3


# ----------------------------- kernel helpers --------------------------------
def _layernorm(x, g, b):
    mu = jnp.mean(x, axis=-1, keepdims=True)
    var = jnp.mean((x - mu) ** 2, axis=-1, keepdims=True)
    return (x - mu) * lax.rsqrt(var + EPS) * g + b


# ----------------------------- fused encoder kernel --------------------------
def _encoder_kernel(patches_ref, prefix_ref, pw_ref,
                    ln1g_ref, ln1b_ref, wqkv_ref, bqkv_ref, wo_ref, bo_ref,
                    ln2g_ref, ln2b_ref, w1_ref, b1_ref, w2_ref, b2_ref,
                    hlng_ref, hlnb_ref, hw_ref, hb_ref,
                    out_ref, hooked_ref,
                    attn_scr):
    scale = 1.0 / math.sqrt(HEAD_DIM)

    # Additive key mask: padded key positions (>= SEQ) never contribute.
    key_pos = lax.broadcasted_iota(jnp.int32, (1, SEQ_PAD), 1)
    neg_mask = jnp.where(key_pos < SEQ, 0.0, -1e30).astype(jnp.float32)

    # ---- patch embed + token/pos assembly: one aligned matmul + add ----
    # patches_ref row 0 (CLS slot) and rows SEQ..SEQ_PAD-1 are zero; prefix
    # carries CLS+pos[0] in row 0, pos+patch_bias in rows 1..SEQ-1, zeros after.
    x = (jnp.dot(patches_ref[...], pw_ref[...],
                 preferred_element_type=jnp.float32)
         + prefix_ref[...])                                    # (SEQ_PAD, D)

    # ---- transformer blocks (weights VMEM-resident, unrolled block loop) ----
    for li in range(N_BLOCKS):
        # --- attention branch (pre-LN) ---
        h = _layernorm(x, ln1g_ref[li], ln1b_ref[li])          # (SEQ_PAD, D)
        qkv = (jnp.dot(h, wqkv_ref[li],
                       preferred_element_type=jnp.float32)
               + bqkv_ref[li])                                 # (SEQ_PAD, 3D)

        for hh in range(NUM_HEADS):
            c = hh * HEAD_DIM
            qh = qkv[:, c:c + HEAD_DIM]                        # (SEQ_PAD, hd)
            kh = qkv[:, WIDTH + c:WIDTH + c + HEAD_DIM]
            vh = qkv[:, 2 * WIDTH + c:2 * WIDTH + c + HEAD_DIM]
            s = lax.dot_general(qh, kh, (((1,), (1,)), ((), ())),
                                preferred_element_type=jnp.float32)
            s = s * scale + neg_mask                           # mask pad keys
            s = s - jnp.max(s, axis=-1, keepdims=True)
            e = jnp.exp(s)
            p = e / jnp.sum(e, axis=-1, keepdims=True)         # exact divide
            attn_scr[:, c:c + HEAD_DIM] = jnp.dot(
                p, vh, preferred_element_type=jnp.float32)     # (SEQ_PAD, hd)

        # single K=WIDTH output projection (instead of per-head K=8 matmuls)
        attn_out = (jnp.dot(attn_scr[...], wo_ref[li],
                            preferred_element_type=jnp.float32)
                    + bo_ref[li])
        x = x + attn_out

        # --- MLP branch (pre-LN) ---
        h2 = _layernorm(x, ln2g_ref[li], ln2b_ref[li])
        h2 = (jnp.dot(h2, w1_ref[li], preferred_element_type=jnp.float32)
              + b1_ref[li])
        # TODO(synk): timm ViT uses exact (erf) GELU by default; tanh approx kept.
        h2 = jax.nn.gelu(h2, approximate=True)
        h2 = (jnp.dot(h2, w2_ref[li], preferred_element_type=jnp.float32)
              + b2_ref[li])
        x = x + h2

        if li in HOOKED_BLOCKS:
            j = HOOKED_BLOCKS.index(li)
            hooked_ref[j * SEQ_PAD:(j + 1) * SEQ_PAD, :] = x

    # ---- final LN + head projection on the whole slab; keep the CLS row ----
    hc = _layernorm(x, hlng_ref[...], hlnb_ref[...])
    proj = (jnp.dot(hc, hw_ref[...], preferred_element_type=jnp.float32)
            + hb_ref[...])
    out_ref[...] = proj[0:1, :]


# ----------------------------- pallas_call wrapper ----------------------------
def encoder_forward(patches_padded, prefix, params):
    def full(shape):
        return pl.BlockSpec(shape, lambda b, _s=len(shape): (0,) * _s)

    in_specs = [
        pl.BlockSpec((None, SEQ_PAD, PATCH_DIM), lambda b: (b, 0, 0)),  # patches
        full((SEQ_PAD, WIDTH)),                                         # prefix
        full((PATCH_DIM, WIDTH)),                                       # patch_w
        full((N_BLOCKS, 1, WIDTH)), full((N_BLOCKS, 1, WIDTH)),         # ln1 g/b
        full((N_BLOCKS, WIDTH, 3 * WIDTH)), full((N_BLOCKS, 1, 3 * WIDTH)),
        full((N_BLOCKS, WIDTH, WIDTH)), full((N_BLOCKS, 1, WIDTH)),     # wo/bo
        full((N_BLOCKS, 1, WIDTH)), full((N_BLOCKS, 1, WIDTH)),         # ln2 g/b
        full((N_BLOCKS, WIDTH, MLP_HIDDEN)), full((N_BLOCKS, 1, MLP_HIDDEN)),
        full((N_BLOCKS, MLP_HIDDEN, WIDTH)), full((N_BLOCKS, 1, WIDTH)),
        full((1, WIDTH)), full((1, WIDTH)),                             # head LN
        full((WIDTH, PROJ_DIM)), full((1, PROJ_DIM)),                   # head W/b
    ]
    out_specs = [
        pl.BlockSpec((None, 1, PROJ_DIM), lambda b: (b, 0, 0)),
        pl.BlockSpec((None, N_HOOKED * SEQ_PAD, WIDTH), lambda b: (b, 0, 0)),
    ]
    out_shape = (
        jax.ShapeDtypeStruct((B, 1, PROJ_DIM), jnp.float32),
        jax.ShapeDtypeStruct((B, N_HOOKED * SEQ_PAD, WIDTH), jnp.float32),
    )
    return pl.pallas_call(
        _encoder_kernel,
        grid=(B,),
        in_specs=in_specs,
        out_specs=out_specs,
        out_shape=out_shape,
        scratch_shapes=[pltpu.VMEM((SEQ_PAD, WIDTH), jnp.float32)],
        compiler_params=pltpu.CompilerParams(
            dimension_semantics=("parallel",)),
    )(patches_padded, prefix,
      params["patch_w"],
      params["ln1_g"], params["ln1_b"], params["wqkv"], params["bqkv"],
      params["wo"], params["bo"], params["ln2_g"], params["ln2_b"],
      params["w1"], params["b1"], params["w2"], params["b2"],
      params["head_lng"], params["head_lnb"], params["head_w"],
      params["head_b"])


# ----------------------------- parameters -------------------------------------
def init_params(key):
    keys = iter(jax.random.split(key, 16))
    std = 0.02

    def rand(shape):
        return std * jax.random.normal(next(keys), shape, dtype=jnp.float32)

    ones = lambda s: jnp.ones(s, jnp.float32)
    zeros = lambda s: jnp.zeros(s, jnp.float32)
    return {
        # Conv2d(C, WIDTH, k=PATCH, s=PATCH) flattened in (c, ph, pw) order.
        "patch_w": rand((PATCH_DIM, WIDTH)),
        "patch_b": rand((1, WIDTH)),
        "cls_token": rand((1, WIDTH)),
        "pos_embed": rand((SEQ, WIDTH)),
        # Per-block weights stacked with a leading block axis (VMEM-resident).
        "ln1_g": ones((N_BLOCKS, 1, WIDTH)),
        "ln1_b": zeros((N_BLOCKS, 1, WIDTH)),
        "wqkv": rand((N_BLOCKS, WIDTH, 3 * WIDTH)),
        "bqkv": rand((N_BLOCKS, 1, 3 * WIDTH)),
        "wo": rand((N_BLOCKS, WIDTH, WIDTH)),
        "bo": rand((N_BLOCKS, 1, WIDTH)),
        "ln2_g": ones((N_BLOCKS, 1, WIDTH)),
        "ln2_b": zeros((N_BLOCKS, 1, WIDTH)),
        "w1": rand((N_BLOCKS, WIDTH, MLP_HIDDEN)),
        "b1": rand((N_BLOCKS, 1, MLP_HIDDEN)),
        "w2": rand((N_BLOCKS, MLP_HIDDEN, WIDTH)),
        "b2": rand((N_BLOCKS, 1, WIDTH)),
        # final LN + CLIP projection head
        "head_lng": ones((1, WIDTH)),
        "head_lnb": zeros((1, WIDTH)),
        "head_w": rand((WIDTH, PROJ_DIM)),
        "head_b": rand((1, PROJ_DIM)),
    }


# ----------------------------- forward (glue + kernel) ------------------------
def extract_patches(x):
    # x: (B, C, H, W) NCHW -> (B, num_patches, C * ph * pw), channels-major
    Bx, Cx, Hx, Wx = x.shape
    gh, gw = Hx // PATCH, Wx // PATCH
    x = x.reshape(Bx, Cx, gh, PATCH, gw, PATCH)
    x = x.transpose(0, 2, 4, 1, 3, 5)           # (B, gh, gw, C, ph, pw)
    return x.reshape(Bx, gh * gw, Cx * PATCH * PATCH)


@jax.jit
def forward(x, params):
    """Returns (output, intermediate_outputs) like TIMM_VisualEncoderWithHooks."""
    patches = extract_patches(x)                                   # (B, P, K)
    # Row 0 (CLS slot) and rows SEQ..SEQ_PAD-1 are zero so the in-kernel
    # patch-embed matmul leaves them alone; `prefix` supplies CLS + pos + bias.
    patches_padded = jnp.pad(patches, ((0, 0), (1, SEQ_PAD - SEQ), (0, 0)))
    prefix = jnp.concatenate(
        [params["cls_token"] + params["pos_embed"][0:1],
         params["pos_embed"][1:SEQ] + params["patch_b"],
         jnp.zeros((SEQ_PAD - SEQ, WIDTH), jnp.float32)], axis=0)  # (SEQ_PAD, D)

    # TODO(synk): PyTorch forward hooks have no Pallas equivalent; hooked block
    # outputs are emitted as an extra kernel output (same semantics).
    out, hooked = encoder_forward(patches_padded, prefix, params)
    output = out.reshape(B, PROJ_DIM)
    hooked = hooked.reshape(B, N_HOOKED, SEQ_PAD, WIDTH)
    # reference: intermediate = block_out.permute(1, 0, 2)[1:]  (CLS dropped)
    inter_list = [jnp.transpose(hooked[:, j, 1:SEQ, :], (1, 0, 2))
                  for j in range(N_HOOKED)]
    return output, inter_list


# ----------------------------- main --------------------------------------------
if __name__ == "__main__":
    key = jax.random.PRNGKey(0)
    k_param, k_input = jax.random.split(key)
    params = init_params(k_param)
    x = jax.random.normal(k_input, (B, C, H, W), dtype=jnp.float32)  # NCHW input

    output, intermediates = forward(x, params)
    output = jax.block_until_ready(output)
    for t in intermediates:
        jax.block_until_ready(t)

    assert output.shape == (B, PROJ_DIM)
    assert bool(jnp.all(jnp.isfinite(output)))
    assert len(intermediates) == N_HOOKED
    for t in intermediates:
        assert t.shape == (SEQ - 1, B, WIDTH)
        assert bool(jnp.all(jnp.isfinite(t)))

    print("KERNEL_OK")
</pallas_src>

<mosaic_0001>
module attributes {stable_mosaic.version = 11 : i64} {
  func.func @_encoder_kernel(%arg0: i32, %arg1: memref<1x24x64xf32, #tpu.memory_space<vmem>>, %arg2: memref<24x32xf32, #tpu.memory_space<vmem>>, %arg3: memref<64x32xf32, #tpu.memory_space<vmem>>, %arg4: memref<4x1x32xf32, #tpu.memory_space<vmem>>, %arg5: memref<4x1x32xf32, #tpu.memory_space<vmem>>, %arg6: memref<4x32x96xf32, #tpu.memory_space<vmem>>, %arg7: memref<4x1x96xf32, #tpu.memory_space<vmem>>, %arg8: memref<4x32x32xf32, #tpu.memory_space<vmem>>, %arg9: memref<4x1x32xf32, #tpu.memory_space<vmem>>, %arg10: memref<4x1x32xf32, #tpu.memory_space<vmem>>, %arg11: memref<4x1x32xf32, #tpu.memory_space<vmem>>, %arg12: memref<4x32x128xf32, #tpu.memory_space<vmem>>, %arg13: memref<4x1x128xf32, #tpu.memory_space<vmem>>, %arg14: memref<4x128x32xf32, #tpu.memory_space<vmem>>, %arg15: memref<4x1x32xf32, #tpu.memory_space<vmem>>, %arg16: memref<1x32xf32, #tpu.memory_space<vmem>>, %arg17: memref<1x32xf32, #tpu.memory_space<vmem>>, %arg18: memref<32x32xf32, #tpu.memory_space<vmem>>, %arg19: memref<1x32xf32, #tpu.memory_space<vmem>>, %arg20: memref<1x1x32xf32, #tpu.memory_space<vmem>>, %arg21: memref<1x72x32xf32, #tpu.memory_space<vmem>>, %arg22: memref<24x32xf32, #tpu.memory_space<vmem>>) attributes {dimension_semantics = [#tpu.dimension_semantics<parallel>], iteration_bounds = array<i64: 2>, scalar_prefetch = 0 : i64, scratch_operands = 1 : i64, tpu.core_type = #tpu.core_type<tc>, window_params = [{transform_indices = @transform_0, window_bounds = array<i64: 1, 24, 64>}, {pipeline_mode = #tpu.pipeline_mode<synchronous>, transform_indices = @transform_1, window_bounds = array<i64: 24, 32>}, {pipeline_mode = #tpu.pipeline_mode<synchronous>, transform_indices = @transform_2, window_bounds = array<i64: 64, 32>}, {pipeline_mode = #tpu.pipeline_mode<synchronous>, transform_indices = @transform_3, window_bounds = array<i64: 4, 1, 32>}, {pipeline_mode = #tpu.pipeline_mode<synchronous>, transform_indices = @transform_4, window_bounds = array<i64: 4, 1, 32>}, {pipeline_mode = #tpu.pipeline_mode<synchronous>, transform_indices = @transform_5, window_bounds = array<i64: 4, 32, 96>}, {pipeline_mode = #tpu.pipeline_mode<synchronous>, transform_indices = @transform_6, window_bounds = array<i64: 4, 1, 96>}, {pipeline_mode = #tpu.pipeline_mode<synchronous>, transform_indices = @transform_7, window_bounds = array<i64: 4, 32, 32>}, {pipeline_mode = #tpu.pipeline_mode<synchronous>, transform_indices = @transform_8, window_bounds = array<i64: 4, 1, 32>}, {pipeline_mode = #tpu.pipeline_mode<synchronous>, transform_indices = @transform_9, window_bounds = array<i64: 4, 1, 32>}, {pipeline_mode = #tpu.pipeline_mode<synchronous>, transform_indices = @transform_10, window_bounds = array<i64: 4, 1, 32>}, {pipeline_mode = #tpu.pipeline_mode<synchronous>, transform_indices = @transform_11, window_bounds = array<i64: 4, 32, 128>}, {pipeline_mode = #tpu.pipeline_mode<synchronous>, transform_indices = @transform_12, window_bounds = array<i64: 4, 1, 128>}, {pipeline_mode = #tpu.pipeline_mode<synchronous>, transform_indices = @transform_13, window_bounds = array<i64: 4, 128, 32>}, {pipeline_mode = #tpu.pipeline_mode<synchronous>, transform_indices = @transform_14, window_bounds = array<i64: 4, 1, 32>}, {pipeline_mode = #tpu.pipeline_mode<synchronous>, transform_indices = @transform_15, window_bounds = array<i64: 1, 32>}, {pipeline_mode = #tpu.pipeline_mode<synchronous>, transform_indices = @transform_16, window_bounds = array<i64: 1, 32>}, {pipeline_mode = #tpu.pipeline_mode<synchronous>, transform_indices = @transform_17, window_bounds = array<i64: 32, 32>}, {pipeline_mode = #tpu.pipeline_mode<synchronous>, transform_indices = @transform_18, window_bounds = array<i64: 1, 32>}, {transform_indices = @transform_19, window_bounds = array<i64: 1, 1, 32>}, {transform_indices = @transform_20, window_bounds = array<i64: 1, 72, 32>}]} {
    %0 = tpu.iota {dimensions = array<i32: 1>} : vector<1x24xi32>
    %c17_i32 = arith.constant 17 : i32
    %1 = vector.broadcast %c17_i32 : i32 to vector<1x24xi32>
    %2 = arith.cmpi slt, %0, %1 : vector<1x24xi32>
    %cst = arith.constant 0.000000e+00 : f32
    %cst_0 = arith.constant -1.000000e+30 : f32
    %3 = vector.broadcast %cst : f32 to vector<1x24xf32>
    %4 = vector.broadcast %cst_0 : f32 to vector<1x24xf32>
    %5 = arith.select %2, %3, %4 : vector<1x24xi1>, vector<1x24xf32>
    %c0 = arith.constant 0 : index
    %c0_1 = arith.constant 0 : index
    %c0_2 = arith.constant 0 : index
    %6 = vector.load %arg1[%c0, %c0_1, %c0_2] : memref<1x24x64xf32, #tpu.memory_space<vmem>>, vector<1x24x64xf32>
    %7 = vector.shape_cast %6 : vector<1x24x64xf32> to vector<24x64xf32>
    %c0_3 = arith.constant 0 : index
    %c0_4 = arith.constant 0 : index
    %8 = vector.load %arg3[%c0_3, %c0_4] : memref<64x32xf32, #tpu.memory_space<vmem>>, vector<64x32xf32>
    %cst_5 = arith.constant dense<0.000000e+00> : vector<24x32xf32>
    %9 = tpu.matmul %7, %8, %cst_5 {dimension_numbers = #tpu.dot_dimension_numbers<[1], [0], [0], [1], [0, 0, 1, 1], [], []>} : vector<24x64xf32>, vector<64x32xf32>, vector<24x32xf32> -> vector<24x32xf32>
    %c0_6 = arith.constant 0 : index
    %c0_7 = arith.constant 0 : index
    %10 = vector.load %arg2[%c0_6, %c0_7] : memref<24x32xf32, #tpu.memory_space<vmem>>, vector<24x32xf32>
    %11 = arith.addf %9, %10 : vector<24x32xf32>
    %c0_8 = arith.constant 0 : index
    %c0_9 = arith.constant 0 : index
    %c0_10 = arith.constant 0 : index
    %12 = vector.load %arg4[%c0_8, %c0_9, %c0_10] : memref<4x1x32xf32, #tpu.memory_space<vmem>>, vector<1x1x32xf32>
    %13 = vector.shape_cast %12 : vector<1x1x32xf32> to vector<1x32xf32>
    %c0_11 = arith.constant 0 : index
    %c0_12 = arith.constant 0 : index
    %c0_13 = arith.constant 0 : index
    %14 = vector.load %arg5[%c0_11, %c0_12, %c0_13] : memref<4x1x32xf32, #tpu.memory_space<vmem>>, vector<1x1x32xf32>
    %15 = vector.shape_cast %14 : vector<1x1x32xf32> to vector<1x32xf32>
    %cst_14 = arith.constant dense<0.000000e+00> : vector<24xf32>
    %16 = vector.multi_reduction <add>, %11, %cst_14 [1] : vector<24x32xf32> to vector<24xf32>
    %17 = vector.shape_cast %16 : vector<24xf32> to vector<24x1xf32>
    %cst_15 = arith.constant 3.200000e+01 : f32
    %18 = vector.broadcast %cst_15 : f32 to vector<24x1xf32>
    %19 = arith.divf %17, %18 : vector<24x1xf32>
    %20 = vector.broadcast %19 : vector<24x1xf32> to vector<24x32xf32>
    %21 = arith.subf %11, %20 : vector<24x32xf32>
    %22 = arith.mulf %21, %21 : vector<24x32xf32>
    %cst_16 = arith.constant dense<0.000000e+00> : vector<24xf32>
    %23 = vector.multi_reduction <add>, %22, %cst_16 [1] : vector<24x32xf32> to vector<24xf32>
    %24 = vector.shape_cast %23 : vector<24xf32> to vector<24x1xf32>
    %cst_17 = arith.constant 3.200000e+01 : f32
    %25 = vector.broadcast %cst_17 : f32 to vector<24x1xf32>
    %26 = arith.divf %24, %25 : vector<24x1xf32>
    %27 = vector.broadcast %19 : vector<24x1xf32> to vector<24x32xf32>
    %28 = arith.subf %11, %27 : vector<24x32xf32>
    %cst_18 = arith.constant 9.99999997E-7 : f32
    %29 = vector.broadcast %cst_18 : f32 to vector<24x1xf32>
    %30 = arith.addf %26, %29 : vector<24x1xf32>
    %31 = math.rsqrt %30 : vector<24x1xf32>
    %32 = vector.broadcast %31 : vector<24x1xf32> to vector<24x32xf32>
    %33 = arith.mulf %28, %32 : vector<24x32xf32>
    %34 = vector.broadcast %13 : vector<1x32xf32> to vector<24x32xf32>
    %35 = arith.mulf %33, %34 : vector<24x32xf32>
    %36 = vector.broadcast %15 : vector<1x32xf32> to vector<24x32xf32>
    %37 = arith.addf %35, %36 : vector<24x32xf32>
    %c0_19 = arith.constant 0 : index
    %c0_20 = arith.constant 0 : index
    %c0_21 = arith.constant 0 : index
    %38 = vector.load %arg6[%c0_19, %c0_20, %c0_21] : memref<4x32x96xf32, #tpu.memory_space<vmem>>, vector<1x32x96xf32>
    %39 = vector.shape_cast %38 : vector<1x32x96xf32> to vector<32x96xf32>
    %cst_22 = arith.constant dense<0.000000e+00> : vector<24x96xf32>
    %40 = tpu.matmul %37, %39, %cst_22 {dimension_numbers = #tpu.dot_dimension_numbers<[1], [0], [0], [1], [0, 0, 1, 1], [], []>} : vector<24x32xf32>, vector<32x96xf32>, vector<24x96xf32> -> vector<24x96xf32>
    %c0_23 = arith.constant 0 : index
    %c0_24 = arith.constant 0 : index
    %c0_25 = arith.constant 0 : index
    %41 = vector.load %arg7[%c0_23, %c0_24, %c0_25] : memref<4x1x96xf32, #tpu.memory_space<vmem>>, vector<1x1x96xf32>
    %42 = vector.shape_cast %41 : vector<1x1x96xf32> to vector<1x96xf32>
    %43 = vector.broadcast %42 : vector<1x96xf32> to vector<24x96xf32>
    %44 = arith.addf %40, %43 : vector<24x96xf32>
    %45 = vector.extract_strided_slice %44 {offsets = [0, 0], sizes = [24, 8], strides = [1, 1]} : vector<24x96xf32> to vector<24x8xf32>
    %46 = vector.extract_strided_slice %44 {offsets = [0, 32], sizes = [24, 8], strides = [1, 1]} : vector<24x96xf32> to vector<24x8xf32>
    %47 = vector.extract_strided_slice %44 {offsets = [0, 64], sizes = [24, 8], strides = [1, 1]} : vector<24x96xf32> to vector<24x8xf32>
    %cst_26 = arith.constant dense<0.000000e+00> : vector<24x24xf32>
    %48 = tpu.matmul %45, %46, %cst_26 {dimension_numbers = #tpu.dot_dimension_numbers<[1], [1], [0], [0], [0, 0, 1, 0], [], []>} : vector<24x8xf32>, vector<24x8xf32>, vector<24x24xf32> -> vector<24x24xf32>
    %cst_27 = arith.constant 0.353553385 : f32
    %49 = vector.broadcast %cst_27 : f32 to vector<24x24xf32>
    %50 = arith.mulf %48, %49 : vector<24x24xf32>
    %51 = vector.broadcast %5 : vector<1x24xf32> to vector<24x24xf32>
    %52 = arith.addf %50, %51 : vector<24x24xf32>
    %cst_28 = arith.constant dense<0xFF800000> : vector<24xf32>
    %53 = vector.multi_reduction <maximumf>, %52, %cst_28 [1] : vector<24x24xf32> to vector<24xf32>
    %54 = vector.shape_cast %53 : vector<24xf32> to vector<24x1xf32>
    %55 = vector.broadcast %54 : vector<24x1xf32> to vector<24x24xf32>
    %56 = arith.subf %52, %55 : vector<24x24xf32>
    %57 = math.exp %56 : vector<24x24xf32>
    %cst_29 = arith.constant dense<0.000000e+00> : vector<24xf32>
    %58 = vector.multi_reduction <add>, %57, %cst_29 [1] : vector<24x24xf32> to vector<24xf32>
    %59 = vector.shape_cast %58 : vector<24xf32> to vector<24x1xf32>
    %60 = vector.broadcast %59 : vector<24x1xf32> to vector<24x24xf32>
    %61 = arith.divf %57, %60 : vector<24x24xf32>
    %cst_30 = arith.constant dense<0.000000e+00> : vector<24x8xf32>
    %62 = tpu.matmul %61, %47, %cst_30 {dimension_numbers = #tpu.dot_dimension_numbers<[1], [0], [0], [1], [0, 0, 1, 1], [], []>} : vector<24x24xf32>, vector<24x8xf32>, vector<24x8xf32> -> vector<24x8xf32>
    %c0_31 = arith.constant 0 : index
    %c0_32 = arith.constant 0 : index
    %63 = vector.load %arg22[%c0_31, %c0_32] : memref<24x32xf32, #tpu.memory_space<vmem>>, vector<24x8xf32>
    tpu.vector_store %arg22[%c0_31, %c0_32], %62 {strides = array<i32>} : memref<24x32xf32, #tpu.memory_space<vmem>>, vector<24x8xf32>,
    %64 = vector.extract_strided_slice %44 {offsets = [0, 8], sizes = [24, 8], strides = [1, 1]} : vector<24x96xf32> to vector<24x8xf32>
    %65 = vector.extract_strided_slice %44 {offsets = [0, 40], sizes = [24, 8], strides = [1, 1]} : vector<24x96xf32> to vector<24x8xf32>
    %66 = vector.extract_strided_slice %44 {offsets = [0, 72], sizes = [24, 8], strides = [1, 1]} : vector<24x96xf32> to vector<24x8xf32>
    %cst_33 = arith.constant dense<0.000000e+00> : vector<24x24xf32>
    %67 = tpu.matmul %64, %65, %cst_33 {dimension_numbers = #tpu.dot_dimension_numbers<[1], [1], [0], [0], [0, 0, 1, 0], [], []>} : vector<24x8xf32>, vector<24x8xf32>, vector<24x24xf32> -> vector<24x24xf32>
    %cst_34 = arith.constant 0.353553385 : f32
    %68 = vector.broadcast %cst_34 : f32 to vector<24x24xf32>
    %69 = arith.mulf %67, %68 : vector<24x24xf32>
    %70 = vector.broadcast %5 : vector<1x24xf32> to vector<24x24xf32>
    %71 = arith.addf %69, %70 : vector<24x24xf32>
    %cst_35 = arith.constant dense<0xFF800000> : vector<24xf32>
    %72 = vector.multi_reduction <maximumf>, %71, %cst_35 [1] : vector<24x24xf32> to vector<24xf32>
    %73 = vector.shape_cast %72 : vector<24xf32> to vector<24x1xf32>
    %74 = vector.broadcast %73 : vector<24x1xf32> to vector<24x24xf32>
    %75 = arith.subf %71, %74 : vector<24x24xf32>
    %76 = math.exp %75 : vector<24x24xf32>
    %cst_36 = arith.constant dense<0.000000e+00> : vector<24xf32>
    %77 = vector.multi_reduction <add>, %76, %cst_36 [1] : vector<24x24xf32> to vector<24xf32>
    %78 = vector.shape_cast %77 : vector<24xf32> to vector<24x1xf32>
    %79 = vector.broadcast %78 : vector<24x1xf32> to vector<24x24xf32>
    %80 = arith.divf %76, %79 : vector<24x24xf32>
    %cst_37 = arith.constant dense<0.000000e+00> : vector<24x8xf32>
    %81 = tpu.matmul %80, %66, %cst_37 {dimension_numbers = #tpu.dot_dimension_numbers<[1], [0], [0], [1], [0, 0, 1, 1], [], []>} : vector<24x24xf32>, vector<24x8xf32>, vector<24x8xf32> -> vector<24x8xf32>
    %c0_38 = arith.constant 0 : index
    %c8 = arith.constant 8 : index
    %82 = vector.load %arg22[%c0_38, %c8] : memref<24x32xf32, #tpu.memory_space<vmem>>, vector<24x8xf32>
    tpu.vector_store %arg22[%c0_38, %c8], %81 {strides = array<i32>} : memref<24x32xf32, #tpu.memory_space<vmem>>, vector<24x8xf32>,
    %83 = vector.extract_strided_slice %44 {offsets = [0, 16], sizes = [24, 8], strides = [1, 1]} : vector<24x96xf32> to vector<24x8xf32>
    %84 = vector.extract_strided_slice %44 {offsets = [0, 48], sizes = [24, 8], strides = [1, 1]} : vector<24x96xf32> to vector<24x8xf32>
    %85 = vector.extract_strided_slice %44 {offsets = [0, 80], sizes = [24, 8], strides = [1, 1]} : vector<24x96xf32> to vector<24x8xf32>
    %cst_39 = arith.constant dense<0.000000e+00> : vector<24x24xf32>
    %86 = tpu.matmul %83, %84, %cst_39 {dimension_numbers = #tpu.dot_dimension_numbers<[1], [1], [0], [0], [0, 0, 1, 0], [], []>} : vector<24x8xf32>, vector<24x8xf32>, vector<24x24xf32> -> vector<24x24xf32>
    %cst_40 = arith.constant 0.353553385 : f32
    %87 = vector.broadcast %cst_40 : f32 to vector<24x24xf32>
    %88 = arith.mulf %86, %87 : vector<24x24xf32>
    %89 = vector.broadcast %5 : vector<1x24xf32> to vector<24x24xf32>
    %90 = arith.addf %88, %89 : vector<24x24xf32>
    %cst_41 = arith.constant dense<0xFF800000> : vector<24xf32>
    %91 = vector.multi_reduction <maximumf>, %90, %cst_41 [1] : vector<24x24xf32> to vector<24xf32>
    %92 = vector.shape_cast %91 : vector<24xf32> to vector<24x1xf32>
    %93 = vector.broadcast %92 : vector<24x1xf32> to vector<24x24xf32>
    %94 = arith.subf %90, %93 : vector<24x24xf32>
    %95 = math.exp %94 : vector<24x24xf32>
    %cst_42 = arith.constant dense<0.000000e+00> : vector<24xf32>
    %96 = vector.multi_reduction <add>, %95, %cst_42 [1] : vector<24x24xf32> to vector<24xf32>
    %97 = vector.shape_cast %96 : vector<24xf32> to vector<24x1xf32>
    %98 = vector.broadcast %97 : vector<24x1xf32> to vector<24x24xf32>
    %99 = arith.divf %95, %98 : vector<24x24xf32>
    %cst_43 = arith.constant dense<0.000000e+00> : vector<24x8xf32>
    %100 = tpu.matmul %99, %85, %cst_43 {dimension_numbers = #tpu.dot_dimension_numbers<[1], [0], [0], [1], [0, 0, 1, 1], [], []>} : vector<24x24xf32>, vector<24x8xf32>, vector<24x8xf32> -> vector<24x8xf32>
    %c0_44 = arith.constant 0 : index
    %c16 = arith.constant 16 : index
    %101 = vector.load %arg22[%c0_44, %c16] : memref<24x32xf32, #tpu.memory_space<vmem>>, vector<24x8xf32>
    tpu.vector_store %arg22[%c0_44, %c16], %100 {strides = array<i32>} : memref<24x32xf32, #tpu.memory_space<vmem>>, vector<24x8xf32>,
    %102 = vector.extract_strided_slice %44 {offsets = [0, 24], sizes = [24, 8], strides = [1, 1]} : vector<24x96xf32> to vector<24x8xf32>
    %103 = vector.extract_strided_slice %44 {offsets = [0, 56], sizes = [24, 8], strides = [1, 1]} : vector<24x96xf32> to vector<24x8xf32>
    %104 = vector.extract_strided_slice %44 {offsets = [0, 88], sizes = [24, 8], strides = [1, 1]} : vector<24x96xf32> to vector<24x8xf32>
    %cst_45 = arith.constant dense<0.000000e+00> : vector<24x24xf32>
    %105 = tpu.matmul %102, %103, %cst_45 {dimension_numbers = #tpu.dot_dimension_numbers<[1], [1], [0], [0], [0, 0, 1, 0], [], []>} : vector<24x8xf32>, vector<24x8xf32>, vector<24x24xf32> -> vector<24x24xf32>
    %cst_46 = arith.constant 0.353553385 : f32
    %106 = vector.broadcast %cst_46 : f32 to vector<24x24xf32>
    %107 = arith.mulf %105, %106 : vector<24x24xf32>
    %108 = vector.broadcast %5 : vector<1x24xf32> to vector<24x24xf32>
    %109 = arith.addf %107, %108 : vector<24x24xf32>
    %cst_47 = arith.constant dense<0xFF800000> : vector<24xf32>
    %110 = vector.multi_reduction <maximumf>, %109, %cst_47 [1] : vector<24x24xf32> to vector<24xf32>
    %111 = vector.shape_cast %110 : vector<24xf32> to vector<24x1xf32>
    %112 = vector.broadcast %111 : vector<24x1xf32> to vector<24x24xf32>
    %113 = arith.subf %109, %112 : vector<24x24xf32>
    %114 = math.exp %113 : vector<24x24xf32>
    %cst_48 = arith.constant dense<0.000000e+00> : vector<24xf32>
    %115 = vector.multi_reduction <add>, %114, %cst_48 [1] : vector<24x24xf32> to vector<24xf32>
    %116 = vector.shape_cast %115 : vector<24xf32> to vector<24x1xf32>
    %117 = vector.broadcast %116 : vector<24x1xf32> to vector<24x24xf32>
    %118 = arith.divf %114, %117 : vector<24x24xf32>
    %cst_49 = arith.constant dense<0.000000e+00> : vector<24x8xf32>
    %119 = tpu.matmul %118, %104, %cst_49 {dimension_numbers = #tpu.dot_dimension_numbers<[1], [0], [0], [1], [0, 0, 1, 1], [], []>} : vector<24x24xf32>, vector<24x8xf32>, vector<24x8xf32> -> vector<24x8xf32>
    %c0_50 = arith.constant 0 : index
    %c24 = arith.constant 24 : index
    %120 = vector.load %arg22[%c0_50, %c24] : memref<24x32xf32, #tpu.memory_space<vmem>>, vector<24x8xf32>
    tpu.vector_store %arg22[%c0_50, %c24], %119 {strides = array<i32>} : memref<24x32xf32, #tpu.memory_space<vmem>>, vector<24x8xf32>,
    %c0_51 = arith.constant 0 : index
    %c0_52 = arith.constant 0 : index
    %121 = vector.load %arg22[%c0_51, %c0_52] : memref<24x32xf32, #tpu.memory_space<vmem>>, vector<24x32xf32>
    %c0_53 = arith.constant 0 : index
    %c0_54 = arith.constant 0 : index
    %c0_55 = arith.constant 0 : index
    %122 = vector.load %arg8[%c0_53, %c0_54, %c0_55] : memref<4x32x32xf32, #tpu.memory_space<vmem>>, vector<1x32x32xf32>
    %123 = vector.shape_cast %122 : vector<1x32x32xf32> to vector<32x32xf32>
    %cst_56 = arith.constant dense<0.000000e+00> : vector<24x32xf32>
    %124 = tpu.matmul %121, %123, %cst_56 {dimension_numbers = #tpu.dot_dimension_numbers<[1], [0], [0], [1], [0, 0, 1, 1], [], []>} : vector<24x32xf32>, vector<32x32xf32>, vector<24x32xf32> -> vector<24x32xf32>
    %c0_57 = arith.constant 0 : index
    %c0_58 = arith.constant 0 : index
    %c0_59 = arith.constant 0 : index
    %125 = vector.load %arg9[%c0_57, %c0_58, %c0_59] : memref<4x1x32xf32, #tpu.memory_space<vmem>>, vector<1x1x32xf32>
    %126 = vector.shape_cast %125 : vector<1x1x32xf32> to vector<1x32xf32>
    %127 = vector.broadcast %126 : vector<1x32xf32> to vector<24x32xf32>
    %128 = arith.addf %124, %127 : vector<24x32xf32>
    %129 = arith.addf %11, %128 : vector<24x32xf32>
    %c0_60 = arith.constant 0 : index
    %c0_61 = arith.constant 0 : index
    %c0_62 = arith.constant 0 : index
    %130 = vector.load %arg10[%c0_60, %c0_61, %c0_62] : memref<4x1x32xf32, #tpu.memory_space<vmem>>, vector<1x1x32xf32>
    %131 = vector.shape_cast %130 : vector<1x1x32xf32> to vector<1x32xf32>
    %c0_63 = arith.constant 0 : index
    %c0_64 = arith.constant 0 : index
    %c0_65 = arith.constant 0 : index
    %132 = vector.load %arg11[%c0_63, %c0_64, %c0_65] : memref<4x1x32xf32, #tpu.memory_space<vmem>>, vector<1x1x32xf32>
    %133 = vector.shape_cast %132 : vector<1x1x32xf32> to vector<1x32xf32>
    %cst_66 = arith.constant dense<0.000000e+00> : vector<24xf32>
    %134 = vector.multi_reduction <add>, %129, %cst_66 [1] : vector<24x32xf32> to vector<24xf32>
    %135 = vector.shape_cast %134 : vector<24xf32> to vector<24x1xf32>
    %cst_67 = arith.constant 3.200000e+01 : f32
    %136 = vector.broadcast %cst_67 : f32 to vector<24x1xf32>
    %137 = arith.divf %135, %136 : vector<24x1xf32>
    %138 = vector.broadcast %137 : vector<24x1xf32> to vector<24x32xf32>
    %139 = arith.subf %129, %138 : vector<24x32xf32>
    %140 = arith.mulf %139, %139 : vector<24x32xf32>
    %cst_68 = arith.constant dense<0.000000e+00> : vector<24xf32>
    %141 = vector.multi_reduction <add>, %140, %cst_68 [1] : vector<24x32xf32> to vector<24xf32>
    %142 = vector.shape_cast %141 : vector<24xf32> to vector<24x1xf32>
    %cst_69 = arith.constant 3.200000e+01 : f32
    %143 = vector.broadcast %cst_69 : f32 to vector<24x1xf32>
    %144 = arith.divf %142, %143 : vector<24x1xf32>
    %145 = vector.broadcast %137 : vector<24x1xf32> to vector<24x32xf32>
    %146 = arith.subf %129, %145 : vector<24x32xf32>
    %cst_70 = arith.constant 9.99999997E-7 : f32
    %147 = vector.broadcast %cst_70 : f32 to vector<24x1xf32>
    %148 = arith.addf %144, %147 : vector<24x1xf32>
    %149 = math.rsqrt %148 : vector<24x1xf32>
    %150 = vector.broadcast %149 : vector<24x1xf32> to vector<24x32xf32>
    %151 = arith.mulf %146, %150 : vector<24x32xf32>
    %152 = vector.broadcast %131 : vector<1x32xf32> to vector<24x32xf32>
    %153 = arith.mulf %151, %152 : vector<24x32xf32>
    %154 = vector.broadcast %133 : vector<1x32xf32> to vector<24x32xf32>
    %155 = arith.addf %153, %154 : vector<24x32xf32>
    %c0_71 = arith.constant 0 : index
    %c0_72 = arith.constant 0 : index
    %c0_73 = arith.constant 0 : index
    %156 = vector.load %arg12[%c0_71, %c0_72, %c0_73] : memref<4x32x128xf32, #tpu.memory_space<vmem>>, vector<1x32x128xf32>
    %157 = vector.shape_cast %156 : vector<1x32x128xf32> to vector<32x128xf32>
    %cst_74 = arith.constant dense<0.000000e+00> : vector<24x128xf32>
    %158 = tpu.matmul %155, %157, %cst_74 {dimension_numbers = #tpu.dot_dimension_numbers<[1], [0], [0], [1], [0, 0, 1, 1], [], []>} : vector<24x32xf32>, vector<32x128xf32>, vector<24x128xf32> -> vector<24x128xf32>
    %c0_75 = arith.constant 0 : index
    %c0_76 = arith.constant 0 : index
    %c0_77 = arith.constant 0 : index
    %159 = vector.load %arg13[%c0_75, %c0_76, %c0_77] : memref<4x1x128xf32, #tpu.memory_space<vmem>>, vector<1x1x128xf32>
    %160 = vector.shape_cast %159 : vector<1x1x128xf32> to vector<1x128xf32>
    %161 = vector.broadcast %160 : vector<1x128xf32> to vector<24x128xf32>
    %162 = arith.addf %158, %161 : vector<24x128xf32>
    %163 = arith.mulf %162, %162 : vector<24x128xf32>
    %164 = arith.mulf %162, %163 : vector<24x128xf32>
    %cst_78 = arith.constant 4.471500e-02 : f32
    %165 = vector.broadcast %cst_78 : f32 to vector<24x128xf32>
    %166 = arith.mulf %165, %164 : vector<24x128xf32>
    %167 = arith.addf %162, %166 : vector<24x128xf32>
    %cst_79 = arith.constant 0.797884583 : f32
    %168 = vector.broadcast %cst_79 : f32 to vector<24x128xf32>
    %169 = arith.mulf %168, %167 : vector<24x128xf32>
    %170 = math.tanh %169 : vector<24x128xf32>
    %cst_80 = arith.constant 1.000000e+00 : f32
    %171 = vector.broadcast %cst_80 : f32 to vector<24x128xf32>
    %172 = arith.addf %171, %170 : vector<24x128xf32>
    %cst_81 = arith.constant 5.000000e-01 : f32
    %173 = vector.broadcast %cst_81 : f32 to vector<24x128xf32>
    %174 = arith.mulf %173, %172 : vector<24x128xf32>
    %175 = arith.mulf %162, %174 : vector<24x128xf32>
    %c0_82 = arith.constant 0 : index
    %c0_83 = arith.constant 0 : index
    %c0_84 = arith.constant 0 : index
    %176 = vector.load %arg14[%c0_82, %c0_83, %c0_84] : memref<4x128x32xf32, #tpu.memory_space<vmem>>, vector<1x128x32xf32>
    %177 = vector.shape_cast %176 : vector<1x128x32xf32> to vector<128x32xf32>
    %cst_85 = arith.constant dense<0.000000e+00> : vector<24x32xf32>
    %178 = tpu.matmul %175, %177, %cst_85 {dimension_numbers = #tpu.dot_dimension_numbers<[1], [0], [0], [1], [0, 0, 1, 1], [], []>} : vector<24x128xf32>, vector<128x32xf32>, vector<24x32xf32> -> vector<24x32xf32>
    %c0_86 = arith.constant 0 : index
    %c0_87 = arith.constant 0 : index
    %c0_88 = arith.constant 0 : index
    %179 = vector.load %arg15[%c0_86, %c0_87, %c0_88] : memref<4x1x32xf32, #tpu.memory_space<vmem>>, vector<1x1x32xf32>
    %180 = vector.shape_cast %179 : vector<1x1x32xf32> to vector<1x32xf32>
    %181 = vector.broadcast %180 : vector<1x32xf32> to vector<24x32xf32>
    %182 = arith.addf %178, %181 : vector<24x32xf32>
    %183 = arith.addf %129, %182 : vector<24x32xf32>
    %c0_89 = arith.constant 0 : index
    %c0_90 = arith.constant 0 : index
    %c0_91 = arith.constant 0 : index
    %184 = vector.load %arg21[%c0_89, %c0_90, %c0_91] : memref<1x72x32xf32, #tpu.memory_space<vmem>>, vector<1x24x32xf32>
    %185 = vector.shape_cast %184 : vector<1x24x32xf32> to vector<24x32xf32>
    %186 = vector.shape_cast %183 : vector<24x32xf32> to vector<1x24x32xf32>
    tpu.vector_store %arg21[%c0_89, %c0_90, %c0_91], %186 {strides = array<i32>} : memref<1x72x32xf32, #tpu.memory_space<vmem>>, vector<1x24x32xf32>,
    %c1 = arith.constant 1 : index
    %c0_92 = arith.constant 0 : index
    %c0_93 = arith.constant 0 : index
    %187 = vector.load %arg4[%c1, %c0_92, %c0_93] : memref<4x1x32xf32, #tpu.memory_space<vmem>>, vector<1x1x32xf32>
    %188 = vector.shape_cast %187 : vector<1x1x32xf32> to vector<1x32xf32>
    %c1_94 = arith.constant 1 : index
    %c0_95 = arith.constant 0 : index
    %c0_96 = arith.constant 0 : index
    %189 = vector.load %arg5[%c1_94, %c0_95, %c0_96] : memref<4x1x32xf32, #tpu.memory_space<vmem>>, vector<1x1x32xf32>
    %190 = vector.shape_cast %189 : vector<1x1x32xf32> to vector<1x32xf32>
    %cst_97 = arith.constant dense<0.000000e+00> : vector<24xf32>
    %191 = vector.multi_reduction <add>, %183, %cst_97 [1] : vector<24x32xf32> to vector<24xf32>
    %192 = vector.shape_cast %191 : vector<24xf32> to vector<24x1xf32>
    %cst_98 = arith.constant 3.200000e+01 : f32
    %193 = vector.broadcast %cst_98 : f32 to vector<24x1xf32>
    %194 = arith.divf %192, %193 : vector<24x1xf32>
    %195 = vector.broadcast %194 : vector<24x1xf32> to vector<24x32xf32>
    %196 = arith.subf %183, %195 : vector<24x32xf32>
    %197 = arith.mulf %196, %196 : vector<24x32xf32>
    %cst_99 = arith.constant dense<0.000000e+00> : vector<24xf32>
    %198 = vector.multi_reduction <add>, %197, %cst_99 [1] : vector<24x32xf32> to vector<24xf32>
    %199 = vector.shape_cast %198 : vector<24xf32> to vector<24x1xf32>
    %cst_100 = arith.constant 3.200000e+01 : f32
    %200 = vector.broadcast %cst_100 : f32 to vector<24x1xf32>
    %201 = arith.divf %199, %200 : vector<24x1xf32>
    %202 = vector.broadcast %194 : vector<24x1xf32> to vector<24x32xf32>
    %203 = arith.subf %183, %202 : vector<24x32xf32>
    %cst_101 = arith.constant 9.99999997E-7 : f32
    %204 = vector.broadcast %cst_101 : f32 to vector<24x1xf32>
    %205 = arith.addf %201, %204 : vector<24x1xf32>
    %206 = math.rsqrt %205 : vector<24x1xf32>
    %207 = vector.broadcast %206 : vector<24x1xf32> to vector<24x32xf32>
    %208 = arith.mulf %203, %207 : vector<24x32xf32>
    %209 = vector.broadcast %188 : vector<1x32xf32> to vector<24x32xf32>
    %210 = arith.mulf %208, %209 : vector<24x32xf32>
    %211 = vector.broadcast %190 : vector<1x32xf32> to vector<24x32xf32>
    %212 = arith.addf %210, %211 : vector<24x32xf32>
    %c1_102 = arith.constant 1 : index
    %c0_103 = arith.constant 0 : index
    %c0_104 = arith.constant 0 : index
    %213 = vector.load %arg6[%c1_102, %c0_103, %c0_104] : memref<4x32x96xf32, #tpu.memory_space<vmem>>, vector<1x32x96xf32>
    %214 = vector.shape_cast %213 : vector<1x32x96xf32> to vector<32x96xf32>
    %cst_105 = arith.constant dense<0.000000e+00> : vector<24x96xf32>
    %215 = tpu.matmul %212, %214, %cst_105 {dimension_numbers = #tpu.dot_dimension_numbers<[1], [0], [0], [1], [0, 0, 1, 1], [], []>} : vector<24x32xf32>, vector<32x96xf32>, vector<24x96xf32> -> vector<24x96xf32>
    %c1_106 = arith.constant 1 : index
    %c0_107 = arith.constant 0 : index
    %c0_108 = arith.constant 0 : index
    %216 = vector.load %arg7[%c1_106, %c0_107, %c0_108] : memref<4x1x96xf32, #tpu.memory_space<vmem>>, vector<1x1x96xf32>
    %217 = vector.shape_cast %216 : vector<1x1x96xf32> to vector<1x96xf32>
    %218 = vector.broadcast %217 : vector<1x96xf32> to vector<24x96xf32>
    %219 = arith.addf %215, %218 : vector<24x96xf32>
    %220 = vector.extract_strided_slice %219 {offsets = [0, 0], sizes = [24, 8], strides = [1, 1]} : vector<24x96xf32> to vector<24x8xf32>
    %221 = vector.extract_strided_slice %219 {offsets = [0, 32], sizes = [24, 8], strides = [1, 1]} : vector<24x96xf32> to vector<24x8xf32>
    %222 = vector.extract_strided_slice %219 {offsets = [0, 64], sizes = [24, 8], strides = [1, 1]} : vector<24x96xf32> to vector<24x8xf32>
    %cst_109 = arith.constant dense<0.000000e+00> : vector<24x24xf32>
    %223 = tpu.matmul %220, %221, %cst_109 {dimension_numbers = #tpu.dot_dimension_numbers<[1], [1], [0], [0], [0, 0, 1, 0], [], []>} : vector<24x8xf32>, vector<24x8xf32>, vector<24x24xf32> -> vector<24x24xf32>
    %cst_110 = arith.constant 0.353553385 : f32
    %224 = vector.broadcast %cst_110 : f32 to vector<24x24xf32>
    %225 = arith.mulf %223, %224 : vector<24x24xf32>
    %226 = vector.broadcast %5 : vector<1x24xf32> to vector<24x24xf32>
    %227 = arith.addf %225, %226 : vector<24x24xf32>
    %cst_111 = arith.constant dense<0xFF800000> : vector<24xf32>
    %228 = vector.multi_reduction <maximumf>, %227, %cst_111 [1] : vector<24x24xf32> to vector<24xf32>
    %229 = vector.shape_cast %228 : vector<24xf32> to vector<24x1xf32>
    %230 = vector.broadcast %229 : vector<24x1xf32> to vector<24x24xf32>
    %231 = arith.subf %227, %230 : vector<24x24xf32>
    %232 = math.exp %231 : vector<24x24xf32>
    %cst_112 = arith.constant dense<0.000000e+00> : vector<24xf32>
    %233 = vector.multi_reduction <add>, %232, %cst_112 [1] : vector<24x24xf32> to vector<24xf32>
    %234 = vector.shape_cast %233 : vector<24xf32> to vector<24x1xf32>
    %235 = vector.broadcast %234 : vector<24x1xf32> to vector<24x24xf32>
    %236 = arith.divf %232, %235 : vector<24x24xf32>
    %cst_113 = arith.constant dense<0.000000e+00> : vector<24x8xf32>
    %237 = tpu.matmul %236, %222, %cst_113 {dimension_numbers = #tpu.dot_dimension_numbers<[1], [0], [0], [1], [0, 0, 1, 1], [], []>} : vector<24x24xf32>, vector<24x8xf32>, vector<24x8xf32> -> vector<24x8xf32>
    %c0_114 = arith.constant 0 : index
    %c0_115 = arith.constant 0 : index
    %238 = vector.load %arg22[%c0_114, %c0_115] : memref<24x32xf32, #tpu.memory_space<vmem>>, vector<24x8xf32>
    tpu.vector_store %arg22[%c0_114, %c0_115], %237 {strides = array<i32>} : memref<24x32xf32, #tpu.memory_space<vmem>>, vector<24x8xf32>,
    %239 = vector.extract_strided_slice %219 {offsets = [0, 8], sizes = [24, 8], strides = [1, 1]} : vector<24x96xf32> to vector<24x8xf32>
    %240 = vector.extract_strided_slice %219 {offsets = [0, 40], sizes = [24, 8], strides = [1, 1]} : vector<24x96xf32> to vector<24x8xf32>
    %241 = vector.extract_strided_slice %219 {offsets = [0, 72], sizes = [24, 8], strides = [1, 1]} : vector<24x96xf32> to vector<24x8xf32>
    %cst_116 = arith.constant dense<0.000000e+00> : vector<24x24xf32>
    %242 = tpu.matmul %239, %240, %cst_116 {dimension_numbers = #tpu.dot_dimension_numbers<[1], [1], [0], [0], [0, 0, 1, 0], [], []>} : vector<24x8xf32>, vector<24x8xf32>, vector<24x24xf32> -> vector<24x24xf32>
    %cst_117 = arith.constant 0.353553385 : f32
    %243 = vector.broadcast %cst_117 : f32 to vector<24x24xf32>
    %244 = arith.mulf %242, %243 : vector<24x24xf32>
    %245 = vector.broadcast %5 : vector<1x24xf32> to vector<24x24xf32>
    %246 = arith.addf %244, %245 : vector<24x24xf32>
    %cst_118 = arith.constant dense<0xFF800000> : vector<24xf32>
    %247 = vector.multi_reduction <maximumf>, %246, %cst_118 [1] : vector<24x24xf32> to vector<24xf32>
    %248 = vector.shape_cast %247 : vector<24xf32> to vector<24x1xf32>
    %249 = vector.broadcast %248 : vector<24x1xf32> to vector<24x24xf32>
    %250 = arith.subf %246, %249 : vector<24x24xf32>
    %251 = math.exp %250 : vector<24x24xf32>
    %cst_119 = arith.constant dense<0.000000e+00> : vector<24xf32>
    %252 = vector.multi_reduction <add>, %251, %cst_119 [1] : vector<24x24xf32> to vector<24xf32>
    %253 = vector.shape_cast %252 : vector<24xf32> to vector<24x1xf32>
    %254 = vector.broadcast %253 : vector<24x1xf32> to vector<24x24xf32>
    %255 = arith.divf %251, %254 : vector<24x24xf32>
    %cst_120 = arith.constant dense<0.000000e+00> : vector<24x8xf32>
    %256 = tpu.matmul %255, %241, %cst_120 {dimension_numbers = #tpu.dot_dimension_numbers<[1], [0], [0], [1], [0, 0, 1, 1], [], []>} : vector<24x24xf32>, vector<24x8xf32>, vector<24x8xf32> -> vector<24x8xf32>
    %c0_121 = arith.constant 0 : index
    %c8_122 = arith.constant 8 : index
    %257 = vector.load %arg22[%c0_121, %c8_122] : memref<24x32xf32, #tpu.memory_space<vmem>>, vector<24x8xf32>
    tpu.vector_store %arg22[%c0_121, %c8_122], %256 {strides = array<i32>} : memref<24x32xf32, #tpu.memory_space<vmem>>, vector<24x8xf32>,
    %258 = vector.extract_strided_slice %219 {offsets = [0, 16], sizes = [24, 8], strides = [1, 1]} : vector<24x96xf32> to vector<24x8xf32>
    %259 = vector.extract_strided_slice %219 {offsets = [0, 48], sizes = [24, 8], strides = [1, 1]} : vector<24x96xf32> to vector<24x8xf32>
    %260 = vector.extract_strided_slice %219 {offsets = [0, 80], sizes = [24, 8], strides = [1, 1]} : vector<24x96xf32> to vector<24x8xf32>
    %cst_123 = arith.constant dense<0.000000e+00> : vector<24x24xf32>
    %261 = tpu.matmul %258, %259, %cst_123 {dimension_numbers = #tpu.dot_dimension_numbers<[1], [1], [0], [0], [0, 0, 1, 0], [], []>} : vector<24x8xf32>, vector<24x8xf32>, vector<24x24xf32> -> vector<24x24xf32>
    %cst_124 = arith.constant 0.353553385 : f32
    %262 = vector.broadcast %cst_124 : f32 to vector<24x24xf32>
    %263 = arith.mulf %261, %262 : vector<24x24xf32>
    %264 = vector.broadcast %5 : vector<1x24xf32> to vector<24x24xf32>
    %265 = arith.addf %263, %264 : vector<24x24xf32>
    %cst_125 = arith.constant dense<0xFF800000> : vector<24xf32>
    %266 = vector.multi_reduction <maximumf>, %265, %cst_125 [1] : vector<24x24xf32> to vector<24xf32>
    %267 = vector.shape_cast %266 : vector<24xf32> to vector<24x1xf32>
    %268 = vector.broadcast %267 : vector<24x1xf32> to vector<24x24xf32>
    %269 = arith.subf %265, %268 : vector<24x24xf32>
    %270 = math.exp %269 : vector<24x24xf32>
    %cst_126 = arith.constant dense<0.000000e+00> : vector<24xf32>
    %271 = vector.multi_reduction <add>, %270, %cst_126 [1] : vector<24x24xf32> to vector<24xf32>
    %272 = vector.shape_cast %271 : vector<24xf32> to vector<24x1xf32>
    %273 = vector.broadcast %272 : vector<24x1xf32> to vector<24x24xf32>
    %274 = arith.divf %270, %273 : vector<24x24xf32>
    %cst_127 = arith.constant dense<0.000000e+00> : vector<24x8xf32>
    %275 = tpu.matmul %274, %260, %cst_127 {dimension_numbers = #tpu.dot_dimension_numbers<[1], [0], [0], [1], [0, 0, 1, 1], [], []>} : vector<24x24xf32>, vector<24x8xf32>, vector<24x8xf32> -> vector<24x8xf32>
    %c0_128 = arith.constant 0 : index
    %c16_129 = arith.constant 16 : index
    %276 = vector.load %arg22[%c0_128, %c16_129] : memref<24x32xf32, #tpu.memory_space<vmem>>, vector<24x8xf32>
    tpu.vector_store %arg22[%c0_128, %c16_129], %275 {strides = array<i32>} : memref<24x32xf32, #tpu.memory_space<vmem>>, vector<24x8xf32>,
    %277 = vector.extract_strided_slice %219 {offsets = [0, 24], sizes = [24, 8], strides = [1, 1]} : vector<24x96xf32> to vector<24x8xf32>
    %278 = vector.extract_strided_slice %219 {offsets = [0, 56], sizes = [24, 8], strides = [1, 1]} : vector<24x96xf32> to vector<24x8xf32>
    %279 = vector.extract_strided_slice %219 {offsets = [0, 88], sizes = [24, 8], strides = [1, 1]} : vector<24x96xf32> to vector<24x8xf32>
    %cst_130 = arith.constant dense<0.000000e+00> : vector<24x24xf32>
    %280 = tpu.matmul %277, %278, %cst_130 {dimension_numbers = #tpu.dot_dimension_numbers<[1], [1], [0], [0], [0, 0, 1, 0], [], []>} : vector<24x8xf32>, vector<24x8xf32>, vector<24x24xf32> -> vector<24x24xf32>
    %cst_131 = arith.constant 0.353553385 : f32
    %281 = vector.broadcast %cst_131 : f32 to vector<24x24xf32>
    %282 = arith.mulf %280, %281 : vector<24x24xf32>
    %283 = vector.broadcast %5 : vector<1x24xf32> to vector<24x24xf32>
    %284 = arith.addf %282, %283 : vector<24x24xf32>
    %cst_132 = arith.constant dense<0xFF800000> : vector<24xf32>
    %285 = vector.multi_reduction <maximumf>, %284, %cst_132 [1] : vector<24x24xf32> to vector<24xf32>
    %286 = vector.shape_cast %285 : vector<24xf32> to vector<24x1xf32>
    %287 = vector.broadcast %286 : vector<24x1xf32> to vector<24x24xf32>
    %288 = arith.subf %284, %287 : vector<24x24xf32>
    %289 = math.exp %288 : vector<24x24xf32>
    %cst_133 = arith.constant dense<0.000000e+00> : vector<24xf32>
    %290 = vector.multi_reduction <add>, %289, %cst_133 [1] : vector<24x24xf32> to vector<24xf32>
    %291 = vector.shape_cast %290 : vector<24xf32> to vector<24x1xf32>
    %292 = vector.broadcast %291 : vector<24x1xf32> to vector<24x24xf32>
    %293 = arith.divf %289, %292 : vector<24x24xf32>
    %cst_134 = arith.constant dense<0.000000e+00> : vector<24x8xf32>
    %294 = tpu.matmul %293, %279, %cst_134 {dimension_numbers = #tpu.dot_dimension_numbers<[1], [0], [0], [1], [0, 0, 1, 1], [], []>} : vector<24x24xf32>, vector<24x8xf32>, vector<24x8xf32> -> vector<24x8xf32>
    %c0_135 = arith.constant 0 : index
    %c24_136 = arith.constant 24 : index
    %295 = vector.load %arg22[%c0_135, %c24_136] : memref<24x32xf32, #tpu.memory_space<vmem>>, vector<24x8xf32>
    tpu.vector_store %arg22[%c0_135, %c24_136], %294 {strides = array<i32>} : memref<24x32xf32, #tpu.memory_space<vmem>>, vector<24x8xf32>,
    %c0_137 = arith.constant 0 : index
    %c0_138 = arith.constant 0 : index
    %296 = vector.load %arg22[%c0_137, %c0_138] : memref<24x32xf32, #tpu.memory_space<vmem>>, vector<24x32xf32>
    %c1_139 = arith.constant 1 : index
    %c0_140 = arith.constant 0 : index
    %c0_141 = arith.constant 0 : index
    %297 = vector.load %arg8[%c1_139, %c0_140, %c0_141] : memref<4x32x32xf32, #tpu.memory_space<vmem>>, vector<1x32x32xf32>
    %298 = vector.shape_cast %297 : vector<1x32x32xf32> to vector<32x32xf32>
    %cst_142 = arith.constant dense<0.000000e+00> : vector<24x32xf32>
    %299 = tpu.matmul %296, %298, %cst_142 {dimension_numbers = #tpu.dot_dimension_numbers<[1], [0], [0], [1], [0, 0, 1, 1], [], []>} : vector<24x32xf32>, vector<32x32xf32>, vector<24x32xf32> -> vector<24x32xf32>
    %c1_143 = arith.constant 1 : index
    %c0_144 = arith.constant 0 : index
    %c0_145 = arith.constant 0 : index
    %300 = vector.load %arg9[%c1_143, %c0_144, %c0_145] : memref<4x1x32xf32, #tpu.memory_space<vmem>>, vector<1x1x32xf32>
    %301 = vector.shape_cast %300 : vector<1x1x32xf32> to vector<1x32xf32>
    %302 = vector.broadcast %301 : vector<1x32xf32> to vector<24x32xf32>
    %303 = arith.addf %299, %302 : vector<24x32xf32>
    %304 = arith.addf %183, %303 : vector<24x32xf32>
    %c1_146 = arith.constant 1 : index
    %c0_147 = arith.constant 0 : index
    %c0_148 = arith.constant 0 : index
    %305 = vector.load %arg10[%c1_146, %c0_147, %c0_148] : memref<4x1x32xf32, #tpu.memory_space<vmem>>, vector<1x1x32xf32>
    %306 = vector.shape_cast %305 : vector<1x1x32xf32> to vector<1x32xf32>
    %c1_149 = arith.constant 1 : index
    %c0_150 = arith.constant 0 : index
    %c0_151 = arith.constant 0 : index
    %307 = vector.load %arg11[%c1_149, %c0_150, %c0_151] : memref<4x1x32xf32, #tpu.memory_space<vmem>>, vector<1x1x32xf32>
    %308 = vector.shape_cast %307 : vector<1x1x32xf32> to vector<1x32xf32>
    %cst_152 = arith.constant dense<0.000000e+00> : vector<24xf32>
    %309 = vector.multi_reduction <add>, %304, %cst_152 [1] : vector<24x32xf32> to vector<24xf32>
    %310 = vector.shape_cast %309 : vector<24xf32> to vector<24x1xf32>
    %cst_153 = arith.constant 3.200000e+01 : f32
    %311 = vector.broadcast %cst_153 : f32 to vector<24x1xf32>
    %312 = arith.divf %310, %311 : vector<24x1xf32>
    %313 = vector.broadcast %312 : vector<24x1xf32> to vector<24x32xf32>
    %314 = arith.subf %304, %313 : vector<24x32xf32>
    %315 = arith.mulf %314, %314 : vector<24x32xf32>
    %cst_154 = arith.constant dense<0.000000e+00> : vector<24xf32>
    %316 = vector.multi_reduction <add>, %315, %cst_154 [1] : vector<24x32xf32> to vector<24xf32>
    %317 = vector.shape_cast %316 : vector<24xf32> to vector<24x1xf32>
    %cst_155 = arith.constant 3.200000e+01 : f32
    %318 = vector.broadcast %cst_155 : f32 to vector<24x1xf32>
    %319 = arith.divf %317, %318 : vector<24x1xf32>
    %320 = vector.broadcast %312 : vector<24x1xf32> to vector<24x32xf32>
    %321 = arith.subf %304, %320 : vector<24x32xf32>
    %cst_156 = arith.constant 9.99999997E-7 : f32
    %322 = vector.broadcast %cst_156 : f32 to vector<24x1xf32>
    %323 = arith.addf %319, %322 : vector<24x1xf32>
    %324 = math.rsqrt %323 : vector<24x1xf32>
    %325 = vector.broadcast %324 : vector<24x1xf32> to vector<24x32xf32>
    %326 = arith.mulf %321, %325 : vector<24x32xf32>
    %327 = vector.broadcast %306 : vector<1x32xf32> to vector<24x32xf32>
    %328 = arith.mulf %326, %327 : vector<24x32xf32>
    %329 = vector.broadcast %308 : vector<1x32xf32> to vector<24x32xf32>
    %330 = arith.addf %328, %329 : vector<24x32xf32>
    %c1_157 = arith.constant 1 : index
    %c0_158 = arith.constant 0 : index
    %c0_159 = arith.constant 0 : index
    %331 = vector.load %arg12[%c1_157, %c0_158, %c0_159] : memref<4x32x128xf32, #tpu.memory_space<vmem>>, vector<1x32x128xf32>
    %332 = vector.shape_cast %331 : vector<1x32x128xf32> to vector<32x128xf32>
    %cst_160 = arith.constant dense<0.000000e+00> : vector<24x128xf32>
    %333 = tpu.matmul %330, %332, %cst_160 {dimension_numbers = #tpu.dot_dimension_numbers<[1], [0], [0], [1], [0, 0, 1, 1], [], []>} : vector<24x32xf32>, vector<32x128xf32>, vector<24x128xf32> -> vector<24x128xf32>
    %c1_161 = arith.constant 1 : index
    %c0_162 = arith.constant 0 : index
    %c0_163 = arith.constant 0 : index
    %334 = vector.load %arg13[%c1_161, %c0_162, %c0_163] : memref<4x1x128xf32, #tpu.memory_space<vmem>>, vector<1x1x128xf32>
    %335 = vector.shape_cast %334 : vector<1x1x128xf32> to vector<1x128xf32>
    %336 = vector.broadcast %335 : vector<1x128xf32> to vector<24x128xf32>
    %337 = arith.addf %333, %336 : vector<24x128xf32>
    %338 = arith.mulf %337, %337 : vector<24x128xf32>
    %339 = arith.mulf %337, %338 : vector<24x128xf32>
    %cst_164 = arith.constant 4.471500e-02 : f32
    %340 = vector.broadcast %cst_164 : f32 to vector<24x128xf32>
    %341 = arith.mulf %340, %339 : vector<24x128xf32>
    %342 = arith.addf %337, %341 : vector<24x128xf32>
    %cst_165 = arith.constant 0.797884583 : f32
    %343 = vector.broadcast %cst_165 : f32 to vector<24x128xf32>
    %344 = arith.mulf %343, %342 : vector<24x128xf32>
    %345 = math.tanh %344 : vector<24x128xf32>
    %cst_166 = arith.constant 1.000000e+00 : f32
    %346 = vector.broadcast %cst_166 : f32 to vector<24x128xf32>
    %347 = arith.addf %346, %345 : vector<24x128xf32>
    %cst_167 = arith.constant 5.000000e-01 : f32
    %348 = vector.broadcast %cst_167 : f32 to vector<24x128xf32>
    %349 = arith.mulf %348, %347 : vector<24x128xf32>
    %350 = arith.mulf %337, %349 : vector<24x128xf32>
    %c1_168 = arith.constant 1 : index
    %c0_169 = arith.constant 0 : index
    %c0_170 = arith.constant 0 : index
    %351 = vector.load %arg14[%c1_168, %c0_169, %c0_170] : memref<4x128x32xf32, #tpu.memory_space<vmem>>, vector<1x128x32xf32>
    %352 = vector.shape_cast %351 : vector<1x128x32xf32> to vector<128x32xf32>
    %cst_171 = arith.constant dense<0.000000e+00> : vector<24x32xf32>
    %353 = tpu.matmul %350, %352, %cst_171 {dimension_numbers = #tpu.dot_dimension_numbers<[1], [0], [0], [1], [0, 0, 1, 1], [], []>} : vector<24x128xf32>, vector<128x32xf32>, vector<24x32xf32> -> vector<24x32xf32>
    %c1_172 = arith.constant 1 : index
    %c0_173 = arith.constant 0 : index
    %c0_174 = arith.constant 0 : index
    %354 = vector.load %arg15[%c1_172, %c0_173, %c0_174] : memref<4x1x32xf32, #tpu.memory_space<vmem>>, vector<1x1x32xf32>
    %355 = vector.shape_cast %354 : vector<1x1x32xf32> to vector<1x32xf32>
    %356 = vector.broadcast %355 : vector<1x32xf32> to vector<24x32xf32>
    %357 = arith.addf %353, %356 : vector<24x32xf32>
    %358 = arith.addf %304, %357 : vector<24x32xf32>
    %c0_175 = arith.constant 0 : index
    %c24_176 = arith.constant 24 : index
    %c0_177 = arith.constant 0 : index
    %359 = vector.load %arg21[%c0_175, %c24_176, %c0_177] : memref<1x72x32xf32, #tpu.memory_space<vmem>>, vector<1x24x32xf32>
    %360 = vector.shape_cast %359 : vector<1x24x32xf32> to vector<24x32xf32>
    %361 = vector.shape_cast %358 : vector<24x32xf32> to vector<1x24x32xf32>
    tpu.vector_store %arg21[%c0_175, %c24_176, %c0_177], %361 {strides = array<i32>} : memref<1x72x32xf32, #tpu.memory_space<vmem>>, vector<1x24x32xf32>,
    %c2 = arith.constant 2 : index
    %c0_178 = arith.constant 0 : index
    %c0_179 = arith.constant 0 : index
    %362 = vector.load %arg4[%c2, %c0_178, %c0_179] : memref<4x1x32xf32, #tpu.memory_space<vmem>>, vector<1x1x32xf32>
    %363 = vector.shape_cast %362 : vector<1x1x32xf32> to vector<1x32xf32>
    %c2_180 = arith.constant 2 : index
    %c0_181 = arith.constant 0 : index
    %c0_182 = arith.constant 0 : index
    %364 = vector.load %arg5[%c2_180, %c0_181, %c0_182] : memref<4x1x32xf32, #tpu.memory_space<vmem>>, vector<1x1x32xf32>
    %365 = vector.shape_cast %364 : vector<1x1x32xf32> to vector<1x32xf32>
    %cst_183 = arith.constant dense<0.000000e+00> : vector<24xf32>
    %366 = vector.multi_reduction <add>, %358, %cst_183 [1] : vector<24x32xf32> to vector<24xf32>
    %367 = vector.shape_cast %366 : vector<24xf32> to vector<24x1xf32>
    %cst_184 = arith.constant 3.200000e+01 : f32
    %368 = vector.broadcast %cst_184 : f32 to vector<24x1xf32>
    %369 = arith.divf %367, %368 : vector<24x1xf32>
    %370 = vector.broadcast %369 : vector<24x1xf32> to vector<24x32xf32>
    %371 = arith.subf %358, %370 : vector<24x32xf32>
    %372 = arith.mulf %371, %371 : vector<24x32xf32>
    %cst_185 = arith.constant dense<0.000000e+00> : vector<24xf32>
    %373 = vector.multi_reduction <add>, %372, %cst_185 [1] : vector<24x32xf32> to vector<24xf32>
    %374 = vector.shape_cast %373 : vector<24xf32> to vector<24x1xf32>
    %cst_186 = arith.constant 3.200000e+01 : f32
    %375 = vector.broadcast %cst_186 : f32 to vector<24x1xf32>
    %376 = arith.divf %374, %375 : vector<24x1xf32>
    %377 = vector.broadcast %369 : vector<24x1xf32> to vector<24x32xf32>
    %378 = arith.subf %358, %377 : vector<24x32xf32>
    %cst_187 = arith.constant 9.99999997E-7 : f32
    %379 = vector.broadcast %cst_187 : f32 to vector<24x1xf32>
    %380 = arith.addf %376, %379 : vector<24x1xf32>
    %381 = math.rsqrt %380 : vector<24x1xf32>
    %382 = vector.broadcast %381 : vector<24x1xf32> to vector<24x32xf32>
    %383 = arith.mulf %378, %382 : vector<24x32xf32>
    %384 = vector.broadcast %363 : vector<1x32xf32> to vector<24x32xf32>
    %385 = arith.mulf %383, %384 : vector<24x32xf32>
    %386 = vector.broadcast %365 : vector<1x32xf32> to vector<24x32xf32>
    %387 = arith.addf %385, %386 : vector<24x32xf32>
    %c2_188 = arith.constant 2 : index
    %c0_189 = arith.constant 0 : index
    %c0_190 = arith.constant 0 : index
    %388 = vector.load %arg6[%c2_188, %c0_189, %c0_190] : memref<4x32x96xf32, #tpu.memory_space<vmem>>, vector<1x32x96xf32>
    %389 = vector.shape_cast %388 : vector<1x32x96xf32> to vector<32x96xf32>
    %cst_191 = arith.constant dense<0.000000e+00> : vector<24x96xf32>
    %390 = tpu.matmul %387, %389, %cst_191 {dimension_numbers = #tpu.dot_dimension_numbers<[1], [0], [0], [1], [0, 0, 1, 1], [], []>} : vector<24x32xf32>, vector<32x96xf32>, vector<24x96xf32> -> vector<24x96xf32>
    %c2_192 = arith.constant 2 : index
    %c0_193 = arith.constant 0 : index
    %c0_194 = arith.constant 0 : index
    %391 = vector.load %arg7[%c2_192, %c0_193, %c0_194] : memref<4x1x96xf32, #tpu.memory_space<vmem>>, vector<1x1x96xf32>
    %392 = vector.shape_cast %391 : vector<1x1x96xf32> to vector<1x96xf32>
    %393 = vector.broadcast %392 : vector<1x96xf32> to vector<24x96xf32>
    %394 = arith.addf %390, %393 : vector<24x96xf32>
    %395 = vector.extract_strided_slice %394 {offsets = [0, 0], sizes = [24, 8], strides = [1, 1]} : vector<24x96xf32> to vector<24x8xf32>
    %396 = vector.extract_strided_slice %394 {offsets = [0, 32], sizes = [24, 8], strides = [1, 1]} : vector<24x96xf32> to vector<24x8xf32>
    %397 = vector.extract_strided_slice %394 {offsets = [0, 64], sizes = [24, 8], strides = [1, 1]} : vector<24x96xf32> to vector<24x8xf32>
    %cst_195 = arith.constant dense<0.000000e+00> : vector<24x24xf32>
    %398 = tpu.matmul %395, %396, %cst_195 {dimension_numbers = #tpu.dot_dimension_numbers<[1], [1], [0], [0], [0, 0, 1, 0], [], []>} : vector<24x8xf32>, vector<24x8xf32>, vector<24x24xf32> -> vector<24x24xf32>
    %cst_196 = arith.constant 0.353553385 : f32
    %399 = vector.broadcast %cst_196 : f32 to vector<24x24xf32>
    %400 = arith.mulf %398, %399 : vector<24x24xf32>
    %401 = vector.broadcast %5 : vector<1x24xf32> to vector<24x24xf32>
    %402 = arith.addf %400, %401 : vector<24x24xf32>
    %cst_197 = arith.constant dense<0xFF800000> : vector<24xf32>
    %403 = vector.multi_reduction <maximumf>, %402, %cst_197 [1] : vector<24x24xf32> to vector<24xf32>
    %404 = vector.shape_cast %403 : vector<24xf32> to vector<24x1xf32>
    %405 = vector.broadcast %404 : vector<24x1xf32> to vector<24x24xf32>
    %406 = arith.subf %402, %405 : vector<24x24xf32>
    %407 = math.exp %406 : vector<24x24xf32>
    %cst_198 = arith.constant dense<0.000000e+00> : vector<24xf32>
    %408 = vector.multi_reduction <add>, %407, %cst_198 [1] : vector<24x24xf32> to vector<24xf32>
    %409 = vector.shape_cast %408 : vector<24xf32> to vector<24x1xf32>
    %410 = vector.broadcast %409 : vector<24x1xf32> to vector<24x24xf32>
    %411 = arith.divf %407, %410 : vector<24x24xf32>
    %cst_199 = arith.constant dense<0.000000e+00> : vector<24x8xf32>
    %412 = tpu.matmul %411, %397, %cst_199 {dimension_numbers = #tpu.dot_dimension_numbers<[1], [0], [0], [1], [0, 0, 1, 1], [], []>} : vector<24x24xf32>, vector<24x8xf32>, vector<24x8xf32> -> vector<24x8xf32>
    %c0_200 = arith.constant 0 : index
    %c0_201 = arith.constant 0 : index
    %413 = vector.load %arg22[%c0_200, %c0_201] : memref<24x32xf32, #tpu.memory_space<vmem>>, vector<24x8xf32>
    tpu.vector_store %arg22[%c0_200, %c0_201], %412 {strides = array<i32>} : memref<24x32xf32, #tpu.memory_space<vmem>>, vector<24x8xf32>,
    %414 = vector.extract_strided_slice %394 {offsets = [0, 8], sizes = [24, 8], strides = [1, 1]} : vector<24x96xf32> to vector<24x8xf32>
    %415 = vector.extract_strided_slice %394 {offsets = [0, 40], sizes = [24, 8], strides = [1, 1]} : vector<24x96xf32> to vector<24x8xf32>
    %416 = vector.extract_strided_slice %394 {offsets = [0, 72], sizes = [24, 8], strides = [1, 1]} : vector<24x96xf32> to vector<24x8xf32>
    %cst_202 = arith.constant dense<0.000000e+00> : vector<24x24xf32>
    %417 = tpu.matmul %414, %415, %cst_202 {dimension_numbers = #tpu.dot_dimension_numbers<[1], [1], [0], [0], [0, 0, 1, 0], [], []>} : vector<24x8xf32>, vector<24x8xf32>, vector<24x24xf32> -> vector<24x24xf32>
    %cst_203 = arith.constant 0.353553385 : f32
    %418 = vector.broadcast %cst_203 : f32 to vector<24x24xf32>
    %419 = arith.mulf %417, %418 : vector<24x24xf32>
    %420 = vector.broadcast %5 : vector<1x24xf32> to vector<24x24xf32>
    %421 = arith.addf %419, %420 : vector<24x24xf32>
    %cst_204 = arith.constant dense<0xFF800000> : vector<24xf32>
    %422 = vector.multi_reduction <maximumf>, %421, %cst_204 [1] : vector<24x24xf32> to vector<24xf32>
    %423 = vector.shape_cast %422 : vector<24xf32> to vector<24x1xf32>
    %424 = vector.broadcast %423 : vector<24x1xf32> to vector<24x24xf32>
    %425 = arith.subf %421, %424 : vector<24x24xf32>
    %426 = math.exp %425 : vector<24x24xf32>
    %cst_205 = arith.constant dense<0.000000e+00> : vector<24xf32>
    %427 = vector.multi_reduction <add>, %426, %cst_205 [1] : vector<24x24xf32> to vector<24xf32>
    %428 = vector.shape_cast %427 : vector<24xf32> to vector<24x1xf32>
    %429 = vector.broadcast %428 : vector<24x1xf32> to vector<24x24xf32>
    %430 = arith.divf %426, %429 : vector<24x24xf32>
    %cst_206 = arith.constant dense<0.000000e+00> : vector<24x8xf32>
    %431 = tpu.matmul %430, %416, %cst_206 {dimension_numbers = #tpu.dot_dimension_numbers<[1], [0], [0], [1], [0, 0, 1, 1], [], []>} : vector<24x24xf32>, vector<24x8xf32>, vector<24x8xf32> -> vector<24x8xf32>
    %c0_207 = arith.constant 0 : index
    %c8_208 = arith.constant 8 : index
    %432 = vector.load %arg22[%c0_207, %c8_208] : memref<24x32xf32, #tpu.memory_space<vmem>>, vector<24x8xf32>
    tpu.vector_store %arg22[%c0_207, %c8_208], %431 {strides = array<i32>} : memref<24x32xf32, #tpu.memory_space<vmem>>, vector<24x8xf32>,
    %433 = vector.extract_strided_slice %394 {offsets = [0, 16], sizes = [24, 8], strides = [1, 1]} : vector<24x96xf32> to vector<24x8xf32>
    %434 = vector.extract_strided_slice %394 {offsets = [0, 48], sizes = [24, 8], strides = [1, 1]} : vector<24x96xf32> to vector<24x8xf32>
    %435 = vector.extract_strided_slice %394 {offsets = [0, 80], sizes = [24, 8], strides = [1, 1]} : vector<24x96xf32> to vector<24x8xf32>
    %cst_209 = arith.constant dense<0.000000e+00> : vector<24x24xf32>
    %436 = tpu.matmul %433, %434, %cst_209 {dimension_numbers = #tpu.dot_dimension_numbers<[1], [1], [0], [0], [0, 0, 1, 0], [], []>} : vector<24x8xf32>, vector<24x8xf32>, vector<24x24xf32> -> vector<24x24xf32>
    %cst_210 = arith.constant 0.353553385 : f32
    %437 = vector.broadcast %cst_210 : f32 to vector<24x24xf32>
    %438 = arith.mulf %436, %437 : vector<24x24xf32>
    %439 = vector.broadcast %5 : vector<1x24xf32> to vector<24x24xf32>
    %440 = arith.addf %438, %439 : vector<24x24xf32>
    %cst_211 = arith.constant dense<0xFF800000> : vector<24xf32>
    %441 = vector.multi_reduction <maximumf>, %440, %cst_211 [1] : vector<24x24xf32> to vector<24xf32>
    %442 = vector.shape_cast %441 : vector<24xf32> to vector<24x1xf32>
    %443 = vector.broadcast %442 : vector<24x1xf32> to vector<24x24xf32>
    %444 = arith.subf %440, %443 : vector<24x24xf32>
    %445 = math.exp %444 : vector<24x24xf32>
    %cst_212 = arith.constant dense<0.000000e+00> : vector<24xf32>
    %446 = vector.multi_reduction <add>, %445, %cst_212 [1] : vector<24x24xf32> to vector<24xf32>
    %447 = vector.shape_cast %446 : vector<24xf32> to vector<24x1xf32>
    %448 = vector.broadcast %447 : vector<24x1xf32> to vector<24x24xf32>
    %449 = arith.divf %445, %448 : vector<24x24xf32>
    %cst_213 = arith.constant dense<0.000000e+00> : vector<24x8xf32>
    %450 = tpu.matmul %449, %435, %cst_213 {dimension_numbers = #tpu.dot_dimension_numbers<[1], [0], [0], [1], [0, 0, 1, 1], [], []>} : vector<24x24xf32>, vector<24x8xf32>, vector<24x8xf32> -> vector<24x8xf32>
    %c0_214 = arith.constant 0 : index
    %c16_215 = arith.constant 16 : index
    %451 = vector.load %arg22[%c0_214, %c16_215] : memref<24x32xf32, #tpu.memory_space<vmem>>, vector<24x8xf32>
    tpu.vector_store %arg22[%c0_214, %c16_215], %450 {strides = array<i32>} : memref<24x32xf32, #tpu.memory_space<vmem>>, vector<24x8xf32>,
    %452 = vector.extract_strided_slice %394 {offsets = [0, 24], sizes = [24, 8], strides = [1, 1]} : vector<24x96xf32> to vector<24x8xf32>
    %453 = vector.extract_strided_slice %394 {offsets = [0, 56], sizes = [24, 8], strides = [1, 1]} : vector<24x96xf32> to vector<24x8xf32>
    %454 = vector.extract_strided_slice %394 {offsets = [0, 88], sizes = [24, 8], strides = [1, 1]} : vector<24x96xf32> to vector<24x8xf32>
    %cst_216 = arith.constant dense<0.000000e+00> : vector<24x24xf32>
    %455 = tpu.matmul %452, %453, %cst_216 {dimension_numbers = #tpu.dot_dimension_numbers<[1], [1], [0], [0], [0, 0, 1, 0], [], []>} : vector<24x8xf32>, vector<24x8xf32>, vector<24x24xf32> -> vector<24x24xf32>
    %cst_217 = arith.constant 0.353553385 : f32
    %456 = vector.broadcast %cst_217 : f32 to vector<24x24xf32>
    %457 = arith.mulf %455, %456 : vector<24x24xf32>
    %458 = vector.broadcast %5 : vector<1x24xf32> to vector<24x24xf32>
    %459 = arith.addf %457, %458 : vector<24x24xf32>
    %cst_218 = arith.constant dense<0xFF800000> : vector<24xf32>
    %460 = vector.multi_reduction <maximumf>, %459, %cst_218 [1] : vector<24x24xf32> to vector<24xf32>
    %461 = vector.shape_cast %460 : vector<24xf32> to vector<24x1xf32>
    %462 = vector.broadcast %461 : vector<24x1xf32> to vector<24x24xf32>
    %463 = arith.subf %459, %462 : vector<24x24xf32>
    %464 = math.exp %463 : vector<24x24xf32>
    %cst_219 = arith.constant dense<0.000000e+00> : vector<24xf32>
    %465 = vector.multi_reduction <add>, %464, %cst_219 [1] : vector<24x24xf32> to vector<24xf32>
    %466 = vector.shape_cast %465 : vector<24xf32> to vector<24x1xf32>
    %467 = vector.broadcast %466 : vector<24x1xf32> to vector<24x24xf32>
    %468 = arith.divf %464, %467 : vector<24x24xf32>
    %cst_220 = arith.constant dense<0.000000e+00> : vector<24x8xf32>
    %469 = tpu.matmul %468, %454, %cst_220 {dimension_numbers = #tpu.dot_dimension_numbers<[1], [0], [0], [1], [0, 0, 1, 1], [], []>} : vector<24x24xf32>, vector<24x8xf32>, vector<24x8xf32> -> vector<24x8xf32>
    %c0_221 = arith.constant 0 : index
    %c24_222 = arith.constant 24 : index
    %470 = vector.load %arg22[%c0_221, %c24_222] : memref<24x32xf32, #tpu.memory_space<vmem>>, vector<24x8xf32>
    tpu.vector_store %arg22[%c0_221, %c24_222], %469 {strides = array<i32>} : memref<24x32xf32, #tpu.memory_space<vmem>>, vector<24x8xf32>,
    %c0_223 = arith.constant 0 : index
    %c0_224 = arith.constant 0 : index
    %471 = vector.load %arg22[%c0_223, %c0_224] : memref<24x32xf32, #tpu.memory_space<vmem>>, vector<24x32xf32>
    %c2_225 = arith.constant 2 : index
    %c0_226 = arith.constant 0 : index
    %c0_227 = arith.constant 0 : index
    %472 = vector.load %arg8[%c2_225, %c0_226, %c0_227] : memref<4x32x32xf32, #tpu.memory_space<vmem>>, vector<1x32x32xf32>
    %473 = vector.shape_cast %472 : vector<1x32x32xf32> to vector<32x32xf32>
    %cst_228 = arith.constant dense<0.000000e+00> : vector<24x32xf32>
    %474 = tpu.matmul %471, %473, %cst_228 {dimension_numbers = #tpu.dot_dimension_numbers<[1], [0], [0], [1], [0, 0, 1, 1], [], []>} : vector<24x32xf32>, vector<32x32xf32>, vector<24x32xf32> -> vector<24x32xf32>
    %c2_229 = arith.constant 2 : index
    %c0_230 = arith.constant 0 : index
    %c0_231 = arith.constant 0 : index
    %475 = vector.load %arg9[%c2_229, %c0_230, %c0_231] : memref<4x1x32xf32, #tpu.memory_space<vmem>>, vector<1x1x32xf32>
    %476 = vector.shape_cast %475 : vector<1x1x32xf32> to vector<1x32xf32>
    %477 = vector.broadcast %476 : vector<1x32xf32> to vector<24x32xf32>
    %478 = arith.addf %474, %477 : vector<24x32xf32>
    %479 = arith.addf %358, %478 : vector<24x32xf32>
    %c2_232 = arith.constant 2 : index
    %c0_233 = arith.constant 0 : index
    %c0_234 = arith.constant 0 : index
    %480 = vector.load %arg10[%c2_232, %c0_233, %c0_234] : memref<4x1x32xf32, #tpu.memory_space<vmem>>, vector<1x1x32xf32>
    %481 = vector.shape_cast %480 : vector<1x1x32xf32> to vector<1x32xf32>
    %c2_235 = arith.constant 2 : index
    %c0_236 = arith.constant 0 : index
    %c0_237 = arith.constant 0 : index
    %482 = vector.load %arg11[%c2_235, %c0_236, %c0_237] : memref<4x1x32xf32, #tpu.memory_space<vmem>>, vector<1x1x32xf32>
    %483 = vector.shape_cast %482 : vector<1x1x32xf32> to vector<1x32xf32>
    %cst_238 = arith.constant dense<0.000000e+00> : vector<24xf32>
    %484 = vector.multi_reduction <add>, %479, %cst_238 [1] : vector<24x32xf32> to vector<24xf32>
    %485 = vector.shape_cast %484 : vector<24xf32> to vector<24x1xf32>
    %cst_239 = arith.constant 3.200000e+01 : f32
    %486 = vector.broadcast %cst_239 : f32 to vector<24x1xf32>
    %487 = arith.divf %485, %486 : vector<24x1xf32>
    %488 = vector.broadcast %487 : vector<24x1xf32> to vector<24x32xf32>
    %489 = arith.subf %479, %488 : vector<24x32xf32>
    %490 = arith.mulf %489, %489 : vector<24x32xf32>
    %cst_240 = arith.constant dense<0.000000e+00> : vector<24xf32>
    %491 = vector.multi_reduction <add>, %490, %cst_240 [1] : vector<24x32xf32> to vector<24xf32>
    %492 = vector.shape_cast %491 : vector<24xf32> to vector<24x1xf32>
    %cst_241 = arith.constant 3.200000e+01 : f32
    %493 = vector.broadcast %cst_241 : f32 to vector<24x1xf32>
    %494 = arith.divf %492, %493 : vector<24x1xf32>
    %495 = vector.broadcast %487 : vector<24x1xf32> to vector<24x32xf32>
    %496 = arith.subf %479, %495 : vector<24x32xf32>
    %cst_242 = arith.constant 9.99999997E-7 : f32
    %497 = vector.broadcast %cst_242 : f32 to vector<24x1xf32>
    %498 = arith.addf %494, %497 : vector<24x1xf32>
    %499 = math.rsqrt %498 : vector<24x1xf32>
    %500 = vector.broadcast %499 : vector<24x1xf32> to vector<24x32xf32>
    %501 = arith.mulf %496, %500 : vector<24x32xf32>
    %502 = vector.broadcast %481 : vector<1x32xf32> to vector<24x32xf32>
    %503 = arith.mulf %501, %502 : vector<24x32xf32>
    %504 = vector.broadcast %483 : vector<1x32xf32> to vector<24x32xf32>
    %505 = arith.addf %503, %504 : vector<24x32xf32>
    %c2_243 = arith.constant 2 : index
    %c0_244 = arith.constant 0 : index
    %c0_245 = arith.constant 0 : index
    %506 = vector.load %arg12[%c2_243, %c0_244, %c0_245] : memref<4x32x128xf32, #tpu.memory_space<vmem>>, vector<1x32x128xf32>
    %507 = vector.shape_cast %506 : vector<1x32x128xf32> to vector<32x128xf32>
    %cst_246 = arith.constant dense<0.000000e+00> : vector<24x128xf32>
    %508 = tpu.matmul %505, %507, %cst_246 {dimension_numbers = #tpu.dot_dimension_numbers<[1], [0], [0], [1], [0, 0, 1, 1], [], []>} : vector<24x32xf32>, vector<32x128xf32>, vector<24x128xf32> -> vector<24x128xf32>
    %c2_247 = arith.constant 2 : index
    %c0_248 = arith.constant 0 : index
    %c0_249 = arith.constant 0 : index
    %509 = vector.load %arg13[%c2_247, %c0_248, %c0_249] : memref<4x1x128xf32, #tpu.memory_space<vmem>>, vector<1x1x128xf32>
    %510 = vector.shape_cast %509 : vector<1x1x128xf32> to vector<1x128xf32>
    %511 = vector.broadcast %510 : vector<1x128xf32> to vector<24x128xf32>
    %512 = arith.addf %508, %511 : vector<24x128xf32>
    %513 = arith.mulf %512, %512 : vector<24x128xf32>
    %514 = arith.mulf %512, %513 : vector<24x128xf32>
    %cst_250 = arith.constant 4.471500e-02 : f32
    %515 = vector.broadcast %cst_250 : f32 to vector<24x128xf32>
    %516 = arith.mulf %515, %514 : vector<24x128xf32>
    %517 = arith.addf %512, %516 : vector<24x128xf32>
    %cst_251 = arith.constant 0.797884583 : f32
    %518 = vector.broadcast %cst_251 : f32 to vector<24x128xf32>
    %519 = arith.mulf %518, %517 : vector<24x128xf32>
    %520 = math.tanh %519 : vector<24x128xf32>
    %cst_252 = arith.constant 1.000000e+00 : f32
    %521 = vector.broadcast %cst_252 : f32 to vector<24x128xf32>
    %522 = arith.addf %521, %520 : vector<24x128xf32>
    %cst_253 = arith.constant 5.000000e-01 : f32
    %523 = vector.broadcast %cst_253 : f32 to vector<24x128xf32>
    %524 = arith.mulf %523, %522 : vector<24x128xf32>
    %525 = arith.mulf %512, %524 : vector<24x128xf32>
    %c2_254 = arith.constant 2 : index
    %c0_255 = arith.constant 0 : index
    %c0_256 = arith.constant 0 : index
    %526 = vector.load %arg14[%c2_254, %c0_255, %c0_256] : memref<4x128x32xf32, #tpu.memory_space<vmem>>, vector<1x128x32xf32>
    %527 = vector.shape_cast %526 : vector<1x128x32xf32> to vector<128x32xf32>
    %cst_257 = arith.constant dense<0.000000e+00> : vector<24x32xf32>
    %528 = tpu.matmul %525, %527, %cst_257 {dimension_numbers = #tpu.dot_dimension_numbers<[1], [0], [0], [1], [0, 0, 1, 1], [], []>} : vector<24x128xf32>, vector<128x32xf32>, vector<24x32xf32> -> vector<24x32xf32>
    %c2_258 = arith.constant 2 : index
    %c0_259 = arith.constant 0 : index
    %c0_260 = arith.constant 0 : index
    %529 = vector.load %arg15[%c2_258, %c0_259, %c0_260] : memref<4x1x32xf32, #tpu.memory_space<vmem>>, vector<1x1x32xf32>
    %530 = vector.shape_cast %529 : vector<1x1x32xf32> to vector<1x32xf32>
    %531 = vector.broadcast %530 : vector<1x32xf32> to vector<24x32xf32>
    %532 = arith.addf %528, %531 : vector<24x32xf32>
    %533 = arith.addf %479, %532 : vector<24x32xf32>
    %c3 = arith.constant 3 : index
    %c0_261 = arith.constant 0 : index
    %c0_262 = arith.constant 0 : index
    %534 = vector.load %arg4[%c3, %c0_261, %c0_262] : memref<4x1x32xf32, #tpu.memory_space<vmem>>, vector<1x1x32xf32>
    %535 = vector.shape_cast %534 : vector<1x1x32xf32> to vector<1x32xf32>
    %c3_263 = arith.constant 3 : index
    %c0_264 = arith.constant 0 : index
    %c0_265 = arith.constant 0 : index
    %536 = vector.load %arg5[%c3_263, %c0_264, %c0_265] : memref<4x1x32xf32, #tpu.memory_space<vmem>>, vector<1x1x32xf32>
    %537 = vector.shape_cast %536 : vector<1x1x32xf32> to vector<1x32xf32>
    %cst_266 = arith.constant dense<0.000000e+00> : vector<24xf32>
    %538 = vector.multi_reduction <add>, %533, %cst_266 [1] : vector<24x32xf32> to vector<24xf32>
    %539 = vector.shape_cast %538 : vector<24xf32> to vector<24x1xf32>
    %cst_267 = arith.constant 3.200000e+01 : f32
    %540 = vector.broadcast %cst_267 : f32 to vector<24x1xf32>
    %541 = arith.divf %539, %540 : vector<24x1xf32>
    %542 = vector.broadcast %541 : vector<24x1xf32> to vector<24x32xf32>
    %543 = arith.subf %533, %542 : vector<24x32xf32>
    %544 = arith.mulf %543, %543 : vector<24x32xf32>
    %cst_268 = arith.constant dense<0.000000e+00> : vector<24xf32>
    %545 = vector.multi_reduction <add>, %544, %cst_268 [1] : vector<24x32xf32> to vector<24xf32>
    %546 = vector.shape_cast %545 : vector<24xf32> to vector<24x1xf32>
    %cst_269 = arith.constant 3.200000e+01 : f32
    %547 = vector.broadcast %cst_269 : f32 to vector<24x1xf32>
    %548 = arith.divf %546, %547 : vector<24x1xf32>
    %549 = vector.broadcast %541 : vector<24x1xf32> to vector<24x32xf32>
    %550 = arith.subf %533, %549 : vector<24x32xf32>
    %cst_270 = arith.constant 9.99999997E-7 : f32
    %551 = vector.broadcast %cst_270 : f32 to vector<24x1xf32>
    %552 = arith.addf %548, %551 : vector<24x1xf32>
    %553 = math.rsqrt %552 : vector<24x1xf32>
    %554 = vector.broadcast %553 : vector<24x1xf32> to vector<24x32xf32>
    %555 = arith.mulf %550, %554 : vector<24x32xf32>
    %556 = vector.broadcast %535 : vector<1x32xf32> to vector<24x32xf32>
    %557 = arith.mulf %555, %556 : vector<24x32xf32>
    %558 = vector.broadcast %537 : vector<1x32xf32> to vector<24x32xf32>
    %559 = arith.addf %557, %558 : vector<24x32xf32>
    %c3_271 = arith.constant 3 : index
    %c0_272 = arith.constant 0 : index
    %c0_273 = arith.constant 0 : index
    %560 = vector.load %arg6[%c3_271, %c0_272, %c0_273] : memref<4x32x96xf32, #tpu.memory_space<vmem>>, vector<1x32x96xf32>
    %561 = vector.shape_cast %560 : vector<1x32x96xf32> to vector<32x96xf32>
    %cst_274 = arith.constant dense<0.000000e+00> : vector<24x96xf32>
    %562 = tpu.matmul %559, %561, %cst_274 {dimension_numbers = #tpu.dot_dimension_numbers<[1], [0], [0], [1], [0, 0, 1, 1], [], []>} : vector<24x32xf32>, vector<32x96xf32>, vector<24x96xf32> -> vector<24x96xf32>
    %c3_275 = arith.constant 3 : index
    %c0_276 = arith.constant 0 : index
    %c0_277 = arith.constant 0 : index
    %563 = vector.load %arg7[%c3_275, %c0_276, %c0_277] : memref<4x1x96xf32, #tpu.memory_space<vmem>>, vector<1x1x96xf32>
    %564 = vector.shape_cast %563 : vector<1x1x96xf32> to vector<1x96xf32>
    %565 = vector.broadcast %564 : vector<1x96xf32> to vector<24x96xf32>
    %566 = arith.addf %562, %565 : vector<24x96xf32>
    %567 = vector.extract_strided_slice %566 {offsets = [0, 0], sizes = [24, 8], strides = [1, 1]} : vector<24x96xf32> to vector<24x8xf32>
    %568 = vector.extract_strided_slice %566 {offsets = [0, 32], sizes = [24, 8], strides = [1, 1]} : vector<24x96xf32> to vector<24x8xf32>
    %569 = vector.extract_strided_slice %566 {offsets = [0, 64], sizes = [24, 8], strides = [1, 1]} : vector<24x96xf32> to vector<24x8xf32>
    %cst_278 = arith.constant dense<0.000000e+00> : vector<24x24xf32>
    %570 = tpu.matmul %567, %568, %cst_278 {dimension_numbers = #tpu.dot_dimension_numbers<[1], [1], [0], [0], [0, 0, 1, 0], [], []>} : vector<24x8xf32>, vector<24x8xf32>, vector<24x24xf32> -> vector<24x24xf32>
    %cst_279 = arith.constant 0.353553385 : f32
    %571 = vector.broadcast %cst_279 : f32 to vector<24x24xf32>
    %572 = arith.mulf %570, %571 : vector<24x24xf32>
    %573 = vector.broadcast %5 : vector<1x24xf32> to vector<24x24xf32>
    %574 = arith.addf %572, %573 : vector<24x24xf32>
    %cst_280 = arith.constant dense<0xFF800000> : vector<24xf32>
    %575 = vector.multi_reduction <maximumf>, %574, %cst_280 [1] : vector<24x24xf32> to vector<24xf32>
    %576 = vector.shape_cast %575 : vector<24xf32> to vector<24x1xf32>
    %577 = vector.broadcast %576 : vector<24x1xf32> to vector<24x24xf32>
    %578 = arith.subf %574, %577 : vector<24x24xf32>
    %579 = math.exp %578 : vector<24x24xf32>
    %cst_281 = arith.constant dense<0.000000e+00> : vector<24xf32>
    %580 = vector.multi_reduction <add>, %579, %cst_281 [1] : vector<24x24xf32> to vector<24xf32>
    %581 = vector.shape_cast %580 : vector<24xf32> to vector<24x1xf32>
    %582 = vector.broadcast %581 : vector<24x1xf32> to vector<24x24xf32>
    %583 = arith.divf %579, %582 : vector<24x24xf32>
    %cst_282 = arith.constant dense<0.000000e+00> : vector<24x8xf32>
    %584 = tpu.matmul %583, %569, %cst_282 {dimension_numbers = #tpu.dot_dimension_numbers<[1], [0], [0], [1], [0, 0, 1, 1], [], []>} : vector<24x24xf32>, vector<24x8xf32>, vector<24x8xf32> -> vector<24x8xf32>
    %c0_283 = arith.constant 0 : index
    %c0_284 = arith.constant 0 : index
    %585 = vector.load %arg22[%c0_283, %c0_284] : memref<24x32xf32, #tpu.memory_space<vmem>>, vector<24x8xf32>
    tpu.vector_store %arg22[%c0_283, %c0_284], %584 {strides = array<i32>} : memref<24x32xf32, #tpu.memory_space<vmem>>, vector<24x8xf32>,
    %586 = vector.extract_strided_slice %566 {offsets = [0, 8], sizes = [24, 8], strides = [1, 1]} : vector<24x96xf32> to vector<24x8xf32>
    %587 = vector.extract_strided_slice %566 {offsets = [0, 40], sizes = [24, 8], strides = [1, 1]} : vector<24x96xf32> to vector<24x8xf32>
    %588 = vector.extract_strided_slice %566 {offsets = [0, 72], sizes = [24, 8], strides = [1, 1]} : vector<24x96xf32> to vector<24x8xf32>
    %cst_285 = arith.constant dense<0.000000e+00> : vector<24x24xf32>
    %589 = tpu.matmul %586, %587, %cst_285 {dimension_numbers = #tpu.dot_dimension_numbers<[1], [1], [0], [0], [0, 0, 1, 0], [], []>} : vector<24x8xf32>, vector<24x8xf32>, vector<24x24xf32> -> vector<24x24xf32>
    %cst_286 = arith.constant 0.353553385 : f32
    %590 = vector.broadcast %cst_286 : f32 to vector<24x24xf32>
    %591 = arith.mulf %589, %590 : vector<24x24xf32>
    %592 = vector.broadcast %5 : vector<1x24xf32> to vector<24x24xf32>
    %593 = arith.addf %591, %592 : vector<24x24xf32>
    %cst_287 = arith.constant dense<0xFF800000> : vector<24xf32>
    %594 = vector.multi_reduction <maximumf>, %593, %cst_287 [1] : vector<24x24xf32> to vector<24xf32>
    %595 = vector.shape_cast %594 : vector<24xf32> to vector<24x1xf32>
    %596 = vector.broadcast %595 : vector<24x1xf32> to vector<24x24xf32>
    %597 = arith.subf %593, %596 : vector<24x24xf32>
    %598 = math.exp %597 : vector<24x24xf32>
    %cst_288 = arith.constant dense<0.000000e+00> : vector<24xf32>
    %599 = vector.multi_reduction <add>, %598, %cst_288 [1] : vector<24x24xf32> to vector<24xf32>
    %600 = vector.shape_cast %599 : vector<24xf32> to vector<24x1xf32>
    %601 = vector.broadcast %600 : vector<24x1xf32> to vector<24x24xf32>
    %602 = arith.divf %598, %601 : vector<24x24xf32>
    %cst_289 = arith.constant dense<0.000000e+00> : vector<24x8xf32>
    %603 = tpu.matmul %602, %588, %cst_289 {dimension_numbers = #tpu.dot_dimension_numbers<[1], [0], [0], [1], [0, 0, 1, 1], [], []>} : vector<24x24xf32>, vector<24x8xf32>, vector<24x8xf32> -> vector<24x8xf32>
    %c0_290 = arith.constant 0 : index
    %c8_291 = arith.constant 8 : index
    %604 = vector.load %arg22[%c0_290, %c8_291] : memref<24x32xf32, #tpu.memory_space<vmem>>, vector<24x8xf32>
    tpu.vector_store %arg22[%c0_290, %c8_291], %603 {strides = array<i32>} : memref<24x32xf32, #tpu.memory_space<vmem>>, vector<24x8xf32>,
    %605 = vector.extract_strided_slice %566 {offsets = [0, 16], sizes = [24, 8], strides = [1, 1]} : vector<24x96xf32> to vector<24x8xf32>
    %606 = vector.extract_strided_slice %566 {offsets = [0, 48], sizes = [24, 8], strides = [1, 1]} : vector<24x96xf32> to vector<24x8xf32>
    %607 = vector.extract_strided_slice %566 {offsets = [0, 80], sizes = [24, 8], strides = [1, 1]} : vector<24x96xf32> to vector<24x8xf32>
    %cst_292 = arith.constant dense<0.000000e+00> : vector<24x24xf32>
    %608 = tpu.matmul %605, %606, %cst_292 {dimension_numbers = #tpu.dot_dimension_numbers<[1], [1], [0], [0], [0, 0, 1, 0], [], []>} : vector<24x8xf32>, vector<24x8xf32>, vector<24x24xf32> -> vector<24x24xf32>
    %cst_293 = arith.constant 0.353553385 : f32
    %609 = vector.broadcast %cst_293 : f32 to vector<24x24xf32>
    %610 = arith.mulf %608, %609 : vector<24x24xf32>
    %611 = vector.broadcast %5 : vector<1x24xf32> to vector<24x24xf32>
    %612 = arith.addf %610, %611 : vector<24x24xf32>
    %cst_294 = arith.constant dense<0xFF800000> : vector<24xf32>
    %613 = vector.multi_reduction <maximumf>, %612, %cst_294 [1] : vector<24x24xf32> to vector<24xf32>
    %614 = vector.shape_cast %613 : vector<24xf32> to vector<24x1xf32>
    %615 = vector.broadcast %614 : vector<24x1xf32> to vector<24x24xf32>
    %616 = arith.subf %612, %615 : vector<24x24xf32>
    %617 = math.exp %616 : vector<24x24xf32>
    %cst_295 = arith.constant dense<0.000000e+00> : vector<24xf32>
    %618 = vector.multi_reduction <add>, %617, %cst_295 [1] : vector<24x24xf32> to vector<24xf32>
    %619 = vector.shape_cast %618 : vector<24xf32> to vector<24x1xf32>
    %620 = vector.broadcast %619 : vector<24x1xf32> to vector<24x24xf32>
    %621 = arith.divf %617, %620 : vector<24x24xf32>
    %cst_296 = arith.constant dense<0.000000e+00> : vector<24x8xf32>
    %622 = tpu.matmul %621, %607, %cst_296 {dimension_numbers = #tpu.dot_dimension_numbers<[1], [0], [0], [1], [0, 0, 1, 1], [], []>} : vector<24x24xf32>, vector<24x8xf32>, vector<24x8xf32> -> vector<24x8xf32>
    %c0_297 = arith.constant 0 : index
    %c16_298 = arith.constant 16 : index
    %623 = vector.load %arg22[%c0_297, %c16_298] : memref<24x32xf32, #tpu.memory_space<vmem>>, vector<24x8xf32>
    tpu.vector_store %arg22[%c0_297, %c16_298], %622 {strides = array<i32>} : memref<24x32xf32, #tpu.memory_space<vmem>>, vector<24x8xf32>,
    %624 = vector.extract_strided_slice %566 {offsets = [0, 24], sizes = [24, 8], strides = [1, 1]} : vector<24x96xf32> to vector<24x8xf32>
    %625 = vector.extract_strided_slice %566 {offsets = [0, 56], sizes = [24, 8], strides = [1, 1]} : vector<24x96xf32> to vector<24x8xf32>
    %626 = vector.extract_strided_slice %566 {offsets = [0, 88], sizes = [24, 8], strides = [1, 1]} : vector<24x96xf32> to vector<24x8xf32>
    %cst_299 = arith.constant dense<0.000000e+00> : vector<24x24xf32>
    %627 = tpu.matmul %624, %625, %cst_299 {dimension_numbers = #tpu.dot_dimension_numbers<[1], [1], [0], [0], [0, 0, 1, 0], [], []>} : vector<24x8xf32>, vector<24x8xf32>, vector<24x24xf32> -> vector<24x24xf32>
    %cst_300 = arith.constant 0.353553385 : f32
    %628 = vector.broadcast %cst_300 : f32 to vector<24x24xf32>
    %629 = arith.mulf %627, %628 : vector<24x24xf32>
    %630 = vector.broadcast %5 : vector<1x24xf32> to vector<24x24xf32>
    %631 = arith.addf %629, %630 : vector<24x24xf32>
    %cst_301 = arith.constant dense<0xFF800000> : vector<24xf32>
    %632 = vector.multi_reduction <maximumf>, %631, %cst_301 [1] : vector<24x24xf32> to vector<24xf32>
    %633 = vector.shape_cast %632 : vector<24xf32> to vector<24x1xf32>
    %634 = vector.broadcast %633 : vector<24x1xf32> to vector<24x24xf32>
    %635 = arith.subf %631, %634 : vector<24x24xf32>
    %636 = math.exp %635 : vector<24x24xf32>
    %cst_302 = arith.constant dense<0.000000e+00> : vector<24xf32>
    %637 = vector.multi_reduction <add>, %636, %cst_302 [1] : vector<24x24xf32> to vector<24xf32>
    %638 = vector.shape_cast %637 : vector<24xf32> to vector<24x1xf32>
    %639 = vector.broadcast %638 : vector<24x1xf32> to vector<24x24xf32>
    %640 = arith.divf %636, %639 : vector<24x24xf32>
    %cst_303 = arith.constant dense<0.000000e+00> : vector<24x8xf32>
    %641 = tpu.matmul %640, %626, %cst_303 {dimension_numbers = #tpu.dot_dimension_numbers<[1], [0], [0], [1], [0, 0, 1, 1], [], []>} : vector<24x24xf32>, vector<24x8xf32>, vector<24x8xf32> -> vector<24x8xf32>
    %c0_304 = arith.constant 0 : index
    %c24_305 = arith.constant 24 : index
    %642 = vector.load %arg22[%c0_304, %c24_305] : memref<24x32xf32, #tpu.memory_space<vmem>>, vector<24x8xf32>
    tpu.vector_store %arg22[%c0_304, %c24_305], %641 {strides = array<i32>} : memref<24x32xf32, #tpu.memory_space<vmem>>, vector<24x8xf32>,
    %c0_306 = arith.constant 0 : index
    %c0_307 = arith.constant 0 : index
    %643 = vector.load %arg22[%c0_306, %c0_307] : memref<24x32xf32, #tpu.memory_space<vmem>>, vector<24x32xf32>
    %c3_308 = arith.constant 3 : index
    %c0_309 = arith.constant 0 : index
    %c0_310 = arith.constant 0 : index
    %644 = vector.load %arg8[%c3_308, %c0_309, %c0_310] : memref<4x32x32xf32, #tpu.memory_space<vmem>>, vector<1x32x32xf32>
    %645 = vector.shape_cast %644 : vector<1x32x32xf32> to vector<32x32xf32>
    %cst_311 = arith.constant dense<0.000000e+00> : vector<24x32xf32>
    %646 = tpu.matmul %643, %645, %cst_311 {dimension_numbers = #tpu.dot_dimension_numbers<[1], [0], [0], [1], [0, 0, 1, 1], [], []>} : vector<24x32xf32>, vector<32x32xf32>, vector<24x32xf32> -> vector<24x32xf32>
    %c3_312 = arith.constant 3 : index
    %c0_313 = arith.constant 0 : index
    %c0_314 = arith.constant 0 : index
    %647 = vector.load %arg9[%c3_312, %c0_313, %c0_314] : memref<4x1x32xf32, #tpu.memory_space<vmem>>, vector<1x1x32xf32>
    %648 = vector.shape_cast %647 : vector<1x1x32xf32> to vector<1x32xf32>
    %649 = vector.broadcast %648 : vector<1x32xf32> to vector<24x32xf32>
    %650 = arith.addf %646, %649 : vector<24x32xf32>
    %651 = arith.addf %533, %650 : vector<24x32xf32>
    %c3_315 = arith.constant 3 : index
    %c0_316 = arith.constant 0 : index
    %c0_317 = arith.constant 0 : index
    %652 = vector.load %arg10[%c3_315, %c0_316, %c0_317] : memref<4x1x32xf32, #tpu.memory_space<vmem>>, vector<1x1x32xf32>
    %653 = vector.shape_cast %652 : vector<1x1x32xf32> to vector<1x32xf32>
    %c3_318 = arith.constant 3 : index
    %c0_319 = arith.constant 0 : index
    %c0_320 = arith.constant 0 : index
    %654 = vector.load %arg11[%c3_318, %c0_319, %c0_320] : memref<4x1x32xf32, #tpu.memory_space<vmem>>, vector<1x1x32xf32>
    %655 = vector.shape_cast %654 : vector<1x1x32xf32> to vector<1x32xf32>
    %cst_321 = arith.constant dense<0.000000e+00> : vector<24xf32>
    %656 = vector.multi_reduction <add>, %651, %cst_321 [1] : vector<24x32xf32> to vector<24xf32>
    %657 = vector.shape_cast %656 : vector<24xf32> to vector<24x1xf32>
    %cst_322 = arith.constant 3.200000e+01 : f32
    %658 = vector.broadcast %cst_322 : f32 to vector<24x1xf32>
    %659 = arith.divf %657, %658 : vector<24x1xf32>
    %660 = vector.broadcast %659 : vector<24x1xf32> to vector<24x32xf32>
    %661 = arith.subf %651, %660 : vector<24x32xf32>
    %662 = arith.mulf %661, %661 : vector<24x32xf32>
    %cst_323 = arith.constant dense<0.000000e+00> : vector<24xf32>
    %663 = vector.multi_reduction <add>, %662, %cst_323 [1] : vector<24x32xf32> to vector<24xf32>
    %664 = vector.shape_cast %663 : vector<24xf32> to vector<24x1xf32>
    %cst_324 = arith.constant 3.200000e+01 : f32
    %665 = vector.broadcast %cst_324 : f32 to vector<24x1xf32>
    %666 = arith.divf %664, %665 : vector<24x1xf32>
    %667 = vector.broadcast %659 : vector<24x1xf32> to vector<24x32xf32>
    %668 = arith.subf %651, %667 : vector<24x32xf32>
    %cst_325 = arith.constant 9.99999997E-7 : f32
    %669 = vector.broadcast %cst_325 : f32 to vector<24x1xf32>
    %670 = arith.addf %666, %669 : vector<24x1xf32>
    %671 = math.rsqrt %670 : vector<24x1xf32>
    %672 = vector.broadcast %671 : vector<24x1xf32> to vector<24x32xf32>
    %673 = arith.mulf %668, %672 : vector<24x32xf32>
    %674 = vector.broadcast %653 : vector<1x32xf32> to vector<24x32xf32>
    %675 = arith.mulf %673, %674 : vector<24x32xf32>
    %676 = vector.broadcast %655 : vector<1x32xf32> to vector<24x32xf32>
    %677 = arith.addf %675, %676 : vector<24x32xf32>
    %c3_326 = arith.constant 3 : index
    %c0_327 = arith.constant 0 : index
    %c0_328 = arith.constant 0 : index
    %678 = vector.load %arg12[%c3_326, %c0_327, %c0_328] : memref<4x32x128xf32, #tpu.memory_space<vmem>>, vector<1x32x128xf32>
    %679 = vector.shape_cast %678 : vector<1x32x128xf32> to vector<32x128xf32>
    %cst_329 = arith.constant dense<0.000000e+00> : vector<24x128xf32>
    %680 = tpu.matmul %677, %679, %cst_329 {dimension_numbers = #tpu.dot_dimension_numbers<[1], [0], [0], [1], [0, 0, 1, 1], [], []>} : vector<24x32xf32>, vector<32x128xf32>, vector<24x128xf32> -> vector<24x128xf32>
    %c3_330 = arith.constant 3 : index
    %c0_331 = arith.constant 0 : index
    %c0_332 = arith.constant 0 : index
    %681 = vector.load %arg13[%c3_330, %c0_331, %c0_332] : memref<4x1x128xf32, #tpu.memory_space<vmem>>, vector<1x1x128xf32>
    %682 = vector.shape_cast %681 : vector<1x1x128xf32> to vector<1x128xf32>
    %683 = vector.broadcast %682 : vector<1x128xf32> to vector<24x128xf32>
    %684 = arith.addf %680, %683 : vector<24x128xf32>
    %685 = arith.mulf %684, %684 : vector<24x128xf32>
    %686 = arith.mulf %684, %685 : vector<24x128xf32>
    %cst_333 = arith.constant 4.471500e-02 : f32
    %687 = vector.broadcast %cst_333 : f32 to vector<24x128xf32>
    %688 = arith.mulf %687, %686 : vector<24x128xf32>
    %689 = arith.addf %684, %688 : vector<24x128xf32>
    %cst_334 = arith.constant 0.797884583 : f32
    %690 = vector.broadcast %cst_334 : f32 to vector<24x128xf32>
    %691 = arith.mulf %690, %689 : vector<24x128xf32>
    %692 = math.tanh %691 : vector<24x128xf32>
    %cst_335 = arith.constant 1.000000e+00 : f32
    %693 = vector.broadcast %cst_335 : f32 to vector<24x128xf32>
    %694 = arith.addf %693, %692 : vector<24x128xf32>
    %cst_336 = arith.constant 5.000000e-01 : f32
    %695 = vector.broadcast %cst_336 : f32 to vector<24x128xf32>
    %696 = arith.mulf %695, %694 : vector<24x128xf32>
    %697 = arith.mulf %684, %696 : vector<24x128xf32>
    %c3_337 = arith.constant 3 : index
    %c0_338 = arith.constant 0 : index
    %c0_339 = arith.constant 0 : index
    %698 = vector.load %arg14[%c3_337, %c0_338, %c0_339] : memref<4x128x32xf32, #tpu.memory_space<vmem>>, vector<1x128x32xf32>
    %699 = vector.shape_cast %698 : vector<1x128x32xf32> to vector<128x32xf32>
    %cst_340 = arith.constant dense<0.000000e+00> : vector<24x32xf32>
    %700 = tpu.matmul %697, %699, %cst_340 {dimension_numbers = #tpu.dot_dimension_numbers<[1], [0], [0], [1], [0, 0, 1, 1], [], []>} : vector<24x128xf32>, vector<128x32xf32>, vector<24x32xf32> -> vector<24x32xf32>
    %c3_341 = arith.constant 3 : index
    %c0_342 = arith.constant 0 : index
    %c0_343 = arith.constant 0 : index
    %701 = vector.load %arg15[%c3_341, %c0_342, %c0_343] : memref<4x1x32xf32, #tpu.memory_space<vmem>>, vector<1x1x32xf32>
    %702 = vector.shape_cast %701 : vector<1x1x32xf32> to vector<1x32xf32>
    %703 = vector.broadcast %702 : vector<1x32xf32> to vector<24x32xf32>
    %704 = arith.addf %700, %703 : vector<24x32xf32>
    %705 = arith.addf %651, %704 : vector<24x32xf32>
    %c0_344 = arith.constant 0 : index
    %c48 = arith.constant 48 : index
    %c0_345 = arith.constant 0 : index
    %706 = vector.load %arg21[%c0_344, %c48, %c0_345] : memref<1x72x32xf32, #tpu.memory_space<vmem>>, vector<1x24x32xf32>
    %707 = vector.shape_cast %706 : vector<1x24x32xf32> to vector<24x32xf32>
    %708 = vector.shape_cast %705 : vector<24x32xf32> to vector<1x24x32xf32>
    tpu.vector_store %arg21[%c0_344, %c48, %c0_345], %708 {strides = array<i32>} : memref<1x72x32xf32, #tpu.memory_space<vmem>>, vector<1x24x32xf32>,
    %c0_346 = arith.constant 0 : index
    %c0_347 = arith.constant 0 : index
    %709 = vector.load %arg16[%c0_346, %c0_347] : memref<1x32xf32, #tpu.memory_space<vmem>>, vector<1x32xf32>
    %c0_348 = arith.constant 0 : index
    %c0_349 = arith.constant 0 : index
    %710 = vector.load %arg17[%c0_348, %c0_349] : memref<1x32xf32, #tpu.memory_space<vmem>>, vector<1x32xf32>
    %cst_350 = arith.constant dense<0.000000e+00> : vector<24xf32>
    %711 = vector.multi_reduction <add>, %705, %cst_350 [1] : vector<24x32xf32> to vector<24xf32>
    %712 = vector.shape_cast %711 : vector<24xf32> to vector<24x1xf32>
    %cst_351 = arith.constant 3.200000e+01 : f32
    %713 = vector.broadcast %cst_351 : f32 to vector<24x1xf32>
    %714 = arith.divf %712, %713 : vector<24x1xf32>
    %715 = vector.broadcast %714 : vector<24x1xf32> to vector<24x32xf32>
    %716 = arith.subf %705, %715 : vector<24x32xf32>
    %717 = arith.mulf %716, %716 : vector<24x32xf32>
    %cst_352 = arith.constant dense<0.000000e+00> : vector<24xf32>
    %718 = vector.multi_reduction <add>, %717, %cst_352 [1] : vector<24x32xf32> to vector<24xf32>
    %719 = vector.shape_cast %718 : vector<24xf32> to vector<24x1xf32>
    %cst_353 = arith.constant 3.200000e+01 : f32
    %720 = vector.broadcast %cst_353 : f32 to vector<24x1xf32>
    %721 = arith.divf %719, %720 : vector<24x1xf32>
    %722 = vector.broadcast %714 : vector<24x1xf32> to vector<24x32xf32>
    %723 = arith.subf %705, %722 : vector<24x32xf32>
    %cst_354 = arith.constant 9.99999997E-7 : f32
    %724 = vector.broadcast %cst_354 : f32 to vector<24x1xf32>
    %725 = arith.addf %721, %724 : vector<24x1xf32>
    %726 = math.rsqrt %725 : vector<24x1xf32>
    %727 = vector.broadcast %726 : vector<24x1xf32> to vector<24x32xf32>
    %728 = arith.mulf %723, %727 : vector<24x32xf32>
    %729 = vector.broadcast %709 : vector<1x32xf32> to vector<24x32xf32>
    %730 = arith.mulf %728, %729 : vector<24x32xf32>
    %731 = vector.broadcast %710 : vector<1x32xf32> to vector<24x32xf32>
    %732 = arith.addf %730, %731 : vector<24x32xf32>
    %c0_355 = arith.constant 0 : index
    %c0_356 = arith.constant 0 : index
    %733 = vector.load %arg18[%c0_355, %c0_356] : memref<32x32xf32, #tpu.memory_space<vmem>>, vector<32x32xf32>
    %cst_357 = arith.constant dense<0.000000e+00> : vector<24x32xf32>
    %734 = tpu.matmul %732, %733, %cst_357 {dimension_numbers = #tpu.dot_dimension_numbers<[1], [0], [0], [1], [0, 0, 1, 1], [], []>} : vector<24x32xf32>, vector<32x32xf32>, vector<24x32xf32> -> vector<24x32xf32>
    %c0_358 = arith.constant 0 : index
    %c0_359 = arith.constant 0 : index
    %735 = vector.load %arg19[%c0_358, %c0_359] : memref<1x32xf32, #tpu.memory_space<vmem>>, vector<1x32xf32>
    %736 = vector.broadcast %735 : vector<1x32xf32> to vector<24x32xf32>
    %737 = arith.addf %734, %736 : vector<24x32xf32>
    %738 = vector.extract_strided_slice %737 {offsets = [0, 0], sizes = [1, 32], strides = [1, 1]} : vector<24x32xf32> to vector<1x32xf32>
    %c0_360 = arith.constant 0 : index
    %c0_361 = arith.constant 0 : index
    %c0_362 = arith.constant 0 : index
    %739 = vector.load %arg20[%c0_360, %c0_361, %c0_362] : memref<1x1x32xf32, #tpu.memory_space<vmem>>, vector<1x1x32xf32>
    %740 = vector.shape_cast %739 : vector<1x1x32xf32> to vector<1x32xf32>
    %741 = vector.shape_cast %738 : vector<1x32xf32> to vector<1x1x32xf32>
    tpu.vector_store %arg20[%c0_360, %c0_361, %c0_362], %741 {strides = array<i32>} : memref<1x1x32xf32, #tpu.memory_space<vmem>>, vector<1x1x32xf32>,
    return
  }
  func.func @transform_0(%arg0: i32) -> (i32, i32, i32) {
    %c0_i32 = arith.constant 0 : i32
    %c0_i32_0 = arith.constant 0 : i32
    %c0_i32_1 = arith.constant 0 : i32
    return %arg0, %c0_i32, %c0_i32_0 : i32, i32, i32
  }
  func.func @transform_1(%arg0: i32) -> (i32, i32) {
    %c0_i32 = arith.constant 0 : i32
    %c0_i32_0 = arith.constant 0 : i32
    %c0_i32_1 = arith.constant 0 : i32
    return %c0_i32, %c0_i32_0 : i32, i32
  }
  func.func @transform_2(%arg0: i32) -> (i32, i32) {
    %c0_i32 = arith.constant 0 : i32
    %c0_i32_0 = arith.constant 0 : i32
    %c0_i32_1 = arith.constant 0 : i32
    return %c0_i32, %c0_i32_0 : i32, i32
  }
  func.func @transform_3(%arg0: i32) -> (i32, i32, i32) {
    %c0_i32 = arith.constant 0 : i32
    %c0_i32_0 = arith.constant 0 : i32
    %c0_i32_1 = arith.constant 0 : i32
    %c0_i32_2 = arith.constant 0 : i32
    return %c0_i32, %c0_i32_0, %c0_i32_1 : i32, i32, i32
  }
  func.func @transform_4(%arg0: i32) -> (i32, i32, i32) {
    %c0_i32 = arith.constant 0 : i32
    %c0_i32_0 = arith.constant 0 : i32
    %c0_i32_1 = arith.constant 0 : i32
    %c0_i32_2 = arith.constant 0 : i32
    return %c0_i32, %c0_i32_0, %c0_i32_1 : i32, i32, i32
  }
  func.func @transform_5(%arg0: i32) -> (i32, i32, i32) {
    %c0_i32 = arith.constant 0 : i32
    %c0_i32_0 = arith.constant 0 : i32
    %c0_i32_1 = arith.constant 0 : i32
    %c0_i32_2 = arith.constant 0 : i32
    return %c0_i32, %c0_i32_0, %c0_i32_1 : i32, i32, i32
  }
  func.func @transform_6(%arg0: i32) -> (i32, i32, i32) {
    %c0_i32 = arith.constant 0 : i32
    %c0_i32_0 = arith.constant 0 : i32
    %c0_i32_1 = arith.constant 0 : i32
    %c0_i32_2 = arith.constant 0 : i32
    return %c0_i32, %c0_i32_0, %c0_i32_1 : i32, i32, i32
  }
  func.func @transform_7(%arg0: i32) -> (i32, i32, i32) {
    %c0_i32 = arith.constant 0 : i32
    %c0_i32_0 = arith.constant 0 : i32
    %c0_i32_1 = arith.constant 0 : i32
    %c0_i32_2 = arith.constant 0 : i32
    return %c0_i32, %c0_i32_0, %c0_i32_1 : i32, i32, i32
  }
  func.func @transform_8(%arg0: i32) -> (i32, i32, i32) {
    %c0_i32 = arith.constant 0 : i32
    %c0_i32_0 = arith.constant 0 : i32
    %c0_i32_1 = arith.constant 0 : i32
    %c0_i32_2 = arith.constant 0 : i32
    return %c0_i32, %c0_i32_0, %c0_i32_1 : i32, i32, i32
  }
  func.func @transform_9(%arg0: i32) -> (i32, i32, i32) {
    %c0_i32 = arith.constant 0 : i32
    %c0_i32_0 = arith.constant 0 : i32
    %c0_i32_1 = arith.constant 0 : i32
    %c0_i32_2 = arith.constant 0 : i32
    return %c0_i32, %c0_i32_0, %c0_i32_1 : i32, i32, i32
  }
  func.func @transform_10(%arg0: i32) -> (i32, i32, i32) {
    %c0_i32 = arith.constant 0 : i32
    %c0_i32_0 = arith.constant 0 : i32
    %c0_i32_1 = arith.constant 0 : i32
    %c0_i32_2 = arith.constant 0 : i32
    return %c0_i32, %c0_i32_0, %c0_i32_1 : i32, i32, i32
  }
  func.func @transform_11(%arg0: i32) -> (i32, i32, i32) {
    %c0_i32 = arith.constant 0 : i32
    %c0_i32_0 = arith.constant 0 : i32
    %c0_i32_1 = arith.constant 0 : i32
    %c0_i32_2 = arith.constant 0 : i32
    return %c0_i32, %c0_i32_0, %c0_i32_1 : i32, i32, i32
  }
  func.func @transform_12(%arg0: i32) -> (i32, i32, i32) {
    %c0_i32 = arith.constant 0 : i32
    %c0_i32_0 = arith.constant 0 : i32
    %c0_i32_1 = arith.constant 0 : i32
    %c0_i32_2 = arith.constant 0 : i32
    return %c0_i32, %c0_i32_0, %c0_i32_1 : i32, i32, i32
  }
  func.func @transform_13(%arg0: i32) -> (i32, i32, i32) {
    %c0_i32 = arith.constant 0 : i32
    %c0_i32_0 = arith.constant 0 : i32
    %c0_i32_1 = arith.constant 0 : i32
    %c0_i32_2 = arith.constant 0 : i32
    return %c0_i32, %c0_i32_0, %c0_i32_1 : i32, i32, i32
  }
  func.func @transform_14(%arg0: i32) -> (i32, i32, i32) {
    %c0_i32 = arith.constant 0 : i32
    %c0_i32_0 = arith.constant 0 : i32
    %c0_i32_1 = arith.constant 0 : i32
    %c0_i32_2 = arith.constant 0 : i32
    return %c0_i32, %c0_i32_0, %c0_i32_1 : i32, i32, i32
  }
  func.func @transform_15(%arg0: i32) -> (i32, i32) {
    %c0_i32 = arith.constant 0 : i32
    %c0_i32_0 = arith.constant 0 : i32
    %c0_i32_1 = arith.constant 0 : i32
    return %c0_i32, %c0_i32_0 : i32, i32
  }
  func.func @transform_16(%arg0: i32) -> (i32, i32) {
    %c0_i32 = arith.constant 0 : i32
    %c0_i32_0 = arith.constant 0 : i32
    %c0_i32_1 = arith.constant 0 : i32
    return %c0_i32, %c0_i32_0 : i32, i32
  }
  func.func @transform_17(%arg0: i32) -> (i32, i32) {
    %c0_i32 = arith.constant 0 : i32
    %c0_i32_0 = arith.constant 0 : i32
    %c0_i32_1 = arith.constant 0 : i32
    return %c0_i32, %c0_i32_0 : i32, i32
  }
  func.func @transform_18(%arg0: i32) -> (i32, i32) {
    %c0_i32 = arith.constant 0 : i32
    %c0_i32_0 = arith.constant 0 : i32
    %c0_i32_1 = arith.constant 0 : i32
    return %c0_i32, %c0_i32_0 : i32, i32
  }
  func.func @transform_19(%arg0: i32) -> (i32, i32, i32) {
    %c0_i32 = arith.constant 0 : i32
    %c0_i32_0 = arith.constant 0 : i32
    %c0_i32_1 = arith.constant 0 : i32
    return %arg0, %c0_i32, %c0_i32_0 : i32, i32, i32
  }
  func.func @transform_20(%arg0: i32) -> (i32, i32, i32) {
    %c0_i32 = arith.constant 0 : i32
    %c0_i32_0 = arith.constant 0 : i32
    %c0_i32_1 = arith.constant 0 : i32
    return %arg0, %c0_i32, %c0_i32_0 : i32, i32, i32
  }
}

</mosaic_0001>

<llo_original>
// kernel: forward.1
$region0: #{forward.1}
  #allocation0 [shape = 'u32[]', space=smem, size = 0x4, offset = 0x4, fixed_abs, tag = 'smem constant byte address 0x4 - core index']
  #allocation1 [shape = 'u32[144,128]{1,0:T(1,128)}', space=vmem, size = 0x12000, scoped, tag = 'internal scratch']
  #allocation2 [shape = 'f32[24,32]{1,0:T(8,128)}', space=vmem, size = 0x3000, scoped, tag = 'scratch operand']
  %s0 = inlined_call_operand.vmem [shape: f32[2,24,64], index: 0, kind: input, shape index: {}]
  %s1 = inlined_call_operand.vmem [shape: f32[24,32], index: 1, kind: input, shape index: {}]
  %s2 = inlined_call_operand.vmem [shape: f32[64,32], index: 2, kind: input, shape index: {}]
  %s3 = inlined_call_operand.vmem [shape: f32[4,1,32], index: 3, kind: input, shape index: {}]
  %s4 = inlined_call_operand.vmem [shape: f32[4,1,32], index: 4, kind: input, shape index: {}]
  %s5 = inlined_call_operand.vmem [shape: f32[4,32,96], index: 5, kind: input, shape index: {}]
  %s6 = inlined_call_operand.vmem [shape: f32[4,1,96], index: 6, kind: input, shape index: {}]
  %s7 = inlined_call_operand.vmem [shape: f32[4,32,32], index: 7, kind: input, shape index: {}]
  %s8 = inlined_call_operand.vmem [shape: f32[4,1,32], index: 8, kind: input, shape index: {}]
  %s9 = inlined_call_operand.vmem [shape: f32[4,1,32], index: 9, kind: input, shape index: {}]
  %s10 = inlined_call_operand.vmem [shape: f32[4,1,32], index: 10, kind: input, shape index: {}]
  %s11 = inlined_call_operand.vmem [shape: f32[4,32,128], index: 11, kind: input, shape index: {}]
  %s12 = inlined_call_operand.vmem [shape: f32[4,1,128], index: 12, kind: input, shape index: {}]
  %s13 = inlined_call_operand.vmem [shape: f32[4,128,32], index: 13, kind: input, shape index: {}]
  %s14 = inlined_call_operand.vmem [shape: f32[4,1,32], index: 14, kind: input, shape index: {}]
  %s15 = inlined_call_operand.vmem [shape: f32[1,32], index: 15, kind: input, shape index: {}]
  %s16 = inlined_call_operand.vmem [shape: f32[1,32], index: 16, kind: input, shape index: {}]
  %s17 = inlined_call_operand.vmem [shape: f32[32,32], index: 17, kind: input, shape index: {}]
  %s18 = inlined_call_operand.vmem [shape: f32[1,32], index: 18, kind: input, shape index: {}]
  %s19 = inlined_call_operand.hbm [shape: f32[2,1,32], index: 19, kind: output, shape index: {0}]
  %s20 = inlined_call_operand.vmem [shape: f32[2,72,32], index: 20, kind: output, shape index: {1}]
  %21 = xla_tuple %s19, %s20
  %s22 = sld [smem:[#allocation0]]
  $region117: #{forward.1} parent=0
    _
  %s24 = ssub.s32 1, %s22
  %s25 = scalar_select 0, %s24, %s22
  $region1: #{forward.1} parent=0
    #allocation3 [shape = 'u8[1024]{0}', space=vmem, size = 0x400, scoped, tag = 'output window, operand 0']
    #allocation4 [shape = 's32[2]{0}', space=sflag, size = 0x8, scoped, tag = 'scoped memory for forward.1']
    %26 = vsyncpa [#allocation4], 0
    %s27 = scalar_lea.sflag [#allocation4], 1
    %28 = vsyncpa %s27, 0
    loop: start=0, step=1, limit=4
    $region2: #{forward.1} parent=1 // loop_pre_header
      _
    $region3: #{forward.1} parent=1 // loop_header
      %s30 = sphi 0, %s34
      %p31 = scmp.ge.s32.totalorder %s30, 4
      %s40 = sphi 0, %s42
      %s43 = sphi 0, %s40
      %s44 = sphi 0, %s43
      %s60 = sphi 0, %s44
      %s64 = sphi 0, %s64
      %s66 = sphi 0, %s64
      %s67 = sphi 0, %s66
      %s81 = sphi 0, %s67
      %s85 = sphi 0, %s85
      %s87 = sphi 0, %s85
      %s88 = sphi 0, %s87
      %s102 = sphi 0, %s88
      %s106 = sphi 0, %s106
      %s108 = sphi 0, %s106
      %s109 = sphi 0, %s108
      %s123 = sphi 0, %s109
      %s127 = sphi 0, %s127
      %s129 = sphi 0, %s127
      %s130 = sphi 0, %s129
      %s144 = sphi 0, %s130
      %s148 = sphi 0, %s148
      %s150 = sphi 0, %s148
      %s151 = sphi 0, %s150
      %s165 = sphi 0, %s151
      %s169 = sphi 0, %s169
      %s171 = sphi 0, %s169
      %s172 = sphi 0, %s171
      %s186 = sphi 0, %s172
      %s190 = sphi 0, %s190
      %s192 = sphi 0, %s190
      %s193 = sphi 0, %s192
      %s207 = sphi 0, %s193
      %s211 = sphi 0, %s211
      %s213 = sphi 0, %s211
      %s214 = sphi 0, %s213
      %s228 = sphi 0, %s214
      %s232 = sphi 0, %s232
      %s234 = sphi 0, %s232
      %s235 = sphi 0, %s234
      %s249 = sphi 0, %s235
      %s253 = sphi 0, %s253
      %s255 = sphi 0, %s253
      %s256 = sphi 0, %s255
      %s270 = sphi 0, %s256
      %s274 = sphi 0, %s274
      %s276 = sphi 0, %s274
      %s277 = sphi 0, %s276
      %s291 = sphi 0, %s277
      %s295 = sphi 0, %s295
      %s297 = sphi 0, %s295
      %s298 = sphi 0, %s297
      %s312 = sphi 0, %s298
      %s316 = sphi 0, %s316
      %s318 = sphi 0, %s316
      %s319 = sphi 0, %s318
      %s333 = sphi 0, %s319
      %s337 = sphi 0, %s337
      %s339 = sphi 0, %s337
      %s340 = sphi 0, %s339
      %s354 = sphi 0, %s340
      %s358 = sphi 0, %s358
      %s360 = sphi 0, %s358
      %s361 = sphi 0, %s360
      %s375 = sphi 0, %s361
      %s379 = sphi 0, %s379
      %s381 = sphi 0, %s379
      %s382 = sphi 0, %s381
      %s396 = sphi 0, %s382
      %s400 = sphi 0, %s400
      %s402 = sphi 0, %s400
      %s403 = sphi 0, %s402
      %s417 = sphi 0, %s403
      %s421 = sphi 0, %s421
      %s423 = sphi 0, %s421
      %s424 = sphi 0, %s423
      %s438 = sphi 0, %s424
      %s444 = sphi 0, %s446
      %s447 = sphi 0, %s444
      %s448 = sphi 0, %s447
      %s464 = sphi 0, %s448
      %s470 = sphi 0, %s472
      %s473 = sphi 0, %s470
      %s474 = sphi 0, %s473
      %s490 = sphi 0, %s474
    $region4: #{forward.1} parent=1 // loop_header_branch
      %33 = sbr.rel (%p31) target = $region8
    $region5: #{forward.1} parent=1 // loop_body
      %s35 = ssub.s32 %s30, 1
      %s36 = ssub.s32 %s30, 2
      %s37 = sadd.s32 %s30, 1
      %s38 = ssub.s32 %s30, %s37
      %p39 = scmp.eq.s32.totalorder %s38, 0
      %s41 = sadd.s32 %s40, 1
      %s42 = scalar_select %p39, %s40, %s41
      %p45 = pneg %p39
      %p46 = scmp.eq.s32.totalorder %s30, 1
      %p47 = por %p45, %p46
      %p48 = scmp.ne.s32.totalorder %s40, %s43
      %p49 = scmp.eq.s32.totalorder %s30, 0
      %p50 = por %p48, %p49
      %p51 = scmp.ne.s32.totalorder %s40, %s43
      %p52 = scmp.eq.s32.totalorder %s35, 1
      %p53 = por %p51, %p52
      %p54 = scmp.ne.s32.totalorder %s43, %s44
      %p55 = scmp.eq.s32.totalorder %s35, 0
      %p56 = por %p54, %p55
      %p57 = scmp.ne.s32.totalorder %s43, %s44
      %p58 = scmp.eq.s32.totalorder %s36, 1
      %p59 = por %p57, %p58
      %p61 = scmp.ne.s32.totalorder %s44, %s60
      %p62 = scmp.eq.s32.totalorder %s36, 0
      %p63 = por %p61, %p62
      %s65 = sadd.s32 %s64, 1
      %p68 = scmp.eq.s32.totalorder %s30, 1
      %p69 = scmp.ne.s32.totalorder %s64, %s66
      %p70 = scmp.eq.s32.totalorder %s30, 0
      %p71 = por %p69, %p70
      %p72 = scmp.ne.s32.totalorder %s64, %s66
      %p73 = scmp.eq.s32.totalorder %s35, 1
      %p74 = por %p72, %p73
      %p75 = scmp.ne.s32.totalorder %s66, %s67
      %p76 = scmp.eq.s32.totalorder %s35, 0
      %p77 = por %p75, %p76
      %p78 = scmp.ne.s32.totalorder %s66, %s67
      %p79 = scmp.eq.s32.totalorder %s36, 1
      %p80 = por %p78, %p79
      %p82 = scmp.ne.s32.totalorder %s67, %s81
      %p83 = scmp.eq.s32.totalorder %s36, 0
      %p84 = por %p82, %p83
      %s86 = sadd.s32 %s85, 1
      %p89 = scmp.eq.s32.totalorder %s30, 1
      %p90 = scmp.ne.s32.totalorder %s85, %s87
      %p91 = scmp.eq.s32.totalorder %s30, 0
      %p92 = por %p90, %p91
      %p93 = scmp.ne.s32.totalorder %s85, %s87
      %p94 = scmp.eq.s32.totalorder %s35, 1
      %p95 = por %p93, %p94
      %p96 = scmp.ne.s32.totalorder %s87, %s88
      %p97 = scmp.eq.s32.totalorder %s35, 0
      %p98 = por %p96, %p97
      %p99 = scmp.ne.s32.totalorder %s87, %s88
      %p100 = scmp.eq.s32.totalorder %s36, 1
      %p101 = por %p99, %p100
      %p103 = scmp.ne.s32.totalorder %s88, %s102
      %p104 = scmp.eq.s32.totalorder %s36, 0
      %p105 = por %p103, %p104
      %s107 = sadd.s32 %s106, 1
      %p110 = scmp.eq.s32.totalorder %s30, 1
      %p111 = scmp.ne.s32.totalorder %s106, %s108
      %p112 = scmp.eq.s32.totalorder %s30, 0
      %p113 = por %p111, %p112
      %p114 = scmp.ne.s32.totalorder %s106, %s108
      %p115 = scmp.eq.s32.totalorder %s35, 1
      %p116 = por %p114, %p115
      %p117 = scmp.ne.s32.totalorder %s108, %s109
      %p118 = scmp.eq.s32.totalorder %s35, 0
      %p119 = por %p117, %p118
      %p120 = scmp.ne.s32.totalorder %s108, %s109
      %p121 = scmp.eq.s32.totalorder %s36, 1
      %p122 = por %p120, %p121
      %p124 = scmp.ne.s32.totalorder %s109, %s123
      %p125 = scmp.eq.s32.totalorder %s36, 0
      %p126 = por %p124, %p125
      %s128 = sadd.s32 %s127, 1
      %p131 = scmp.eq.s32.totalorder %s30, 1
      %p132 = scmp.ne.s32.totalorder %s127, %s129
      %p133 = scmp.eq.s32.totalorder %s30, 0
      %p134 = por %p132, %p133
      %p135 = scmp.ne.s32.totalorder %s127, %s129
      %p136 = scmp.eq.s32.totalorder %s35, 1
      %p137 = por %p135, %p136
      %p138 = scmp.ne.s32.totalorder %s129, %s130
      %p139 = scmp.eq.s32.totalorder %s35, 0
      %p140 = por %p138, %p139
      %p141 = scmp.ne.s32.totalorder %s129, %s130
      %p142 = scmp.eq.s32.totalorder %s36, 1
      %p143 = por %p141, %p142
      %p145 = scmp.ne.s32.totalorder %s130, %s144
      %p146 = scmp.eq.s32.totalorder %s36, 0
      %p147 = por %p145, %p146
      %s149 = sadd.s32 %s148, 1
      %p152 = scmp.eq.s32.totalorder %s30, 1
      %p153 = scmp.ne.s32.totalorder %s148, %s150
      %p154 = scmp.eq.s32.totalorder %s30, 0
      %p155 = por %p153, %p154
      %p156 = scmp.ne.s32.totalorder %s148, %s150
      %p157 = scmp.eq.s32.totalorder %s35, 1
      %p158 = por %p156, %p157
      %p159 = scmp.ne.s32.totalorder %s150, %s151
      %p160 = scmp.eq.s32.totalorder %s35, 0
      %p161 = por %p159, %p160
      %p162 = scmp.ne.s32.totalorder %s150, %s151
      %p163 = scmp.eq.s32.totalorder %s36, 1
      %p164 = por %p162, %p163
      %p166 = scmp.ne.s32.totalorder %s151, %s165
      %p167 = scmp.eq.s32.totalorder %s36, 0
      %p168 = por %p166, %p167
      %s170 = sadd.s32 %s169, 1
      %p173 = scmp.eq.s32.totalorder %s30, 1
      %p174 = scmp.ne.s32.totalorder %s169, %s171
      %p175 = scmp.eq.s32.totalorder %s30, 0
      %p176 = por %p174, %p175
      %p177 = scmp.ne.s32.totalorder %s169, %s171
      %p178 = scmp.eq.s32.totalorder %s35, 1
      %p179 = por %p177, %p178
      %p180 = scmp.ne.s32.totalorder %s171, %s172
      %p181 = scmp.eq.s32.totalorder %s35, 0
      %p182 = por %p180, %p181
      %p183 = scmp.ne.s32.totalorder %s171, %s172
      %p184 = scmp.eq.s32.totalorder %s36, 1
      %p185 = por %p183, %p184
      %p187 = scmp.ne.s32.totalorder %s172, %s186
      %p188 = scmp.eq.s32.totalorder %s36, 0
      %p189 = por %p187, %p188
      %s191 = sadd.s32 %s190, 1
      %p194 = scmp.eq.s32.totalorder %s30, 1
      %p195 = scmp.ne.s32.totalorder %s190, %s192
      %p196 = scmp.eq.s32.totalorder %s30, 0
      %p197 = por %p195, %p196
      %p198 = scmp.ne.s32.totalorder %s190, %s192
      %p199 = scmp.eq.s32.totalorder %s35, 1
      %p200 = por %p198, %p199
      %p201 = scmp.ne.s32.totalorder %s192, %s193
      %p202 = scmp.eq.s32.totalorder %s35, 0
      %p203 = por %p201, %p202
      %p204 = scmp.ne.s32.totalorder %s192, %s193
      %p205 = scmp.eq.s32.totalorder %s36, 1
      %p206 = por %p204, %p205
      %p208 = scmp.ne.s32.totalorder %s193, %s207
      %p209 = scmp.eq.s32.totalorder %s36, 0
      %p210 = por %p208, %p209
      %s212 = sadd.s32 %s211, 1
      %p215 = scmp.eq.s32.totalorder %s30, 1
      %p216 = scmp.ne.s32.totalorder %s211, %s213
      %p217 = scmp.eq.s32.totalorder %s30, 0
      %p218 = por %p216, %p217
      %p219 = scmp.ne.s32.totalorder %s211, %s213
      %p220 = scmp.eq.s32.totalorder %s35, 1
      %p221 = por %p219, %p220
      %p222 = scmp.ne.s32.totalorder %s213, %s214
      %p223 = scmp.eq.s32.totalorder %s35, 0
      %p224 = por %p222, %p223
      %p225 = scmp.ne.s32.totalorder %s213, %s214
      %p226 = scmp.eq.s32.totalorder %s36, 1
      %p227 = por %p225, %p226
      %p229 = scmp.ne.s32.totalorder %s214, %s228
      %p230 = scmp.eq.s32.totalorder %s36, 0
      %p231 = por %p229, %p230
      %s233 = sadd.s32 %s232, 1
      %p236 = scmp.eq.s32.totalorder %s30, 1
      %p237 = scmp.ne.s32.totalorder %s232, %s234
      %p238 = scmp.eq.s32.totalorder %s30, 0
      %p239 = por %p237, %p238
      %p240 = scmp.ne.s32.totalorder %s232, %s234
      %p241 = scmp.eq.s32.totalorder %s35, 1
      %p242 = por %p240, %p241
      %p243 = scmp.ne.s32.totalorder %s234, %s235
      %p244 = scmp.eq.s32.totalorder %s35, 0
      %p245 = por %p243, %p244
      %p246 = scmp.ne.s32.totalorder %s234, %s235
      %p247 = scmp.eq.s32.totalorder %s36, 1
      %p248 = por %p246, %p247
      %p250 = scmp.ne.s32.totalorder %s235, %s249
      %p251 = scmp.eq.s32.totalorder %s36, 0
      %p252 = por %p250, %p251
      %s254 = sadd.s32 %s253, 1
      %p257 = scmp.eq.s32.totalorder %s30, 1
      %p258 = scmp.ne.s32.totalorder %s253, %s255
      %p259 = scmp.eq.s32.totalorder %s30, 0
      %p260 = por %p258, %p259
      %p261 = scmp.ne.s32.totalorder %s253, %s255
      %p262 = scmp.eq.s32.totalorder %s35, 1
      %p263 = por %p261, %p262
      %p264 = scmp.ne.s32.totalorder %s255, %s256
      %p265 = scmp.eq.s32.totalorder %s35, 0
      %p266 = por %p264, %p265
      %p267 = scmp.ne.s32.totalorder %s255, %s256
      %p268 = scmp.eq.s32.totalorder %s36, 1
      %p269 = por %p267, %p268
      %p271 = scmp.ne.s32.totalorder %s256, %s270
      %p272 = scmp.eq.s32.totalorder %s36, 0
      %p273 = por %p271, %p272
      %s275 = sadd.s32 %s274, 1
      %p278 = scmp.eq.s32.totalorder %s30, 1
      %p279 = scmp.ne.s32.totalorder %s274, %s276
      %p280 = scmp.eq.s32.totalorder %s30, 0
      %p281 = por %p279, %p280
      %p282 = scmp.ne.s32.totalorder %s274, %s276
      %p283 = scmp.eq.s32.totalorder %s35, 1
      %p284 = por %p282, %p283
      %p285 = scmp.ne.s32.totalorder %s276, %s277
      %p286 = scmp.eq.s32.totalorder %s35, 0
      %p287 = por %p285, %p286
      %p288 = scmp.ne.s32.totalorder %s276, %s277
      %p289 = scmp.eq.s32.totalorder %s36, 1
      %p290 = por %p288, %p289
      %p292 = scmp.ne.s32.totalorder %s277, %s291
      %p293 = scmp.eq.s32.totalorder %s36, 0
      %p294 = por %p292, %p293
      %s296 = sadd.s32 %s295, 1
      %p299 = scmp.eq.s32.totalorder %s30, 1
      %p300 = scmp.ne.s32.totalorder %s295, %s297
      %p301 = scmp.eq.s32.totalorder %s30, 0
      %p302 = por %p300, %p301
      %p303 = scmp.ne.s32.totalorder %s295, %s297
      %p304 = scmp.eq.s32.totalorder %s35, 1
      %p305 = por %p303, %p304
      %p306 = scmp.ne.s32.totalorder %s297, %s298
      %p307 = scmp.eq.s32.totalorder %s35, 0
      %p308 = por %p306, %p307
      %p309 = scmp.ne.s32.totalorder %s297, %s298
      %p310 = scmp.eq.s32.totalorder %s36, 1
      %p311 = por %p309, %p310
      %p313 = scmp.ne.s32.totalorder %s298, %s312
      %p314 = scmp.eq.s32.totalorder %s36, 0
      %p315 = por %p313, %p314
      %s317 = sadd.s32 %s316, 1
      %p320 = scmp.eq.s32.totalorder %s30, 1
      %p321 = scmp.ne.s32.totalorder %s316, %s318
      %p322 = scmp.eq.s32.totalorder %s30, 0
      %p323 = por %p321, %p322
      %p324 = scmp.ne.s32.totalorder %s316, %s318
      %p325 = scmp.eq.s32.totalorder %s35, 1
      %p326 = por %p324, %p325
      %p327 = scmp.ne.s32.totalorder %s318, %s319
      %p328 = scmp.eq.s32.totalorder %s35, 0
      %p329 = por %p327, %p328
      %p330 = scmp.ne.s32.totalorder %s318, %s319
      %p331 = scmp.eq.s32.totalorder %s36, 1
      %p332 = por %p330, %p331
      %p334 = scmp.ne.s32.totalorder %s319, %s333
      %p335 = scmp.eq.s32.totalorder %s36, 0
      %p336 = por %p334, %p335
      %s338 = sadd.s32 %s337, 1
      %p341 = scmp.eq.s32.totalorder %s30, 1
      %p342 = scmp.ne.s32.totalorder %s337, %s339
      %p343 = scmp.eq.s32.totalorder %s30, 0
      %p344 = por %p342, %p343
      %p345 = scmp.ne.s32.totalorder %s337, %s339
      %p346 = scmp.eq.s32.totalorder %s35, 1
      %p347 = por %p345, %p346
      %p348 = scmp.ne.s32.totalorder %s339, %s340
      %p349 = scmp.eq.s32.totalorder %s35, 0
      %p350 = por %p348, %p349
      %p351 = scmp.ne.s32.totalorder %s339, %s340
      %p352 = scmp.eq.s32.totalorder %s36, 1
      %p353 = por %p351, %p352
      %p355 = scmp.ne.s32.totalorder %s340, %s354
      %p356 = scmp.eq.s32.totalorder %s36, 0
      %p357 = por %p355, %p356
      %s359 = sadd.s32 %s358, 1
      %p362 = scmp.eq.s32.totalorder %s30, 1
      %p363 = scmp.ne.s32.totalorder %s358, %s360
      %p364 = scmp.eq.s32.totalorder %s30, 0
      %p365 = por %p363, %p364
      %p366 = scmp.ne.s32.totalorder %s358, %s360
      %p367 = scmp.eq.s32.totalorder %s35, 1
      %p368 = por %p366, %p367
      %p369 = scmp.ne.s32.totalorder %s360, %s361
      %p370 = scmp.eq.s32.totalorder %s35, 0
      %p371 = por %p369, %p370
      %p372 = scmp.ne.s32.totalorder %s360, %s361
      %p373 = scmp.eq.s32.totalorder %s36, 1
      %p374 = por %p372, %p373
      %p376 = scmp.ne.s32.totalorder %s361, %s375
      %p377 = scmp.eq.s32.totalorder %s36, 0
      %p378 = por %p376, %p377
      %s380 = sadd.s32 %s379, 1
      %p383 = scmp.eq.s32.totalorder %s30, 1
      %p384 = scmp.ne.s32.totalorder %s379, %s381
      %p385 = scmp.eq.s32.totalorder %s30, 0
      %p386 = por %p384, %p385
      %p387 = scmp.ne.s32.totalorder %s379, %s381
      %p388 = scmp.eq.s32.totalorder %s35, 1
      %p389 = por %p387, %p388
      %p390 = scmp.ne.s32.totalorder %s381, %s382
      %p391 = scmp.eq.s32.totalorder %s35, 0
      %p392 = por %p390, %p391
      %p393 = scmp.ne.s32.totalorder %s381, %s382
      %p394 = scmp.eq.s32.totalorder %s36, 1
      %p395 = por %p393, %p394
      %p397 = scmp.ne.s32.totalorder %s382, %s396
      %p398 = scmp.eq.s32.totalorder %s36, 0
      %p399 = por %p397, %p398
      %s401 = sadd.s32 %s400, 1
      %p404 = scmp.eq.s32.totalorder %s30, 1
      %p405 = scmp.ne.s32.totalorder %s400, %s402
      %p406 = scmp.eq.s32.totalorder %s30, 0
      %p407 = por %p405, %p406
      %p408 = scmp.ne.s32.totalorder %s400, %s402
      %p409 = scmp.eq.s32.totalorder %s35, 1
      %p410 = por %p408, %p409
      %p411 = scmp.ne.s32.totalorder %s402, %s403
      %p412 = scmp.eq.s32.totalorder %s35, 0
      %p413 = por %p411, %p412
      %p414 = scmp.ne.s32.totalorder %s402, %s403
      %p415 = scmp.eq.s32.totalorder %s36, 1
      %p416 = por %p414, %p415
      %p418 = scmp.ne.s32.totalorder %s403, %s417
      %p419 = scmp.eq.s32.totalorder %s36, 0
      %p420 = por %p418, %p419
      %s422 = sadd.s32 %s421, 1
      %p425 = scmp.eq.s32.totalorder %s30, 1
      %p426 = scmp.ne.s32.totalorder %s421, %s423
      %p427 = scmp.eq.s32.totalorder %s30, 0
      %p428 = por %p426, %p427
      %p429 = scmp.ne.s32.totalorder %s421, %s423
      %p430 = scmp.eq.s32.totalorder %s35, 1
      %p431 = por %p429, %p430
      %p432 = scmp.ne.s32.totalorder %s423, %s424
      %p433 = scmp.eq.s32.totalorder %s35, 0
      %p434 = por %p432, %p433
      %p435 = scmp.ne.s32.totalorder %s423, %s424
      %p436 = scmp.eq.s32.totalorder %s36, 1
      %p437 = por %p435, %p436
      %p439 = scmp.ne.s32.totalorder %s424, %s438
      %p440 = scmp.eq.s32.totalorder %s36, 0
      %p441 = por %p439, %p440
      %s442 = ssub.s32 %s30, %s37
      %p443 = scmp.eq.s32.totalorder %s442, 0
      %s445 = sadd.s32 %s444, 1
      %s446 = scalar_select %p443, %s444, %s445
      %p449 = pneg %p443
      %p450 = scmp.eq.s32.totalorder %s30, 1
      %p451 = por %p449, %p450
      %p452 = scmp.ne.s32.totalorder %s444, %s447
      %p453 = scmp.eq.s32.totalorder %s30, 0
      %p454 = por %p452, %p453
      %p455 = scmp.ne.s32.totalorder %s444, %s447
      %p456 = scmp.eq.s32.totalorder %s35, 1
      %p457 = por %p455, %p456
      %p458 = scmp.ne.s32.totalorder %s447, %s448
      %p459 = scmp.eq.s32.totalorder %s35, 0
      %p460 = por %p458, %p459
      %p461 = scmp.ne.s32.totalorder %s447, %s448
      %p462 = scmp.eq.s32.totalorder %s36, 1
      %p463 = por %p461, %p462
      %p465 = scmp.ne.s32.totalorder %s448, %s464
      %p466 = scmp.eq.s32.totalorder %s36, 0
      %p467 = por %p465, %p466
      %s468 = ssub.s32 %s30, %s37
      %p469 = scmp.eq.s32.totalorder %s468, 0
      %s471 = sadd.s32 %s470, 1
      %s472 = scalar_select %p469, %s470, %s471
      %p475 = pneg %p469
      %p476 = scmp.eq.s32.totalorder %s30, 1
      %p477 = por %p475, %p476
      %p478 = scmp.ne.s32.totalorder %s470, %s473
      %p479 = scmp.eq.s32.totalorder %s30, 0
      %p480 = por %p478, %p479
      %p481 = scmp.ne.s32.totalorder %s470, %s473
      %p482 = scmp.eq.s32.totalorder %s35, 1
      %p483 = por %p481, %p482
      %p484 = scmp.ne.s32.totalorder %s473, %s474
      %p485 = scmp.eq.s32.totalorder %s35, 0
      %p486 = por %p484, %p485
      %p487 = scmp.ne.s32.totalorder %s473, %s474
      %p488 = scmp.eq.s32.totalorder %s36, 1
      %p489 = por %p487, %p488
      %p491 = scmp.ne.s32.totalorder %s474, %s490
      %p492 = scmp.eq.s32.totalorder %s36, 0
      %p493 = por %p491, %p492
      %p494 = scmp.le.s32.totalorder 1, %s30
      %p495 = scmp.lt.s32.totalorder %s30, 3
      %p496 = pnand %p494, %p495
      %p497 = pneg %p496
      // Predicated region
      $region9: #{forward.1} parent=5 // pred_check
        _
      $region10: #{forward.1} parent=5 // pred_check_branch
        %499 = sbr.rel (%p496) target = $region12
      $region11: #{forward.1} parent=5 // pred_region
        %s500 = ssub.s32 %s30, 1
        // Predicated region
        $region13: #{forward.1} parent=11 // pred_check
          %p501 = pneg %p77
        $region14: #{forward.1} parent=11 // pred_check_branch
          %503 = sbr.rel (%p501) target = $region16
        $region15: #{forward.1} parent=11 // pred_region
          _
        $region16: #{forward.1} parent=11 // pred_fallthru
          _
        // Predicated region
        $region17: #{forward.1} parent=11 // pred_check
          %p504 = pneg %p98
        $region18: #{forward.1} parent=11 // pred_check_branch
          %506 = sbr.rel (%p504) target = $region20
        $region19: #{forward.1} parent=11 // pred_region
          _
        $region20: #{forward.1} parent=11 // pred_fallthru
          _
        // Predicated region
        $region21: #{forward.1} parent=11 // pred_check
          %p507 = pneg %p119
        $region22: #{forward.1} parent=11 // pred_check_branch
          %509 = sbr.rel (%p507) target = $region24
        $region23: #{forward.1} parent=11 // pred_region
          _
        $region24: #{forward.1} parent=11 // pred_fallthru
          _
        // Predicated region
        $region25: #{forward.1} parent=11 // pred_check
          %p510 = pneg %p140
        $region26: #{forward.1} parent=11 // pred_check_branch
          %512 = sbr.rel (%p510) target = $region28
        $region27: #{forward.1} parent=11 // pred_region
          _
        $region28: #{forward.1} parent=11 // pred_fallthru
          _
        // Predicated region
        $region29: #{forward.1} parent=11 // pred_check
          %p513 = pneg %p161
        $region30: #{forward.1} parent=11 // pred_check_branch
          %515 = sbr.rel (%p513) target = $region32
        $region31: #{forward.1} parent=11 // pred_region
          _
        $region32: #{forward.1} parent=11 // pred_fallthru
          _
        // Predicated region
        $region33: #{forward.1} parent=11 // pred_check
          %p516 = pneg %p182
        $region34: #{forward.1} parent=11 // pred_check_branch
          %518 = sbr.rel (%p516) target = $region36
        $region35: #{forward.1} parent=11 // pred_region
          _
        $region36: #{forward.1} parent=11 // pred_fallthru
          _
        // Predicated region
        $region37: #{forward.1} parent=11 // pred_check
          %p519 = pneg %p203
        $region38: #{forward.1} parent=11 // pred_check_branch
          %521 = sbr.rel (%p519) target = $region40
        $region39: #{forward.1} parent=11 // pred_region
          _
        $region40: #{forward.1} parent=11 // pred_fallthru
          _
        // Predicated region
        $region41: #{forward.1} parent=11 // pred_check
          %p522 = pneg %p224
        $region42: #{forward.1} parent=11 // pred_check_branch
          %524 = sbr.rel (%p522) target = $region44
        $region43: #{forward.1} parent=11 // pred_region
          _
        $region44: #{forward.1} parent=11 // pred_fallthru
          _
        // Predicated region
        $region45: #{forward.1} parent=11 // pred_check
          %p525 = pneg %p245
        $region46: #{forward.1} parent=11 // pred_check_branch
          %527 = sbr.rel (%p525) target = $region48
        $region47: #{forward.1} parent=11 // pred_region
          _
        $region48: #{forward.1} parent=11 // pred_fallthru
          _
        // Predicated region
        $region49: #{forward.1} parent=11 // pred_check
          %p528 = pneg %p266
        $region50: #{forward.1} parent=11 // pred_check_branch
          %530 = sbr.rel (%p528) target = $region52
        $region51: #{forward.1} parent=11 // pred_region
          _
        $region52: #{forward.1} parent=11 // pred_fallthru
          _
        // Predicated region
        $region53: #{forward.1} parent=11 // pred_check
          %p531 = pneg %p287
        $region54: #{forward.1} parent=11 // pred_check_branch
          %533 = sbr.rel (%p531) target = $region56
        $region55: #{forward.1} parent=11 // pred_region
          _
        $region56: #{forward.1} parent=11 // pred_fallthru
          _
        // Predicated region
        $region57: #{forward.1} parent=11 // pred_check
          %p534 = pneg %p308
        $region58: #{forward.1} parent=11 // pred_check_branch
          %536 = sbr.rel (%p534) target = $region60
        $region59: #{forward.1} parent=11 // pred_region
          _
        $region60: #{forward.1} parent=11 // pred_fallthru
          _
        // Predicated region
        $region61: #{forward.1} parent=11 // pred_check
          %p537 = pneg %p329
        $region62: #{forward.1} parent=11 // pred_check_branch
          %539 = sbr.rel (%p537) target = $region64
        $region63: #{forward.1} parent=11 // pred_region
          _
        $region64: #{forward.1} parent=11 // pred_fallthru
          _
        // Predicated region
        $region65: #{forward.1} parent=11 // pred_check
          %p540 = pneg %p350
        $region66: #{forward.1} parent=11 // pred_check_branch
          %542 = sbr.rel (%p540) target = $region68
        $region67: #{forward.1} parent=11 // pred_region
          _
        $region68: #{forward.1} parent=11 // pred_fallthru
          _
        // Predicated region
        $region69: #{forward.1} parent=11 // pred_check
          %p543 = pneg %p371
        $region70: #{forward.1} parent=11 // pred_check_branch
          %545 = sbr.rel (%p543) target = $region72
        $region71: #{forward.1} parent=11 // pred_region
          _
        $region72: #{forward.1} parent=11 // pred_fallthru
          _
        // Predicated region
        $region73: #{forward.1} parent=11 // pred_check
          %p546 = pneg %p392
        $region74: #{forward.1} parent=11 // pred_check_branch
          %548 = sbr.rel (%p546) target = $region76
        $region75: #{forward.1} parent=11 // pred_region
          _
        $region76: #{forward.1} parent=11 // pred_fallthru
          _
        // Predicated region
        $region77: #{forward.1} parent=11 // pred_check
          %p549 = pneg %p413
        $region78: #{forward.1} parent=11 // pred_check_branch
          %551 = sbr.rel (%p549) target = $region80
        $region79: #{forward.1} parent=11 // pred_region
          _
        $region80: #{forward.1} parent=11 // pred_fallthru
          _
        // Predicated region
        $region81: #{forward.1} parent=11 // pred_check
          %p552 = pneg %p434
        $region82: #{forward.1} parent=11 // pred_check_branch
          %554 = sbr.rel (%p552) target = $region84
        $region83: #{forward.1} parent=11 // pred_region
          _
        $region84: #{forward.1} parent=11 // pred_fallthru
          _
      $region12: #{forward.1} parent=5 // pred_fallthru
        _
      %p555 = scmp.lt.s32.totalorder %s30, 2
      // Predicated region
      $region85: #{forward.1} parent=5 // pred_check
        %p556 = pneg %p555
      $region86: #{forward.1} parent=5 // pred_check_branch
        %558 = sbr.rel (%p556) target = $region88
      $region87: #{forward.1} parent=5 // pred_region
        // Predicated region
        $region89: #{forward.1} parent=87 // pred_check
          %p559 = pneg %p50
        $region90: #{forward.1} parent=87 // pred_check_branch
          %561 = sbr.rel (%p559) target = $region92
        $region91: #{forward.1} parent=87 // pred_region
          %p562 = scmp.lt.s32.totalorder %s30, 1
          %s563 = scalar_select %p562, %s30, 1
          %s564 = smul.addr %s563, 3
          %s565 = smul.addr %s564, 8
          %s566 = scalar_lea.vmem %s0, %s565
        $region92: #{forward.1} parent=87 // pred_fallthru
          _
      $region88: #{forward.1} parent=5 // pred_fallthru
        _
      %p567 = scmp.le.s32.totalorder 1, %s30
      %p568 = scmp.lt.s32.totalorder %s30, 3
      %p569 = pnand %p567, %p568
      %p570 = pneg %p569
      // Predicated region
      $region93: #{forward.1} parent=5 // pred_check
        _
      $region94: #{forward.1} parent=5 // pred_check_branch
        %572 = sbr.rel (%p569) target = $region96
      $region95: #{forward.1} parent=5 // pred_region
        %s573 = ssub.s32 %s30, 1
        %p574 = scmp.lt.s32.totalorder %s35, 1
        %s575 = scalar_select %p574, %s35, 1
        %s576 = smul.addr %s575, 3
        %s577 = smul.addr %s576, 8
        %s578 = scalar_lea.vmem %s0, %s577
        %p579 = pneg %p56
        %p580 = pneg %p53
        %p581 = pneg %p77
        %p582 = pneg %p74
        %p583 = pneg %p98
        %p584 = pneg %p95
        %p585 = pneg %p119
        %p586 = pneg %p116
        %p587 = pneg %p140
        %p588 = pneg %p137
        %p589 = pneg %p161
        %p590 = pneg %p158
        %p591 = pneg %p182
        %p592 = pneg %p179
        %p593 = pneg %p203
        %p594 = pneg %p200
        %p595 = pneg %p224
        %p596 = pneg %p221
        %p597 = pneg %p245
        %p598 = pneg %p242
        %p599 = pneg %p266
        %p600 = pneg %p263
        %p601 = pneg %p287
        %p602 = pneg %p284
        %p603 = pneg %p308
        %p604 = pneg %p305
        %p605 = pneg %p329
        %p606 = pneg %p326
        %p607 = pneg %p350
        %p608 = pneg %p347
        %p609 = pneg %p371
        %p610 = pneg %p368
        %p611 = pneg %p392
        %p612 = pneg %p389
        %p613 = pneg %p413
        %p614 = pneg %p410
        %p615 = pneg %p434
        %p616 = pneg %p431
        %p617 = pneg %p460
        %p618 = pneg %p457
        %s619 = sand.u32 %s447, 1
        %s620 = scalar_lea.sflag [#allocation4], %s619
        %s621 = sand.u32 %s447, 1
        %s622 = scalar_lea.vmem [#allocation3], %s621
        %p623 = pneg %p486
        %p624 = pneg %p483
        %p625 = scmp.lt.s32.totalorder %s35, 1
        %s626 = scalar_select %p625, %s35, 1
        %s627 = smul.addr %s626, 9
        %s628 = smul.addr %s627, 8
        %s629 = scalar_lea.vmem %s20, %s628
        %p630 = scmp.lt.s32.totalorder %s35, 1
        %s631 = scalar_select %p630, %s35, 1
        %s632 = smul.addr %s631, 3
        %s633 = smul.addr %s632, 8
        %s634 = scalar_lea.vmem %s0, %s633
        %p635 = scmp.lt.s32.totalorder %s35, 1
        %s636 = scalar_select %p635, %s35, 1
        %s637 = smul.addr %s636, 9
        %s638 = smul.addr %s637, 8
        %s639 = scalar_lea.vmem %s20, %s638
        %v640 = vlaneseq
        %v641 = vand.u32 %v640, 127
        %vm642 = vcmp.lt.s32.totalorder %v641, 17
        %v643 = vsel %vm642, 0.0, -1e+30
        %v644 = vld [vmem:[%s634] sm:$0xff]
        %v645 = vld [vmem:[%s634 + $0x8] sm:$0xff]
        %v646 = vld [vmem:[%s634 + $0x10] sm:$0xff]
        %v647 = vld [vmem:[%s2] sm:$0xff]
        %v648 = vld [vmem:[%s2 + $0x8] sm:$0xff]
        %v649 = vld [vmem:[%s2 + $0x10] sm:$0xff]
        %v650 = vld [vmem:[%s2 + $0x18] sm:$0xff]
        %v651 = vld [vmem:[%s2 + $0x20] sm:$0xff]
        %v652 = vld [vmem:[%s2 + $0x28] sm:$0xff]
        %v653 = vld [vmem:[%s2 + $0x30] sm:$0xff]
        %v654 = vld [vmem:[%s2 + $0x38] sm:$0xff]
        %v655 = vld [vmem:[%s1] sm:$0xff]
        %v656 = vld [vmem:[%s1 + $0x8] sm:$0xff]
        %v657 = vld [vmem:[%s1 + $0x10] sm:$0xff]
        %vm658 = vcmask 523264
        %v660 = vsel %vm658, %v644, 0
        %v663 = vsel %vm658, %v645, 0
        %v666 = vsel %vm658, %v646, 0
        %668 = vmatprep.subr.mxu0 0.0
        %669 = vmatpush1.msra.mxu0 %v647
        %670 = vmatprep.subr.mxu0 0.0
        %671 = vmatpush1.msra.mxu0 %v648
        %672 = vmatprep.subr.mxu0 0.0
        %673 = vmatpush1.msra.mxu0 %v649
        %674 = vmatprep.subr.mxu0 0.0
        %675 = vmatpush1.msra.mxu0 %v650
        %676 = vmatprep.subr.mxu0 0.0
        %677 = vmatpush1.msra.mxu0 %v651
        %678 = vmatprep.subr.mxu0 0.0
        %679 = vmatpush1.msra.mxu0 %v652
        %680 = vmatprep.subr.mxu0 0.0
        %681 = vmatpush1.msra.mxu0 %v653
        %682 = vmatprep.subr.mxu0 0.0
        %683 = vmatpush1.msra.mxu0 %v654
        %684 = vmatprep.subr.mxu0 0.0
        %685 = vmatpush1.msra.mxu0 0.0
        %686 = vmatprep.subr.mxu0 0.0
        %687 = vmatpush1.msra.mxu0 0.0
        %688 = vmatprep.subr.mxu0 0.0
        %689 = vmatpush1.msra.mxu0 0.0
        %690 = vmatprep.subr.mxu0 0.0
        %691 = vmatpush1.msra.mxu0 0.0
        %692 = vmatprep.subr.mxu0 0.0
        %693 = vmatpush1.msra.mxu0 0.0
        %694 = vmatprep.subr.mxu0 0.0
        %695 = vmatpush1.msra.mxu0 0.0
        %696 = vmatprep.subr.mxu0 0.0
        %697 = vmatpush1.msra.mxu0 0.0
        %698 = vmatprep.subr.mxu0 0.0
        %699 = vmatpush1.msra.mxu0 0.0
        %700 = vmatprep.subr.mxu0 0.0
        %701 = vmatpush1.msra.mxu0 0.0
        %702 = vmatprep.subr.mxu0 0.0
        %703 = vmatpush1.msra.mxu0 0.0
        %704 = vmatprep.subr.mxu0 0.0
        %705 = vmatpush1.msra.mxu0 0.0
        %706 = vmatprep.subr.mxu0 0.0
        %707 = vmatpush1.msra.mxu0 0.0
        %708 = vmatprep.subr.mxu0 0.0
        %709 = vmatpush1.msra.mxu0 0.0
        %710 = vmatprep.subr.mxu0 0.0
        %711 = vmatpush1.msra.mxu0 0.0
        %712 = vmatprep.subr.mxu0 0.0
        %713 = vmatpush1.msra.mxu0 0.0
        %714 = vmatprep.subr.mxu0 0.0
        %715 = vmatpush1.msra.mxu0 0.0
        %716 = vmatprep.subr.mxu0 0.0
        %717 = vmatpush1.msra.mxu0 0.0
        %718 = vmatprep.subr.mxu0 0.0
        %719 = vmatpush1.msra.mxu0 0.0
        %720 = vmatprep.subr.mxu0 0.0
        %721 = vmatpush1.msra.mxu0 0.0
        %722 = vmatprep.subr.mxu0 0.0
        %723 = vmatpush1.msra.mxu0 0.0
        %724 = vmatprep.subr.mxu0 0.0
        %725 = vmatpush1.msra.mxu0 0.0
        %726 = vmatprep.subr.mxu0 0.0
        %727 = vmatpush1.msra.mxu0 0.0
        %728 = vmatprep.subr.mxu0 0.0
        %729 = vmatpush1.msra.mxu0 0.0
        %730 = vmatprep.subr.mxu0 0.0
        %731 = vmatpush1.msra.mxu0 0.0
        %732 = vmatprep.mubr.f32.mxu0 0.0
        %733 = vmatmul.mubr.f32.gmra.mrb[0].mxu0 %v660
        %v734 = vpop.f32.mrb[0].mxu0
        %v735 = vadd.f32 %v655, %v734
        %v736 = vpop.f32.mrb[0].mxu0
        %737 = vmatprep.mubr.f32.mxu0 0.0
        %738 = vmatmul.mubr.f32.gmra.mrb[0].mxu0 %v663
        %v739 = vpop.f32.mrb[0].mxu0
        %v740 = vadd.f32 %v656, %v739
        %v741 = vpop.f32.mrb[0].mxu0
        %742 = vmatprep.mubr.f32.mxu0 0.0
        %743 = vmatmul.mubr.f32.gmra.mrb[0].mxu0 %v666
        %v744 = vpop.f32.mrb[0].mxu0
        %v745 = vadd.f32 %v657, %v744
        %v746 = vpop.f32.mrb[0].mxu0
        %747 = vdwg.mxu0
        %v748 = vld [vmem:[%s3] sm:$0x1]
        %v749 = vld [vmem:[%s4] sm:$0x1]
        %vm750 = vcmask 261120
        %v751 = vsel %vm750, %v735, 0.0
        %752 = vadd.xlane.f32.xlu0 %v751
        %v753 = vpop.xlane.xlu0 %752
        %v754 = vsel %vm750, %v740, 0.0
        %755 = vadd.xlane.f32.xlu0 %v754
        %v756 = vpop.xlane.xlu0 %755
        %v757 = vsel %vm750, %v745, 0.0
        %758 = vadd.xlane.f32.xlu0 %v757
        %v759 = vpop.xlane.xlu0 %758
        %v760 = vrcp.pop 32.0
        %v761 = vmul.f32 %v753, %v760
        %v762 = vmul.f32 %v756, %v760
        %v763 = vmul.f32 %v759, %v760
        %v764 = vsub.f32 %v735, %v761
        %v765 = vsub.f32 %v740, %v762
        %v766 = vsub.f32 %v745, %v763
        %v767 = vmul.f32 %v764, %v764
        %v768 = vmul.f32 %v765, %v765
        %v769 = vmul.f32 %v766, %v766
        %v770 = vsel %vm750, %v767, 0.0
        %771 = vadd.xlane.f32.xlu0 %v770
        %v772 = vpop.xlane.xlu0 %771
        %v773 = vsel %vm750, %v768, 0.0
        %774 = vadd.xlane.f32.xlu0 %v773
        %v775 = vpop.xlane.xlu0 %774
        %v776 = vsel %vm750, %v769, 0.0
        %777 = vadd.xlane.f32.xlu0 %v776
        %v778 = vpop.xlane.xlu0 %777
        %v779 = vmul.f32 %v772, %v760
        %v780 = vmul.f32 %v775, %v760
        %v781 = vmul.f32 %v778, %v760
        %v782 = vadd.f32 %v779, 1e-06
        %v783 = vadd.f32 %v780, 1e-06
        %v784 = vadd.f32 %v781, 1e-06
        %v785 = vrsqrt.pop %v782
        %v786 = vrsqrt.pop %v783
        %v787 = vrsqrt.pop %v784
        %v788 = vmul.f32 %v764, %v785
        %v789 = vmul.f32 %v765, %v786
        %v790 = vmul.f32 %v766, %v787
        %v792 = vlaneseq
        %v793 = vshrl.u32 %v792, 7
        %v794 = vsub.s32 0, %v793
        %v795 = vrot.slane %v748, %v794
        %v797 = vmul.f32 %v788, %v795
        %v798 = vmul.f32 %v789, %v795
        %v799 = vmul.f32 %v790, %v795
        %v801 = vlaneseq
        %v802 = vshrl.u32 %v801, 7
        %v803 = vsub.s32 0, %v802
        %v804 = vrot.slane %v749, %v803
        %v806 = vadd.f32 %v797, %v804
        %v807 = vadd.f32 %v798, %v804
        %v808 = vadd.f32 %v799, %v804
        %v809 = vld [vmem:[%s5] sm:$0xff]
        %v810 = vld [vmem:[%s5 + $0x8] sm:$0xff]
        %v811 = vld [vmem:[%s5 + $0x10] sm:$0xff]
        %v812 = vld [vmem:[%s5 + $0x18] sm:$0xff]
        %v813 = vld [vmem:[%s6] sm:$0x1]
        %v815 = vlaneseq
        %v816 = vshrl.u32 %v815, 7
        %v817 = vsub.s32 0, %v816
        %v818 = vrot.slane %v813, %v817
        %v821 = vsel %vm750, %v806, 0
        %v824 = vsel %vm750, %v807, 0
        %v827 = vsel %vm750, %v808, 0
        %829 = vmatprep.subr.mxu0 0.0
        %830 = vmatpush1.msra.mxu0 %v809
        %831 = vmatprep.subr.mxu0 0.0
        %832 = vmatpush1.msra.mxu0 %v810
        %833 = vmatprep.subr.mxu0 0.0
        %834 = vmatpush1.msra.mxu0 %v811
        %835 = vmatprep.subr.mxu0 0.0
        %836 = vmatpush1.msra.mxu0 %v812
        %837 = vmatprep.subr.mxu0 0.0
        %838 = vmatpush1.msra.mxu0 0.0
        %839 = vmatprep.subr.mxu0 0.0
        %840 = vmatpush1.msra.mxu0 0.0
        %841 = vmatprep.subr.mxu0 0.0
        %842 = vmatpush1.msra.mxu0 0.0
        %843 = vmatprep.subr.mxu0 0.0
        %844 = vmatpush1.msra.mxu0 0.0
        %845 = vmatprep.subr.mxu0 0.0
        %846 = vmatpush1.msra.mxu0 0.0
        %847 = vmatprep.subr.mxu0 0.0
        %848 = vmatpush1.msra.mxu0 0.0
        %849 = vmatprep.subr.mxu0 0.0
        %850 = vmatpush1.msra.mxu0 0.0
        %851 = vmatprep.subr.mxu0 0.0
        %852 = vmatpush1.msra.mxu0 0.0
        %853 = vmatprep.subr.mxu0 0.0
        %854 = vmatpush1.msra.mxu0 0.0
        %855 = vmatprep.subr.mxu0 0.0
        %856 = vmatpush1.msra.mxu0 0.0
        %857 = vmatprep.subr.mxu0 0.0
        %858 = vmatpush1.msra.mxu0 0.0
        %859 = vmatprep.subr.mxu0 0.0
        %860 = vmatpush1.msra.mxu0 0.0
        %861 = vmatprep.subr.mxu0 0.0
        %862 = vmatpush1.msra.mxu0 0.0
        %863 = vmatprep.subr.mxu0 0.0
        %864 = vmatpush1.msra.mxu0 0.0
        %865 = vmatprep.subr.mxu0 0.0
        %866 = vmatpush1.msra.mxu0 0.0
        %867 = vmatprep.subr.mxu0 0.0
        %868 = vmatpush1.msra.mxu0 0.0
        %869 = vmatprep.subr.mxu0 0.0
        %870 = vmatpush1.msra.mxu0 0.0
        %871 = vmatprep.subr.mxu0 0.0
        %872 = vmatpush1.msra.mxu0 0.0
        %873 = vmatprep.subr.mxu0 0.0
        %874 = vmatpush1.msra.mxu0 0.0
        %875 = vmatprep.subr.mxu0 0.0
        %876 = vmatpush1.msra.mxu0 0.0
        %877 = vmatprep.subr.mxu0 0.0
        %878 = vmatpush1.msra.mxu0 0.0
        %879 = vmatprep.subr.mxu0 0.0
        %880 = vmatpush1.msra.mxu0 0.0
        %881 = vmatprep.subr.mxu0 0.0
        %882 = vmatpush1.msra.mxu0 0.0
        %883 = vmatprep.subr.mxu0 0.0
        %884 = vmatpush1.msra.mxu0 0.0
        %885 = vmatprep.subr.mxu0 0.0
        %886 = vmatpush1.msra.mxu0 0.0
        %887 = vmatprep.subr.mxu0 0.0
        %888 = vmatpush1.msra.mxu0 0.0
        %889 = vmatprep.subr.mxu0 0.0
        %890 = vmatpush1.msra.mxu0 0.0
        %891 = vmatprep.subr.mxu0 0.0
        %892 = vmatpush1.msra.mxu0 0.0
        %893 = vmatprep.mubr.f32.mxu0 0.0
        %894 = vmatmul.mubr.f32.gmra.mrb[0].mxu0 %v821
        %v895 = vpop.f32.mrb[0].mxu0
        %v896 = vadd.f32 %v818, %v895
        %v897 = vpop.f32.mrb[0].mxu0
        %898 = vmatprep.mubr.f32.mxu0 0.0
        %899 = vmatmul.mubr.f32.gmra.mrb[0].mxu0 %v824
        %v900 = vpop.f32.mrb[0].mxu0
        %v901 = vadd.f32 %v818, %v900
        %v902 = vpop.f32.mrb[0].mxu0
        %903 = vmatprep.mubr.f32.mxu0 0.0
        %904 = vmatmul.mubr.f32.gmra.mrb[0].mxu0 %v827
        %v905 = vpop.f32.mrb[0].mxu0
        %v906 = vadd.f32 %v818, %v905
        %v907 = vpop.f32.mrb[0].mxu0
        %908 = vdwg.mxu0
        %912 = vrot.lane.b32.xlu0 %v896, 96
        %v913 = vpop.permute.xlu0 %912
        %914 = vrot.lane.b32.xlu0 %v901, 96
        %v915 = vpop.permute.xlu0 %914
        %916 = vrot.lane.b32.xlu0 %v906, 96
        %v917 = vpop.permute.xlu0 %916
        %vm918 = vcmask 64512
        %v919 = vsel %vm918, %v896, 0
        %v921 = vsel %vm918, %v901, 0
        %v923 = vsel %vm918, %v906, 0
        %v925 = vsel %vm918, %v913, 0
        %v927 = vsel %vm918, %v915, 0
        %v929 = vsel %vm918, %v917, 0
        %931 = vmatprep.subr.mxu0 0.0
        %932 = vmatpush1.xpose.msra.mxu0 %v925
        %933 = vmatprep.subr.mxu0 0.0
        %934 = vmatpush1.xpose.msra.mxu0 %v927
        %935 = vmatprep.subr.mxu0 0.0
        %936 = vmatpush1.xpose.msra.mxu0 %v929
        %937 = vmatprep.subr.mxu0 0.0
        %938 = vmatpush1.xpose.msra.mxu0 0.0
        %939 = vmatprep.subr.mxu0 0.0
        %940 = vmatpush1.xpose.msra.mxu0 0.0
        %941 = vmatprep.subr.mxu0 0.0
        %942 = vmatpush1.xpose.msra.mxu0 0.0
        %943 = vmatprep.subr.mxu0 0.0
        %944 = vmatpush1.xpose.msra.mxu0 0.0
        %945 = vmatprep.subr.mxu0 0.0
        %946 = vmatpush1.xpose.msra.mxu0 0.0
        %947 = vmatprep.subr.mxu0 0.0
        %948 = vmatpush1.xpose.msra.mxu0 0.0
        %949 = vmatprep.subr.mxu0 0.0
        %950 = vmatpush1.xpose.msra.mxu0 0.0
        %951 = vmatprep.subr.mxu0 0.0
        %952 = vmatpush1.xpose.msra.mxu0 0.0
        %953 = vmatprep.subr.mxu0 0.0
        %954 = vmatpush1.xpose.msra.mxu0 0.0
        %955 = vmatprep.subr.mxu0 0.0
        %956 = vmatpush1.xpose.msra.mxu0 0.0
        %957 = vmatprep.subr.mxu0 0.0
        %958 = vmatpush1.xpose.msra.mxu0 0.0
        %959 = vmatprep.subr.mxu0 0.0
        %960 = vmatpush1.xpose.msra.mxu0 0.0
        %961 = vmatprep.subr.mxu0 0.0
        %962 = vmatpush1.xpose.msra.mxu0 0.0
        %963 = vmatprep.subr.mxu0 0.0
        %964 = vmatpush1.xpose.msra.mxu0 0.0
        %965 = vmatprep.subr.mxu0 0.0
        %966 = vmatpush1.xpose.msra.mxu0 0.0
        %967 = vmatprep.subr.mxu0 0.0
        %968 = vmatpush1.xpose.msra.mxu0 0.0
        %969 = vmatprep.subr.mxu0 0.0
        %970 = vmatpush1.xpose.msra.mxu0 0.0
        %971 = vmatprep.subr.mxu0 0.0
        %972 = vmatpush1.xpose.msra.mxu0 0.0
        %973 = vmatprep.subr.mxu0 0.0
        %974 = vmatpush1.xpose.msra.mxu0 0.0
        %975 = vmatprep.subr.mxu0 0.0
        %976 = vmatpush1.xpose.msra.mxu0 0.0
        %977 = vmatprep.subr.mxu0 0.0
        %978 = vmatpush1.xpose.msra.mxu0 0.0
        %979 = vmatprep.subr.mxu0 0.0
        %980 = vmatpush1.xpose.msra.mxu0 0.0
        %981 = vmatprep.subr.mxu0 0.0
        %982 = vmatpush1.xpose.msra.mxu0 0.0
        %983 = vmatprep.subr.mxu0 0.0
        %984 = vmatpush1.xpose.msra.mxu0 0.0
        %985 = vmatprep.subr.mxu0 0.0
        %986 = vmatpush1.xpose.msra.mxu0 0.0
        %987 = vmatprep.subr.mxu0 0.0
        %988 = vmatpush1.xpose.msra.mxu0 0.0
        %989 = vmatprep.subr.mxu0 0.0
        %990 = vmatpush1.xpose.msra.mxu0 0.0
        %991 = vmatprep.subr.mxu0 0.0
        %992 = vmatpush1.xpose.msra.mxu0 0.0
        %993 = vmatprep.subr.mxu0 0.0
        %994 = vmatpush1.xpose.msra.mxu0 0.0
        %995 = vmatprep.mubr.f32.mxu0 0.0
        %996 = vmatmul.mubr.f32.gmra.mrb[0].mxu0 %v919
        %v997 = vpop.f32.mrb[0].mxu0
        %v998 = vadd.f32 0.0, %v997
        %v999 = vpop.f32.mrb[0].mxu0
        %1000 = vmatprep.mubr.f32.mxu0 0.0
        %1001 = vmatmul.mubr.f32.gmra.mrb[0].mxu0 %v921
        %v1002 = vpop.f32.mrb[0].mxu0
        %v1003 = vadd.f32 0.0, %v1002
        %v1004 = vpop.f32.mrb[0].mxu0
        %1005 = vmatprep.mubr.f32.mxu0 0.0
        %1006 = vmatmul.mubr.f32.gmra.mrb[0].mxu0 %v923
        %v1007 = vpop.f32.mrb[0].mxu0
        %v1008 = vadd.f32 0.0, %v1007
        %v1009 = vpop.f32.mrb[0].mxu0
        %1010 = vdwg.mxu0
        %v1011 = vmul.f32 %v998, 0.35355338
        %v1012 = vmul.f32 %v1003, 0.35355338
        %v1013 = vmul.f32 %v1008, 0.35355338
        %v1014 = vadd.f32 %v1011, %v643
        %v1015 = vadd.f32 %v1012, %v643
        %v1016 = vadd.f32 %v1013, %v643
        %vm1017 = vcmask 195584
        %v1018 = vsel %vm1017, %v1014, -inf
        %1019 = vmax.xlane.f32.xlu0 %v1018
        %v1020 = vpop.xlane.xlu0 %1019
        %v1021 = vsel %vm1017, %v1015, -inf
        %1022 = vmax.xlane.f32.xlu0 %v1021
        %v1023 = vpop.xlane.xlu0 %1022
        %v1024 = vsel %vm1017, %v1016, -inf
        %1025 = vmax.xlane.f32.xlu0 %v1024
        %v1026 = vpop.xlane.xlu0 %1025
        %v1027 = vsub.f32 %v1014, %v1020
        %v1028 = vsub.f32 %v1015, %v1023
        %v1029 = vsub.f32 %v1016, %v1026
        %v1030 = vmul.f32 %v1027, 1.442695
        %v1031 = vpow.pop %v1030
        %v1032 = vmul.f32 %v1028, 1.442695
        %v1033 = vpow.pop %v1032
        %v1034 = vmul.f32 %v1029, 1.442695
        %v1035 = vpow.pop %v1034
        %v1036 = vsel %vm1017, %v1031, 0.0
        %1037 = vadd.xlane.f32.xlu0 %v1036
        %v1038 = vpop.xlane.xlu0 %1037
        %v1039 = vsel %vm1017, %v1033, 0.0
        %1040 = vadd.xlane.f32.xlu0 %v1039
        %v1041 = vpop.xlane.xlu0 %1040
        %v1042 = vsel %vm1017, %v1035, 0.0
        %1043 = vadd.xlane.f32.xlu0 %v1042
        %v1044 = vpop.xlane.xlu0 %1043
        %v1045 = vrcp.pop %v1038
        %v1046 = vmul.f32 %v1031, %v1045
        %v1047 = vrcp.pop %v1041
        %v1048 = vmul.f32 %v1033, %v1047
        %v1049 = vrcp.pop %v1044
        %v1050 = vmul.f32 %v1035, %v1049
        %1051 = vrot.lane.b32.xlu0 %v896, 64
        %v1052 = vpop.permute.xlu0 %1051
        %1053 = vrot.lane.b32.xlu0 %v901, 64
        %v1054 = vpop.permute.xlu0 %1053
        %1055 = vrot.lane.b32.xlu0 %v906, 64
        %v1056 = vpop.permute.xlu0 %1055
        %v1061 = vsel %vm1017, %v1046, 0
        %v1064 = vsel %vm1017, %v1048, 0
        %v1067 = vsel %vm1017, %v1050, 0
        %1069 = vmatprep.subr.mxu0 0.0
        %1070 = vmatpush1.msra.mxu0 %v1052
        %1071 = vmatprep.subr.mxu0 0.0
        %1072 = vmatpush1.msra.mxu0 %v1054
        %1073 = vmatprep.subr.mxu0 0.0
        %1074 = vmatpush1.msra.mxu0 %v1056
        %1075 = vmatprep.subr.mxu0 0.0
        %1076 = vmatpush1.msra.mxu0 0.0
        %1077 = vmatprep.subr.mxu0 0.0
        %1078 = vmatpush1.msra.mxu0 0.0
        %1079 = vmatprep.subr.mxu0 0.0
        %1080 = vmatpush1.msra.mxu0 0.0
        %1081 = vmatprep.subr.mxu0 0.0
        %1082 = vmatpush1.msra.mxu0 0.0
        %1083 = vmatprep.subr.mxu0 0.0
        %1084 = vmatpush1.msra.mxu0 0.0
        %1085 = vmatprep.subr.mxu0 0.0
        %1086 = vmatpush1.msra.mxu0 0.0
        %1087 = vmatprep.subr.mxu0 0.0
        %1088 = vmatpush1.msra.mxu0 0.0
        %1089 = vmatprep.subr.mxu0 0.0
        %1090 = vmatpush1.msra.mxu0 0.0
        %1091 = vmatprep.subr.mxu0 0.0
        %1092 = vmatpush1.msra.mxu0 0.0
        %1093 = vmatprep.subr.mxu0 0.0
        %1094 = vmatpush1.msra.mxu0 0.0
        %1095 = vmatprep.subr.mxu0 0.0
        %1096 = vmatpush1.msra.mxu0 0.0
        %1097 = vmatprep.subr.mxu0 0.0
        %1098 = vmatpush1.msra.mxu0 0.0
        %1099 = vmatprep.subr.mxu0 0.0
        %1100 = vmatpush1.msra.mxu0 0.0
        %1101 = vmatprep.subr.mxu0 0.0
        %1102 = vmatpush1.msra.mxu0 0.0
        %1103 = vmatprep.subr.mxu0 0.0
        %1104 = vmatpush1.msra.mxu0 0.0
        %1105 = vmatprep.subr.mxu0 0.0
        %1106 = vmatpush1.msra.mxu0 0.0
        %1107 = vmatprep.subr.mxu0 0.0
        %1108 = vmatpush1.msra.mxu0 0.0
        %1109 = vmatprep.subr.mxu0 0.0
        %1110 = vmatpush1.msra.mxu0 0.0
        %1111 = vmatprep.subr.mxu0 0.0
        %1112 = vmatpush1.msra.mxu0 0.0
        %1113 = vmatprep.subr.mxu0 0.0
        %1114 = vmatpush1.msra.mxu0 0.0
        %1115 = vmatprep.subr.mxu0 0.0
        %1116 = vmatpush1.msra.mxu0 0.0
        %1117 = vmatprep.subr.mxu0 0.0
        %1118 = vmatpush1.msra.mxu0 0.0
        %1119 = vmatprep.subr.mxu0 0.0
        %1120 = vmatpush1.msra.mxu0 0.0
        %1121 = vmatprep.subr.mxu0 0.0
        %1122 = vmatpush1.msra.mxu0 0.0
        %1123 = vmatprep.subr.mxu0 0.0
        %1124 = vmatpush1.msra.mxu0 0.0
        %1125 = vmatprep.subr.mxu0 0.0
        %1126 = vmatpush1.msra.mxu0 0.0
        %1127 = vmatprep.subr.mxu0 0.0
        %1128 = vmatpush1.msra.mxu0 0.0
        %1129 = vmatprep.subr.mxu0 0.0
        %1130 = vmatpush1.msra.mxu0 0.0
        %1131 = vmatprep.subr.mxu0 0.0
        %1132 = vmatpush1.msra.mxu0 0.0
        %1133 = vmatprep.mubr.f32.mxu0 0.0
        %1134 = vmatmul.mubr.f32.gmra.mrb[0].mxu0 %v1061
        %v1135 = vpop.f32.mrb[0].mxu0
        %v1136 = vadd.f32 0.0, %v1135
        %v1137 = vpop.f32.mrb[0].mxu0
        %1138 = vmatprep.mubr.f32.mxu0 0.0
        %1139 = vmatmul.mubr.f32.gmra.mrb[0].mxu0 %v1064
        %v1140 = vpop.f32.mrb[0].mxu0
        %v1141 = vadd.f32 0.0, %v1140
        %v1142 = vpop.f32.mrb[0].mxu0
        %1143 = vmatprep.mubr.f32.mxu0 0.0
        %1144 = vmatmul.mubr.f32.gmra.mrb[0].mxu0 %v1067
        %v1145 = vpop.f32.mrb[0].mxu0
        %v1146 = vadd.f32 0.0, %v1145
        %v1147 = vpop.f32.mrb[0].mxu0
        %1148 = vdwg.mxu0
        %1149 = vst.msk [vmem:[#allocation2] sm:$0xff] %vm918, %v1136
        %1150 = vst.msk [vmem:[#allocation2 + $0x8] sm:$0xff] %vm918, %v1141
        %1151 = vst.msk [vmem:[#allocation2 + $0x10] sm:$0xff] %vm918, %v1146
        %1152 = vrot.lane.b32.xlu0 %v896, 120
        %v1153 = vpop.permute.xlu0 %1152
        %1154 = vrot.lane.b32.xlu0 %v901, 120
        %v1155 = vpop.permute.xlu0 %1154
        %1156 = vrot.lane.b32.xlu0 %v906, 120
        %v1157 = vpop.permute.xlu0 %1156
        %1158 = vrot.lane.b32.xlu0 %v896, 88
        %v1159 = vpop.permute.xlu0 %1158
        %1160 = vrot.lane.b32.xlu0 %v901, 88
        %v1161 = vpop.permute.xlu0 %1160
        %1162 = vrot.lane.b32.xlu0 %v906, 88
        %v1163 = vpop.permute.xlu0 %1162
        %v1164 = vsel %vm918, %v1153, 0
        %v1166 = vsel %vm918, %v1155, 0
        %v1168 = vsel %vm918, %v1157, 0
        %v1170 = vsel %vm918, %v1159, 0
        %v1172 = vsel %vm918, %v1161, 0
        %v1174 = vsel %vm918, %v1163, 0
        %1176 = vmatprep.subr.mxu0 0.0
        %1177 = vmatpush1.xpose.msra.mxu0 %v1170
        %1178 = vmatprep.subr.mxu0 0.0
        %1179 = vmatpush1.xpose.msra.mxu0 %v1172
        %1180 = vmatprep.subr.mxu0 0.0
        %1181 = vmatpush1.xpose.msra.mxu0 %v1174
        %1182 = vmatprep.subr.mxu0 0.0
        %1183 = vmatpush1.xpose.msra.mxu0 0.0
        %1184 = vmatprep.subr.mxu0 0.0
        %1185 = vmatpush1.xpose.msra.mxu0 0.0
        %1186 = vmatprep.subr.mxu0 0.0
        %1187 = vmatpush1.xpose.msra.mxu0 0.0
        %1188 = vmatprep.subr.mxu0 0.0
        %1189 = vmatpush1.xpose.msra.mxu0 0.0
        %1190 = vmatprep.subr.mxu0 0.0
        %1191 = vmatpush1.xpose.msra.mxu0 0.0
        %1192 = vmatprep.subr.mxu0 0.0
        %1193 = vmatpush1.xpose.msra.mxu0 0.0
        %1194 = vmatprep.subr.mxu0 0.0
        %1195 = vmatpush1.xpose.msra.mxu0 0.0
        %1196 = vmatprep.subr.mxu0 0.0
        %1197 = vmatpush1.xpose.msra.mxu0 0.0
        %1198 = vmatprep.subr.mxu0 0.0
        %1199 = vmatpush1.xpose.msra.mxu0 0.0
        %1200 = vmatprep.subr.mxu0 0.0
        %1201 = vmatpush1.xpose.msra.mxu0 0.0
        %1202 = vmatprep.subr.mxu0 0.0
        %1203 = vmatpush1.xpose.msra.mxu0 0.0
        %1204 = vmatprep.subr.mxu0 0.0
        %1205 = vmatpush1.xpose.msra.mxu0 0.0
        %1206 = vmatprep.subr.mxu0 0.0
        %1207 = vmatpush1.xpose.msra.mxu0 0.0
        %1208 = vmatprep.subr.mxu0 0.0
        %1209 = vmatpush1.xpose.msra.mxu0 0.0
        %1210 = vmatprep.subr.mxu0 0.0
        %1211 = vmatpush1.xpose.msra.mxu0 0.0
        %1212 = vmatprep.subr.mxu0 0.0
        %1213 = vmatpush1.xpose.msra.mxu0 0.0
        %1214 = vmatprep.subr.mxu0 0.0
        %1215 = vmatpush1.xpose.msra.mxu0 0.0
        %1216 = vmatprep.subr.mxu0 0.0
        %1217 = vmatpush1.xpose.msra.mxu0 0.0
        %1218 = vmatprep.subr.mxu0 0.0
        %1219 = vmatpush1.xpose.msra.mxu0 0.0
        %1220 = vmatprep.subr.mxu0 0.0
        %1221 = vmatpush1.xpose.msra.mxu0 0.0
        %1222 = vmatprep.subr.mxu0 0.0
        %1223 = vmatpush1.xpose.msra.mxu0 0.0
        %1224 = vmatprep.subr.mxu0 0.0
        %1225 = vmatpush1.xpose.msra.mxu0 0.0
        %1226 = vmatprep.subr.mxu0 0.0
        %1227 = vmatpush1.xpose.msra.mxu0 0.0
        %1228 = vmatprep.subr.mxu0 0.0
        %1229 = vmatpush1.xpose.msra.mxu0 0.0
        %1230 = vmatprep.subr.mxu0 0.0
        %1231 = vmatpush1.xpose.msra.mxu0 0.0
        %1232 = vmatprep.subr.mxu0 0.0
        %1233 = vmatpush1.xpose.msra.mxu0 0.0
        %1234 = vmatprep.subr.mxu0 0.0
        %1235 = vmatpush1.xpose.msra.mxu0 0.0
        %1236 = vmatprep.subr.mxu0 0.0
        %1237 = vmatpush1.xpose.msra.mxu0 0.0
        %1238 = vmatprep.subr.mxu0 0.0
        %1239 = vmatpush1.xpose.msra.mxu0 0.0
        %1240 = vmatprep.mubr.f32.mxu0 0.0
        %1241 = vmatmul.mubr.f32.gmra.mrb[0].mxu0 %v1164
        %v1242 = vpop.f32.mrb[0].mxu0
        %v1243 = vadd.f32 0.0, %v1242
        %v1244 = vpop.f32.mrb[0].mxu0
        %1245 = vmatprep.mubr.f32.mxu0 0.0
        %1246 = vmatmul.mubr.f32.gmra.mrb[0].mxu0 %v1166
        %v1247 = vpop.f32.mrb[0].mxu0
        %v1248 = vadd.f32 0.0, %v1247
        %v1249 = vpop.f32.mrb[0].mxu0
        %1250 = vmatprep.mubr.f32.mxu0 0.0
        %1251 = vmatmul.mubr.f32.gmra.mrb[0].mxu0 %v1168
        %v1252 = vpop.f32.mrb[0].mxu0
        %v1253 = vadd.f32 0.0, %v1252
        %v1254 = vpop.f32.mrb[0].mxu0
        %1255 = vdwg.mxu0
        %v1256 = vmul.f32 %v1243, 0.35355338
        %v1257 = vmul.f32 %v1248, 0.35355338
        %v1258 = vmul.f32 %v1253, 0.35355338
        %v1259 = vadd.f32 %v1256, %v643
        %v1260 = vadd.f32 %v1257, %v643
        %v1261 = vadd.f32 %v1258, %v643
        %v1262 = vsel %vm1017, %v1259, -inf
        %1263 = vmax.xlane.f32.xlu0 %v1262
        %v1264 = vpop.xlane.xlu0 %1263
        %v1265 = vsel %vm1017, %v1260, -inf
        %1266 = vmax.xlane.f32.xlu0 %v1265
        %v1267 = vpop.xlane.xlu0 %1266
        %v1268 = vsel %vm1017, %v1261, -inf
        %1269 = vmax.xlane.f32.xlu0 %v1268
        %v1270 = vpop.xlane.xlu0 %1269
        %v1271 = vsub.f32 %v1259, %v1264
        %v1272 = vsub.f32 %v1260, %v1267
        %v1273 = vsub.f32 %v1261, %v1270
        %v1274 = vmul.f32 %v1271, 1.442695
        %v1275 = vpow.pop %v1274
        %v1276 = vmul.f32 %v1272, 1.442695
        %v1277 = vpow.pop %v1276
        %v1278 = vmul.f32 %v1273, 1.442695
        %v1279 = vpow.pop %v1278
        %v1280 = vsel %vm1017, %v1275, 0.0
        %1281 = vadd.xlane.f32.xlu0 %v1280
        %v1282 = vpop.xlane.xlu0 %1281
        %v1283 = vsel %vm1017, %v1277, 0.0
        %1284 = vadd.xlane.f32.xlu0 %v1283
        %v1285 = vpop.xlane.xlu0 %1284
        %v1286 = vsel %vm1017, %v1279, 0.0
        %1287 = vadd.xlane.f32.xlu0 %v1286
        %v1288 = vpop.xlane.xlu0 %1287
        %v1289 = vrcp.pop %v1282
        %v1290 = vmul.f32 %v1275, %v1289
        %v1291 = vrcp.pop %v1285
        %v1292 = vmul.f32 %v1277, %v1291
        %v1293 = vrcp.pop %v1288
        %v1294 = vmul.f32 %v1279, %v1293
        %1295 = vrot.lane.b32.xlu0 %v896, 56
        %v1296 = vpop.permute.xlu0 %1295
        %1297 = vrot.lane.b32.xlu0 %v901, 56
        %v1298 = vpop.permute.xlu0 %1297
        %1299 = vrot.lane.b32.xlu0 %v906, 56
        %v1300 = vpop.permute.xlu0 %1299
        %v1305 = vsel %vm1017, %v1290, 0
        %v1308 = vsel %vm1017, %v1292, 0
        %v1311 = vsel %vm1017, %v1294, 0
        %1313 = vmatprep.subr.mxu0 0.0
        %1314 = vmatpush1.msra.mxu0 %v1296
        %1315 = vmatprep.subr.mxu0 0.0
        %1316 = vmatpush1.msra.mxu0 %v1298
        %1317 = vmatprep.subr.mxu0 0.0
        %1318 = vmatpush1.msra.mxu0 %v1300
        %1319 = vmatprep.subr.mxu0 0.0
        %1320 = vmatpush1.msra.mxu0 0.0
        %1321 = vmatprep.subr.mxu0 0.0
        %1322 = vmatpush1.msra.mxu0 0.0
        %1323 = vmatprep.subr.mxu0 0.0
        %1324 = vmatpush1.msra.mxu0 0.0
        %1325 = vmatprep.subr.mxu0 0.0
        %1326 = vmatpush1.msra.mxu0 0.0
        %1327 = vmatprep.subr.mxu0 0.0
        %1328 = vmatpush1.msra.mxu0 0.0
        %1329 = vmatprep.subr.mxu0 0.0
        %1330 = vmatpush1.msra.mxu0 0.0
        %1331 = vmatprep.subr.mxu0 0.0
        %1332 = vmatpush1.msra.mxu0 0.0
        %1333 = vmatprep.subr.mxu0 0.0
        %1334 = vmatpush1.msra.mxu0 0.0
        %1335 = vmatprep.subr.mxu0 0.0
        %1336 = vmatpush1.msra.mxu0 0.0
        %1337 = vmatprep.subr.mxu0 0.0
        %1338 = vmatpush1.msra.mxu0 0.0
        %1339 = vmatprep.subr.mxu0 0.0
        %1340 = vmatpush1.msra.mxu0 0.0
        %1341 = vmatprep.subr.mxu0 0.0
        %1342 = vmatpush1.msra.mxu0 0.0
        %1343 = vmatprep.subr.mxu0 0.0
        %1344 = vmatpush1.msra.mxu0 0.0
        %1345 = vmatprep.subr.mxu0 0.0
        %1346 = vmatpush1.msra.mxu0 0.0
        %1347 = vmatprep.subr.mxu0 0.0
        %1348 = vmatpush1.msra.mxu0 0.0
        %1349 = vmatprep.subr.mxu0 0.0
        %1350 = vmatpush1.msra.mxu0 0.0
        %1351 = vmatprep.subr.mxu0 0.0
        %1352 = vmatpush1.msra.mxu0 0.0
        %1353 = vmatprep.subr.mxu0 0.0
        %1354 = vmatpush1.msra.mxu0 0.0
        %1355 = vmatprep.subr.mxu0 0.0
        %1356 = vmatpush1.msra.mxu0 0.0
        %1357 = vmatprep.subr.mxu0 0.0
        %1358 = vmatpush1.msra.mxu0 0.0
        %1359 = vmatprep.subr.mxu0 0.0
        %1360 = vmatpush1.msra.mxu0 0.0
        %1361 = vmatprep.subr.mxu0 0.0
        %1362 = vmatpush1.msra.mxu0 0.0
        %1363 = vmatprep.subr.mxu0 0.0
        %1364 = vmatpush1.msra.mxu0 0.0
        %1365 = vmatprep.subr.mxu0 0.0
        %1366 = vmatpush1.msra.mxu0 0.0
        %1367 = vmatprep.subr.mxu0 0.0
        %1368 = vmatpush1.msra.mxu0 0.0
        %1369 = vmatprep.subr.mxu0 0.0
        %1370 = vmatpush1.msra.mxu0 0.0
        %1371 = vmatprep.subr.mxu0 0.0
        %1372 = vmatpush1.msra.mxu0 0.0
        %1373 = vmatprep.subr.mxu0 0.0
        %1374 = vmatpush1.msra.mxu0 0.0
        %1375 = vmatprep.subr.mxu0 0.0
        %1376 = vmatpush1.msra.mxu0 0.0
        %1377 = vmatprep.mubr.f32.mxu0 0.0
        %1378 = vmatmul.mubr.f32.gmra.mrb[0].mxu0 %v1305
        %v1379 = vpop.f32.mrb[0].mxu0
        %v1380 = vadd.f32 0.0, %v1379
        %v1381 = vpop.f32.mrb[0].mxu0
        %1382 = vmatprep.mubr.f32.mxu0 0.0
        %1383 = vmatmul.mubr.f32.gmra.mrb[0].mxu0 %v1308
        %v1384 = vpop.f32.mrb[0].mxu0
        %v1385 = vadd.f32 0.0, %v1384
        %v1386 = vpop.f32.mrb[0].mxu0
        %1387 = vmatprep.mubr.f32.mxu0 0.0
        %1388 = vmatmul.mubr.f32.gmra.mrb[0].mxu0 %v1311
        %v1389 = vpop.f32.mrb[0].mxu0
        %v1390 = vadd.f32 0.0, %v1389
        %v1391 = vpop.f32.mrb[0].mxu0
        %1392 = vdwg.mxu0
        %1396 = vrot.lane.b32.xlu0 %v1380, 8
        %v1397 = vpop.permute.xlu0 %1396
        %1398 = vrot.lane.b32.xlu0 %v1385, 8
        %v1399 = vpop.permute.xlu0 %1398
        %1400 = vrot.lane.b32.xlu0 %v1390, 8
        %v1401 = vpop.permute.xlu0 %1400
        %vm1405 = vcmask 130112
        %1406 = vst.msk [vmem:[#allocation2] sm:$0xff] %vm1405, %v1397
        %1407 = vst.msk [vmem:[#allocation2 + $0x8] sm:$0xff] %vm1405, %v1399
        %1408 = vst.msk [vmem:[#allocation2 + $0x10] sm:$0xff] %vm1405, %v1401
        %1409 = vrot.lane.b32.xlu0 %v896, 112
        %v1410 = vpop.permute.xlu0 %1409
        %1411 = vrot.lane.b32.xlu0 %v901, 112
        %v1412 = vpop.permute.xlu0 %1411
        %1413 = vrot.lane.b32.xlu0 %v906, 112
        %v1414 = vpop.permute.xlu0 %1413
        %1415 = vrot.lane.b32.xlu0 %v896, 80
        %v1416 = vpop.permute.xlu0 %1415
        %1417 = vrot.lane.b32.xlu0 %v901, 80
        %v1418 = vpop.permute.xlu0 %1417
        %1419 = vrot.lane.b32.xlu0 %v906, 80
        %v1420 = vpop.permute.xlu0 %1419
        %v1421 = vsel %vm918, %v1410, 0
        %v1423 = vsel %vm918, %v1412, 0
        %v1425 = vsel %vm918, %v1414, 0
        %v1427 = vsel %vm918, %v1416, 0
        %v1429 = vsel %vm918, %v1418, 0
        %v1431 = vsel %vm918, %v1420, 0
        %1433 = vmatprep.subr.mxu0 0.0
        %1434 = vmatpush1.xpose.msra.mxu0 %v1427
        %1435 = vmatprep.subr.mxu0 0.0
        %1436 = vmatpush1.xpose.msra.mxu0 %v1429
        %1437 = vmatprep.subr.mxu0 0.0
        %1438 = vmatpush1.xpose.msra.mxu0 %v1431
        %1439 = vmatprep.subr.mxu0 0.0
        %1440 = vmatpush1.xpose.msra.mxu0 0.0
        %1441 = vmatprep.subr.mxu0 0.0
        %1442 = vmatpush1.xpose.msra.mxu0 0.0
        %1443 = vmatprep.subr.mxu0 0.0
        %1444 = vmatpush1.xpose.msra.mxu0 0.0
        %1445 = vmatprep.subr.mxu0 0.0
        %1446 = vmatpush1.xpose.msra.mxu0 0.0
        %1447 = vmatprep.subr.mxu0 0.0
        %1448 = vmatpush1.xpose.msra.mxu0 0.0
        %1449 = vmatprep.subr.mxu0 0.0
        %1450 = vmatpush1.xpose.msra.mxu0 0.0
        %1451 = vmatprep.subr.mxu0 0.0
        %1452 = vmatpush1.xpose.msra.mxu0 0.0
        %1453 = vmatprep.subr.mxu0 0.0
        %1454 = vmatpush1.xpose.msra.mxu0 0.0
        %1455 = vmatprep.subr.mxu0 0.0
        %1456 = vmatpush1.xpose.msra.mxu0 0.0
        %1457 = vmatprep.subr.mxu0 0.0
        %1458 = vmatpush1.xpose.msra.mxu0 0.0
        %1459 = vmatprep.subr.mxu0 0.0
        %1460 = vmatpush1.xpose.msra.mxu0 0.0
        %1461 = vmatprep.subr.mxu0 0.0
        %1462 = vmatpush1.xpose.msra.mxu0 0.0
        %1463 = vmatprep.subr.mxu0 0.0
        %1464 = vmatpush1.xpose.msra.mxu0 0.0
        %1465 = vmatprep.subr.mxu0 0.0
        %1466 = vmatpush1.xpose.msra.mxu0 0.0
        %1467 = vmatprep.subr.mxu0 0.0
        %1468 = vmatpush1.xpose.msra.mxu0 0.0
        %1469 = vmatprep.subr.mxu0 0.0
        %1470 = vmatpush1.xpose.msra.mxu0 0.0
        %1471 = vmatprep.subr.mxu0 0.0
        %1472 = vmatpush1.xpose.msra.mxu0 0.0
        %1473 = vmatprep.subr.mxu0 0.0
        %1474 = vmatpush1.xpose.msra.mxu0 0.0
        %1475 = vmatprep.subr.mxu0 0.0
        %1476 = vmatpush1.xpose.msra.mxu0 0.0
        %1477 = vmatprep.subr.mxu0 0.0
        %1478 = vmatpush1.xpose.msra.mxu0 0.0
        %1479 = vmatprep.subr.mxu0 0.0
        %1480 = vmatpush1.xpose.msra.mxu0 0.0
        %1481 = vmatprep.subr.mxu0 0.0
        %1482 = vmatpush1.xpose.msra.mxu0 0.0
        %1483 = vmatprep.subr.mxu0 0.0
        %1484 = vmatpush1.xpose.msra.mxu0 0.0
        %1485 = vmatprep.subr.mxu0 0.0
        %1486 = vmatpush1.xpose.msra.mxu0 0.0
        %1487 = vmatprep.subr.mxu0 0.0
        %1488 = vmatpush1.xpose.msra.mxu0 0.0
        %1489 = vmatprep.subr.mxu0 0.0
        %1490 = vmatpush1.xpose.msra.mxu0 0.0
        %1491 = vmatprep.subr.mxu0 0.0
        %1492 = vmatpush1.xpose.msra.mxu0 0.0
        %1493 = vmatprep.subr.mxu0 0.0
        %1494 = vmatpush1.xpose.msra.mxu0 0.0
        %1495 = vmatprep.subr.mxu0 0.0
        %1496 = vmatpush1.xpose.msra.mxu0 0.0
        %1497 = vmatprep.mubr.f32.mxu0 0.0
        %1498 = vmatmul.mubr.f32.gmra.mrb[0].mxu0 %v1421
        %v1499 = vpop.f32.mrb[0].mxu0
        %v1500 = vadd.f32 0.0, %v1499
        %v1501 = vpop.f32.mrb[0].mxu0
        %1502 = vmatprep.mubr.f32.mxu0 0.0
        %1503 = vmatmul.mubr.f32.gmra.mrb[0].mxu0 %v1423
        %v1504 = vpop.f32.mrb[0].mxu0
        %v1505 = vadd.f32 0.0, %v1504
        %v1506 = vpop.f32.mrb[0].mxu0
        %1507 = vmatprep.mubr.f32.mxu0 0.0
        %1508 = vmatmul.mubr.f32.gmra.mrb[0].mxu0 %v1425
        %v1509 = vpop.f32.mrb[0].mxu0
        %v1510 = vadd.f32 0.0, %v1509
        %v1511 = vpop.f32.mrb[0].mxu0
        %1512 = vdwg.mxu0
        %v1513 = vmul.f32 %v1500, 0.35355338
        %v1514 = vmul.f32 %v1505, 0.35355338
        %v1515 = vmul.f32 %v1510, 0.35355338
        %v1516 = vadd.f32 %v1513, %v643
        %v1517 = vadd.f32 %v1514, %v643
        %v1518 = vadd.f32 %v1515, %v643
        %v1519 = vsel %vm1017, %v1516, -inf
        %1520 = vmax.xlane.f32.xlu0 %v1519
        %v1521 = vpop.xlane.xlu0 %1520
        %v1522 = vsel %vm1017, %v1517, -inf
        %1523 = vmax.xlane.f32.xlu0 %v1522
        %v1524 = vpop.xlane.xlu0 %1523
        %v1525 = vsel %vm1017, %v1518, -inf
        %1526 = vmax.xlane.f32.xlu0 %v1525
        %v1527 = vpop.xlane.xlu0 %1526
        %v1528 = vsub.f32 %v1516, %v1521
        %v1529 = vsub.f32 %v1517, %v1524
        %v1530 = vsub.f32 %v1518, %v1527
        %v1531 = vmul.f32 %v1528, 1.442695
        %v1532 = vpow.pop %v1531
        %v1533 = vmul.f32 %v1529, 1.442695
        %v1534 = vpow.pop %v1533
        %v1535 = vmul.f32 %v1530, 1.442695
        %v1536 = vpow.pop %v1535
        %v1537 = vsel %vm1017, %v1532, 0.0
        %1538 = vadd.xlane.f32.xlu0 %v1537
        %v1539 = vpop.xlane.xlu0 %1538
        %v1540 = vsel %vm1017, %v1534, 0.0
        %1541 = vadd.xlane.f32.xlu0 %v1540
        %v1542 = vpop.xlane.xlu0 %1541
        %v1543 = vsel %vm1017, %v1536, 0.0
        %1544 = vadd.xlane.f32.xlu0 %v1543
        %v1545 = vpop.xlane.xlu0 %1544
        %v1546 = vrcp.pop %v1539
        %v1547 = vmul.f32 %v1532, %v1546
        %v1548 = vrcp.pop %v1542
        %v1549 = vmul.f32 %v1534, %v1548
        %v1550 = vrcp.pop %v1545
        %v1551 = vmul.f32 %v1536, %v1550
        %1552 = vrot.lane.b32.xlu0 %v896, 48
        %v1553 = vpop.permute.xlu0 %1552
        %1554 = vrot.lane.b32.xlu0 %v901, 48
        %v1555 = vpop.permute.xlu0 %1554
        %1556 = vrot.lane.b32.xlu0 %v906, 48
        %v1557 = vpop.permute.xlu0 %1556
        %v1562 = vsel %vm1017, %v1547, 0
        %v1565 = vsel %vm1017, %v1549, 0
        %v1568 = vsel %vm1017, %v1551, 0
        %1570 = vmatprep.subr.mxu0 0.0
        %1571 = vmatpush1.msra.mxu0 %v1553
        %1572 = vmatprep.subr.mxu0 0.0
        %1573 = vmatpush1.msra.mxu0 %v1555
        %1574 = vmatprep.subr.mxu0 0.0
        %1575 = vmatpush1.msra.mxu0 %v1557
        %1576 = vmatprep.subr.mxu0 0.0
        %1577 = vmatpush1.msra.mxu0 0.0
        %1578 = vmatprep.subr.mxu0 0.0
        %1579 = vmatpush1.msra.mxu0 0.0
        %1580 = vmatprep.subr.mxu0 0.0
        %1581 = vmatpush1.msra.mxu0 0.0
        %1582 = vmatprep.subr.mxu0 0.0
        %1583 = vmatpush1.msra.mxu0 0.0
        %1584 = vmatprep.subr.mxu0 0.0
        %1585 = vmatpush1.msra.mxu0 0.0
        %1586 = vmatprep.subr.mxu0 0.0
        %1587 = vmatpush1.msra.mxu0 0.0
        %1588 = vmatprep.subr.mxu0 0.0
        %1589 = vmatpush1.msra.mxu0 0.0
        %1590 = vmatprep.subr.mxu0 0.0
        %1591 = vmatpush1.msra.mxu0 0.0
        %1592 = vmatprep.subr.mxu0 0.0
        %1593 = vmatpush1.msra.mxu0 0.0
        %1594 = vmatprep.subr.mxu0 0.0
        %1595 = vmatpush1.msra.mxu0 0.0
        %1596 = vmatprep.subr.mxu0 0.0
        %1597 = vmatpush1.msra.mxu0 0.0
        %1598 = vmatprep.subr.mxu0 0.0
        %1599 = vmatpush1.msra.mxu0 0.0
        %1600 = vmatprep.subr.mxu0 0.0
        %1601 = vmatpush1.msra.mxu0 0.0
        %1602 = vmatprep.subr.mxu0 0.0
        %1603 = vmatpush1.msra.mxu0 0.0
        %1604 = vmatprep.subr.mxu0 0.0
        %1605 = vmatpush1.msra.mxu0 0.0
        %1606 = vmatprep.subr.mxu0 0.0
        %1607 = vmatpush1.msra.mxu0 0.0
        %1608 = vmatprep.subr.mxu0 0.0
        %1609 = vmatpush1.msra.mxu0 0.0
        %1610 = vmatprep.subr.mxu0 0.0
        %1611 = vmatpush1.msra.mxu0 0.0
        %1612 = vmatprep.subr.mxu0 0.0
        %1613 = vmatpush1.msra.mxu0 0.0
        %1614 = vmatprep.subr.mxu0 0.0
        %1615 = vmatpush1.msra.mxu0 0.0
        %1616 = vmatprep.subr.mxu0 0.0
        %1617 = vmatpush1.msra.mxu0 0.0
        %1618 = vmatprep.subr.mxu0 0.0
        %1619 = vmatpush1.msra.mxu0 0.0
        %1620 = vmatprep.subr.mxu0 0.0
        %1621 = vmatpush1.msra.mxu0 0.0
        %1622 = vmatprep.subr.mxu0 0.0
        %1623 = vmatpush1.msra.mxu0 0.0
        %1624 = vmatprep.subr.mxu0 0.0
        %1625 = vmatpush1.msra.mxu0 0.0
        %1626 = vmatprep.subr.mxu0 0.0
        %1627 = vmatpush1.msra.mxu0 0.0
        %1628 = vmatprep.subr.mxu0 0.0
        %1629 = vmatpush1.msra.mxu0 0.0
        %1630 = vmatprep.subr.mxu0 0.0
        %1631 = vmatpush1.msra.mxu0 0.0
        %1632 = vmatprep.subr.mxu0 0.0
        %1633 = vmatpush1.msra.mxu0 0.0
        %1634 = vmatprep.mubr.f32.mxu0 0.0
        %1635 = vmatmul.mubr.f32.gmra.mrb[0].mxu0 %v1562
        %v1636 = vpop.f32.mrb[0].mxu0
        %v1637 = vadd.f32 0.0, %v1636
        %v1638 = vpop.f32.mrb[0].mxu0
        %1639 = vmatprep.mubr.f32.mxu0 0.0
        %1640 = vmatmul.mubr.f32.gmra.mrb[0].mxu0 %v1565
        %v1641 = vpop.f32.mrb[0].mxu0
        %v1642 = vadd.f32 0.0, %v1641
        %v1643 = vpop.f32.mrb[0].mxu0
        %1644 = vmatprep.mubr.f32.mxu0 0.0
        %1645 = vmatmul.mubr.f32.gmra.mrb[0].mxu0 %v1568
        %v1646 = vpop.f32.mrb[0].mxu0
        %v1647 = vadd.f32 0.0, %v1646
        %v1648 = vpop.f32.mrb[0].mxu0
        %1649 = vdwg.mxu0
        %1653 = vrot.lane.b32.xlu0 %v1637, 16
        %v1654 = vpop.permute.xlu0 %1653
        %1655 = vrot.lane.b32.xlu0 %v1642, 16
        %v1656 = vpop.permute.xlu0 %1655
        %1657 = vrot.lane.b32.xlu0 %v1647, 16
        %v1658 = vpop.permute.xlu0 %1657
        %vm1662 = vcmask 195712
        %1663 = vst.msk [vmem:[#allocation2] sm:$0xff] %vm1662, %v1654
        %1664 = vst.msk [vmem:[#allocation2 + $0x8] sm:$0xff] %vm1662, %v1656
        %1665 = vst.msk [vmem:[#allocation2 + $0x10] sm:$0xff] %vm1662, %v1658
        %1666 = vrot.lane.b32.xlu0 %v896, 104
        %v1667 = vpop.permute.xlu0 %1666
        %1668 = vrot.lane.b32.xlu0 %v901, 104
        %v1669 = vpop.permute.xlu0 %1668
        %1670 = vrot.lane.b32.xlu0 %v906, 104
        %v1671 = vpop.permute.xlu0 %1670
        %1672 = vrot.lane.b32.xlu0 %v896, 72
        %v1673 = vpop.permute.xlu0 %1672
        %1674 = vrot.lane.b32.xlu0 %v901, 72
        %v1675 = vpop.permute.xlu0 %1674
        %1676 = vrot.lane.b32.xlu0 %v906, 72
        %v1677 = vpop.permute.xlu0 %1676
        %v1678 = vsel %vm918, %v1667, 0
        %v1680 = vsel %vm918, %v1669, 0
        %v1682 = vsel %vm918, %v1671, 0
        %v1684 = vsel %vm918, %v1673, 0
        %v1686 = vsel %vm918, %v1675, 0
        %v1688 = vsel %vm918, %v1677, 0
        %1690 = vmatprep.subr.mxu0 0.0
        %1691 = vmatpush1.xpose.msra.mxu0 %v1684
        %1692 = vmatprep.subr.mxu0 0.0
        %1693 = vmatpush1.xpose.msra.mxu0 %v1686
        %1694 = vmatprep.subr.mxu0 0.0
        %1695 = vmatpush1.xpose.msra.mxu0 %v1688
        %1696 = vmatprep.subr.mxu0 0.0
        %1697 = vmatpush1.xpose.msra.mxu0 0.0
        %1698 = vmatprep.subr.mxu0 0.0
        %1699 = vmatpush1.xpose.msra.mxu0 0.0
        %1700 = vmatprep.subr.mxu0 0.0
        %1701 = vmatpush1.xpose.msra.mxu0 0.0
        %1702 = vmatprep.subr.mxu0 0.0
        %1703 = vmatpush1.xpose.msra.mxu0 0.0
        %1704 = vmatprep.subr.mxu0 0.0
        %1705 = vmatpush1.xpose.msra.mxu0 0.0
        %1706 = vmatprep.subr.mxu0 0.0
        %1707 = vmatpush1.xpose.msra.mxu0 0.0
        %1708 = vmatprep.subr.mxu0 0.0
        %1709 = vmatpush1.xpose.msra.mxu0 0.0
        %1710 = vmatprep.subr.mxu0 0.0
        %1711 = vmatpush1.xpose.msra.mxu0 0.0
        %1712 = vmatprep.subr.mxu0 0.0
        %1713 = vmatpush1.xpose.msra.mxu0 0.0
        %1714 = vmatprep.subr.mxu0 0.0
        %1715 = vmatpush1.xpose.msra.mxu0 0.0
        %1716 = vmatprep.subr.mxu0 0.0
        %1717 = vmatpush1.xpose.msra.mxu0 0.0
        %1718 = vmatprep.subr.mxu0 0.0
        %1719 = vmatpush1.xpose.msra.mxu0 0.0
        %1720 = vmatprep.subr.mxu0 0.0
        %1721 = vmatpush1.xpose.msra.mxu0 0.0
        %1722 = vmatprep.subr.mxu0 0.0
        %1723 = vmatpush1.xpose.msra.mxu0 0.0
        %1724 = vmatprep.subr.mxu0 0.0
        %1725 = vmatpush1.xpose.msra.mxu0 0.0
        %1726 = vmatprep.subr.mxu0 0.0
        %1727 = vmatpush1.xpose.msra.mxu0 0.0
        %1728 = vmatprep.subr.mxu0 0.0
        %1729 = vmatpush1.xpose.msra.mxu0 0.0
        %1730 = vmatprep.subr.mxu0 0.0
        %1731 = vmatpush1.xpose.msra.mxu0 0.0
        %1732 = vmatprep.subr.mxu0 0.0
        %1733 = vmatpush1.xpose.msra.mxu0 0.0
        %1734 = vmatprep.subr.mxu0 0.0
        %1735 = vmatpush1.xpose.msra.mxu0 0.0
        %1736 = vmatprep.subr.mxu0 0.0
        %1737 = vmatpush1.xpose.msra.mxu0 0.0
        %1738 = vmatprep.subr.mxu0 0.0
        %1739 = vmatpush1.xpose.msra.mxu0 0.0
        %1740 = vmatprep.subr.mxu0 0.0
        %1741 = vmatpush1.xpose.msra.mxu0 0.0
        %1742 = vmatprep.subr.mxu0 0.0
        %1743 = vmatpush1.xpose.msra.mxu0 0.0
        %1744 = vmatprep.subr.mxu0 0.0
        %1745 = vmatpush1.xpose.msra.mxu0 0.0
        %1746 = vmatprep.subr.mxu0 0.0
        %1747 = vmatpush1.xpose.msra.mxu0 0.0
        %1748 = vmatprep.subr.mxu0 0.0
        %1749 = vmatpush1.xpose.msra.mxu0 0.0
        %1750 = vmatprep.subr.mxu0 0.0
        %1751 = vmatpush1.xpose.msra.mxu0 0.0
        %1752 = vmatprep.subr.mxu0 0.0
        %1753 = vmatpush1.xpose.msra.mxu0 0.0
        %1754 = vmatprep.mubr.f32.mxu0 0.0
        %1755 = vmatmul.mubr.f32.gmra.mrb[0].mxu0 %v1678
        %v1756 = vpop.f32.mrb[0].mxu0
        %v1757 = vadd.f32 0.0, %v1756
        %v1758 = vpop.f32.mrb[0].mxu0
        %1759 = vmatprep.mubr.f32.mxu0 0.0
        %1760 = vmatmul.mubr.f32.gmra.mrb[0].mxu0 %v1680
        %v1761 = vpop.f32.mrb[0].mxu0
        %v1762 = vadd.f32 0.0, %v1761
        %v1763 = vpop.f32.mrb[0].mxu0
        %1764 = vmatprep.mubr.f32.mxu0 0.0
        %1765 = vmatmul.mubr.f32.gmra.mrb[0].mxu0 %v1682
        %v1766 = vpop.f32.mrb[0].mxu0
        %v1767 = vadd.f32 0.0, %v1766
        %v1768 = vpop.f32.mrb[0].mxu0
        %1769 = vdwg.mxu0
        %v1770 = vmul.f32 %v1757, 0.35355338
        %v1771 = vmul.f32 %v1762, 0.35355338
        %v1772 = vmul.f32 %v1767, 0.35355338
        %v1773 = vadd.f32 %v1770, %v643
        %v1774 = vadd.f32 %v1771, %v643
        %v1775 = vadd.f32 %v1772, %v643
        %v1776 = vsel %vm1017, %v1773, -inf
        %1777 = vmax.xlane.f32.xlu0 %v1776
        %v1778 = vpop.xlane.xlu0 %1777
        %v1779 = vsel %vm1017, %v1774, -inf
        %1780 = vmax.xlane.f32.xlu0 %v1779
        %v1781 = vpop.xlane.xlu0 %1780
        %v1782 = vsel %vm1017, %v1775, -inf
        %1783 = vmax.xlane.f32.xlu0 %v1782
        %v1784 = vpop.xlane.xlu0 %1783
        %v1785 = vsub.f32 %v1773, %v1778
        %v1786 = vsub.f32 %v1774, %v1781
        %v1787 = vsub.f32 %v1775, %v1784
        %v1788 = vmul.f32 %v1785, 1.442695
        %v1789 = vpow.pop %v1788
        %v1790 = vmul.f32 %v1786, 1.442695
        %v1791 = vpow.pop %v1790
        %v1792 = vmul.f32 %v1787, 1.442695
        %v1793 = vpow.pop %v1792
        %v1794 = vsel %vm1017, %v1789, 0.0
        %1795 = vadd.xlane.f32.xlu0 %v1794
        %v1796 = vpop.xlane.xlu0 %1795
        %v1797 = vsel %vm1017, %v1791, 0.0
        %1798 = vadd.xlane.f32.xlu0 %v1797
        %v1799 = vpop.xlane.xlu0 %1798
        %v1800 = vsel %vm1017, %v1793, 0.0
        %1801 = vadd.xlane.f32.xlu0 %v1800
        %v1802 = vpop.xlane.xlu0 %1801
        %v1803 = vrcp.pop %v1796
        %v1804 = vmul.f32 %v1789, %v1803
        %v1805 = vrcp.pop %v1799
        %v1806 = vmul.f32 %v1791, %v1805
        %v1807 = vrcp.pop %v1802
        %v1808 = vmul.f32 %v1793, %v1807
        %1809 = vrot.lane.b32.xlu0 %v896, 40
        %v1810 = vpop.permute.xlu0 %1809
        %1811 = vrot.lane.b32.xlu0 %v901, 40
        %v1812 = vpop.permute.xlu0 %1811
        %1813 = vrot.lane.b32.xlu0 %v906, 40
        %v1814 = vpop.permute.xlu0 %1813
        %v1819 = vsel %vm1017, %v1804, 0
        %v1822 = vsel %vm1017, %v1806, 0
        %v1825 = vsel %vm1017, %v1808, 0
        %1827 = vmatprep.subr.mxu0 0.0
        %1828 = vmatpush1.msra.mxu0 %v1810
        %1829 = vmatprep.subr.mxu0 0.0
        %1830 = vmatpush1.msra.mxu0 %v1812
        %1831 = vmatprep.subr.mxu0 0.0
        %1832 = vmatpush1.msra.mxu0 %v1814
        %1833 = vmatprep.subr.mxu0 0.0
        %1834 = vmatpush1.msra.mxu0 0.0
        %1835 = vmatprep.subr.mxu0 0.0
        %1836 = vmatpush1.msra.mxu0 0.0
        %1837 = vmatprep.subr.mxu0 0.0
        %1838 = vmatpush1.msra.mxu0 0.0
        %1839 = vmatprep.subr.mxu0 0.0
        %1840 = vmatpush1.msra.mxu0 0.0
        %1841 = vmatprep.subr.mxu0 0.0
        %1842 = vmatpush1.msra.mxu0 0.0
        %1843 = vmatprep.subr.mxu0 0.0
        %1844 = vmatpush1.msra.mxu0 0.0
        %1845 = vmatprep.subr.mxu0 0.0
        %1846 = vmatpush1.msra.mxu0 0.0
        %1847 = vmatprep.subr.mxu0 0.0
        %1848 = vmatpush1.msra.mxu0 0.0
        %1849 = vmatprep.subr.mxu0 0.0
        %1850 = vmatpush1.msra.mxu0 0.0
        %1851 = vmatprep.subr.mxu0 0.0
        %1852 = vmatpush1.msra.mxu0 0.0
        %1853 = vmatprep.subr.mxu0 0.0
        %1854 = vmatpush1.msra.mxu0 0.0
        %1855 = vmatprep.subr.mxu0 0.0
        %1856 = vmatpush1.msra.mxu0 0.0
        %1857 = vmatprep.subr.mxu0 0.0
        %1858 = vmatpush1.msra.mxu0 0.0
        %1859 = vmatprep.subr.mxu0 0.0
        %1860 = vmatpush1.msra.mxu0 0.0
        %1861 = vmatprep.subr.mxu0 0.0
        %1862 = vmatpush1.msra.mxu0 0.0
        %1863 = vmatprep.subr.mxu0 0.0
        %1864 = vmatpush1.msra.mxu0 0.0
        %1865 = vmatprep.subr.mxu0 0.0
        %1866 = vmatpush1.msra.mxu0 0.0
        %1867 = vmatprep.subr.mxu0 0.0
        %1868 = vmatpush1.msra.mxu0 0.0
        %1869 = vmatprep.subr.mxu0 0.0
        %1870 = vmatpush1.msra.mxu0 0.0
        %1871 = vmatprep.subr.mxu0 0.0
        %1872 = vmatpush1.msra.mxu0 0.0
        %1873 = vmatprep.subr.mxu0 0.0
        %1874 = vmatpush1.msra.mxu0 0.0
        %1875 = vmatprep.subr.mxu0 0.0
        %1876 = vmatpush1.msra.mxu0 0.0
        %1877 = vmatprep.subr.mxu0 0.0
        %1878 = vmatpush1.msra.mxu0 0.0
        %1879 = vmatprep.subr.mxu0 0.0
        %1880 = vmatpush1.msra.mxu0 0.0
        %1881 = vmatprep.subr.mxu0 0.0
        %1882 = vmatpush1.msra.mxu0 0.0
        %1883 = vmatprep.subr.mxu0 0.0
        %1884 = vmatpush1.msra.mxu0 0.0
        %1885 = vmatprep.subr.mxu0 0.0
        %1886 = vmatpush1.msra.mxu0 0.0
        %1887 = vmatprep.subr.mxu0 0.0
        %1888 = vmatpush1.msra.mxu0 0.0
        %1889 = vmatprep.subr.mxu0 0.0
        %1890 = vmatpush1.msra.mxu0 0.0
        %1891 = vmatprep.mubr.f32.mxu0 0.0
        %1892 = vmatmul.mubr.f32.gmra.mrb[0].mxu0 %v1819
        %v1893 = vpop.f32.mrb[0].mxu0
        %v1894 = vadd.f32 0.0, %v1893
        %v1895 = vpop.f32.mrb[0].mxu0
        %1896 = vmatprep.mubr.f32.mxu0 0.0
        %1897 = vmatmul.mubr.f32.gmra.mrb[0].mxu0 %v1822
        %v1898 = vpop.f32.mrb[0].mxu0
        %v1899 = vadd.f32 0.0, %v1898
        %v1900 = vpop.f32.mrb[0].mxu0
        %1901 = vmatprep.mubr.f32.mxu0 0.0
        %1902 = vmatmul.mubr.f32.gmra.mrb[0].mxu0 %v1825
        %v1903 = vpop.f32.mrb[0].mxu0
        %v1904 = vadd.f32 0.0, %v1903
        %v1905 = vpop.f32.mrb[0].mxu0
        %1906 = vdwg.mxu0
        %1910 = vrot.lane.b32.xlu0 %v1894, 24
        %v1911 = vpop.permute.xlu0 %1910
        %1912 = vrot.lane.b32.xlu0 %v1899, 24
        %v1913 = vpop.permute.xlu0 %1912
        %1914 = vrot.lane.b32.xlu0 %v1904, 24
        %v1915 = vpop.permute.xlu0 %1914
        %vm1919 = vcmask 261312
        %1920 = vst.msk [vmem:[#allocation2] sm:$0xff] %vm1919, %v1911
        %1921 = vst.msk [vmem:[#allocation2 + $0x8] sm:$0xff] %vm1919, %v1913
        %1922 = vst.msk [vmem:[#allocation2 + $0x10] sm:$0xff] %vm1919, %v1915
        %v1923 = vld [vmem:[#allocation2] sm:$0xff]
        %v1924 = vld [vmem:[#allocation2 + $0x8] sm:$0xff]
        %v1925 = vld [vmem:[#allocation2 + $0x10] sm:$0xff]
        %v1926 = vld [vmem:[%s7] sm:$0xff]
        %v1927 = vld [vmem:[%s7 + $0x8] sm:$0xff]
        %v1928 = vld [vmem:[%s7 + $0x10] sm:$0xff]
        %v1929 = vld [vmem:[%s7 + $0x18] sm:$0xff]
        %v1930 = vld [vmem:[%s8] sm:$0x1]
        %v1932 = vlaneseq
        %v1933 = vshrl.u32 %v1932, 7
        %v1934 = vsub.s32 0, %v1933
        %v1935 = vrot.slane %v1930, %v1934
        %v1938 = vsel %vm750, %v1923, 0
        %v1941 = vsel %vm750, %v1924, 0
        %v1944 = vsel %vm750, %v1925, 0
        %1946 = vmatprep.subr.mxu0 0.0
        %1947 = vmatpush1.msra.mxu0 %v1926
        %1948 = vmatprep.subr.mxu0 0.0
        %1949 = vmatpush1.msra.mxu0 %v1927
        %1950 = vmatprep.subr.mxu0 0.0
        %1951 = vmatpush1.msra.mxu0 %v1928
        %1952 = vmatprep.subr.mxu0 0.0
        %1953 = vmatpush1.msra.mxu0 %v1929
        %1954 = vmatprep.subr.mxu0 0.0
        %1955 = vmatpush1.msra.mxu0 0.0
        %1956 = vmatprep.subr.mxu0 0.0
        %1957 = vmatpush1.msra.mxu0 0.0
        %1958 = vmatprep.subr.mxu0 0.0
        %1959 = vmatpush1.msra.mxu0 0.0
        %1960 = vmatprep.subr.mxu0 0.0
        %1961 = vmatpush1.msra.mxu0 0.0
        %1962 = vmatprep.subr.mxu0 0.0
        %1963 = vmatpush1.msra.mxu0 0.0
        %1964 = vmatprep.subr.mxu0 0.0
        %1965 = vmatpush1.msra.mxu0 0.0
        %1966 = vmatprep.subr.mxu0 0.0
        %1967 = vmatpush1.msra.mxu0 0.0
        %1968 = vmatprep.subr.mxu0 0.0
        %1969 = vmatpush1.msra.mxu0 0.0
        %1970 = vmatprep.subr.mxu0 0.0
        %1971 = vmatpush1.msra.mxu0 0.0
        %1972 = vmatprep.subr.mxu0 0.0
        %1973 = vmatpush1.msra.mxu0 0.0
        %1974 = vmatprep.subr.mxu0 0.0
        %1975 = vmatpush1.msra.mxu0 0.0
        %1976 = vmatprep.subr.mxu0 0.0
        %1977 = vmatpush1.msra.mxu0 0.0
        %1978 = vmatprep.subr.mxu0 0.0
        %1979 = vmatpush1.msra.mxu0 0.0
        %1980 = vmatprep.subr.mxu0 0.0
        %1981 = vmatpush1.msra.mxu0 0.0
        %1982 = vmatprep.subr.mxu0 0.0
        %1983 = vmatpush1.msra.mxu0 0.0
        %1984 = vmatprep.subr.mxu0 0.0
        %1985 = vmatpush1.msra.mxu0 0.0
        %1986 = vmatprep.subr.mxu0 0.0
        %1987 = vmatpush1.msra.mxu0 0.0
        %1988 = vmatprep.subr.mxu0 0.0
        %1989 = vmatpush1.msra.mxu0 0.0
        %1990 = vmatprep.subr.mxu0 0.0
        %1991 = vmatpush1.msra.mxu0 0.0
        %1992 = vmatprep.subr.mxu0 0.0
        %1993 = vmatpush1.msra.mxu0 0.0
        %1994 = vmatprep.subr.mxu0 0.0
        %1995 = vmatpush1.msra.mxu0 0.0
        %1996 = vmatprep.subr.mxu0 0.0
        %1997 = vmatpush1.msra.mxu0 0.0
        %1998 = vmatprep.subr.mxu0 0.0
        %1999 = vmatpush1.msra.mxu0 0.0
        %2000 = vmatprep.subr.mxu0 0.0
        %2001 = vmatpush1.msra.mxu0 0.0
        %2002 = vmatprep.subr.mxu0 0.0
        %2003 = vmatpush1.msra.mxu0 0.0
        %2004 = vmatprep.subr.mxu0 0.0
        %2005 = vmatpush1.msra.mxu0 0.0
        %2006 = vmatprep.subr.mxu0 0.0
        %2007 = vmatpush1.msra.mxu0 0.0
        %2008 = vmatprep.subr.mxu0 0.0
        %2009 = vmatpush1.msra.mxu0 0.0
        %2010 = vmatprep.mubr.f32.mxu0 0.0
        %2011 = vmatmul.mubr.f32.gmra.mrb[0].mxu0 %v1938
        %v2012 = vpop.f32.mrb[0].mxu0
        %v2013 = vadd.f32 %v1935, %v2012
        %v2014 = vpop.f32.mrb[0].mxu0
        %2015 = vmatprep.mubr.f32.mxu0 0.0
        %2016 = vmatmul.mubr.f32.gmra.mrb[0].mxu0 %v1941
        %v2017 = vpop.f32.mrb[0].mxu0
        %v2018 = vadd.f32 %v1935, %v2017
        %v2019 = vpop.f32.mrb[0].mxu0
        %2020 = vmatprep.mubr.f32.mxu0 0.0
        %2021 = vmatmul.mubr.f32.gmra.mrb[0].mxu0 %v1944
        %v2022 = vpop.f32.mrb[0].mxu0
        %v2023 = vadd.f32 %v1935, %v2022
        %v2024 = vpop.f32.mrb[0].mxu0
        %2025 = vdwg.mxu0
        %v2026 = vadd.f32 %v735, %v2013
        %v2027 = vadd.f32 %v740, %v2018
        %v2028 = vadd.f32 %v745, %v2023
        %v2029 = vld [vmem:[%s9] sm:$0x1]
        %v2030 = vld [vmem:[%s10] sm:$0x1]
        %v2031 = vsel %vm750, %v2026, 0.0
        %2032 = vadd.xlane.f32.xlu0 %v2031
        %v2033 = vpop.xlane.xlu0 %2032
        %v2034 = vsel %vm750, %v2027, 0.0
        %2035 = vadd.xlane.f32.xlu0 %v2034
        %v2036 = vpop.xlane.xlu0 %2035
        %v2037 = vsel %vm750, %v2028, 0.0
        %2038 = vadd.xlane.f32.xlu0 %v2037
        %v2039 = vpop.xlane.xlu0 %2038
        %v2040 = vmul.f32 %v2033, %v760
        %v2041 = vmul.f32 %v2036, %v760
        %v2042 = vmul.f32 %v2039, %v760
        %v2043 = vsub.f32 %v2026, %v2040
        %v2044 = vsub.f32 %v2027, %v2041
        %v2045 = vsub.f32 %v2028, %v2042
        %v2046 = vmul.f32 %v2043, %v2043
        %v2047 = vmul.f32 %v2044, %v2044
        %v2048 = vmul.f32 %v2045, %v2045
        %v2049 = vsel %vm750, %v2046, 0.0
        %2050 = vadd.xlane.f32.xlu0 %v2049
        %v2051 = vpop.xlane.xlu0 %2050
        %v2052 = vsel %vm750, %v2047, 0.0
        %2053 = vadd.xlane.f32.xlu0 %v2052
        %v2054 = vpop.xlane.xlu0 %2053
        %v2055 = vsel %vm750, %v2048, 0.0
        %2056 = vadd.xlane.f32.xlu0 %v2055
        %v2057 = vpop.xlane.xlu0 %2056
        %v2058 = vmul.f32 %v2051, %v760
        %v2059 = vmul.f32 %v2054, %v760
        %v2060 = vmul.f32 %v2057, %v760
        %v2061 = vadd.f32 %v2058, 1e-06
        %v2062 = vadd.f32 %v2059, 1e-06
        %v2063 = vadd.f32 %v2060, 1e-06
        %v2064 = vrsqrt.pop %v2061
        %v2065 = vrsqrt.pop %v2062
        %v2066 = vrsqrt.pop %v2063
        %v2067 = vmul.f32 %v2043, %v2064
        %v2068 = vmul.f32 %v2044, %v2065
        %v2069 = vmul.f32 %v2045, %v2066
        %v2071 = vlaneseq
        %v2072 = vshrl.u32 %v2071, 7
        %v2073 = vsub.s32 0, %v2072
        %v2074 = vrot.slane %v2029, %v2073
        %v2076 = vmul.f32 %v2067, %v2074
        %v2077 = vmul.f32 %v2068, %v2074
        %v2078 = vmul.f32 %v2069, %v2074
        %v2080 = vlaneseq
        %v2081 = vshrl.u32 %v2080, 7
        %v2082 = vsub.s32 0, %v2081
        %v2083 = vrot.slane %v2030, %v2082
        %v2085 = vadd.f32 %v2076, %v2083
        %v2086 = vadd.f32 %v2077, %v2083
        %v2087 = vadd.f32 %v2078, %v2083
        %v2088 = vld [vmem:[%s11] sm:$0xff]
        %v2089 = vld [vmem:[%s11 + $0x8] sm:$0xff]
        %v2090 = vld [vmem:[%s11 + $0x10] sm:$0xff]
        %v2091 = vld [vmem:[%s11 + $0x18] sm:$0xff]
        %v2092 = vld [vmem:[%s12] sm:$0x1]
        %v2094 = vlaneseq
        %v2095 = vshrl.u32 %v2094, 7
        %v2096 = vsub.s32 0, %v2095
        %v2097 = vrot.slane %v2092, %v2096
        %v2100 = vsel %vm750, %v2085, 0
        %v2103 = vsel %vm750, %v2086, 0
        %v2106 = vsel %vm750, %v2087, 0
        %2108 = vmatprep.subr.mxu0 0.0
        %2109 = vmatpush1.msra.mxu0 %v2088
        %2110 = vmatprep.subr.mxu0 0.0
        %2111 = vmatpush1.msra.mxu0 %v2089
        %2112 = vmatprep.subr.mxu0 0.0
        %2113 = vmatpush1.msra.mxu0 %v2090
        %2114 = vmatprep.subr.mxu0 0.0
        %2115 = vmatpush1.msra.mxu0 %v2091
        %2116 = vmatprep.subr.mxu0 0.0
        %2117 = vmatpush1.msra.mxu0 0.0
        %2118 = vmatprep.subr.mxu0 0.0
        %2119 = vmatpush1.msra.mxu0 0.0
        %2120 = vmatprep.subr.mxu0 0.0
        %2121 = vmatpush1.msra.mxu0 0.0
        %2122 = vmatprep.subr.mxu0 0.0
        %2123 = vmatpush1.msra.mxu0 0.0
        %2124 = vmatprep.subr.mxu0 0.0
        %2125 = vmatpush1.msra.mxu0 0.0
        %2126 = vmatprep.subr.mxu0 0.0
        %2127 = vmatpush1.msra.mxu0 0.0
        %2128 = vmatprep.subr.mxu0 0.0
        %2129 = vmatpush1.msra.mxu0 0.0
        %2130 = vmatprep.subr.mxu0 0.0
        %2131 = vmatpush1.msra.mxu0 0.0
        %2132 = vmatprep.subr.mxu0 0.0
        %2133 = vmatpush1.msra.mxu0 0.0
        %2134 = vmatprep.subr.mxu0 0.0
        %2135 = vmatpush1.msra.mxu0 0.0
        %2136 = vmatprep.subr.mxu0 0.0
        %2137 = vmatpush1.msra.mxu0 0.0
        %2138 = vmatprep.subr.mxu0 0.0
        %2139 = vmatpush1.msra.mxu0 0.0
        %2140 = vmatprep.subr.mxu0 0.0
        %2141 = vmatpush1.msra.mxu0 0.0
        %2142 = vmatprep.subr.mxu0 0.0
        %2143 = vmatpush1.msra.mxu0 0.0
        %2144 = vmatprep.subr.mxu0 0.0
        %2145 = vmatpush1.msra.mxu0 0.0
        %2146 = vmatprep.subr.mxu0 0.0
        %2147 = vmatpush1.msra.mxu0 0.0
        %2148 = vmatprep.subr.mxu0 0.0
        %2149 = vmatpush1.msra.mxu0 0.0
        %2150 = vmatprep.subr.mxu0 0.0
        %2151 = vmatpush1.msra.mxu0 0.0
        %2152 = vmatprep.subr.mxu0 0.0
        %2153 = vmatpush1.msra.mxu0 0.0
        %2154 = vmatprep.subr.mxu0 0.0
        %2155 = vmatpush1.msra.mxu0 0.0
        %2156 = vmatprep.subr.mxu0 0.0
        %2157 = vmatpush1.msra.mxu0 0.0
        %2158 = vmatprep.subr.mxu0 0.0
        %2159 = vmatpush1.msra.mxu0 0.0
        %2160 = vmatprep.subr.mxu0 0.0
        %2161 = vmatpush1.msra.mxu0 0.0
        %2162 = vmatprep.subr.mxu0 0.0
        %2163 = vmatpush1.msra.mxu0 0.0
        %2164 = vmatprep.subr.mxu0 0.0
        %2165 = vmatpush1.msra.mxu0 0.0
        %2166 = vmatprep.subr.mxu0 0.0
        %2167 = vmatpush1.msra.mxu0 0.0
        %2168 = vmatprep.subr.mxu0 0.0
        %2169 = vmatpush1.msra.mxu0 0.0
        %2170 = vmatprep.subr.mxu0 0.0
        %2171 = vmatpush1.msra.mxu0 0.0
        %2172 = vmatprep.mubr.f32.mxu0 0.0
        %2173 = vmatmul.mubr.f32.gmra.mrb[0].mxu0 %v2100
        %v2174 = vpop.f32.mrb[0].mxu0
        %v2175 = vadd.f32 %v2097, %v2174
        %v2176 = vpop.f32.mrb[0].mxu0
        %2177 = vmatprep.mubr.f32.mxu0 0.0
        %2178 = vmatmul.mubr.f32.gmra.mrb[0].mxu0 %v2103
        %v2179 = vpop.f32.mrb[0].mxu0
        %v2180 = vadd.f32 %v2097, %v2179
        %v2181 = vpop.f32.mrb[0].mxu0
        %2182 = vmatprep.mubr.f32.mxu0 0.0
        %2183 = vmatmul.mubr.f32.gmra.mrb[0].mxu0 %v2106
        %v2184 = vpop.f32.mrb[0].mxu0
        %v2185 = vadd.f32 %v2097, %v2184
        %v2186 = vpop.f32.mrb[0].mxu0
        %2187 = vdwg.mxu0
        %v2188 = vmul.f32 %v2175, %v2175
        %v2189 = vmul.f32 %v2180, %v2180
        %v2190 = vmul.f32 %v2185, %v2185
        %v2191 = vmul.f32 %v2175, %v2188
        %v2192 = vmul.f32 %v2180, %v2189
        %v2193 = vmul.f32 %v2185, %v2190
        %v2194 = vmul.f32 %v2191, 0.044715
        %v2195 = vmul.f32 %v2192, 0.044715
        %v2196 = vmul.f32 %v2193, 0.044715
        %v2197 = vadd.f32 %v2175, %v2194
        %v2198 = vadd.f32 %v2180, %v2195
        %v2199 = vadd.f32 %v2185, %v2196
        %v2200 = vmul.f32 %v2197, 0.7978846
        %v2201 = vmul.f32 %v2198, 0.7978846
        %v2202 = vmul.f32 %v2199, 0.7978846
        %v2203 = vtanh.pop %v2200
        %v2204 = vtanh.pop %v2201
        %v2205 = vtanh.pop %v2202
        %v2206 = vadd.f32 %v2203, 1.0
        %v2207 = vadd.f32 %v2204, 1.0
        %v2208 = vadd.f32 %v2205, 1.0
        %v2209 = vmul.f32 %v2206, 0.5
        %v2210 = vmul.f32 %v2207, 0.5
        %v2211 = vmul.f32 %v2208, 0.5
        %v2212 = vmul.f32 %v2175, %v2209
        %v2213 = vmul.f32 %v2180, %v2210
        %v2214 = vmul.f32 %v2185, %v2211
        %v2215 = vld [vmem:[%s13] sm:$0xff]
        %v2216 = vld [vmem:[%s13 + $0x8] sm:$0xff]
        %v2217 = vld [vmem:[%s13 + $0x10] sm:$0xff]
        %v2218 = vld [vmem:[%s13 + $0x18] sm:$0xff]
        %v2219 = vld [vmem:[%s13 + $0x20] sm:$0xff]
        %v2220 = vld [vmem:[%s13 + $0x28] sm:$0xff]
        %v2221 = vld [vmem:[%s13 + $0x30] sm:$0xff]
        %v2222 = vld [vmem:[%s13 + $0x38] sm:$0xff]
        %v2223 = vld [vmem:[%s13 + $0x40] sm:$0xff]
        %v2224 = vld [vmem:[%s13 + $0x48] sm:$0xff]
        %v2225 = vld [vmem:[%s13 + $0x50] sm:$0xff]
        %v2226 = vld [vmem:[%s13 + $0x58] sm:$0xff]
        %v2227 = vld [vmem:[%s13 + $0x60] sm:$0xff]
        %v2228 = vld [vmem:[%s13 + $0x68] sm:$0xff]
        %v2229 = vld [vmem:[%s13 + $0x70] sm:$0xff]
        %v2230 = vld [vmem:[%s13 + $0x78] sm:$0xff]
        %v2231 = vld [vmem:[%s14] sm:$0x1]
        %v2233 = vlaneseq
        %v2234 = vshrl.u32 %v2233, 7
        %v2235 = vsub.s32 0, %v2234
        %v2236 = vrot.slane %v2231, %v2235
        %2238 = vmatprep.subr.mxu0 0.0
        %2239 = vmatpush1.msra.mxu0 %v2215
        %2240 = vmatprep.subr.mxu0 0.0
        %2241 = vmatpush1.msra.mxu0 %v2216
        %2242 = vmatprep.subr.mxu0 0.0
        %2243 = vmatpush1.msra.mxu0 %v2217
        %2244 = vmatprep.subr.mxu0 0.0
        %2245 = vmatpush1.msra.mxu0 %v2218
        %2246 = vmatprep.subr.mxu0 0.0
        %2247 = vmatpush1.msra.mxu0 %v2219
        %2248 = vmatprep.subr.mxu0 0.0
        %2249 = vmatpush1.msra.mxu0 %v2220
        %2250 = vmatprep.subr.mxu0 0.0
        %2251 = vmatpush1.msra.mxu0 %v2221
        %2252 = vmatprep.subr.mxu0 0.0
        %2253 = vmatpush1.msra.mxu0 %v2222
        %2254 = vmatprep.subr.mxu0 0.0
        %2255 = vmatpush1.msra.mxu0 %v2223
        %2256 = vmatprep.subr.mxu0 0.0
        %2257 = vmatpush1.msra.mxu0 %v2224
        %2258 = vmatprep.subr.mxu0 0.0
        %2259 = vmatpush1.msra.mxu0 %v2225
        %2260 = vmatprep.subr.mxu0 0.0
        %2261 = vmatpush1.msra.mxu0 %v2226
        %2262 = vmatprep.subr.mxu0 0.0
        %2263 = vmatpush1.msra.mxu0 %v2227
        %2264 = vmatprep.subr.mxu0 0.0
        %2265 = vmatpush1.msra.mxu0 %v2228
        %2266 = vmatprep.subr.mxu0 0.0
        %2267 = vmatpush1.msra.mxu0 %v2229
        %2268 = vmatprep.subr.mxu0 0.0
        %2269 = vmatpush1.msra.mxu0 %v2230
        %2270 = vmatprep.subr.mxu0 0.0
        %2271 = vmatpush1.msra.mxu0 0.0
        %2272 = vmatprep.subr.mxu0 0.0
        %2273 = vmatpush1.msra.mxu0 0.0
        %2274 = vmatprep.subr.mxu0 0.0
        %2275 = vmatpush1.msra.mxu0 0.0
        %2276 = vmatprep.subr.mxu0 0.0
        %2277 = vmatpush1.msra.mxu0 0.0
        %2278 = vmatprep.subr.mxu0 0.0
        %2279 = vmatpush1.msra.mxu0 0.0
        %2280 = vmatprep.subr.mxu0 0.0
        %2281 = vmatpush1.msra.mxu0 0.0
        %2282 = vmatprep.subr.mxu0 0.0
        %2283 = vmatpush1.msra.mxu0 0.0
        %2284 = vmatprep.subr.mxu0 0.0
        %2285 = vmatpush1.msra.mxu0 0.0
        %2286 = vmatprep.subr.mxu0 0.0
        %2287 = vmatpush1.msra.mxu0 0.0
        %2288 = vmatprep.subr.mxu0 0.0
        %2289 = vmatpush1.msra.mxu0 0.0
        %2290 = vmatprep.subr.mxu0 0.0
        %2291 = vmatpush1.msra.mxu0 0.0
        %2292 = vmatprep.subr.mxu0 0.0
        %2293 = vmatpush1.msra.mxu0 0.0
        %2294 = vmatprep.subr.mxu0 0.0
        %2295 = vmatpush1.msra.mxu0 0.0
        %2296 = vmatprep.subr.mxu0 0.0
        %2297 = vmatpush1.msra.mxu0 0.0
        %2298 = vmatprep.subr.mxu0 0.0
        %2299 = vmatpush1.msra.mxu0 0.0
        %2300 = vmatprep.subr.mxu0 0.0
        %2301 = vmatpush1.msra.mxu0 0.0
        %2302 = vmatprep.mubr.f32.mxu0 0.0
        %2303 = vmatmul.mubr.f32.gmra.mrb[0].mxu0 %v2212
        %v2304 = vpop.f32.mrb[0].mxu0
        %v2305 = vadd.f32 %v2236, %v2304
        %v2306 = vpop.f32.mrb[0].mxu0
        %2307 = vmatprep.mubr.f32.mxu0 0.0
        %2308 = vmatmul.mubr.f32.gmra.mrb[0].mxu0 %v2213
        %v2309 = vpop.f32.mrb[0].mxu0
        %v2310 = vadd.f32 %v2236, %v2309
        %v2311 = vpop.f32.mrb[0].mxu0
        %2312 = vmatprep.mubr.f32.mxu0 0.0
        %2313 = vmatmul.mubr.f32.gmra.mrb[0].mxu0 %v2214
        %v2314 = vpop.f32.mrb[0].mxu0
        %v2315 = vadd.f32 %v2236, %v2314
        %v2316 = vpop.f32.mrb[0].mxu0
        %2317 = vdwg.mxu0
        %v2318 = vadd.f32 %v2026, %v2305
        %v2319 = vadd.f32 %v2027, %v2310
        %v2320 = vadd.f32 %v2028, %v2315
        %2321 = vst.msk [vmem:[%s639] sm:$0xff] %vm750, %v2318
        %2322 = vst.msk [vmem:[%s639 + $0x8] sm:$0xff] %vm750, %v2319
        %2323 = vst.msk [vmem:[%s639 + $0x10] sm:$0xff] %vm750, %v2320
        %s2324 = scalar_lea.vmem %s3, 1
        %v2325 = vld [vmem:[%s2324] sm:$0x1]
        %s2326 = scalar_lea.vmem %s4, 1
        %v2327 = vld [vmem:[%s2326] sm:$0x1]
        %v2328 = vsel %vm750, %v2318, 0.0
        %2329 = vadd.xlane.f32.xlu0 %v2328
        %v2330 = vpop.xlane.xlu0 %2329
        %v2331 = vsel %vm750, %v2319, 0.0
        %2332 = vadd.xlane.f32.xlu0 %v2331
        %v2333 = vpop.xlane.xlu0 %2332
        %v2334 = vsel %vm750, %v2320, 0.0
        %2335 = vadd.xlane.f32.xlu0 %v2334
        %v2336 = vpop.xlane.xlu0 %2335
        %v2337 = vmul.f32 %v2330, %v760
        %v2338 = vmul.f32 %v2333, %v760
        %v2339 = vmul.f32 %v2336, %v760
        %v2340 = vsub.f32 %v2318, %v2337
        %v2341 = vsub.f32 %v2319, %v2338
        %v2342 = vsub.f32 %v2320, %v2339
        %v2343 = vmul.f32 %v2340, %v2340
        %v2344 = vmul.f32 %v2341, %v2341
        %v2345 = vmul.f32 %v2342, %v2342
        %v2346 = vsel %vm750, %v2343, 0.0
        %2347 = vadd.xlane.f32.xlu0 %v2346
        %v2348 = vpop.xlane.xlu0 %2347
        %v2349 = vsel %vm750, %v2344, 0.0
        %2350 = vadd.xlane.f32.xlu0 %v2349
        %v2351 = vpop.xlane.xlu0 %2350
        %v2352 = vsel %vm750, %v2345, 0.0
        %2353 = vadd.xlane.f32.xlu0 %v2352
        %v2354 = vpop.xlane.xlu0 %2353
        %v2355 = vmul.f32 %v2348, %v760
        %v2356 = vmul.f32 %v2351, %v760
        %v2357 = vmul.f32 %v2354, %v760
        %v2358 = vadd.f32 %v2355, 1e-06
        %v2359 = vadd.f32 %v2356, 1e-06
        %v2360 = vadd.f32 %v2357, 1e-06
        %v2361 = vrsqrt.pop %v2358
        %v2362 = vrsqrt.pop %v2359
        %v2363 = vrsqrt.pop %v2360
        %v2364 = vmul.f32 %v2340, %v2361
        %v2365 = vmul.f32 %v2341, %v2362
        %v2366 = vmul.f32 %v2342, %v2363
        %v2368 = vlaneseq
        %v2369 = vshrl.u32 %v2368, 7
        %v2370 = vsub.s32 0, %v2369
        %v2371 = vrot.slane %v2325, %v2370
        %v2373 = vmul.f32 %v2364, %v2371
        %v2374 = vmul.f32 %v2365, %v2371
        %v2375 = vmul.f32 %v2366, %v2371
        %v2377 = vlaneseq
        %v2378 = vshrl.u32 %v2377, 7
        %v2379 = vsub.s32 0, %v2378
        %v2380 = vrot.slane %v2327, %v2379
        %v2382 = vadd.f32 %v2373, %v2380
        %v2383 = vadd.f32 %v2374, %v2380
        %v2384 = vadd.f32 %v2375, %v2380
        %s2385 = scalar_lea.vmem %s5, 32
        %v2386 = vld [vmem:[%s2385] sm:$0xff]
        %v2387 = vld [vmem:[%s2385 + $0x8] sm:$0xff]
        %v2388 = vld [vmem:[%s2385 + $0x10] sm:$0xff]
        %v2389 = vld [vmem:[%s2385 + $0x18] sm:$0xff]
        %s2390 = scalar_lea.vmem %s6, 1
        %v2391 = vld [vmem:[%s2390] sm:$0x1]
        %v2393 = vlaneseq
        %v2394 = vshrl.u32 %v2393, 7
        %v2395 = vsub.s32 0, %v2394
        %v2396 = vrot.slane %v2391, %v2395
        %v2399 = vsel %vm750, %v2382, 0
        %v2402 = vsel %vm750, %v2383, 0
        %v2405 = vsel %vm750, %v2384, 0
        %2407 = vmatprep.subr.mxu0 0.0
        %2408 = vmatpush1.msra.mxu0 %v2386
        %2409 = vmatprep.subr.mxu0 0.0
        %2410 = vmatpush1.msra.mxu0 %v2387
        %2411 = vmatprep.subr.mxu0 0.0
        %2412 = vmatpush1.msra.mxu0 %v2388
        %2413 = vmatprep.subr.mxu0 0.0
        %2414 = vmatpush1.msra.mxu0 %v2389
        %2415 = vmatprep.subr.mxu0 0.0
        %2416 = vmatpush1.msra.mxu0 0.0
        %2417 = vmatprep.subr.mxu0 0.0
        %2418 = vmatpush1.msra.mxu0 0.0
        %2419 = vmatprep.subr.mxu0 0.0
        %2420 = vmatpush1.msra.mxu0 0.0
        %2421 = vmatprep.subr.mxu0 0.0
        %2422 = vmatpush1.msra.mxu0 0.0
        %2423 = vmatprep.subr.mxu0 0.0
        %2424 = vmatpush1.msra.mxu0 0.0
        %2425 = vmatprep.subr.mxu0 0.0
        %2426 = vmatpush1.msra.mxu0 0.0
        %2427 = vmatprep.subr.mxu0 0.0
        %2428 = vmatpush1.msra.mxu0 0.0
        %2429 = vmatprep.subr.mxu0 0.0
        %2430 = vmatpush1.msra.mxu0 0.0
        %2431 = vmatprep.subr.mxu0 0.0
        %2432 = vmatpush1.msra.mxu0 0.0
        %2433 = vmatprep.subr.mxu0 0.0
        %2434 = vmatpush1.msra.mxu0 0.0
        %2435 = vmatprep.subr.mxu0 0.0
        %2436 = vmatpush1.msra.mxu0 0.0
        %2437 = vmatprep.subr.mxu0 0.0
        %2438 = vmatpush1.msra.mxu0 0.0
        %2439 = vmatprep.subr.mxu0 0.0
        %2440 = vmatpush1.msra.mxu0 0.0
        %2441 = vmatprep.subr.mxu0 0.0
        %2442 = vmatpush1.msra.mxu0 0.0
        %2443 = vmatprep.subr.mxu0 0.0
        %2444 = vmatpush1.msra.mxu0 0.0
        %2445 = vmatprep.subr.mxu0 0.0
        %2446 = vmatpush1.msra.mxu0 0.0
        %2447 = vmatprep.subr.mxu0 0.0
        %2448 = vmatpush1.msra.mxu0 0.0
        %2449 = vmatprep.subr.mxu0 0.0
        %2450 = vmatpush1.msra.mxu0 0.0
        %2451 = vmatprep.subr.mxu0 0.0
        %2452 = vmatpush1.msra.mxu0 0.0
        %2453 = vmatprep.subr.mxu0 0.0
        %2454 = vmatpush1.msra.mxu0 0.0
        %2455 = vmatprep.subr.mxu0 0.0
        %2456 = vmatpush1.msra.mxu0 0.0
        %2457 = vmatprep.subr.mxu0 0.0
        %2458 = vmatpush1.msra.mxu0 0.0
        %2459 = vmatprep.subr.mxu0 0.0
        %2460 = vmatpush1.msra.mxu0 0.0
        %2461 = vmatprep.subr.mxu0 0.0
        %2462 = vmatpush1.msra.mxu0 0.0
        %2463 = vmatprep.subr.mxu0 0.0
        %2464 = vmatpush1.msra.mxu0 0.0
        %2465 = vmatprep.subr.mxu0 0.0
        %2466 = vmatpush1.msra.mxu0 0.0
        %2467 = vmatprep.subr.mxu0 0.0
        %2468 = vmatpush1.msra.mxu0 0.0
        %2469 = vmatprep.subr.mxu0 0.0
        %2470 = vmatpush1.msra.mxu0 0.0
        %2471 = vmatprep.mubr.f32.mxu0 0.0
        %2472 = vmatmul.mubr.f32.gmra.mrb[0].mxu0 %v2399
        %v2473 = vpop.f32.mrb[0].mxu0
        %v2474 = vadd.f32 %v2396, %v2473
        %v2475 = vpop.f32.mrb[0].mxu0
        %2476 = vmatprep.mubr.f32.mxu0 0.0
        %2477 = vmatmul.mubr.f32.gmra.mrb[0].mxu0 %v2402
        %v2478 = vpop.f32.mrb[0].mxu0
        %v2479 = vadd.f32 %v2396, %v2478
        %v2480 = vpop.f32.mrb[0].mxu0
        %2481 = vmatprep.mubr.f32.mxu0 0.0
        %2482 = vmatmul.mubr.f32.gmra.mrb[0].mxu0 %v2405
        %v2483 = vpop.f32.mrb[0].mxu0
        %v2484 = vadd.f32 %v2396, %v2483
        %v2485 = vpop.f32.mrb[0].mxu0
        %2486 = vdwg.mxu0
        %2490 = vrot.lane.b32.xlu0 %v2474, 96
        %v2491 = vpop.permute.xlu0 %2490
        %2492 = vrot.lane.b32.xlu0 %v2479, 96
        %v2493 = vpop.permute.xlu0 %2492
        %2494 = vrot.lane.b32.xlu0 %v2484, 96
        %v2495 = vpop.permute.xlu0 %2494
        %v2496 = vsel %vm918, %v2474, 0
        %v2498 = vsel %vm918, %v2479, 0
        %v2500 = vsel %vm918, %v2484, 0
        %v2502 = vsel %vm918, %v2491, 0
        %v2504 = vsel %vm918, %v2493, 0
        %v2506 = vsel %vm918, %v2495, 0
        %2508 = vmatprep.subr.mxu0 0.0
        %2509 = vmatpush1.xpose.msra.mxu0 %v2502
        %2510 = vmatprep.subr.mxu0 0.0
        %2511 = vmatpush1.xpose.msra.mxu0 %v2504
        %2512 = vmatprep.subr.mxu0 0.0
        %2513 = vmatpush1.xpose.msra.mxu0 %v2506
        %2514 = vmatprep.subr.mxu0 0.0
        %2515 = vmatpush1.xpose.msra.mxu0 0.0
        %2516 = vmatprep.subr.mxu0 0.0
        %2517 = vmatpush1.xpose.msra.mxu0 0.0
        %2518 = vmatprep.subr.mxu0 0.0
        %2519 = vmatpush1.xpose.msra.mxu0 0.0
        %2520 = vmatprep.subr.mxu0 0.0
        %2521 = vmatpush1.xpose.msra.mxu0 0.0
        %2522 = vmatprep.subr.mxu0 0.0
        %2523 = vmatpush1.xpose.msra.mxu0 0.0
        %2524 = vmatprep.subr.mxu0 0.0
        %2525 = vmatpush1.xpose.msra.mxu0 0.0
        %2526 = vmatprep.subr.mxu0 0.0
        %2527 = vmatpush1.xpose.msra.mxu0 0.0
        %2528 = vmatprep.subr.mxu0 0.0
        %2529 = vmatpush1.xpose.msra.mxu0 0.0
        %2530 = vmatprep.subr.mxu0 0.0
        %2531 = vmatpush1.xpose.msra.mxu0 0.0
        %2532 = vmatprep.subr.mxu0 0.0
        %2533 = vmatpush1.xpose.msra.mxu0 0.0
        %2534 = vmatprep.subr.mxu0 0.0
        %2535 = vmatpush1.xpose.msra.mxu0 0.0
        %2536 = vmatprep.subr.mxu0 0.0
        %2537 = vmatpush1.xpose.msra.mxu0 0.0
        %2538 = vmatprep.subr.mxu0 0.0
        %2539 = vmatpush1.xpose.msra.mxu0 0.0
        %2540 = vmatprep.subr.mxu0 0.0
        %2541 = vmatpush1.xpose.msra.mxu0 0.0
        %2542 = vmatprep.subr.mxu0 0.0
        %2543 = vmatpush1.xpose.msra.mxu0 0.0
        %2544 = vmatprep.subr.mxu0 0.0
        %2545 = vmatpush1.xpose.msra.mxu0 0.0
        %2546 = vmatprep.subr.mxu0 0.0
        %2547 = vmatpush1.xpose.msra.mxu0 0.0
        %2548 = vmatprep.subr.mxu0 0.0
        %2549 = vmatpush1.xpose.msra.mxu0 0.0
        %2550 = vmatprep.subr.mxu0 0.0
        %2551 = vmatpush1.xpose.msra.mxu0 0.0
        %2552 = vmatprep.subr.mxu0 0.0
        %2553 = vmatpush1.xpose.msra.mxu0 0.0
        %2554 = vmatprep.subr.mxu0 0.0
        %2555 = vmatpush1.xpose.msra.mxu0 0.0
        %2556 = vmatprep.subr.mxu0 0.0
        %2557 = vmatpush1.xpose.msra.mxu0 0.0
        %2558 = vmatprep.subr.mxu0 0.0
        %2559 = vmatpush1.xpose.msra.mxu0 0.0
        %2560 = vmatprep.subr.mxu0 0.0
        %2561 = vmatpush1.xpose.msra.mxu0 0.0
        %2562 = vmatprep.subr.mxu0 0.0
        %2563 = vmatpush1.xpose.msra.mxu0 0.0
        %2564 = vmatprep.subr.mxu0 0.0
        %2565 = vmatpush1.xpose.msra.mxu0 0.0
        %2566 = vmatprep.subr.mxu0 0.0
        %2567 = vmatpush1.xpose.msra.mxu0 0.0
        %2568 = vmatprep.subr.mxu0 0.0
        %2569 = vmatpush1.xpose.msra.mxu0 0.0
        %2570 = vmatprep.subr.mxu0 0.0
        %2571 = vmatpush1.xpose.msra.mxu0 0.0
        %2572 = vmatprep.mubr.f32.mxu0 0.0
        %2573 = vmatmul.mubr.f32.gmra.mrb[0].mxu0 %v2496
        %v2574 = vpop.f32.mrb[0].mxu0
        %v2575 = vadd.f32 0.0, %v2574
        %v2576 = vpop.f32.mrb[0].mxu0
        %2577 = vmatprep.mubr.f32.mxu0 0.0
        %2578 = vmatmul.mubr.f32.gmra.mrb[0].mxu0 %v2498
        %v2579 = vpop.f32.mrb[0].mxu0
        %v2580 = vadd.f32 0.0, %v2579
        %v2581 = vpop.f32.mrb[0].mxu0
        %2582 = vmatprep.mubr.f32.mxu0 0.0
        %2583 = vmatmul.mubr.f32.gmra.mrb[0].mxu0 %v2500
        %v2584 = vpop.f32.mrb[0].mxu0
        %v2585 = vadd.f32 0.0, %v2584
        %v2586 = vpop.f32.mrb[0].mxu0
        %2587 = vdwg.mxu0
        %v2588 = vmul.f32 %v2575, 0.35355338
        %v2589 = vmul.f32 %v2580, 0.35355338
        %v2590 = vmul.f32 %v2585, 0.35355338
        %v2591 = vadd.f32 %v2588, %v643
        %v2592 = vadd.f32 %v2589, %v643
        %v2593 = vadd.f32 %v2590, %v643
        %v2594 = vsel %vm1017, %v2591, -inf
        %2595 = vmax.xlane.f32.xlu0 %v2594
        %v2596 = vpop.xlane.xlu0 %2595
        %v2597 = vsel %vm1017, %v2592, -inf
        %2598 = vmax.xlane.f32.xlu0 %v2597
        %v2599 = vpop.xlane.xlu0 %2598
        %v2600 = vsel %vm1017, %v2593, -inf
        %2601 = vmax.xlane.f32.xlu0 %v2600
        %v2602 = vpop.xlane.xlu0 %2601
        %v2603 = vsub.f32 %v2591, %v2596
        %v2604 = vsub.f32 %v2592, %v2599
        %v2605 = vsub.f32 %v2593, %v2602
        %v2606 = vmul.f32 %v2603, 1.442695
        %v2607 = vpow.pop %v2606
        %v2608 = vmul.f32 %v2604, 1.442695
        %v2609 = vpow.pop %v2608
        %v2610 = vmul.f32 %v2605, 1.442695
        %v2611 = vpow.pop %v2610
        %v2612 = vsel %vm1017, %v2607, 0.0
        %2613 = vadd.xlane.f32.xlu0 %v2612
        %v2614 = vpop.xlane.xlu0 %2613
        %v2615 = vsel %vm1017, %v2609, 0.0
        %2616 = vadd.xlane.f32.xlu0 %v2615
        %v2617 = vpop.xlane.xlu0 %2616
        %v2618 = vsel %vm1017, %v2611, 0.0
        %2619 = vadd.xlane.f32.xlu0 %v2618
        %v2620 = vpop.xlane.xlu0 %2619
        %v2621 = vrcp.pop %v2614
        %v2622 = vmul.f32 %v2607, %v2621
        %v2623 = vrcp.pop %v2617
        %v2624 = vmul.f32 %v2609, %v2623
        %v2625 = vrcp.pop %v2620
        %v2626 = vmul.f32 %v2611, %v2625
        %2627 = vrot.lane.b32.xlu0 %v2474, 64
        %v2628 = vpop.permute.xlu0 %2627
        %2629 = vrot.lane.b32.xlu0 %v2479, 64
        %v2630 = vpop.permute.xlu0 %2629
        %2631 = vrot.lane.b32.xlu0 %v2484, 64
        %v2632 = vpop.permute.xlu0 %2631
        %v2637 = vsel %vm1017, %v2622, 0
        %v2640 = vsel %vm1017, %v2624, 0
        %v2643 = vsel %vm1017, %v2626, 0
        %2645 = vmatprep.subr.mxu0 0.0
        %2646 = vmatpush1.msra.mxu0 %v2628
        %2647 = vmatprep.subr.mxu0 0.0
        %2648 = vmatpush1.msra.mxu0 %v2630
        %2649 = vmatprep.subr.mxu0 0.0
        %2650 = vmatpush1.msra.mxu0 %v2632
        %2651 = vmatprep.subr.mxu0 0.0
        %2652 = vmatpush1.msra.mxu0 0.0
        %2653 = vmatprep.subr.mxu0 0.0
        %2654 = vmatpush1.msra.mxu0 0.0
        %2655 = vmatprep.subr.mxu0 0.0
        %2656 = vmatpush1.msra.mxu0 0.0
        %2657 = vmatprep.subr.mxu0 0.0
        %2658 = vmatpush1.msra.mxu0 0.0
        %2659 = vmatprep.subr.mxu0 0.0
        %2660 = vmatpush1.msra.mxu0 0.0
        %2661 = vmatprep.subr.mxu0 0.0
        %2662 = vmatpush1.msra.mxu0 0.0
        %2663 = vmatprep.subr.mxu0 0.0
        %2664 = vmatpush1.msra.mxu0 0.0
        %2665 = vmatprep.subr.mxu0 0.0
        %2666 = vmatpush1.msra.mxu0 0.0
        %2667 = vmatprep.subr.mxu0 0.0
        %2668 = vmatpush1.msra.mxu0 0.0
        %2669 = vmatprep.subr.mxu0 0.0
        %2670 = vmatpush1.msra.mxu0 0.0
        %2671 = vmatprep.subr.mxu0 0.0
        %2672 = vmatpush1.msra.mxu0 0.0
        %2673 = vmatprep.subr.mxu0 0.0
        %2674 = vmatpush1.msra.mxu0 0.0
        %2675 = vmatprep.subr.mxu0 0.0
        %2676 = vmatpush1.msra.mxu0 0.0
        %2677 = vmatprep.subr.mxu0 0.0
        %2678 = vmatpush1.msra.mxu0 0.0
        %2679 = vmatprep.subr.mxu0 0.0
        %2680 = vmatpush1.msra.mxu0 0.0
        %2681 = vmatprep.subr.mxu0 0.0
        %2682 = vmatpush1.msra.mxu0 0.0
        %2683 = vmatprep.subr.mxu0 0.0
        %2684 = vmatpush1.msra.mxu0 0.0
        %2685 = vmatprep.subr.mxu0 0.0
        %2686 = vmatpush1.msra.mxu0 0.0
        %2687 = vmatprep.subr.mxu0 0.0
        %2688 = vmatpush1.msra.mxu0 0.0
        %2689 = vmatprep.subr.mxu0 0.0
        %2690 = vmatpush1.msra.mxu0 0.0
        %2691 = vmatprep.subr.mxu0 0.0
        %2692 = vmatpush1.msra.mxu0 0.0
        %2693 = vmatprep.subr.mxu0 0.0
        %2694 = vmatpush1.msra.mxu0 0.0
        %2695 = vmatprep.subr.mxu0 0.0
        %2696 = vmatpush1.msra.mxu0 0.0
        %2697 = vmatprep.subr.mxu0 0.0
        %2698 = vmatpush1.msra.mxu0 0.0
        %2699 = vmatprep.subr.mxu0 0.0
        %2700 = vmatpush1.msra.mxu0 0.0
        %2701 = vmatprep.subr.mxu0 0.0
        %2702 = vmatpush1.msra.mxu0 0.0
        %2703 = vmatprep.subr.mxu0 0.0
        %2704 = vmatpush1.msra.mxu0 0.0
        %2705 = vmatprep.subr.mxu0 0.0
        %2706 = vmatpush1.msra.mxu0 0.0
        %2707 = vmatprep.subr.mxu0 0.0
        %2708 = vmatpush1.msra.mxu0 0.0
        %2709 = vmatprep.mubr.f32.mxu0 0.0
        %2710 = vmatmul.mubr.f32.gmra.mrb[0].mxu0 %v2637
        %v2711 = vpop.f32.mrb[0].mxu0
        %v2712 = vadd.f32 0.0, %v2711
        %v2713 = vpop.f32.mrb[0].mxu0
        %2714 = vmatprep.mubr.f32.mxu0 0.0
        %2715 = vmatmul.mubr.f32.gmra.mrb[0].mxu0 %v2640
        %v2716 = vpop.f32.mrb[0].mxu0
        %v2717 = vadd.f32 0.0, %v2716
        %v2718 = vpop.f32.mrb[0].mxu0
        %2719 = vmatprep.mubr.f32.mxu0 0.0
        %2720 = vmatmul.mubr.f32.gmra.mrb[0].mxu0 %v2643
        %v2721 = vpop.f32.mrb[0].mxu0
        %v2722 = vadd.f32 0.0, %v2721
        %v2723 = vpop.f32.mrb[0].mxu0
        %2724 = vdwg.mxu0
        %2725 = vst.msk [vmem:[#allocation2] sm:$0xff] %vm918, %v2712
        %2726 = vst.msk [vmem:[#allocation2 + $0x8] sm:$0xff] %vm918, %v2717
        %2727 = vst.msk [vmem:[#allocation2 + $0x10] sm:$0xff] %vm918, %v2722
        %2728 = vrot.lane.b32.xlu0 %v2474, 120
        %v2729 = vpop.permute.xlu0 %2728
        %2730 = vrot.lane.b32.xlu0 %v2479, 120
        %v2731 = vpop.permute.xlu0 %2730
        %2732 = vrot.lane.b32.xlu0 %v2484, 120
        %v2733 = vpop.permute.xlu0 %2732
        %2734 = vrot.lane.b32.xlu0 %v2474, 88
        %v2735 = vpop.permute.xlu0 %2734
        %2736 = vrot.lane.b32.xlu0 %v2479, 88
        %v2737 = vpop.permute.xlu0 %2736
        %2738 = vrot.lane.b32.xlu0 %v2484, 88
        %v2739 = vpop.permute.xlu0 %2738
        %v2740 = vsel %vm918, %v2729, 0
        %v2742 = vsel %vm918, %v2731, 0
        %v2744 = vsel %vm918, %v2733, 0
        %v2746 = vsel %vm918, %v2735, 0
        %v2748 = vsel %vm918, %v2737, 0
        %v2750 = vsel %vm918, %v2739, 0
        %2752 = vmatprep.subr.mxu0 0.0
        %2753 = vmatpush1.xpose.msra.mxu0 %v2746
        %2754 = vmatprep.subr.mxu0 0.0
        %2755 = vmatpush1.xpose.msra.mxu0 %v2748
        %2756 = vmatprep.subr.mxu0 0.0
        %2757 = vmatpush1.xpose.msra.mxu0 %v2750
        %2758 = vmatprep.subr.mxu0 0.0
        %2759 = vmatpush1.xpose.msra.mxu0 0.0
        %2760 = vmatprep.subr.mxu0 0.0
        %2761 = vmatpush1.xpose.msra.mxu0 0.0
        %2762 = vmatprep.subr.mxu0 0.0
        %2763 = vmatpush1.xpose.msra.mxu0 0.0
        %2764 = vmatprep.subr.mxu0 0.0
        %2765 = vmatpush1.xpose.msra.mxu0 0.0
        %2766 = vmatprep.subr.mxu0 0.0
        %2767 = vmatpush1.xpose.msra.mxu0 0.0
        %2768 = vmatprep.subr.mxu0 0.0
        %2769 = vmatpush1.xpose.msra.mxu0 0.0
        %2770 = vmatprep.subr.mxu0 0.0
        %2771 = vmatpush1.xpose.msra.mxu0 0.0
        %2772 = vmatprep.subr.mxu0 0.0
        %2773 = vmatpush1.xpose.msra.mxu0 0.0
        %2774 = vmatprep.subr.mxu0 0.0
        %2775 = vmatpush1.xpose.msra.mxu0 0.0
        %2776 = vmatprep.subr.mxu0 0.0
        %2777 = vmatpush1.xpose.msra.mxu0 0.0
        %2778 = vmatprep.subr.mxu0 0.0
        %2779 = vmatpush1.xpose.msra.mxu0 0.0
        %2780 = vmatprep.subr.mxu0 0.0
        %2781 = vmatpush1.xpose.msra.mxu0 0.0
        %2782 = vmatprep.subr.mxu0 0.0
        %2783 = vmatpush1.xpose.msra.mxu0 0.0
        %2784 = vmatprep.subr.mxu0 0.0
        %2785 = vmatpush1.xpose.msra.mxu0 0.0
        %2786 = vmatprep.subr.mxu0 0.0
        %2787 = vmatpush1.xpose.msra.mxu0 0.0
        %2788 = vmatprep.subr.mxu0 0.0
        %2789 = vmatpush1.xpose.msra.mxu0 0.0
        %2790 = vmatprep.subr.mxu0 0.0
        %2791 = vmatpush1.xpose.msra.mxu0 0.0
        %2792 = vmatprep.subr.mxu0 0.0
        %2793 = vmatpush1.xpose.msra.mxu0 0.0
        %2794 = vmatprep.subr.mxu0 0.0
        %2795 = vmatpush1.xpose.msra.mxu0 0.0
        %2796 = vmatprep.subr.mxu0 0.0
        %2797 = vmatpush1.xpose.msra.mxu0 0.0
        %2798 = vmatprep.subr.mxu0 0.0
        %2799 = vmatpush1.xpose.msra.mxu0 0.0
        %2800 = vmatprep.subr.mxu0 0.0
        %2801 = vmatpush1.xpose.msra.mxu0 0.0
        %2802 = vmatprep.subr.mxu0 0.0
        %2803 = vmatpush1.xpose.msra.mxu0 0.0
        %2804 = vmatprep.subr.mxu0 0.0
        %2805 = vmatpush1.xpose.msra.mxu0 0.0
        %2806 = vmatprep.subr.mxu0 0.0
        %2807 = vmatpush1.xpose.msra.mxu0 0.0
        %2808 = vmatprep.subr.mxu0 0.0
        %2809 = vmatpush1.xpose.msra.mxu0 0.0
        %2810 = vmatprep.subr.mxu0 0.0
        %2811 = vmatpush1.xpose.msra.mxu0 0.0
        %2812 = vmatprep.subr.mxu0 0.0
        %2813 = vmatpush1.xpose.msra.mxu0 0.0
        %2814 = vmatprep.subr.mxu0 0.0
        %2815 = vmatpush1.xpose.msra.mxu0 0.0
        %2816 = vmatprep.mubr.f32.mxu0 0.0
        %2817 = vmatmul.mubr.f32.gmra.mrb[0].mxu0 %v2740
        %v2818 = vpop.f32.mrb[0].mxu0
        %v2819 = vadd.f32 0.0, %v2818
        %v2820 = vpop.f32.mrb[0].mxu0
        %2821 = vmatprep.mubr.f32.mxu0 0.0
        %2822 = vmatmul.mubr.f32.gmra.mrb[0].mxu0 %v2742
        %v2823 = vpop.f32.mrb[0].mxu0
        %v2824 = vadd.f32 0.0, %v2823
        %v2825 = vpop.f32.mrb[0].mxu0
        %2826 = vmatprep.mubr.f32.mxu0 0.0
        %2827 = vmatmul.mubr.f32.gmra.mrb[0].mxu0 %v2744
        %v2828 = vpop.f32.mrb[0].mxu0
        %v2829 = vadd.f32 0.0, %v2828
        %v2830 = vpop.f32.mrb[0].mxu0
        %2831 = vdwg.mxu0
        %v2832 = vmul.f32 %v2819, 0.35355338
        %v2833 = vmul.f32 %v2824, 0.35355338
        %v2834 = vmul.f32 %v2829, 0.35355338
        %v2835 = vadd.f32 %v2832, %v643
        %v2836 = vadd.f32 %v2833, %v643
        %v2837 = vadd.f32 %v2834, %v643
        %v2838 = vsel %vm1017, %v2835, -inf
        %2839 = vmax.xlane.f32.xlu0 %v2838
        %v2840 = vpop.xlane.xlu0 %2839
        %v2841 = vsel %vm1017, %v2836, -inf
        %2842 = vmax.xlane.f32.xlu0 %v2841
        %v2843 = vpop.xlane.xlu0 %2842
        %v2844 = vsel %vm1017, %v2837, -inf
        %2845 = vmax.xlane.f32.xlu0 %v2844
        %v2846 = vpop.xlane.xlu0 %2845
        %v2847 = vsub.f32 %v2835, %v2840
        %v2848 = vsub.f32 %v2836, %v2843
        %v2849 = vsub.f32 %v2837, %v2846
        %v2850 = vmul.f32 %v2847, 1.442695
        %v2851 = vpow.pop %v2850
        %v2852 = vmul.f32 %v2848, 1.442695
        %v2853 = vpow.pop %v2852
        %v2854 = vmul.f32 %v2849, 1.442695
        %v2855 = vpow.pop %v2854
        %v2856 = vsel %vm1017, %v2851, 0.0
        %2857 = vadd.xlane.f32.xlu0 %v2856
        %v2858 = vpop.xlane.xlu0 %2857
        %v2859 = vsel %vm1017, %v2853, 0.0
        %2860 = vadd.xlane.f32.xlu0 %v2859
        %v2861 = vpop.xlane.xlu0 %2860
        %v2862 = vsel %vm1017, %v2855, 0.0
        %2863 = vadd.xlane.f32.xlu0 %v2862
        %v2864 = vpop.xlane.xlu0 %2863
        %v2865 = vrcp.pop %v2858
        %v2866 = vmul.f32 %v2851, %v2865
        %v2867 = vrcp.pop %v2861
        %v2868 = vmul.f32 %v2853, %v2867
        %v2869 = vrcp.pop %v2864
        %v2870 = vmul.f32 %v2855, %v2869
        %2871 = vrot.lane.b32.xlu0 %v2474, 56
        %v2872 = vpop.permute.xlu0 %2871
        %2873 = vrot.lane.b32.xlu0 %v2479, 56
        %v2874 = vpop.permute.xlu0 %2873
        %2875 = vrot.lane.b32.xlu0 %v2484, 56
        %v2876 = vpop.permute.xlu0 %2875
        %v2881 = vsel %vm1017, %v2866, 0
        %v2884 = vsel %vm1017, %v2868, 0
        %v2887 = vsel %vm1017, %v2870, 0
        %2889 = vmatprep.subr.mxu0 0.0
        %2890 = vmatpush1.msra.mxu0 %v2872
        %2891 = vmatprep.subr.mxu0 0.0
        %2892 = vmatpush1.msra.mxu0 %v2874
        %2893 = vmatprep.subr.mxu0 0.0
        %2894 = vmatpush1.msra.mxu0 %v2876
        %2895 = vmatprep.subr.mxu0 0.0
        %2896 = vmatpush1.msra.mxu0 0.0
        %2897 = vmatprep.subr.mxu0 0.0
        %2898 = vmatpush1.msra.mxu0 0.0
        %2899 = vmatprep.subr.mxu0 0.0
        %2900 = vmatpush1.msra.mxu0 0.0
        %2901 = vmatprep.subr.mxu0 0.0
        %2902 = vmatpush1.msra.mxu0 0.0
        %2903 = vmatprep.subr.mxu0 0.0
        %2904 = vmatpush1.msra.mxu0 0.0
        %2905 = vmatprep.subr.mxu0 0.0
        %2906 = vmatpush1.msra.mxu0 0.0
        %2907 = vmatprep.subr.mxu0 0.0
        %2908 = vmatpush1.msra.mxu0 0.0
        %2909 = vmatprep.subr.mxu0 0.0
        %2910 = vmatpush1.msra.mxu0 0.0
        %2911 = vmatprep.subr.mxu0 0.0
        %2912 = vmatpush1.msra.mxu0 0.0
        %2913 = vmatprep.subr.mxu0 0.0
        %2914 = vmatpush1.msra.mxu0 0.0
        %2915 = vmatprep.subr.mxu0 0.0
        %2916 = vmatpush1.msra.mxu0 0.0
        %2917 = vmatprep.subr.mxu0 0.0
        %2918 = vmatpush1.msra.mxu0 0.0
        %2919 = vmatprep.subr.mxu0 0.0
        %2920 = vmatpush1.msra.mxu0 0.0
        %2921 = vmatprep.subr.mxu0 0.0
        %2922 = vmatpush1.msra.mxu0 0.0
        %2923 = vmatprep.subr.mxu0 0.0
        %2924 = vmatpush1.msra.mxu0 0.0
        %2925 = vmatprep.subr.mxu0 0.0
        %2926 = vmatpush1.msra.mxu0 0.0
        %2927 = vmatprep.subr.mxu0 0.0
        %2928 = vmatpush1.msra.mxu0 0.0
        %2929 = vmatprep.subr.mxu0 0.0
        %2930 = vmatpush1.msra.mxu0 0.0
        %2931 = vmatprep.subr.mxu0 0.0
        %2932 = vmatpush1.msra.mxu0 0.0
        %2933 = vmatprep.subr.mxu0 0.0
        %2934 = vmatpush1.msra.mxu0 0.0
        %2935 = vmatprep.subr.mxu0 0.0
        %2936 = vmatpush1.msra.mxu0 0.0
        %2937 = vmatprep.subr.mxu0 0.0
        %2938 = vmatpush1.msra.mxu0 0.0
        %2939 = vmatprep.subr.mxu0 0.0
        %2940 = vmatpush1.msra.mxu0 0.0
        %2941 = vmatprep.subr.mxu0 0.0
        %2942 = vmatpush1.msra.mxu0 0.0
        %2943 = vmatprep.subr.mxu0 0.0
        %2944 = vmatpush1.msra.mxu0 0.0
        %2945 = vmatprep.subr.mxu0 0.0
        %2946 = vmatpush1.msra.mxu0 0.0
        %2947 = vmatprep.subr.mxu0 0.0
        %2948 = vmatpush1.msra.mxu0 0.0
        %2949 = vmatprep.subr.mxu0 0.0
        %2950 = vmatpush1.msra.mxu0 0.0
        %2951 = vmatprep.subr.mxu0 0.0
        %2952 = vmatpush1.msra.mxu0 0.0
        %2953 = vmatprep.mubr.f32.mxu0 0.0
        %2954 = vmatmul.mubr.f32.gmra.mrb[0].mxu0 %v2881
        %v2955 = vpop.f32.mrb[0].mxu0
        %v2956 = vadd.f32 0.0, %v2955
        %v2957 = vpop.f32.mrb[0].mxu0
        %2958 = vmatprep.mubr.f32.mxu0 0.0
        %2959 = vmatmul.mubr.f32.gmra.mrb[0].mxu0 %v2884
        %v2960 = vpop.f32.mrb[0].mxu0
        %v2961 = vadd.f32 0.0, %v2960
        %v2962 = vpop.f32.mrb[0].mxu0
        %2963 = vmatprep.mubr.f32.mxu0 0.0
        %2964 = vmatmul.mubr.f32.gmra.mrb[0].mxu0 %v2887
        %v2965 = vpop.f32.mrb[0].mxu0
        %v2966 = vadd.f32 0.0, %v2965
        %v2967 = vpop.f32.mrb[0].mxu0
        %2968 = vdwg.mxu0
        %2972 = vrot.lane.b32.xlu0 %v2956, 8
        %v2973 = vpop.permute.xlu0 %2972
        %2974 = vrot.lane.b32.xlu0 %v2961, 8
        %v2975 = vpop.permute.xlu0 %2974
        %2976 = vrot.lane.b32.xlu0 %v2966, 8
        %v2977 = vpop.permute.xlu0 %2976
        %2981 = vst.msk [vmem:[#allocation2] sm:$0xff] %vm1405, %v2973
        %2982 = vst.msk [vmem:[#allocation2 + $0x8] sm:$0xff] %vm1405, %v2975
        %2983 = vst.msk [vmem:[#allocation2 + $0x10] sm:$0xff] %vm1405, %v2977
        %2984 = vrot.lane.b32.xlu0 %v2474, 112
        %v2985 = vpop.permute.xlu0 %2984
        %2986 = vrot.lane.b32.xlu0 %v2479, 112
        %v2987 = vpop.permute.xlu0 %2986
        %2988 = vrot.lane.b32.xlu0 %v2484, 112
        %v2989 = vpop.permute.xlu0 %2988
        %2990 = vrot.lane.b32.xlu0 %v2474, 80
        %v2991 = vpop.permute.xlu0 %2990
        %2992 = vrot.lane.b32.xlu0 %v2479, 80
        %v2993 = vpop.permute.xlu0 %2992
        %2994 = vrot.lane.b32.xlu0 %v2484, 80
        %v2995 = vpop.permute.xlu0 %2994
        %v2996 = vsel %vm918, %v2985, 0
        %v2998 = vsel %vm918, %v2987, 0
        %v3000 = vsel %vm918, %v2989, 0
        %v3002 = vsel %vm918, %v2991, 0
        %v3004 = vsel %vm918, %v2993, 0
        %v3006 = vsel %vm918, %v2995, 0
        %3008 = vmatprep.subr.mxu0 0.0
        %3009 = vmatpush1.xpose.msra.mxu0 %v3002
        %3010 = vmatprep.subr.mxu0 0.0
        %3011 = vmatpush1.xpose.msra.mxu0 %v3004
        %3012 = vmatprep.subr.mxu0 0.0
        %3013 = vmatpush1.xpose.msra.mxu0 %v3006
        %3014 = vmatprep.subr.mxu0 0.0
        %3015 = vmatpush1.xpose.msra.mxu0 0.0
        %3016 = vmatprep.subr.mxu0 0.0
        %3017 = vmatpush1.xpose.msra.mxu0 0.0
        %3018 = vmatprep.subr.mxu0 0.0
        %3019 = vmatpush1.xpose.msra.mxu0 0.0
        %3020 = vmatprep.subr.mxu0 0.0
        %3021 = vmatpush1.xpose.msra.mxu0 0.0
        %3022 = vmatprep.subr.mxu0 0.0
        %3023 = vmatpush1.xpose.msra.mxu0 0.0
        %3024 = vmatprep.subr.mxu0 0.0
        %3025 = vmatpush1.xpose.msra.mxu0 0.0
        %3026 = vmatprep.subr.mxu0 0.0
        %3027 = vmatpush1.xpose.msra.mxu0 0.0
        %3028 = vmatprep.subr.mxu0 0.0
        %3029 = vmatpush1.xpose.msra.mxu0 0.0
        %3030 = vmatprep.subr.mxu0 0.0
        %3031 = vmatpush1.xpose.msra.mxu0 0.0
        %3032 = vmatprep.subr.mxu0 0.0
        %3033 = vmatpush1.xpose.msra.mxu0 0.0
        %3034 = vmatprep.subr.mxu0 0.0
        %3035 = vmatpush1.xpose.msra.mxu0 0.0
        %3036 = vmatprep.subr.mxu0 0.0
        %3037 = vmatpush1.xpose.msra.mxu0 0.0
        %3038 = vmatprep.subr.mxu0 0.0
        %3039 = vmatpush1.xpose.msra.mxu0 0.0
        %3040 = vmatprep.subr.mxu0 0.0
        %3041 = vmatpush1.xpose.msra.mxu0 0.0
        %3042 = vmatprep.subr.mxu0 0.0
        %3043 = vmatpush1.xpose.msra.mxu0 0.0
        %3044 = vmatprep.subr.mxu0 0.0
        %3045 = vmatpush1.xpose.msra.mxu0 0.0
        %3046 = vmatprep.subr.mxu0 0.0
        %3047 = vmatpush1.xpose.msra.mxu0 0.0
        %3048 = vmatprep.subr.mxu0 0.0
        %3049 = vmatpush1.xpose.msra.mxu0 0.0
        %3050 = vmatprep.subr.mxu0 0.0
        %3051 = vmatpush1.xpose.msra.mxu0 0.0
        %3052 = vmatprep.subr.mxu0 0.0
        %3053 = vmatpush1.xpose.msra.mxu0 0.0
        %3054 = vmatprep.subr.mxu0 0.0
        %3055 = vmatpush1.xpose.msra.mxu0 0.0
        %3056 = vmatprep.subr.mxu0 0.0
        %3057 = vmatpush1.xpose.msra.mxu0 0.0
        %3058 = vmatprep.subr.mxu0 0.0
        %3059 = vmatpush1.xpose.msra.mxu0 0.0
        %3060 = vmatprep.subr.mxu0 0.0
        %3061 = vmatpush1.xpose.msra.mxu0 0.0
        %3062 = vmatprep.subr.mxu0 0.0
        %3063 = vmatpush1.xpose.msra.mxu0 0.0
        %3064 = vmatprep.subr.mxu0 0.0
        %3065 = vmatpush1.xpose.msra.mxu0 0.0
        %3066 = vmatprep.subr.mxu0 0.0
        %3067 = vmatpush1.xpose.msra.mxu0 0.0
        %3068 = vmatprep.subr.mxu0 0.0
        %3069 = vmatpush1.xpose.msra.mxu0 0.0
        %3070 = vmatprep.subr.mxu0 0.0
        %3071 = vmatpush1.xpose.msra.mxu0 0.0
        %3072 = vmatprep.mubr.f32.mxu0 0.0
        %3073 = vmatmul.mubr.f32.gmra.mrb[0].mxu0 %v2996
        %v3074 = vpop.f32.mrb[0].mxu0
        %v3075 = vadd.f32 0.0, %v3074
        %v3076 = vpop.f32.mrb[0].mxu0
        %3077 = vmatprep.mubr.f32.mxu0 0.0
        %3078 = vmatmul.mubr.f32.gmra.mrb[0].mxu0 %v2998
        %v3079 = vpop.f32.mrb[0].mxu0
        %v3080 = vadd.f32 0.0, %v3079
        %v3081 = vpop.f32.mrb[0].mxu0
        %3082 = vmatprep.mubr.f32.mxu0 0.0
        %3083 = vmatmul.mubr.f32.gmra.mrb[0].mxu0 %v3000
        %v3084 = vpop.f32.mrb[0].mxu0
        %v3085 = vadd.f32 0.0, %v3084
        %v3086 = vpop.f32.mrb[0].mxu0
        %3087 = vdwg.mxu0
        %v3088 = vmul.f32 %v3075, 0.35355338
        %v3089 = vmul.f32 %v3080, 0.35355338
        %v3090 = vmul.f32 %v3085, 0.35355338
        %v3091 = vadd.f32 %v3088, %v643
        %v3092 = vadd.f32 %v3089, %v643
        %v3093 = vadd.f32 %v3090, %v643
        %v3094 = vsel %vm1017, %v3091, -inf
        %3095 = vmax.xlane.f32.xlu0 %v3094
        %v3096 = vpop.xlane.xlu0 %3095
        %v3097 = vsel %vm1017, %v3092, -inf
        %3098 = vmax.xlane.f32.xlu0 %v3097
        %v3099 = vpop.xlane.xlu0 %3098
        %v3100 = vsel %vm1017, %v3093, -inf
        %3101 = vmax.xlane.f32.xlu0 %v3100
        %v3102 = vpop.xlane.xlu0 %3101
        %v3103 = vsub.f32 %v3091, %v3096
        %v3104 = vsub.f32 %v3092, %v3099
        %v3105 = vsub.f32 %v3093, %v3102
        %v3106 = vmul.f32 %v3103, 1.442695
        %v3107 = vpow.pop %v3106
        %v3108 = vmul.f32 %v3104, 1.442695
        %v3109 = vpow.pop %v3108
        %v3110 = vmul.f32 %v3105, 1.442695
        %v3111 = vpow.pop %v3110
        %v3112 = vsel %vm1017, %v3107, 0.0
        %3113 = vadd.xlane.f32.xlu0 %v3112
        %v3114 = vpop.xlane.xlu0 %3113
        %v3115 = vsel %vm1017, %v3109, 0.0
        %3116 = vadd.xlane.f32.xlu0 %v3115
        %v3117 = vpop.xlane.xlu0 %3116
        %v3118 = vsel %vm1017, %v3111, 0.0
        %3119 = vadd.xlane.f32.xlu0 %v3118
        %v3120 = vpop.xlane.xlu0 %3119
        %v3121 = vrcp.pop %v3114
        %v3122 = vmul.f32 %v3107, %v3121
        %v3123 = vrcp.pop %v3117
        %v3124 = vmul.f32 %v3109, %v3123
        %v3125 = vrcp.pop %v3120
        %v3126 = vmul.f32 %v3111, %v3125
        %3127 = vrot.lane.b32.xlu0 %v2474, 48
        %v3128 = vpop.permute.xlu0 %3127
        %3129 = vrot.lane.b32.xlu0 %v2479, 48
        %v3130 = vpop.permute.xlu0 %3129
        %3131 = vrot.lane.b32.xlu0 %v2484, 48
        %v3132 = vpop.permute.xlu0 %3131
        %v3137 = vsel %vm1017, %v3122, 0
        %v3140 = vsel %vm1017, %v3124, 0
        %v3143 = vsel %vm1017, %v3126, 0
        %3145 = vmatprep.subr.mxu0 0.0
        %3146 = vmatpush1.msra.mxu0 %v3128
        %3147 = vmatprep.subr.mxu0 0.0
        %3148 = vmatpush1.msra.mxu0 %v3130
        %3149 = vmatprep.subr.mxu0 0.0
        %3150 = vmatpush1.msra.mxu0 %v3132
        %3151 = vmatprep.subr.mxu0 0.0
        %3152 = vmatpush1.msra.mxu0 0.0
        %3153 = vmatprep.subr.mxu0 0.0
        %3154 = vmatpush1.msra.mxu0 0.0
        %3155 = vmatprep.subr.mxu0 0.0
        %3156 = vmatpush1.msra.mxu0 0.0
        %3157 = vmatprep.subr.mxu0 0.0
        %3158 = vmatpush1.msra.mxu0 0.0
        %3159 = vmatprep.subr.mxu0 0.0
        %3160 = vmatpush1.msra.mxu0 0.0
        %3161 = vmatprep.subr.mxu0 0.0
        %3162 = vmatpush1.msra.mxu0 0.0
        %3163 = vmatprep.subr.mxu0 0.0
        %3164 = vmatpush1.msra.mxu0 0.0
        %3165 = vmatprep.subr.mxu0 0.0
        %3166 = vmatpush1.msra.mxu0 0.0
        %3167 = vmatprep.subr.mxu0 0.0
        %3168 = vmatpush1.msra.mxu0 0.0
        %3169 = vmatprep.subr.mxu0 0.0
        %3170 = vmatpush1.msra.mxu0 0.0
        %3171 = vmatprep.subr.mxu0 0.0
        %3172 = vmatpush1.msra.mxu0 0.0
        %3173 = vmatprep.subr.mxu0 0.0
        %3174 = vmatpush1.msra.mxu0 0.0
        %3175 = vmatprep.subr.mxu0 0.0
        %3176 = vmatpush1.msra.mxu0 0.0
        %3177 = vmatprep.subr.mxu0 0.0
        %3178 = vmatpush1.msra.mxu0 0.0
        %3179 = vmatprep.subr.mxu0 0.0
        %3180 = vmatpush1.msra.mxu0 0.0
        %3181 = vmatprep.subr.mxu0 0.0
        %3182 = vmatpush1.msra.mxu0 0.0
        %3183 = vmatprep.subr.mxu0 0.0
        %3184 = vmatpush1.msra.mxu0 0.0
        %3185 = vmatprep.subr.mxu0 0.0
        %3186 = vmatpush1.msra.mxu0 0.0
        %3187 = vmatprep.subr.mxu0 0.0
        %3188 = vmatpush1.msra.mxu0 0.0
        %3189 = vmatprep.subr.mxu0 0.0
        %3190 = vmatpush1.msra.mxu0 0.0
        %3191 = vmatprep.subr.mxu0 0.0
        %3192 = vmatpush1.msra.mxu0 0.0
        %3193 = vmatprep.subr.mxu0 0.0
        %3194 = vmatpush1.msra.mxu0 0.0
        %3195 = vmatprep.subr.mxu0 0.0
        %3196 = vmatpush1.msra.mxu0 0.0
        %3197 = vmatprep.subr.mxu0 0.0
        %3198 = vmatpush1.msra.mxu0 0.0
        %3199 = vmatprep.subr.mxu0 0.0
        %3200 = vmatpush1.msra.mxu0 0.0
        %3201 = vmatprep.subr.mxu0 0.0
        %3202 = vmatpush1.msra.mxu0 0.0
        %3203 = vmatprep.subr.mxu0 0.0
        %3204 = vmatpush1.msra.mxu0 0.0
        %3205 = vmatprep.subr.mxu0 0.0
        %3206 = vmatpush1.msra.mxu0 0.0
        %3207 = vmatprep.subr.mxu0 0.0
        %3208 = vmatpush1.msra.mxu0 0.0
        %3209 = vmatprep.mubr.f32.mxu0 0.0
        %3210 = vmatmul.mubr.f32.gmra.mrb[0].mxu0 %v3137
        %v3211 = vpop.f32.mrb[0].mxu0
        %v3212 = vadd.f32 0.0, %v3211
        %v3213 = vpop.f32.mrb[0].mxu0
        %3214 = vmatprep.mubr.f32.mxu0 0.0
        %3215 = vmatmul.mubr.f32.gmra.mrb[0].mxu0 %v3140
        %v3216 = vpop.f32.mrb[0].mxu0
        %v3217 = vadd.f32 0.0, %v3216
        %v3218 = vpop.f32.mrb[0].mxu0
        %3219 = vmatprep.mubr.f32.mxu0 0.0
        %3220 = vmatmul.mubr.f32.gmra.mrb[0].mxu0 %v3143
        %v3221 = vpop.f32.mrb[0].mxu0
        %v3222 = vadd.f32 0.0, %v3221
        %v3223 = vpop.f32.mrb[0].mxu0
        %3224 = vdwg.mxu0
        %3228 = vrot.lane.b32.xlu0 %v3212, 16
        %v3229 = vpop.permute.xlu0 %3228
        %3230 = vrot.lane.b32.xlu0 %v3217, 16
        %v3231 = vpop.permute.xlu0 %3230
        %3232 = vrot.lane.b32.xlu0 %v3222, 16
        %v3233 = vpop.permute.xlu0 %3232
        %3237 = vst.msk [vmem:[#allocation2] sm:$0xff] %vm1662, %v3229
        %3238 = vst.msk [vmem:[#allocation2 + $0x8] sm:$0xff] %vm1662, %v3231
        %3239 = vst.msk [vmem:[#allocation2 + $0x10] sm:$0xff] %vm1662, %v3233
        %3240 = vrot.lane.b32.xlu0 %v2474, 104
        %v3241 = vpop.permute.xlu0 %3240
        %3242 = vrot.lane.b32.xlu0 %v2479, 104
        %v3243 = vpop.permute.xlu0 %3242
        %3244 = vrot.lane.b32.xlu0 %v2484, 104
        %v3245 = vpop.permute.xlu0 %3244
        %3246 = vrot.lane.b32.xlu0 %v2474, 72
        %v3247 = vpop.permute.xlu0 %3246
        %3248 = vrot.lane.b32.xlu0 %v2479, 72
        %v3249 = vpop.permute.xlu0 %3248
        %3250 = vrot.lane.b32.xlu0 %v2484, 72
        %v3251 = vpop.permute.xlu0 %3250
        %v3252 = vsel %vm918, %v3241, 0
        %v3254 = vsel %vm918, %v3243, 0
        %v3256 = vsel %vm918, %v3245, 0
        %v3258 = vsel %vm918, %v3247, 0
        %v3260 = vsel %vm918, %v3249, 0
        %v3262 = vsel %vm918, %v3251, 0
        %3264 = vmatprep.subr.mxu0 0.0
        %3265 = vmatpush1.xpose.msra.mxu0 %v3258
        %3266 = vmatprep.subr.mxu0 0.0
        %3267 = vmatpush1.xpose.msra.mxu0 %v3260
        %3268 = vmatprep.subr.mxu0 0.0
        %3269 = vmatpush1.xpose.msra.mxu0 %v3262
        %3270 = vmatprep.subr.mxu0 0.0
        %3271 = vmatpush1.xpose.msra.mxu0 0.0
        %3272 = vmatprep.subr.mxu0 0.0
        %3273 = vmatpush1.xpose.msra.mxu0 0.0
        %3274 = vmatprep.subr.mxu0 0.0
        %3275 = vmatpush1.xpose.msra.mxu0 0.0
        %3276 = vmatprep.subr.mxu0 0.0
        %3277 = vmatpush1.xpose.msra.mxu0 0.0
        %3278 = vmatprep.subr.mxu0 0.0
        %3279 = vmatpush1.xpose.msra.mxu0 0.0
        %3280 = vmatprep.subr.mxu0 0.0
        %3281 = vmatpush1.xpose.msra.mxu0 0.0
        %3282 = vmatprep.subr.mxu0 0.0
        %3283 = vmatpush1.xpose.msra.mxu0 0.0
        %3284 = vmatprep.subr.mxu0 0.0
        %3285 = vmatpush1.xpose.msra.mxu0 0.0
        %3286 = vmatprep.subr.mxu0 0.0
        %3287 = vmatpush1.xpose.msra.mxu0 0.0
        %3288 = vmatprep.subr.mxu0 0.0
        %3289 = vmatpush1.xpose.msra.mxu0 0.0
        %3290 = vmatprep.subr.mxu0 0.0
        %3291 = vmatpush1.xpose.msra.mxu0 0.0
        %3292 = vmatprep.subr.mxu0 0.0
        %3293 = vmatpush1.xpose.msra.mxu0 0.0
        %3294 = vmatprep.subr.mxu0 0.0
        %3295 = vmatpush1.xpose.msra.mxu0 0.0
        %3296 = vmatprep.subr.mxu0 0.0
        %3297 = vmatpush1.xpose.msra.mxu0 0.0
        %3298 = vmatprep.subr.mxu0 0.0
        %3299 = vmatpush1.xpose.msra.mxu0 0.0
        %3300 = vmatprep.subr.mxu0 0.0
        %3301 = vmatpush1.xpose.msra.mxu0 0.0
        %3302 = vmatprep.subr.mxu0 0.0
        %3303 = vmatpush1.xpose.msra.mxu0 0.0
        %3304 = vmatprep.subr.mxu0 0.0
        %3305 = vmatpush1.xpose.msra.mxu0 0.0
        %3306 = vmatprep.subr.mxu0 0.0
        %3307 = vmatpush1.xpose.msra.mxu0 0.0
        %3308 = vmatprep.subr.mxu0 0.0
        %3309 = vmatpush1.xpose.msra.mxu0 0.0
        %3310 = vmatprep.subr.mxu0 0.0
        %3311 = vmatpush1.xpose.msra.mxu0 0.0
        %3312 = vmatprep.subr.mxu0 0.0
        %3313 = vmatpush1.xpose.msra.mxu0 0.0
        %3314 = vmatprep.subr.mxu0 0.0
        %3315 = vmatpush1.xpose.msra.mxu0 0.0
        %3316 = vmatprep.subr.mxu0 0.0
        %3317 = vmatpush1.xpose.msra.mxu0 0.0
        %3318 = vmatprep.subr.mxu0 0.0
        %3319 = vmatpush1.xpose.msra.mxu0 0.0
        %3320 = vmatprep.subr.mxu0 0.0
        %3321 = vmatpush1.xpose.msra.mxu0 0.0
        %3322 = vmatprep.subr.mxu0 0.0
        %3323 = vmatpush1.xpose.msra.mxu0 0.0
        %3324 = vmatprep.subr.mxu0 0.0
        %3325 = vmatpush1.xpose.msra.mxu0 0.0
        %3326 = vmatprep.subr.mxu0 0.0
        %3327 = vmatpush1.xpose.msra.mxu0 0.0
        %3328 = vmatprep.mubr.f32.mxu0 0.0
        %3329 = vmatmul.mubr.f32.gmra.mrb[0].mxu0 %v3252
        %v3330 = vpop.f32.mrb[0].mxu0
        %v3331 = vadd.f32 0.0, %v3330
        %v3332 = vpop.f32.mrb[0].mxu0
        %3333 = vmatprep.mubr.f32.mxu0 0.0
        %3334 = vmatmul.mubr.f32.gmra.mrb[0].mxu0 %v3254
        %v3335 = vpop.f32.mrb[0].mxu0
        %v3336 = vadd.f32 0.0, %v3335
        %v3337 = vpop.f32.mrb[0].mxu0
        %3338 = vmatprep.mubr.f32.mxu0 0.0
        %3339 = vmatmul.mubr.f32.gmra.mrb[0].mxu0 %v3256
        %v3340 = vpop.f32.mrb[0].mxu0
        %v3341 = vadd.f32 0.0, %v3340
        %v3342 = vpop.f32.mrb[0].mxu0
        %3343 = vdwg.mxu0
        %v3344 = vmul.f32 %v3331, 0.35355338
        %v3345 = vmul.f32 %v3336, 0.35355338
        %v3346 = vmul.f32 %v3341, 0.35355338
        %v3347 = vadd.f32 %v3344, %v643
        %v3348 = vadd.f32 %v3345, %v643
        %v3349 = vadd.f32 %v3346, %v643
        %v3350 = vsel %vm1017, %v3347, -inf
        %3351 = vmax.xlane.f32.xlu0 %v3350
        %v3352 = vpop.xlane.xlu0 %3351
        %v3353 = vsel %vm1017, %v3348, -inf
        %3354 = vmax.xlane.f32.xlu0 %v3353
        %v3355 = vpop.xlane.xlu0 %3354
        %v3356 = vsel %vm1017, %v3349, -inf
        %3357 = vmax.xlane.f32.xlu0 %v3356
        %v3358 = vpop.xlane.xlu0 %3357
        %v3359 = vsub.f32 %v3347, %v3352
        %v3360 = vsub.f32 %v3348, %v3355
        %v3361 = vsub.f32 %v3349, %v3358
        %v3362 = vmul.f32 %v3359, 1.442695
        %v3363 = vpow.pop %v3362
        %v3364 = vmul.f32 %v3360, 1.442695
        %v3365 = vpow.pop %v3364
        %v3366 = vmul.f32 %v3361, 1.442695
        %v3367 = vpow.pop %v3366
        %v3368 = vsel %vm1017, %v3363, 0.0
        %3369 = vadd.xlane.f32.xlu0 %v3368
        %v3370 = vpop.xlane.xlu0 %3369
        %v3371 = vsel %vm1017, %v3365, 0.0
        %3372 = vadd.xlane.f32.xlu0 %v3371
        %v3373 = vpop.xlane.xlu0 %3372
        %v3374 = vsel %vm1017, %v3367, 0.0
        %3375 = vadd.xlane.f32.xlu0 %v3374
        %v3376 = vpop.xlane.xlu0 %3375
        %v3377 = vrcp.pop %v3370
        %v3378 = vmul.f32 %v3363, %v3377
        %v3379 = vrcp.pop %v3373
        %v3380 = vmul.f32 %v3365, %v3379
        %v3381 = vrcp.pop %v3376
        %v3382 = vmul.f32 %v3367, %v3381
        %3383 = vrot.lane.b32.xlu0 %v2474, 40
        %v3384 = vpop.permute.xlu0 %3383
        %3385 = vrot.lane.b32.xlu0 %v2479, 40
        %v3386 = vpop.permute.xlu0 %3385
        %3387 = vrot.lane.b32.xlu0 %v2484, 40
        %v3388 = vpop.permute.xlu0 %3387
        %v3393 = vsel %vm1017, %v3378, 0
        %v3396 = vsel %vm1017, %v3380, 0
        %v3399 = vsel %vm1017, %v3382, 0
        %3401 = vmatprep.subr.mxu0 0.0
        %3402 = vmatpush1.msra.mxu0 %v3384
        %3403 = vmatprep.subr.mxu0 0.0
        %3404 = vmatpush1.msra.mxu0 %v3386
        %3405 = vmatprep.subr.mxu0 0.0
        %3406 = vmatpush1.msra.mxu0 %v3388
        %3407 = vmatprep.subr.mxu0 0.0
        %3408 = vmatpush1.msra.mxu0 0.0
        %3409 = vmatprep.subr.mxu0 0.0
        %3410 = vmatpush1.msra.mxu0 0.0
        %3411 = vmatprep.subr.mxu0 0.0
        %3412 = vmatpush1.msra.mxu0 0.0
        %3413 = vmatprep.subr.mxu0 0.0
        %3414 = vmatpush1.msra.mxu0 0.0
        %3415 = vmatprep.subr.mxu0 0.0
        %3416 = vmatpush1.msra.mxu0 0.0
        %3417 = vmatprep.subr.mxu0 0.0
        %3418 = vmatpush1.msra.mxu0 0.0
        %3419 = vmatprep.subr.mxu0 0.0
        %3420 = vmatpush1.msra.mxu0 0.0
        %3421 = vmatprep.subr.mxu0 0.0
        %3422 = vmatpush1.msra.mxu0 0.0
        %3423 = vmatprep.subr.mxu0 0.0
        %3424 = vmatpush1.msra.mxu0 0.0
        %3425 = vmatprep.subr.mxu0 0.0
        %3426 = vmatpush1.msra.mxu0 0.0
        %3427 = vmatprep.subr.mxu0 0.0
        %3428 = vmatpush1.msra.mxu0 0.0
        %3429 = vmatprep.subr.mxu0 0.0
        %3430 = vmatpush1.msra.mxu0 0.0
        %3431 = vmatprep.subr.mxu0 0.0
        %3432 = vmatpush1.msra.mxu0 0.0
        %3433 = vmatprep.subr.mxu0 0.0
        %3434 = vmatpush1.msra.mxu0 0.0
        %3435 = vmatprep.subr.mxu0 0.0
        %3436 = vmatpush1.msra.mxu0 0.0
        %3437 = vmatprep.subr.mxu0 0.0
        %3438 = vmatpush1.msra.mxu0 0.0
        %3439 = vmatprep.subr.mxu0 0.0
        %3440 = vmatpush1.msra.mxu0 0.0
        %3441 = vmatprep.subr.mxu0 0.0
        %3442 = vmatpush1.msra.mxu0 0.0
        %3443 = vmatprep.subr.mxu0 0.0
        %3444 = vmatpush1.msra.mxu0 0.0
        %3445 = vmatprep.subr.mxu0 0.0
        %3446 = vmatpush1.msra.mxu0 0.0
        %3447 = vmatprep.subr.mxu0 0.0
        %3448 = vmatpush1.msra.mxu0 0.0
        %3449 = vmatprep.subr.mxu0 0.0
        %3450 = vmatpush1.msra.mxu0 0.0
        %3451 = vmatprep.subr.mxu0 0.0
        %3452 = vmatpush1.msra.mxu0 0.0
        %3453 = vmatprep.subr.mxu0 0.0
        %3454 = vmatpush1.msra.mxu0 0.0
        %3455 = vmatprep.subr.mxu0 0.0
        %3456 = vmatpush1.msra.mxu0 0.0
        %3457 = vmatprep.subr.mxu0 0.0
        %3458 = vmatpush1.msra.mxu0 0.0
        %3459 = vmatprep.subr.mxu0 0.0
        %3460 = vmatpush1.msra.mxu0 0.0
        %3461 = vmatprep.subr.mxu0 0.0
        %3462 = vmatpush1.msra.mxu0 0.0
        %3463 = vmatprep.subr.mxu0 0.0
        %3464 = vmatpush1.msra.mxu0 0.0
        %3465 = vmatprep.mubr.f32.mxu0 0.0
        %3466 = vmatmul.mubr.f32.gmra.mrb[0].mxu0 %v3393
        %v3467 = vpop.f32.mrb[0].mxu0
        %v3468 = vadd.f32 0.0, %v3467
        %v3469 = vpop.f32.mrb[0].mxu0
        %3470 = vmatprep.mubr.f32.mxu0 0.0
        %3471 = vmatmul.mubr.f32.gmra.mrb[0].mxu0 %v3396
        %v3472 = vpop.f32.mrb[0].mxu0
        %v3473 = vadd.f32 0.0, %v3472
        %v3474 = vpop.f32.mrb[0].mxu0
        %3475 = vmatprep.mubr.f32.mxu0 0.0
        %3476 = vmatmul.mubr.f32.gmra.mrb[0].mxu0 %v3399
        %v3477 = vpop.f32.mrb[0].mxu0
        %v3478 = vadd.f32 0.0, %v3477
        %v3479 = vpop.f32.mrb[0].mxu0
        %3480 = vdwg.mxu0
        %3484 = vrot.lane.b32.xlu0 %v3468, 24
        %v3485 = vpop.permute.xlu0 %3484
        %3486 = vrot.lane.b32.xlu0 %v3473, 24
        %v3487 = vpop.permute.xlu0 %3486
        %3488 = vrot.lane.b32.xlu0 %v3478, 24
        %v3489 = vpop.permute.xlu0 %3488
        %3493 = vst.msk [vmem:[#allocation2] sm:$0xff] %vm1919, %v3485
        %3494 = vst.msk [vmem:[#allocation2 + $0x8] sm:$0xff] %vm1919, %v3487
        %3495 = vst.msk [vmem:[#allocation2 + $0x10] sm:$0xff] %vm1919, %v3489
        %v3496 = vld [vmem:[#allocation2] sm:$0xff]
        %v3497 = vld [vmem:[#allocation2 + $0x8] sm:$0xff]
        %v3498 = vld [vmem:[#allocation2 + $0x10] sm:$0xff]
        %s3499 = scalar_lea.vmem %s7, 32
        %v3500 = vld [vmem:[%s3499] sm:$0xff]
        %v3501 = vld [vmem:[%s3499 + $0x8] sm:$0xff]
        %v3502 = vld [vmem:[%s3499 + $0x10] sm:$0xff]
        %v3503 = vld [vmem:[%s3499 + $0x18] sm:$0xff]
        %s3504 = scalar_lea.vmem %s8, 1
        %v3505 = vld [vmem:[%s3504] sm:$0x1]
        %v3507 = vlaneseq
        %v3508 = vshrl.u32 %v3507, 7
        %v3509 = vsub.s32 0, %v3508
        %v3510 = vrot.slane %v3505, %v3509
        %v3513 = vsel %vm750, %v3496, 0
        %v3516 = vsel %vm750, %v3497, 0
        %v3519 = vsel %vm750, %v3498, 0
        %3521 = vmatprep.subr.mxu0 0.0
        %3522 = vmatpush1.msra.mxu0 %v3500
        %3523 = vmatprep.subr.mxu0 0.0
        %3524 = vmatpush1.msra.mxu0 %v3501
        %3525 = vmatprep.subr.mxu0 0.0
        %3526 = vmatpush1.msra.mxu0 %v3502
        %3527 = vmatprep.subr.mxu0 0.0
        %3528 = vmatpush1.msra.mxu0 %v3503
        %3529 = vmatprep.subr.mxu0 0.0
        %3530 = vmatpush1.msra.mxu0 0.0
        %3531 = vmatprep.subr.mxu0 0.0
        %3532 = vmatpush1.msra.mxu0 0.0
        %3533 = vmatprep.subr.mxu0 0.0
        %3534 = vmatpush1.msra.mxu0 0.0
        %3535 = vmatprep.subr.mxu0 0.0
        %3536 = vmatpush1.msra.mxu0 0.0
        %3537 = vmatprep.subr.mxu0 0.0
        %3538 = vmatpush1.msra.mxu0 0.0
        %3539 = vmatprep.subr.mxu0 0.0
        %3540 = vmatpush1.msra.mxu0 0.0
        %3541 = vmatprep.subr.mxu0 0.0
        %3542 = vmatpush1.msra.mxu0 0.0
        %3543 = vmatprep.subr.mxu0 0.0
        %3544 = vmatpush1.msra.mxu0 0.0
        %3545 = vmatprep.subr.mxu0 0.0
        %3546 = vmatpush1.msra.mxu0 0.0
        %3547 = vmatprep.subr.mxu0 0.0
        %3548 = vmatpush1.msra.mxu0 0.0
        %3549 = vmatprep.subr.mxu0 0.0
        %3550 = vmatpush1.msra.mxu0 0.0
        %3551 = vmatprep.subr.mxu0 0.0
        %3552 = vmatpush1.msra.mxu0 0.0
        %3553 = vmatprep.subr.mxu0 0.0
        %3554 = vmatpush1.msra.mxu0 0.0
        %3555 = vmatprep.subr.mxu0 0.0
        %3556 = vmatpush1.msra.mxu0 0.0
        %3557 = vmatprep.subr.mxu0 0.0
        %3558 = vmatpush1.msra.mxu0 0.0
        %3559 = vmatprep.subr.mxu0 0.0
        %3560 = vmatpush1.msra.mxu0 0.0
        %3561 = vmatprep.subr.mxu0 0.0
        %3562 = vmatpush1.msra.mxu0 0.0
        %3563 = vmatprep.subr.mxu0 0.0
        %3564 = vmatpush1.msra.mxu0 0.0
        %3565 = vmatprep.subr.mxu0 0.0
        %3566 = vmatpush1.msra.mxu0 0.0
        %3567 = vmatprep.subr.mxu0 0.0
        %3568 = vmatpush1.msra.mxu0 0.0
        %3569 = vmatprep.subr.mxu0 0.0
        %3570 = vmatpush1.msra.mxu0 0.0
        %3571 = vmatprep.subr.mxu0 0.0
        %3572 = vmatpush1.msra.mxu0 0.0
        %3573 = vmatprep.subr.mxu0 0.0
        %3574 = vmatpush1.msra.mxu0 0.0
        %3575 = vmatprep.subr.mxu0 0.0
        %3576 = vmatpush1.msra.mxu0 0.0
        %3577 = vmatprep.subr.mxu0 0.0
        %3578 = vmatpush1.msra.mxu0 0.0
        %3579 = vmatprep.subr.mxu0 0.0
        %3580 = vmatpush1.msra.mxu0 0.0
        %3581 = vmatprep.subr.mxu0 0.0
        %3582 = vmatpush1.msra.mxu0 0.0
        %3583 = vmatprep.subr.mxu0 0.0
        %3584 = vmatpush1.msra.mxu0 0.0
        %3585 = vmatprep.mubr.f32.mxu0 0.0
        %3586 = vmatmul.mubr.f32.gmra.mrb[0].mxu0 %v3513
        %v3587 = vpop.f32.mrb[0].mxu0
        %v3588 = vadd.f32 %v3510, %v3587
        %v3589 = vpop.f32.mrb[0].mxu0
        %3590 = vmatprep.mubr.f32.mxu0 0.0
        %3591 = vmatmul.mubr.f32.gmra.mrb[0].mxu0 %v3516
        %v3592 = vpop.f32.mrb[0].mxu0
        %v3593 = vadd.f32 %v3510, %v3592
        %v3594 = vpop.f32.mrb[0].mxu0
        %3595 = vmatprep.mubr.f32.mxu0 0.0
        %3596 = vmatmul.mubr.f32.gmra.mrb[0].mxu0 %v3519
        %v3597 = vpop.f32.mrb[0].mxu0
        %v3598 = vadd.f32 %v3510, %v3597
        %v3599 = vpop.f32.mrb[0].mxu0
        %3600 = vdwg.mxu0
        %v3601 = vadd.f32 %v2318, %v3588
        %v3602 = vadd.f32 %v2319, %v3593
        %v3603 = vadd.f32 %v2320, %v3598
        %s3604 = scalar_lea.vmem %s9, 1
        %v3605 = vld [vmem:[%s3604] sm:$0x1]
        %s3606 = scalar_lea.vmem %s10, 1
        %v3607 = vld [vmem:[%s3606] sm:$0x1]
        %v3608 = vsel %vm750, %v3601, 0.0
        %3609 = vadd.xlane.f32.xlu0 %v3608
        %v3610 = vpop.xlane.xlu0 %3609
        %v3611 = vsel %vm750, %v3602, 0.0
        %3612 = vadd.xlane.f32.xlu0 %v3611
        %v3613 = vpop.xlane.xlu0 %3612
        %v3614 = vsel %vm750, %v3603, 0.0
        %3615 = vadd.xlane.f32.xlu0 %v3614
        %v3616 = vpop.xlane.xlu0 %3615
        %v3617 = vmul.f32 %v3610, %v760
        %v3618 = vmul.f32 %v3613, %v760
        %v3619 = vmul.f32 %v3616, %v760
        %v3620 = vsub.f32 %v3601, %v3617
        %v3621 = vsub.f32 %v3602, %v3618
        %v3622 = vsub.f32 %v3603, %v3619
        %v3623 = vmul.f32 %v3620, %v3620
        %v3624 = vmul.f32 %v3621, %v3621
        %v3625 = vmul.f32 %v3622, %v3622
        %v3626 = vsel %vm750, %v3623, 0.0
        %3627 = vadd.xlane.f32.xlu0 %v3626
        %v3628 = vpop.xlane.xlu0 %3627
        %v3629 = vsel %vm750, %v3624, 0.0
        %3630 = vadd.xlane.f32.xlu0 %v3629
        %v3631 = vpop.xlane.xlu0 %3630
        %v3632 = vsel %vm750, %v3625, 0.0
        %3633 = vadd.xlane.f32.xlu0 %v3632
        %v3634 = vpop.xlane.xlu0 %3633
        %v3635 = vmul.f32 %v3628, %v760
        %v3636 = vmul.f32 %v3631, %v760
        %v3637 = vmul.f32 %v3634, %v760
        %v3638 = vadd.f32 %v3635, 1e-06
        %v3639 = vadd.f32 %v3636, 1e-06
        %v3640 = vadd.f32 %v3637, 1e-06
        %v3641 = vrsqrt.pop %v3638
        %v3642 = vrsqrt.pop %v3639
        %v3643 = vrsqrt.pop %v3640
        %v3644 = vmul.f32 %v3620, %v3641
        %v3645 = vmul.f32 %v3621, %v3642
        %v3646 = vmul.f32 %v3622, %v3643
        %v3648 = vlaneseq
        %v3649 = vshrl.u32 %v3648, 7
        %v3650 = vsub.s32 0, %v3649
        %v3651 = vrot.slane %v3605, %v3650
        %v3653 = vmul.f32 %v3644, %v3651
        %v3654 = vmul.f32 %v3645, %v3651
        %v3655 = vmul.f32 %v3646, %v3651
        %v3657 = vlaneseq
        %v3658 = vshrl.u32 %v3657, 7
        %v3659 = vsub.s32 0, %v3658
        %v3660 = vrot.slane %v3607, %v3659
        %v3662 = vadd.f32 %v3653, %v3660
        %v3663 = vadd.f32 %v3654, %v3660
        %v3664 = vadd.f32 %v3655, %v3660
        %s3665 = scalar_lea.vmem %s11, 32
        %v3666 = vld [vmem:[%s3665] sm:$0xff]
        %v3667 = vld [vmem:[%s3665 + $0x8] sm:$0xff]
        %v3668 = vld [vmem:[%s3665 + $0x10] sm:$0xff]
        %v3669 = vld [vmem:[%s3665 + $0x18] sm:$0xff]
        %s3670 = scalar_lea.vmem %s12, 1
        %v3671 = vld [vmem:[%s3670] sm:$0x1]
        %v3673 = vlaneseq
        %v3674 = vshrl.u32 %v3673, 7
        %v3675 = vsub.s32 0, %v3674
        %v3676 = vrot.slane %v3671, %v3675
        %v3679 = vsel %vm750, %v3662, 0
        %v3682 = vsel %vm750, %v3663, 0
        %v3685 = vsel %vm750, %v3664, 0
        %3687 = vmatprep.subr.mxu0 0.0
        %3688 = vmatpush1.msra.mxu0 %v3666
        %3689 = vmatprep.subr.mxu0 0.0
        %3690 = vmatpush1.msra.mxu0 %v3667
        %3691 = vmatprep.subr.mxu0 0.0
        %3692 = vmatpush1.msra.mxu0 %v3668
        %3693 = vmatprep.subr.mxu0 0.0
        %3694 = vmatpush1.msra.mxu0 %v3669
        %3695 = vmatprep.subr.mxu0 0.0
        %3696 = vmatpush1.msra.mxu0 0.0
        %3697 = vmatprep.subr.mxu0 0.0
        %3698 = vmatpush1.msra.mxu0 0.0
        %3699 = vmatprep.subr.mxu0 0.0
        %3700 = vmatpush1.msra.mxu0 0.0
        %3701 = vmatprep.subr.mxu0 0.0
        %3702 = vmatpush1.msra.mxu0 0.0
        %3703 = vmatprep.subr.mxu0 0.0
        %3704 = vmatpush1.msra.mxu0 0.0
        %3705 = vmatprep.subr.mxu0 0.0
        %3706 = vmatpush1.msra.mxu0 0.0
        %3707 = vmatprep.subr.mxu0 0.0
        %3708 = vmatpush1.msra.mxu0 0.0
        %3709 = vmatprep.subr.mxu0 0.0
        %3710 = vmatpush1.msra.mxu0 0.0
        %3711 = vmatprep.subr.mxu0 0.0
        %3712 = vmatpush1.msra.mxu0 0.0
        %3713 = vmatprep.subr.mxu0 0.0
        %3714 = vmatpush1.msra.mxu0 0.0
        %3715 = vmatprep.subr.mxu0 0.0
        %3716 = vmatpush1.msra.mxu0 0.0
        %3717 = vmatprep.subr.mxu0 0.0
        %3718 = vmatpush1.msra.mxu0 0.0
        %3719 = vmatprep.subr.mxu0 0.0
        %3720 = vmatpush1.msra.mxu0 0.0
        %3721 = vmatprep.subr.mxu0 0.0
        %3722 = vmatpush1.msra.mxu0 0.0
        %3723 = vmatprep.subr.mxu0 0.0
        %3724 = vmatpush1.msra.mxu0 0.0
        %3725 = vmatprep.subr.mxu0 0.0
        %3726 = vmatpush1.msra.mxu0 0.0
        %3727 = vmatprep.subr.mxu0 0.0
        %3728 = vmatpush1.msra.mxu0 0.0
        %3729 = vmatprep.subr.mxu0 0.0
        %3730 = vmatpush1.msra.mxu0 0.0
        %3731 = vmatprep.subr.mxu0 0.0
        %3732 = vmatpush1.msra.mxu0 0.0
        %3733 = vmatprep.subr.mxu0 0.0
        %3734 = vmatpush1.msra.mxu0 0.0
        %3735 = vmatprep.subr.mxu0 0.0
        %3736 = vmatpush1.msra.mxu0 0.0
        %3737 = vmatprep.subr.mxu0 0.0
        %3738 = vmatpush1.msra.mxu0 0.0
        %3739 = vmatprep.subr.mxu0 0.0
        %3740 = vmatpush1.msra.mxu0 0.0
        %3741 = vmatprep.subr.mxu0 0.0
        %3742 = vmatpush1.msra.mxu0 0.0
        %3743 = vmatprep.subr.mxu0 0.0
        %3744 = vmatpush1.msra.mxu0 0.0
        %3745 = vmatprep.subr.mxu0 0.0
        %3746 = vmatpush1.msra.mxu0 0.0
        %3747 = vmatprep.subr.mxu0 0.0
        %3748 = vmatpush1.msra.mxu0 0.0
        %3749 = vmatprep.subr.mxu0 0.0
        %3750 = vmatpush1.msra.mxu0 0.0
        %3751 = vmatprep.mubr.f32.mxu0 0.0
        %3752 = vmatmul.mubr.f32.gmra.mrb[0].mxu0 %v3679
        %v3753 = vpop.f32.mrb[0].mxu0
        %v3754 = vadd.f32 %v3676, %v3753
        %v3755 = vpop.f32.mrb[0].mxu0
        %3756 = vmatprep.mubr.f32.mxu0 0.0
        %3757 = vmatmul.mubr.f32.gmra.mrb[0].mxu0 %v3682
        %v3758 = vpop.f32.mrb[0].mxu0
        %v3759 = vadd.f32 %v3676, %v3758
        %v3760 = vpop.f32.mrb[0].mxu0
        %3761 = vmatprep.mubr.f32.mxu0 0.0
        %3762 = vmatmul.mubr.f32.gmra.mrb[0].mxu0 %v3685
        %v3763 = vpop.f32.mrb[0].mxu0
        %v3764 = vadd.f32 %v3676, %v3763
        %v3765 = vpop.f32.mrb[0].mxu0
        %3766 = vdwg.mxu0
        %v3767 = vmul.f32 %v3754, %v3754
        %v3768 = vmul.f32 %v3759, %v3759
        %v3769 = vmul.f32 %v3764, %v3764
        %v3770 = vmul.f32 %v3754, %v3767
        %v3771 = vmul.f32 %v3759, %v3768
        %v3772 = vmul.f32 %v3764, %v3769
        %v3773 = vmul.f32 %v3770, 0.044715
        %v3774 = vmul.f32 %v3771, 0.044715
        %v3775 = vmul.f32 %v3772, 0.044715
        %v3776 = vadd.f32 %v3754, %v3773
        %v3777 = vadd.f32 %v3759, %v3774
        %v3778 = vadd.f32 %v3764, %v3775
        %v3779 = vmul.f32 %v3776, 0.7978846
        %v3780 = vmul.f32 %v3777, 0.7978846
        %v3781 = vmul.f32 %v3778, 0.7978846
        %v3782 = vtanh.pop %v3779
        %v3783 = vtanh.pop %v3780
        %v3784 = vtanh.pop %v3781
        %v3785 = vadd.f32 %v3782, 1.0
        %v3786 = vadd.f32 %v3783, 1.0
        %v3787 = vadd.f32 %v3784, 1.0
        %v3788 = vmul.f32 %v3785, 0.5
        %v3789 = vmul.f32 %v3786, 0.5
        %v3790 = vmul.f32 %v3787, 0.5
        %v3791 = vmul.f32 %v3754, %v3788
        %v3792 = vmul.f32 %v3759, %v3789
        %v3793 = vmul.f32 %v3764, %v3790
        %s3794 = scalar_lea.vmem %s13, 128
        %v3795 = vld [vmem:[%s3794] sm:$0xff]
        %v3796 = vld [vmem:[%s3794 + $0x8] sm:$0xff]
        %v3797 = vld [vmem:[%s3794 + $0x10] sm:$0xff]
        %v3798 = vld [vmem:[%s3794 + $0x18] sm:$0xff]
        %v3799 = vld [vmem:[%s3794 + $0x20] sm:$0xff]
        %v3800 = vld [vmem:[%s3794 + $0x28] sm:$0xff]
        %v3801 = vld [vmem:[%s3794 + $0x30] sm:$0xff]
        %v3802 = vld [vmem:[%s3794 + $0x38] sm:$0xff]
        %v3803 = vld [vmem:[%s3794 + $0x40] sm:$0xff]
        %v3804 = vld [vmem:[%s3794 + $0x48] sm:$0xff]
        %v3805 = vld [vmem:[%s3794 + $0x50] sm:$0xff]
        %v3806 = vld [vmem:[%s3794 + $0x58] sm:$0xff]
        %v3807 = vld [vmem:[%s3794 + $0x60] sm:$0xff]
        %v3808 = vld [vmem:[%s3794 + $0x68] sm:$0xff]
        %v3809 = vld [vmem:[%s3794 + $0x70] sm:$0xff]
        %v3810 = vld [vmem:[%s3794 + $0x78] sm:$0xff]
        %s3811 = scalar_lea.vmem %s14, 1
        %v3812 = vld [vmem:[%s3811] sm:$0x1]
        %v3814 = vlaneseq
        %v3815 = vshrl.u32 %v3814, 7
        %v3816 = vsub.s32 0, %v3815
        %v3817 = vrot.slane %v3812, %v3816
        %3819 = vmatprep.subr.mxu0 0.0
        %3820 = vmatpush1.msra.mxu0 %v3795
        %3821 = vmatprep.subr.mxu0 0.0
        %3822 = vmatpush1.msra.mxu0 %v3796
        %3823 = vmatprep.subr.mxu0 0.0
        %3824 = vmatpush1.msra.mxu0 %v3797
        %3825 = vmatprep.subr.mxu0 0.0
        %3826 = vmatpush1.msra.mxu0 %v3798
        %3827 = vmatprep.subr.mxu0 0.0
        %3828 = vmatpush1.msra.mxu0 %v3799
        %3829 = vmatprep.subr.mxu0 0.0
        %3830 = vmatpush1.msra.mxu0 %v3800
        %3831 = vmatprep.subr.mxu0 0.0
        %3832 = vmatpush1.msra.mxu0 %v3801
        %3833 = vmatprep.subr.mxu0 0.0
        %3834 = vmatpush1.msra.mxu0 %v3802
        %3835 = vmatprep.subr.mxu0 0.0
        %3836 = vmatpush1.msra.mxu0 %v3803
        %3837 = vmatprep.subr.mxu0 0.0
        %3838 = vmatpush1.msra.mxu0 %v3804
        %3839 = vmatprep.subr.mxu0 0.0
        %3840 = vmatpush1.msra.mxu0 %v3805
        %3841 = vmatprep.subr.mxu0 0.0
        %3842 = vmatpush1.msra.mxu0 %v3806
        %3843 = vmatprep.subr.mxu0 0.0
        %3844 = vmatpush1.msra.mxu0 %v3807
        %3845 = vmatprep.subr.mxu0 0.0
        %3846 = vmatpush1.msra.mxu0 %v3808
        %3847 = vmatprep.subr.mxu0 0.0
        %3848 = vmatpush1.msra.mxu0 %v3809
        %3849 = vmatprep.subr.mxu0 0.0
        %3850 = vmatpush1.msra.mxu0 %v3810
        %3851 = vmatprep.subr.mxu0 0.0
        %3852 = vmatpush1.msra.mxu0 0.0
        %3853 = vmatprep.subr.mxu0 0.0
        %3854 = vmatpush1.msra.mxu0 0.0
        %3855 = vmatprep.subr.mxu0 0.0
        %3856 = vmatpush1.msra.mxu0 0.0
        %3857 = vmatprep.subr.mxu0 0.0
        %3858 = vmatpush1.msra.mxu0 0.0
        %3859 = vmatprep.subr.mxu0 0.0
        %3860 = vmatpush1.msra.mxu0 0.0
        %3861 = vmatprep.subr.mxu0 0.0
        %3862 = vmatpush1.msra.mxu0 0.0
        %3863 = vmatprep.subr.mxu0 0.0
        %3864 = vmatpush1.msra.mxu0 0.0
        %3865 = vmatprep.subr.mxu0 0.0
        %3866 = vmatpush1.msra.mxu0 0.0
        %3867 = vmatprep.subr.mxu0 0.0
        %3868 = vmatpush1.msra.mxu0 0.0
        %3869 = vmatprep.subr.mxu0 0.0
        %3870 = vmatpush1.msra.mxu0 0.0
        %3871 = vmatprep.subr.mxu0 0.0
        %3872 = vmatpush1.msra.mxu0 0.0
        %3873 = vmatprep.subr.mxu0 0.0
        %3874 = vmatpush1.msra.mxu0 0.0
        %3875 = vmatprep.subr.mxu0 0.0
        %3876 = vmatpush1.msra.mxu0 0.0
        %3877 = vmatprep.subr.mxu0 0.0
        %3878 = vmatpush1.msra.mxu0 0.0
        %3879 = vmatprep.subr.mxu0 0.0
        %3880 = vmatpush1.msra.mxu0 0.0
        %3881 = vmatprep.subr.mxu0 0.0
        %3882 = vmatpush1.msra.mxu0 0.0
        %3883 = vmatprep.mubr.f32.mxu0 0.0
        %3884 = vmatmul.mubr.f32.gmra.mrb[0].mxu0 %v3791
        %v3885 = vpop.f32.mrb[0].mxu0
        %v3886 = vadd.f32 %v3817, %v3885
        %v3887 = vpop.f32.mrb[0].mxu0
        %3888 = vmatprep.mubr.f32.mxu0 0.0
        %3889 = vmatmul.mubr.f32.gmra.mrb[0].mxu0 %v3792
        %v3890 = vpop.f32.mrb[0].mxu0
        %v3891 = vadd.f32 %v3817, %v3890
        %v3892 = vpop.f32.mrb[0].mxu0
        %3893 = vmatprep.mubr.f32.mxu0 0.0
        %3894 = vmatmul.mubr.f32.gmra.mrb[0].mxu0 %v3793
        %v3895 = vpop.f32.mrb[0].mxu0
        %v3896 = vadd.f32 %v3817, %v3895
        %v3897 = vpop.f32.mrb[0].mxu0
        %3898 = vdwg.mxu0
        %v3899 = vadd.f32 %v3601, %v3886
        %v3900 = vadd.f32 %v3602, %v3891
        %v3901 = vadd.f32 %v3603, %v3896
        %3902 = vst.msk [vmem:[%s639 + $0x18] sm:$0xff] %vm750, %v3899
        %3903 = vst.msk [vmem:[%s639 + $0x20] sm:$0xff] %vm750, %v3900
        %3904 = vst.msk [vmem:[%s639 + $0x28] sm:$0xff] %vm750, %v3901
        %s3905 = scalar_lea.vmem %s3, 2
        %v3906 = vld [vmem:[%s3905] sm:$0x1]
        %s3907 = scalar_lea.vmem %s4, 2
        %v3908 = vld [vmem:[%s3907] sm:$0x1]
        %v3909 = vsel %vm750, %v3899, 0.0
        %3910 = vadd.xlane.f32.xlu0 %v3909
        %v3911 = vpop.xlane.xlu0 %3910
        %v3912 = vsel %vm750, %v3900, 0.0
        %3913 = vadd.xlane.f32.xlu0 %v3912
        %v3914 = vpop.xlane.xlu0 %3913
        %v3915 = vsel %vm750, %v3901, 0.0
        %3916 = vadd.xlane.f32.xlu0 %v3915
        %v3917 = vpop.xlane.xlu0 %3916
        %v3918 = vmul.f32 %v3911, %v760
        %v3919 = vmul.f32 %v3914, %v760
        %v3920 = vmul.f32 %v3917, %v760
        %v3921 = vsub.f32 %v3899, %v3918
        %v3922 = vsub.f32 %v3900, %v3919
        %v3923 = vsub.f32 %v3901, %v3920
        %v3924 = vmul.f32 %v3921, %v3921
        %v3925 = vmul.f32 %v3922, %v3922
        %v3926 = vmul.f32 %v3923, %v3923
        %v3927 = vsel %vm750, %v3924, 0.0
        %3928 = vadd.xlane.f32.xlu0 %v3927
        %v3929 = vpop.xlane.xlu0 %3928
        %v3930 = vsel %vm750, %v3925, 0.0
        %3931 = vadd.xlane.f32.xlu0 %v3930
        %v3932 = vpop.xlane.xlu0 %3931
        %v3933 = vsel %vm750, %v3926, 0.0
        %3934 = vadd.xlane.f32.xlu0 %v3933
        %v3935 = vpop.xlane.xlu0 %3934
        %v3936 = vmul.f32 %v3929, %v760
        %v3937 = vmul.f32 %v3932, %v760
        %v3938 = vmul.f32 %v3935, %v760
        %v3939 = vadd.f32 %v3936, 1e-06
        %v3940 = vadd.f32 %v3937, 1e-06
        %v3941 = vadd.f32 %v3938, 1e-06
        %v3942 = vrsqrt.pop %v3939
        %v3943 = vrsqrt.pop %v3940
        %v3944 = vrsqrt.pop %v3941
        %v3945 = vmul.f32 %v3921, %v3942
        %v3946 = vmul.f32 %v3922, %v3943
        %v3947 = vmul.f32 %v3923, %v3944
        %v3949 = vlaneseq
        %v3950 = vshrl.u32 %v3949, 7
        %v3951 = vsub.s32 0, %v3950
        %v3952 = vrot.slane %v3906, %v3951
        %v3954 = vmul.f32 %v3945, %v3952
        %v3955 = vmul.f32 %v3946, %v3952
        %v3956 = vmul.f32 %v3947, %v3952
        %v3958 = vlaneseq
        %v3959 = vshrl.u32 %v3958, 7
        %v3960 = vsub.s32 0, %v3959
        %v3961 = vrot.slane %v3908, %v3960
        %v3963 = vadd.f32 %v3954, %v3961
        %v3964 = vadd.f32 %v3955, %v3961
        %v3965 = vadd.f32 %v3956, %v3961
        %s3966 = scalar_lea.vmem %s5, 64
        %v3967 = vld [vmem:[%s3966] sm:$0xff]
        %v3968 = vld [vmem:[%s3966 + $0x8] sm:$0xff]
        %v3969 = vld [vmem:[%s3966 + $0x10] sm:$0xff]
        %v3970 = vld [vmem:[%s3966 + $0x18] sm:$0xff]
        %s3971 = scalar_lea.vmem %s6, 2
        %v3972 = vld [vmem:[%s3971] sm:$0x1]
        %v3974 = vlaneseq
        %v3975 = vshrl.u32 %v3974, 7
        %v3976 = vsub.s32 0, %v3975
        %v3977 = vrot.slane %v3972, %v3976
        %v3980 = vsel %vm750, %v3963, 0
        %v3983 = vsel %vm750, %v3964, 0
        %v3986 = vsel %vm750, %v3965, 0
        %3988 = vmatprep.subr.mxu0 0.0
        %3989 = vmatpush1.msra.mxu0 %v3967
        %3990 = vmatprep.subr.mxu0 0.0
        %3991 = vmatpush1.msra.mxu0 %v3968
        %3992 = vmatprep.subr.mxu0 0.0
        %3993 = vmatpush1.msra.mxu0 %v3969
        %3994 = vmatprep.subr.mxu0 0.0
        %3995 = vmatpush1.msra.mxu0 %v3970
        %3996 = vmatprep.subr.mxu0 0.0
        %3997 = vmatpush1.msra.mxu0 0.0
        %3998 = vmatprep.subr.mxu0 0.0
        %3999 = vmatpush1.msra.mxu0 0.0
        %4000 = vmatprep.subr.mxu0 0.0
        %4001 = vmatpush1.msra.mxu0 0.0
        %4002 = vmatprep.subr.mxu0 0.0
        %4003 = vmatpush1.msra.mxu0 0.0
        %4004 = vmatprep.subr.mxu0 0.0
        %4005 = vmatpush1.msra.mxu0 0.0
        %4006 = vmatprep.subr.mxu0 0.0
        %4007 = vmatpush1.msra.mxu0 0.0
        %4008 = vmatprep.subr.mxu0 0.0
        %4009 = vmatpush1.msra.mxu0 0.0
        %4010 = vmatprep.subr.mxu0 0.0
        %4011 = vmatpush1.msra.mxu0 0.0
        %4012 = vmatprep.subr.mxu0 0.0
        %4013 = vmatpush1.msra.mxu0 0.0
        %4014 = vmatprep.subr.mxu0 0.0
        %4015 = vmatpush1.msra.mxu0 0.0
        %4016 = vmatprep.subr.mxu0 0.0
        %4017 = vmatpush1.msra.mxu0 0.0
        %4018 = vmatprep.subr.mxu0 0.0
        %4019 = vmatpush1.msra.mxu0 0.0
        %4020 = vmatprep.subr.mxu0 0.0
        %4021 = vmatpush1.msra.mxu0 0.0
        %4022 = vmatprep.subr.mxu0 0.0
        %4023 = vmatpush1.msra.mxu0 0.0
        %4024 = vmatprep.subr.mxu0 0.0
        %4025 = vmatpush1.msra.mxu0 0.0
        %4026 = vmatprep.subr.mxu0 0.0
        %4027 = vmatpush1.msra.mxu0 0.0
        %4028 = vmatprep.subr.mxu0 0.0
        %4029 = vmatpush1.msra.mxu0 0.0
        %4030 = vmatprep.subr.mxu0 0.0
        %4031 = vmatpush1.msra.mxu0 0.0
        %4032 = vmatprep.subr.mxu0 0.0
        %4033 = vmatpush1.msra.mxu0 0.0
        %4034 = vmatprep.subr.mxu0 0.0
        %4035 = vmatpush1.msra.mxu0 0.0
        %4036 = vmatprep.subr.mxu0 0.0
        %4037 = vmatpush1.msra.mxu0 0.0
        %4038 = vmatprep.subr.mxu0 0.0
        %4039 = vmatpush1.msra.mxu0 0.0
        %4040 = vmatprep.subr.mxu0 0.0
        %4041 = vmatpush1.msra.mxu0 0.0
        %4042 = vmatprep.subr.mxu0 0.0
        %4043 = vmatpush1.msra.mxu0 0.0
        %4044 = vmatprep.subr.mxu0 0.0
        %4045 = vmatpush1.msra.mxu0 0.0
        %4046 = vmatprep.subr.mxu0 0.0
        %4047 = vmatpush1.msra.mxu0 0.0
        %4048 = vmatprep.subr.mxu0 0.0
        %4049 = vmatpush1.msra.mxu0 0.0
        %4050 = vmatprep.subr.mxu0 0.0
        %4051 = vmatpush1.msra.mxu0 0.0
        %4052 = vmatprep.mubr.f32.mxu0 0.0
        %4053 = vmatmul.mubr.f32.gmra.mrb[0].mxu0 %v3980
        %v4054 = vpop.f32.mrb[0].mxu0
        %v4055 = vadd.f32 %v3977, %v4054
        %v4056 = vpop.f32.mrb[0].mxu0
        %4057 = vmatprep.mubr.f32.mxu0 0.0
        %4058 = vmatmul.mubr.f32.gmra.mrb[0].mxu0 %v3983
        %v4059 = vpop.f32.mrb[0].mxu0
        %v4060 = vadd.f32 %v3977, %v4059
        %v4061 = vpop.f32.mrb[0].mxu0
        %4062 = vmatprep.mubr.f32.mxu0 0.0
        %4063 = vmatmul.mubr.f32.gmra.mrb[0].mxu0 %v3986
        %v4064 = vpop.f32.mrb[0].mxu0
        %v4065 = vadd.f32 %v3977, %v4064
        %v4066 = vpop.f32.mrb[0].mxu0
        %4067 = vdwg.mxu0
        %4071 = vrot.lane.b32.xlu0 %v4055, 96
        %v4072 = vpop.permute.xlu0 %4071
        %4073 = vrot.lane.b32.xlu0 %v4060, 96
        %v4074 = vpop.permute.xlu0 %4073
        %4075 = vrot.lane.b32.xlu0 %v4065, 96
        %v4076 = vpop.permute.xlu0 %4075
        %v4077 = vsel %vm918, %v4055, 0
        %v4079 = vsel %vm918, %v4060, 0
        %v4081 = vsel %vm918, %v4065, 0
        %v4083 = vsel %vm918, %v4072, 0
        %v4085 = vsel %vm918, %v4074, 0
        %v4087 = vsel %vm918, %v4076, 0
        %4089 = vmatprep.subr.mxu0 0.0
        %4090 = vmatpush1.xpose.msra.mxu0 %v4083
        %4091 = vmatprep.subr.mxu0 0.0
        %4092 = vmatpush1.xpose.msra.mxu0 %v4085
        %4093 = vmatprep.subr.mxu0 0.0
        %4094 = vmatpush1.xpose.msra.mxu0 %v4087
        %4095 = vmatprep.subr.mxu0 0.0
        %4096 = vmatpush1.xpose.msra.mxu0 0.0
        %4097 = vmatprep.subr.mxu0 0.0
        %4098 = vmatpush1.xpose.msra.mxu0 0.0
        %4099 = vmatprep.subr.mxu0 0.0
        %4100 = vmatpush1.xpose.msra.mxu0 0.0
        %4101 = vmatprep.subr.mxu0 0.0
        %4102 = vmatpush1.xpose.msra.mxu0 0.0
        %4103 = vmatprep.subr.mxu0 0.0
        %4104 = vmatpush1.xpose.msra.mxu0 0.0
        %4105 = vmatprep.subr.mxu0 0.0
        %4106 = vmatpush1.xpose.msra.mxu0 0.0
        %4107 = vmatprep.subr.mxu0 0.0
        %4108 = vmatpush1.xpose.msra.mxu0 0.0
        %4109 = vmatprep.subr.mxu0 0.0
        %4110 = vmatpush1.xpose.msra.mxu0 0.0
        %4111 = vmatprep.subr.mxu0 0.0
        %4112 = vmatpush1.xpose.msra.mxu0 0.0
        %4113 = vmatprep.subr.mxu0 0.0
        %4114 = vmatpush1.xpose.msra.mxu0 0.0
        %4115 = vmatprep.subr.mxu0 0.0
        %4116 = vmatpush1.xpose.msra.mxu0 0.0
        %4117 = vmatprep.subr.mxu0 0.0
        %4118 = vmatpush1.xpose.msra.mxu0 0.0
        %4119 = vmatprep.subr.mxu0 0.0
        %4120 = vmatpush1.xpose.msra.mxu0 0.0
        %4121 = vmatprep.subr.mxu0 0.0
        %4122 = vmatpush1.xpose.msra.mxu0 0.0
        %4123 = vmatprep.subr.mxu0 0.0
        %4124 = vmatpush1.xpose.msra.mxu0 0.0
        %4125 = vmatprep.subr.mxu0 0.0
        %4126 = vmatpush1.xpose.msra.mxu0 0.0
        %4127 = vmatprep.subr.mxu0 0.0
        %4128 = vmatpush1.xpose.msra.mxu0 0.0
        %4129 = vmatprep.subr.mxu0 0.0
        %4130 = vmatpush1.xpose.msra.mxu0 0.0
        %4131 = vmatprep.subr.mxu0 0.0
        %4132 = vmatpush1.xpose.msra.mxu0 0.0
        %4133 = vmatprep.subr.mxu0 0.0
        %4134 = vmatpush1.xpose.msra.mxu0 0.0
        %4135 = vmatprep.subr.mxu0 0.0
        %4136 = vmatpush1.xpose.msra.mxu0 0.0
        %4137 = vmatprep.subr.mxu0 0.0
        %4138 = vmatpush1.xpose.msra.mxu0 0.0
        %4139 = vmatprep.subr.mxu0 0.0
        %4140 = vmatpush1.xpose.msra.mxu0 0.0
        %4141 = vmatprep.subr.mxu0 0.0
        %4142 = vmatpush1.xpose.msra.mxu0 0.0
        %4143 = vmatprep.subr.mxu0 0.0
        %4144 = vmatpush1.xpose.msra.mxu0 0.0
        %4145 = vmatprep.subr.mxu0 0.0
        %4146 = vmatpush1.xpose.msra.mxu0 0.0
        %4147 = vmatprep.subr.mxu0 0.0
        %4148 = vmatpush1.xpose.msra.mxu0 0.0
        %4149 = vmatprep.subr.mxu0 0.0
        %4150 = vmatpush1.xpose.msra.mxu0 0.0
        %4151 = vmatprep.subr.mxu0 0.0
        %4152 = vmatpush1.xpose.msra.mxu0 0.0
        %4153 = vmatprep.mubr.f32.mxu0 0.0
        %4154 = vmatmul.mubr.f32.gmra.mrb[0].mxu0 %v4077
        %v4155 = vpop.f32.mrb[0].mxu0
        %v4156 = vadd.f32 0.0, %v4155
        %v4157 = vpop.f32.mrb[0].mxu0
        %4158 = vmatprep.mubr.f32.mxu0 0.0
        %4159 = vmatmul.mubr.f32.gmra.mrb[0].mxu0 %v4079
        %v4160 = vpop.f32.mrb[0].mxu0
        %v4161 = vadd.f32 0.0, %v4160
        %v4162 = vpop.f32.mrb[0].mxu0
        %4163 = vmatprep.mubr.f32.mxu0 0.0
        %4164 = vmatmul.mubr.f32.gmra.mrb[0].mxu0 %v4081
        %v4165 = vpop.f32.mrb[0].mxu0
        %v4166 = vadd.f32 0.0, %v4165
        %v4167 = vpop.f32.mrb[0].mxu0
        %4168 = vdwg.mxu0
        %v4169 = vmul.f32 %v4156, 0.35355338
        %v4170 = vmul.f32 %v4161, 0.35355338
        %v4171 = vmul.f32 %v4166, 0.35355338
        %v4172 = vadd.f32 %v4169, %v643
        %v4173 = vadd.f32 %v4170, %v643
        %v4174 = vadd.f32 %v4171, %v643
        %v4175 = vsel %vm1017, %v4172, -inf
        %4176 = vmax.xlane.f32.xlu0 %v4175
        %v4177 = vpop.xlane.xlu0 %4176
        %v4178 = vsel %vm1017, %v4173, -inf
        %4179 = vmax.xlane.f32.xlu0 %v4178
        %v4180 = vpop.xlane.xlu0 %4179
        %v4181 = vsel %vm1017, %v4174, -inf
        %4182 = vmax.xlane.f32.xlu0 %v4181
        %v4183 = vpop.xlane.xlu0 %4182
        %v4184 = vsub.f32 %v4172, %v4177
        %v4185 = vsub.f32 %v4173, %v4180
        %v4186 = vsub.f32 %v4174, %v4183
        %v4187 = vmul.f32 %v4184, 1.442695
        %v4188 = vpow.pop %v4187
        %v4189 = vmul.f32 %v4185, 1.442695
        %v4190 = vpow.pop %v4189
        %v4191 = vmul.f32 %v4186, 1.442695
        %v4192 = vpow.pop %v4191
        %v4193 = vsel %vm1017, %v4188, 0.0
        %4194 = vadd.xlane.f32.xlu0 %v4193
        %v4195 = vpop.xlane.xlu0 %4194
        %v4196 = vsel %vm1017, %v4190, 0.0
        %4197 = vadd.xlane.f32.xlu0 %v4196
        %v4198 = vpop.xlane.xlu0 %4197
        %v4199 = vsel %vm1017, %v4192, 0.0
        %4200 = vadd.xlane.f32.xlu0 %v4199
        %v4201 = vpop.xlane.xlu0 %4200
        %v4202 = vrcp.pop %v4195
        %v4203 = vmul.f32 %v4188, %v4202
        %v4204 = vrcp.pop %v4198
        %v4205 = vmul.f32 %v4190, %v4204
        %v4206 = vrcp.pop %v4201
        %v4207 = vmul.f32 %v4192, %v4206
        %4208 = vrot.lane.b32.xlu0 %v4055, 64
        %v4209 = vpop.permute.xlu0 %4208
        %4210 = vrot.lane.b32.xlu0 %v4060, 64
        %v4211 = vpop.permute.xlu0 %4210
        %4212 = vrot.lane.b32.xlu0 %v4065, 64
        %v4213 = vpop.permute.xlu0 %4212
        %v4218 = vsel %vm1017, %v4203, 0
        %v4221 = vsel %vm1017, %v4205, 0
        %v4224 = vsel %vm1017, %v4207, 0
        %4226 = vmatprep.subr.mxu0 0.0
        %4227 = vmatpush1.msra.mxu0 %v4209
        %4228 = vmatprep.subr.mxu0 0.0
        %4229 = vmatpush1.msra.mxu0 %v4211
        %4230 = vmatprep.subr.mxu0 0.0
        %4231 = vmatpush1.msra.mxu0 %v4213
        %4232 = vmatprep.subr.mxu0 0.0
        %4233 = vmatpush1.msra.mxu0 0.0
        %4234 = vmatprep.subr.mxu0 0.0
        %4235 = vmatpush1.msra.mxu0 0.0
        %4236 = vmatprep.subr.mxu0 0.0
        %4237 = vmatpush1.msra.mxu0 0.0
        %4238 = vmatprep.subr.mxu0 0.0
        %4239 = vmatpush1.msra.mxu0 0.0
        %4240 = vmatprep.subr.mxu0 0.0
        %4241 = vmatpush1.msra.mxu0 0.0
        %4242 = vmatprep.subr.mxu0 0.0
        %4243 = vmatpush1.msra.mxu0 0.0
        %4244 = vmatprep.subr.mxu0 0.0
        %4245 = vmatpush1.msra.mxu0 0.0
        %4246 = vmatprep.subr.mxu0 0.0
        %4247 = vmatpush1.msra.mxu0 0.0
        %4248 = vmatprep.subr.mxu0 0.0
        %4249 = vmatpush1.msra.mxu0 0.0
        %4250 = vmatprep.subr.mxu0 0.0
        %4251 = vmatpush1.msra.mxu0 0.0
        %4252 = vmatprep.subr.mxu0 0.0
        %4253 = vmatpush1.msra.mxu0 0.0
        %4254 = vmatprep.subr.mxu0 0.0
        %4255 = vmatpush1.msra.mxu0 0.0
        %4256 = vmatprep.subr.mxu0 0.0
        %4257 = vmatpush1.msra.mxu0 0.0
        %4258 = vmatprep.subr.mxu0 0.0
        %4259 = vmatpush1.msra.mxu0 0.0
        %4260 = vmatprep.subr.mxu0 0.0
        %4261 = vmatpush1.msra.mxu0 0.0
        %4262 = vmatprep.subr.mxu0 0.0
        %4263 = vmatpush1.msra.mxu0 0.0
        %4264 = vmatprep.subr.mxu0 0.0
        %4265 = vmatpush1.msra.mxu0 0.0
        %4266 = vmatprep.subr.mxu0 0.0
        %4267 = vmatpush1.msra.mxu0 0.0
        %4268 = vmatprep.subr.mxu0 0.0
        %4269 = vmatpush1.msra.mxu0 0.0
        %4270 = vmatprep.subr.mxu0 0.0
        %4271 = vmatpush1.msra.mxu0 0.0
        %4272 = vmatprep.subr.mxu0 0.0
        %4273 = vmatpush1.msra.mxu0 0.0
        %4274 = vmatprep.subr.mxu0 0.0
        %4275 = vmatpush1.msra.mxu0 0.0
        %4276 = vmatprep.subr.mxu0 0.0
        %4277 = vmatpush1.msra.mxu0 0.0
        %4278 = vmatprep.subr.mxu0 0.0
        %4279 = vmatpush1.msra.mxu0 0.0
        %4280 = vmatprep.subr.mxu0 0.0
        %4281 = vmatpush1.msra.mxu0 0.0
        %4282 = vmatprep.subr.mxu0 0.0
        %4283 = vmatpush1.msra.mxu0 0.0
        %4284 = vmatprep.subr.mxu0 0.0
        %4285 = vmatpush1.msra.mxu0 0.0
        %4286 = vmatprep.subr.mxu0 0.0
        %4287 = vmatpush1.msra.mxu0 0.0
        %4288 = vmatprep.subr.mxu0 0.0
        %4289 = vmatpush1.msra.mxu0 0.0
        %4290 = vmatprep.mubr.f32.mxu0 0.0
        %4291 = vmatmul.mubr.f32.gmra.mrb[0].mxu0 %v4218
        %v4292 = vpop.f32.mrb[0].mxu0
        %v4293 = vadd.f32 0.0, %v4292
        %v4294 = vpop.f32.mrb[0].mxu0
        %4295 = vmatprep.mubr.f32.mxu0 0.0
        %4296 = vmatmul.mubr.f32.gmra.mrb[0].mxu0 %v4221
        %v4297 = vpop.f32.mrb[0].mxu0
        %v4298 = vadd.f32 0.0, %v4297
        %v4299 = vpop.f32.mrb[0].mxu0
        %4300 = vmatprep.mubr.f32.mxu0 0.0
        %4301 = vmatmul.mubr.f32.gmra.mrb[0].mxu0 %v4224
        %v4302 = vpop.f32.mrb[0].mxu0
        %v4303 = vadd.f32 0.0, %v4302
        %v4304 = vpop.f32.mrb[0].mxu0
        %4305 = vdwg.mxu0
        %4306 = vst.msk [vmem:[#allocation2] sm:$0xff] %vm918, %v4293
        %4307 = vst.msk [vmem:[#allocation2 + $0x8] sm:$0xff] %vm918, %v4298
        %4308 = vst.msk [vmem:[#allocation2 + $0x10] sm:$0xff] %vm918, %v4303
        %4309 = vrot.lane.b32.xlu0 %v4055, 120
        %v4310 = vpop.permute.xlu0 %4309
        %4311 = vrot.lane.b32.xlu0 %v4060, 120
        %v4312 = vpop.permute.xlu0 %4311
        %4313 = vrot.lane.b32.xlu0 %v4065, 120
        %v4314 = vpop.permute.xlu0 %4313
        %4315 = vrot.lane.b32.xlu0 %v4055, 88
        %v4316 = vpop.permute.xlu0 %4315
        %4317 = vrot.lane.b32.xlu0 %v4060, 88
        %v4318 = vpop.permute.xlu0 %4317
        %4319 = vrot.lane.b32.xlu0 %v4065, 88
        %v4320 = vpop.permute.xlu0 %4319
        %v4321 = vsel %vm918, %v4310, 0
        %v4323 = vsel %vm918, %v4312, 0
        %v4325 = vsel %vm918, %v4314, 0
        %v4327 = vsel %vm918, %v4316, 0
        %v4329 = vsel %vm918, %v4318, 0
        %v4331 = vsel %vm918, %v4320, 0
        %4333 = vmatprep.subr.mxu0 0.0
        %4334 = vmatpush1.xpose.msra.mxu0 %v4327
        %4335 = vmatprep.subr.mxu0 0.0
        %4336 = vmatpush1.xpose.msra.mxu0 %v4329
        %4337 = vmatprep.subr.mxu0 0.0
        %4338 = vmatpush1.xpose.msra.mxu0 %v4331
        %4339 = vmatprep.subr.mxu0 0.0
        %4340 = vmatpush1.xpose.msra.mxu0 0.0
        %4341 = vmatprep.subr.mxu0 0.0
        %4342 = vmatpush1.xpose.msra.mxu0 0.0
        %4343 = vmatprep.subr.mxu0 0.0
        %4344 = vmatpush1.xpose.msra.mxu0 0.0
        %4345 = vmatprep.subr.mxu0 0.0
        %4346 = vmatpush1.xpose.msra.mxu0 0.0
        %4347 = vmatprep.subr.mxu0 0.0
        %4348 = vmatpush1.xpose.msra.mxu0 0.0
        %4349 = vmatprep.subr.mxu0 0.0
        %4350 = vmatpush1.xpose.msra.mxu0 0.0
        %4351 = vmatprep.subr.mxu0 0.0
        %4352 = vmatpush1.xpose.msra.mxu0 0.0
        %4353 = vmatprep.subr.mxu0 0.0
        %4354 = vmatpush1.xpose.msra.mxu0 0.0
        %4355 = vmatprep.subr.mxu0 0.0
        %4356 = vmatpush1.xpose.msra.mxu0 0.0
        %4357 = vmatprep.subr.mxu0 0.0
        %4358 = vmatpush1.xpose.msra.mxu0 0.0
        %4359 = vmatprep.subr.mxu0 0.0
        %4360 = vmatpush1.xpose.msra.mxu0 0.0
        %4361 = vmatprep.subr.mxu0 0.0
        %4362 = vmatpush1.xpose.msra.mxu0 0.0
        %4363 = vmatprep.subr.mxu0 0.0
        %4364 = vmatpush1.xpose.msra.mxu0 0.0
        %4365 = vmatprep.subr.mxu0 0.0
        %4366 = vmatpush1.xpose.msra.mxu0 0.0
        %4367 = vmatprep.subr.mxu0 0.0
        %4368 = vmatpush1.xpose.msra.mxu0 0.0
        %4369 = vmatprep.subr.mxu0 0.0
        %4370 = vmatpush1.xpose.msra.mxu0 0.0
        %4371 = vmatprep.subr.mxu0 0.0
        %4372 = vmatpush1.xpose.msra.mxu0 0.0
        %4373 = vmatprep.subr.mxu0 0.0
        %4374 = vmatpush1.xpose.msra.mxu0 0.0
        %4375 = vmatprep.subr.mxu0 0.0
        %4376 = vmatpush1.xpose.msra.mxu0 0.0
        %4377 = vmatprep.subr.mxu0 0.0
        %4378 = vmatpush1.xpose.msra.mxu0 0.0
        %4379 = vmatprep.subr.mxu0 0.0
        %4380 = vmatpush1.xpose.msra.mxu0 0.0
        %4381 = vmatprep.subr.mxu0 0.0
        %4382 = vmatpush1.xpose.msra.mxu0 0.0
        %4383 = vmatprep.subr.mxu0 0.0
        %4384 = vmatpush1.xpose.msra.mxu0 0.0
        %4385 = vmatprep.subr.mxu0 0.0
        %4386 = vmatpush1.xpose.msra.mxu0 0.0
        %4387 = vmatprep.subr.mxu0 0.0
        %4388 = vmatpush1.xpose.msra.mxu0 0.0
        %4389 = vmatprep.subr.mxu0 0.0
        %4390 = vmatpush1.xpose.msra.mxu0 0.0
        %4391 = vmatprep.subr.mxu0 0.0
        %4392 = vmatpush1.xpose.msra.mxu0 0.0
        %4393 = vmatprep.subr.mxu0 0.0
        %4394 = vmatpush1.xpose.msra.mxu0 0.0
        %4395 = vmatprep.subr.mxu0 0.0
        %4396 = vmatpush1.xpose.msra.mxu0 0.0
        %4397 = vmatprep.mubr.f32.mxu0 0.0
        %4398 = vmatmul.mubr.f32.gmra.mrb[0].mxu0 %v4321
        %v4399 = vpop.f32.mrb[0].mxu0
        %v4400 = vadd.f32 0.0, %v4399
        %v4401 = vpop.f32.mrb[0].mxu0
        %4402 = vmatprep.mubr.f32.mxu0 0.0
        %4403 = vmatmul.mubr.f32.gmra.mrb[0].mxu0 %v4323
        %v4404 = vpop.f32.mrb[0].mxu0
        %v4405 = vadd.f32 0.0, %v4404
        %v4406 = vpop.f32.mrb[0].mxu0
        %4407 = vmatprep.mubr.f32.mxu0 0.0
        %4408 = vmatmul.mubr.f32.gmra.mrb[0].mxu0 %v4325
        %v4409 = vpop.f32.mrb[0].mxu0
        %v4410 = vadd.f32 0.0, %v4409
        %v4411 = vpop.f32.mrb[0].mxu0
        %4412 = vdwg.mxu0
        %v4413 = vmul.f32 %v4400, 0.35355338
        %v4414 = vmul.f32 %v4405, 0.35355338
        %v4415 = vmul.f32 %v4410, 0.35355338
        %v4416 = vadd.f32 %v4413, %v643
        %v4417 = vadd.f32 %v4414, %v643
        %v4418 = vadd.f32 %v4415, %v643
        %v4419 = vsel %vm1017, %v4416, -inf
        %4420 = vmax.xlane.f32.xlu0 %v4419
        %v4421 = vpop.xlane.xlu0 %4420
        %v4422 = vsel %vm1017, %v4417, -inf
        %4423 = vmax.xlane.f32.xlu0 %v4422
        %v4424 = vpop.xlane.xlu0 %4423
        %v4425 = vsel %vm1017, %v4418, -inf
        %4426 = vmax.xlane.f32.xlu0 %v4425
        %v4427 = vpop.xlane.xlu0 %4426
        %v4428 = vsub.f32 %v4416, %v4421
        %v4429 = vsub.f32 %v4417, %v4424
        %v4430 = vsub.f32 %v4418, %v4427
        %v4431 = vmul.f32 %v4428, 1.442695
        %v4432 = vpow.pop %v4431
        %v4433 = vmul.f32 %v4429, 1.442695
        %v4434 = vpow.pop %v4433
        %v4435 = vmul.f32 %v4430, 1.442695
        %v4436 = vpow.pop %v4435
        %v4437 = vsel %vm1017, %v4432, 0.0
        %4438 = vadd.xlane.f32.xlu0 %v4437
        %v4439 = vpop.xlane.xlu0 %4438
        %v4440 = vsel %vm1017, %v4434, 0.0
        %4441 = vadd.xlane.f32.xlu0 %v4440
        %v4442 = vpop.xlane.xlu0 %4441
        %v4443 = vsel %vm1017, %v4436, 0.0
        %4444 = vadd.xlane.f32.xlu0 %v4443
        %v4445 = vpop.xlane.xlu0 %4444
        %v4446 = vrcp.pop %v4439
        %v4447 = vmul.f32 %v4432, %v4446
        %v4448 = vrcp.pop %v4442
        %v4449 = vmul.f32 %v4434, %v4448
        %v4450 = vrcp.pop %v4445
        %v4451 = vmul.f32 %v4436, %v4450
        %4452 = vrot.lane.b32.xlu0 %v4055, 56
        %v4453 = vpop.permute.xlu0 %4452
        %4454 = vrot.lane.b32.xlu0 %v4060, 56
        %v4455 = vpop.permute.xlu0 %4454
        %4456 = vrot.lane.b32.xlu0 %v4065, 56
        %v4457 = vpop.permute.xlu0 %4456
        %v4462 = vsel %vm1017, %v4447, 0
        %v4465 = vsel %vm1017, %v4449, 0
        %v4468 = vsel %vm1017, %v4451, 0
        %4470 = vmatprep.subr.mxu0 0.0
        %4471 = vmatpush1.msra.mxu0 %v4453
        %4472 = vmatprep.subr.mxu0 0.0
        %4473 = vmatpush1.msra.mxu0 %v4455
        %4474 = vmatprep.subr.mxu0 0.0
        %4475 = vmatpush1.msra.mxu0 %v4457
        %4476 = vmatprep.subr.mxu0 0.0
        %4477 = vmatpush1.msra.mxu0 0.0
        %4478 = vmatprep.subr.mxu0 0.0
        %4479 = vmatpush1.msra.mxu0 0.0
        %4480 = vmatprep.subr.mxu0 0.0
        %4481 = vmatpush1.msra.mxu0 0.0
        %4482 = vmatprep.subr.mxu0 0.0
        %4483 = vmatpush1.msra.mxu0 0.0
        %4484 = vmatprep.subr.mxu0 0.0
        %4485 = vmatpush1.msra.mxu0 0.0
        %4486 = vmatprep.subr.mxu0 0.0
        %4487 = vmatpush1.msra.mxu0 0.0
        %4488 = vmatprep.subr.mxu0 0.0
        %4489 = vmatpush1.msra.mxu0 0.0
        %4490 = vmatprep.subr.mxu0 0.0
        %4491 = vmatpush1.msra.mxu0 0.0
        %4492 = vmatprep.subr.mxu0 0.0
        %4493 = vmatpush1.msra.mxu0 0.0
        %4494 = vmatprep.subr.mxu0 0.0
        %4495 = vmatpush1.msra.mxu0 0.0
        %4496 = vmatprep.subr.mxu0 0.0
        %4497 = vmatpush1.msra.mxu0 0.0
        %4498 = vmatprep.subr.mxu0 0.0
        %4499 = vmatpush1.msra.mxu0 0.0
        %4500 = vmatprep.subr.mxu0 0.0
        %4501 = vmatpush1.msra.mxu0 0.0
        %4502 = vmatprep.subr.mxu0 0.0
        %4503 = vmatpush1.msra.mxu0 0.0
        %4504 = vmatprep.subr.mxu0 0.0
        %4505 = vmatpush1.msra.mxu0 0.0
        %4506 = vmatprep.subr.mxu0 0.0
        %4507 = vmatpush1.msra.mxu0 0.0
        %4508 = vmatprep.subr.mxu0 0.0
        %4509 = vmatpush1.msra.mxu0 0.0
        %4510 = vmatprep.subr.mxu0 0.0
        %4511 = vmatpush1.msra.mxu0 0.0
        %4512 = vmatprep.subr.mxu0 0.0
        %4513 = vmatpush1.msra.mxu0 0.0
        %4514 = vmatprep.subr.mxu0 0.0
        %4515 = vmatpush1.msra.mxu0 0.0
        %4516 = vmatprep.subr.mxu0 0.0
        %4517 = vmatpush1.msra.mxu0 0.0
        %4518 = vmatprep.subr.mxu0 0.0
        %4519 = vmatpush1.msra.mxu0 0.0
        %4520 = vmatprep.subr.mxu0 0.0
        %4521 = vmatpush1.msra.mxu0 0.0
        %4522 = vmatprep.subr.mxu0 0.0
        %4523 = vmatpush1.msra.mxu0 0.0
        %4524 = vmatprep.subr.mxu0 0.0
        %4525 = vmatpush1.msra.mxu0 0.0
        %4526 = vmatprep.subr.mxu0 0.0
        %4527 = vmatpush1.msra.mxu0 0.0
        %4528 = vmatprep.subr.mxu0 0.0
        %4529 = vmatpush1.msra.mxu0 0.0
        %4530 = vmatprep.subr.mxu0 0.0
        %4531 = vmatpush1.msra.mxu0 0.0
        %4532 = vmatprep.subr.mxu0 0.0
        %4533 = vmatpush1.msra.mxu0 0.0
        %4534 = vmatprep.mubr.f32.mxu0 0.0
        %4535 = vmatmul.mubr.f32.gmra.mrb[0].mxu0 %v4462
        %v4536 = vpop.f32.mrb[0].mxu0
        %v4537 = vadd.f32 0.0, %v4536
        %v4538 = vpop.f32.mrb[0].mxu0
        %4539 = vmatprep.mubr.f32.mxu0 0.0
        %4540 = vmatmul.mubr.f32.gmra.mrb[0].mxu0 %v4465
        %v4541 = vpop.f32.mrb[0].mxu0
        %v4542 = vadd.f32 0.0, %v4541
        %v4543 = vpop.f32.mrb[0].mxu0
        %4544 = vmatprep.mubr.f32.mxu0 0.0
        %4545 = vmatmul.mubr.f32.gmra.mrb[0].mxu0 %v4468
        %v4546 = vpop.f32.mrb[0].mxu0
        %v4547 = vadd.f32 0.0, %v4546
        %v4548 = vpop.f32.mrb[0].mxu0
        %4549 = vdwg.mxu0
        %4553 = vrot.lane.b32.xlu0 %v4537, 8
        %v4554 = vpop.permute.xlu0 %4553
        %4555 = vrot.lane.b32.xlu0 %v4542, 8
        %v4556 = vpop.permute.xlu0 %4555
        %4557 = vrot.lane.b32.xlu0 %v4547, 8
        %v4558 = vpop.permute.xlu0 %4557
        %4562 = vst.msk [vmem:[#allocation2] sm:$0xff] %vm1405, %v4554
        %4563 = vst.msk [vmem:[#allocation2 + $0x8] sm:$0xff] %vm1405, %v4556
        %4564 = vst.msk [vmem:[#allocation2 + $0x10] sm:$0xff] %vm1405, %v4558
        %4565 = vrot.lane.b32.xlu0 %v4055, 112
        %v4566 = vpop.permute.xlu0 %4565
        %4567 = vrot.lane.b32.xlu0 %v4060, 112
        %v4568 = vpop.permute.xlu0 %4567
        %4569 = vrot.lane.b32.xlu0 %v4065, 112
        %v4570 = vpop.permute.xlu0 %4569
        %4571 = vrot.lane.b32.xlu0 %v4055, 80
        %v4572 = vpop.permute.xlu0 %4571
        %4573 = vrot.lane.b32.xlu0 %v4060, 80
        %v4574 = vpop.permute.xlu0 %4573
        %4575 = vrot.lane.b32.xlu0 %v4065, 80
        %v4576 = vpop.permute.xlu0 %4575
        %v4577 = vsel %vm918, %v4566, 0
        %v4579 = vsel %vm918, %v4568, 0
        %v4581 = vsel %vm918, %v4570, 0
        %v4583 = vsel %vm918, %v4572, 0
        %v4585 = vsel %vm918, %v4574, 0
        %v4587 = vsel %vm918, %v4576, 0
        %4589 = vmatprep.subr.mxu0 0.0
        %4590 = vmatpush1.xpose.msra.mxu0 %v4583
        %4591 = vmatprep.subr.mxu0 0.0
        %4592 = vmatpush1.xpose.msra.mxu0 %v4585
        %4593 = vmatprep.subr.mxu0 0.0
        %4594 = vmatpush1.xpose.msra.mxu0 %v4587
        %4595 = vmatprep.subr.mxu0 0.0
        %4596 = vmatpush1.xpose.msra.mxu0 0.0
        %4597 = vmatprep.subr.mxu0 0.0
        %4598 = vmatpush1.xpose.msra.mxu0 0.0
        %4599 = vmatprep.subr.mxu0 0.0
        %4600 = vmatpush1.xpose.msra.mxu0 0.0
        %4601 = vmatprep.subr.mxu0 0.0
        %4602 = vmatpush1.xpose.msra.mxu0 0.0
        %4603 = vmatprep.subr.mxu0 0.0
        %4604 = vmatpush1.xpose.msra.mxu0 0.0
        %4605 = vmatprep.subr.mxu0 0.0
        %4606 = vmatpush1.xpose.msra.mxu0 0.0
        %4607 = vmatprep.subr.mxu0 0.0
        %4608 = vmatpush1.xpose.msra.mxu0 0.0
        %4609 = vmatprep.subr.mxu0 0.0
        %4610 = vmatpush1.xpose.msra.mxu0 0.0
        %4611 = vmatprep.subr.mxu0 0.0
        %4612 = vmatpush1.xpose.msra.mxu0 0.0
        %4613 = vmatprep.subr.mxu0 0.0
        %4614 = vmatpush1.xpose.msra.mxu0 0.0
        %4615 = vmatprep.subr.mxu0 0.0
        %4616 = vmatpush1.xpose.msra.mxu0 0.0
        %4617 = vmatprep.subr.mxu0 0.0
        %4618 = vmatpush1.xpose.msra.mxu0 0.0
        %4619 = vmatprep.subr.mxu0 0.0
        %4620 = vmatpush1.xpose.msra.mxu0 0.0
        %4621 = vmatprep.subr.mxu0 0.0
        %4622 = vmatpush1.xpose.msra.mxu0 0.0
        %4623 = vmatprep.subr.mxu0 0.0
        %4624 = vmatpush1.xpose.msra.mxu0 0.0
        %4625 = vmatprep.subr.mxu0 0.0
        %4626 = vmatpush1.xpose.msra.mxu0 0.0
        %4627 = vmatprep.subr.mxu0 0.0
        %4628 = vmatpush1.xpose.msra.mxu0 0.0
        %4629 = vmatprep.subr.mxu0 0.0
        %4630 = vmatpush1.xpose.msra.mxu0 0.0
        %4631 = vmatprep.subr.mxu0 0.0
        %4632 = vmatpush1.xpose.msra.mxu0 0.0
        %4633 = vmatprep.subr.mxu0 0.0
        %4634 = vmatpush1.xpose.msra.mxu0 0.0
        %4635 = vmatprep.subr.mxu0 0.0
        %4636 = vmatpush1.xpose.msra.mxu0 0.0
        %4637 = vmatprep.subr.mxu0 0.0
        %4638 = vmatpush1.xpose.msra.mxu0 0.0
        %4639 = vmatprep.subr.mxu0 0.0
        %4640 = vmatpush1.xpose.msra.mxu0 0.0
        %4641 = vmatprep.subr.mxu0 0.0
        %4642 = vmatpush1.xpose.msra.mxu0 0.0
        %4643 = vmatprep.subr.mxu0 0.0
        %4644 = vmatpush1.xpose.msra.mxu0 0.0
        %4645 = vmatprep.subr.mxu0 0.0
        %4646 = vmatpush1.xpose.msra.mxu0 0.0
        %4647 = vmatprep.subr.mxu0 0.0
        %4648 = vmatpush1.xpose.msra.mxu0 0.0
        %4649 = vmatprep.subr.mxu0 0.0
        %4650 = vmatpush1.xpose.msra.mxu0 0.0
        %4651 = vmatprep.subr.mxu0 0.0
        %4652 = vmatpush1.xpose.msra.mxu0 0.0
        %4653 = vmatprep.mubr.f32.mxu0 0.0
        %4654 = vmatmul.mubr.f32.gmra.mrb[0].mxu0 %v4577
        %v4655 = vpop.f32.mrb[0].mxu0
        %v4656 = vadd.f32 0.0, %v4655
        %v4657 = vpop.f32.mrb[0].mxu0
        %4658 = vmatprep.mubr.f32.mxu0 0.0
        %4659 = vmatmul.mubr.f32.gmra.mrb[0].mxu0 %v4579
        %v4660 = vpop.f32.mrb[0].mxu0
        %v4661 = vadd.f32 0.0, %v4660
        %v4662 = vpop.f32.mrb[0].mxu0
        %4663 = vmatprep.mubr.f32.mxu0 0.0
        %4664 = vmatmul.mubr.f32.gmra.mrb[0].mxu0 %v4581
        %v4665 = vpop.f32.mrb[0].mxu0
        %v4666 = vadd.f32 0.0, %v4665
        %v4667 = vpop.f32.mrb[0].mxu0
        %4668 = vdwg.mxu0
        %v4669 = vmul.f32 %v4656, 0.35355338
        %v4670 = vmul.f32 %v4661, 0.35355338
        %v4671 = vmul.f32 %v4666, 0.35355338
        %v4672 = vadd.f32 %v4669, %v643
        %v4673 = vadd.f32 %v4670, %v643
        %v4674 = vadd.f32 %v4671, %v643
        %v4675 = vsel %vm1017, %v4672, -inf
        %4676 = vmax.xlane.f32.xlu0 %v4675
        %v4677 = vpop.xlane.xlu0 %4676
        %v4678 = vsel %vm1017, %v4673, -inf
        %4679 = vmax.xlane.f32.xlu0 %v4678
        %v4680 = vpop.xlane.xlu0 %4679
        %v4681 = vsel %vm1017, %v4674, -inf
        %4682 = vmax.xlane.f32.xlu0 %v4681
        %v4683 = vpop.xlane.xlu0 %4682
        %v4684 = vsub.f32 %v4672, %v4677
        %v4685 = vsub.f32 %v4673, %v4680
        %v4686 = vsub.f32 %v4674, %v4683
        %v4687 = vmul.f32 %v4684, 1.442695
        %v4688 = vpow.pop %v4687
        %v4689 = vmul.f32 %v4685, 1.442695
        %v4690 = vpow.pop %v4689
        %v4691 = vmul.f32 %v4686, 1.442695
        %v4692 = vpow.pop %v4691
        %v4693 = vsel %vm1017, %v4688, 0.0
        %4694 = vadd.xlane.f32.xlu0 %v4693
        %v4695 = vpop.xlane.xlu0 %4694
        %v4696 = vsel %vm1017, %v4690, 0.0
        %4697 = vadd.xlane.f32.xlu0 %v4696
        %v4698 = vpop.xlane.xlu0 %4697
        %v4699 = vsel %vm1017, %v4692, 0.0
        %4700 = vadd.xlane.f32.xlu0 %v4699
        %v4701 = vpop.xlane.xlu0 %4700
        %v4702 = vrcp.pop %v4695
        %v4703 = vmul.f32 %v4688, %v4702
        %v4704 = vrcp.pop %v4698
        %v4705 = vmul.f32 %v4690, %v4704
        %v4706 = vrcp.pop %v4701
        %v4707 = vmul.f32 %v4692, %v4706
        %4708 = vrot.lane.b32.xlu0 %v4055, 48
        %v4709 = vpop.permute.xlu0 %4708
        %4710 = vrot.lane.b32.xlu0 %v4060, 48
        %v4711 = vpop.permute.xlu0 %4710
        %4712 = vrot.lane.b32.xlu0 %v4065, 48
        %v4713 = vpop.permute.xlu0 %4712
        %v4718 = vsel %vm1017, %v4703, 0
        %v4721 = vsel %vm1017, %v4705, 0
        %v4724 = vsel %vm1017, %v4707, 0
        %4726 = vmatprep.subr.mxu0 0.0
        %4727 = vmatpush1.msra.mxu0 %v4709
        %4728 = vmatprep.subr.mxu0 0.0
        %4729 = vmatpush1.msra.mxu0 %v4711
        %4730 = vmatprep.subr.mxu0 0.0
        %4731 = vmatpush1.msra.mxu0 %v4713
        %4732 = vmatprep.subr.mxu0 0.0
        %4733 = vmatpush1.msra.mxu0 0.0
        %4734 = vmatprep.subr.mxu0 0.0
        %4735 = vmatpush1.msra.mxu0 0.0
        %4736 = vmatprep.subr.mxu0 0.0
        %4737 = vmatpush1.msra.mxu0 0.0
        %4738 = vmatprep.subr.mxu0 0.0
        %4739 = vmatpush1.msra.mxu0 0.0
        %4740 = vmatprep.subr.mxu0 0.0
        %4741 = vmatpush1.msra.mxu0 0.0
        %4742 = vmatprep.subr.mxu0 0.0
        %4743 = vmatpush1.msra.mxu0 0.0
        %4744 = vmatprep.subr.mxu0 0.0
        %4745 = vmatpush1.msra.mxu0 0.0
        %4746 = vmatprep.subr.mxu0 0.0
        %4747 = vmatpush1.msra.mxu0 0.0
        %4748 = vmatprep.subr.mxu0 0.0
        %4749 = vmatpush1.msra.mxu0 0.0
        %4750 = vmatprep.subr.mxu0 0.0
        %4751 = vmatpush1.msra.mxu0 0.0
        %4752 = vmatprep.subr.mxu0 0.0
        %4753 = vmatpush1.msra.mxu0 0.0
        %4754 = vmatprep.subr.mxu0 0.0
        %4755 = vmatpush1.msra.mxu0 0.0
        %4756 = vmatprep.subr.mxu0 0.0
        %4757 = vmatpush1.msra.mxu0 0.0
        %4758 = vmatprep.subr.mxu0 0.0
        %4759 = vmatpush1.msra.mxu0 0.0
        %4760 = vmatprep.subr.mxu0 0.0
        %4761 = vmatpush1.msra.mxu0 0.0
        %4762 = vmatprep.subr.mxu0 0.0
        %4763 = vmatpush1.msra.mxu0 0.0
        %4764 = vmatprep.subr.mxu0 0.0
        %4765 = vmatpush1.msra.mxu0 0.0
        %4766 = vmatprep.subr.mxu0 0.0
        %4767 = vmatpush1.msra.mxu0 0.0
        %4768 = vmatprep.subr.mxu0 0.0
        %4769 = vmatpush1.msra.mxu0 0.0
        %4770 = vmatprep.subr.mxu0 0.0
        %4771 = vmatpush1.msra.mxu0 0.0
        %4772 = vmatprep.subr.mxu0 0.0
        %4773 = vmatpush1.msra.mxu0 0.0
        %4774 = vmatprep.subr.mxu0 0.0
        %4775 = vmatpush1.msra.mxu0 0.0
        %4776 = vmatprep.subr.mxu0 0.0
        %4777 = vmatpush1.msra.mxu0 0.0
        %4778 = vmatprep.subr.mxu0 0.0
        %4779 = vmatpush1.msra.mxu0 0.0
        %4780 = vmatprep.subr.mxu0 0.0
        %4781 = vmatpush1.msra.mxu0 0.0
        %4782 = vmatprep.subr.mxu0 0.0
        %4783 = vmatpush1.msra.mxu0 0.0
        %4784 = vmatprep.subr.mxu0 0.0
        %4785 = vmatpush1.msra.mxu0 0.0
        %4786 = vmatprep.subr.mxu0 0.0
        %4787 = vmatpush1.msra.mxu0 0.0
        %4788 = vmatprep.subr.mxu0 0.0
        %4789 = vmatpush1.msra.mxu0 0.0
        %4790 = vmatprep.mubr.f32.mxu0 0.0
        %4791 = vmatmul.mubr.f32.gmra.mrb[0].mxu0 %v4718
        %v4792 = vpop.f32.mrb[0].mxu0
        %v4793 = vadd.f32 0.0, %v4792
        %v4794 = vpop.f32.mrb[0].mxu0
        %4795 = vmatprep.mubr.f32.mxu0 0.0
        %4796 = vmatmul.mubr.f32.gmra.mrb[0].mxu0 %v4721
        %v4797 = vpop.f32.mrb[0].mxu0
        %v4798 = vadd.f32 0.0, %v4797
        %v4799 = vpop.f32.mrb[0].mxu0
        %4800 = vmatprep.mubr.f32.mxu0 0.0
        %4801 = vmatmul.mubr.f32.gmra.mrb[0].mxu0 %v4724
        %v4802 = vpop.f32.mrb[0].mxu0
        %v4803 = vadd.f32 0.0, %v4802
        %v4804 = vpop.f32.mrb[0].mxu0
        %4805 = vdwg.mxu0
        %4809 = vrot.lane.b32.xlu0 %v4793, 16
        %v4810 = vpop.permute.xlu0 %4809
        %4811 = vrot.lane.b32.xlu0 %v4798, 16
        %v4812 = vpop.permute.xlu0 %4811
        %4813 = vrot.lane.b32.xlu0 %v4803, 16
        %v4814 = vpop.permute.xlu0 %4813
        %4818 = vst.msk [vmem:[#allocation2] sm:$0xff] %vm1662, %v4810
        %4819 = vst.msk [vmem:[#allocation2 + $0x8] sm:$0xff] %vm1662, %v4812
        %4820 = vst.msk [vmem:[#allocation2 + $0x10] sm:$0xff] %vm1662, %v4814
        %4821 = vrot.lane.b32.xlu0 %v4055, 104
        %v4822 = vpop.permute.xlu0 %4821
        %4823 = vrot.lane.b32.xlu0 %v4060, 104
        %v4824 = vpop.permute.xlu0 %4823
        %4825 = vrot.lane.b32.xlu0 %v4065, 104
        %v4826 = vpop.permute.xlu0 %4825
        %4827 = vrot.lane.b32.xlu0 %v4055, 72
        %v4828 = vpop.permute.xlu0 %4827
        %4829 = vrot.lane.b32.xlu0 %v4060, 72
        %v4830 = vpop.permute.xlu0 %4829
        %4831 = vrot.lane.b32.xlu0 %v4065, 72
        %v4832 = vpop.permute.xlu0 %4831
        %v4833 = vsel %vm918, %v4822, 0
        %v4835 = vsel %vm918, %v4824, 0
        %v4837 = vsel %vm918, %v4826, 0
        %v4839 = vsel %vm918, %v4828, 0
        %v4841 = vsel %vm918, %v4830, 0
        %v4843 = vsel %vm918, %v4832, 0
        %4845 = vmatprep.subr.mxu0 0.0
        %4846 = vmatpush1.xpose.msra.mxu0 %v4839
        %4847 = vmatprep.subr.mxu0 0.0
        %4848 = vmatpush1.xpose.msra.mxu0 %v4841
        %4849 = vmatprep.subr.mxu0 0.0
        %4850 = vmatpush1.xpose.msra.mxu0 %v4843
        %4851 = vmatprep.subr.mxu0 0.0
        %4852 = vmatpush1.xpose.msra.mxu0 0.0
        %4853 = vmatprep.subr.mxu0 0.0
        %4854 = vmatpush1.xpose.msra.mxu0 0.0
        %4855 = vmatprep.subr.mxu0 0.0
        %4856 = vmatpush1.xpose.msra.mxu0 0.0
        %4857 = vmatprep.subr.mxu0 0.0
        %4858 = vmatpush1.xpose.msra.mxu0 0.0
        %4859 = vmatprep.subr.mxu0 0.0
        %4860 = vmatpush1.xpose.msra.mxu0 0.0
        %4861 = vmatprep.subr.mxu0 0.0
        %4862 = vmatpush1.xpose.msra.mxu0 0.0
        %4863 = vmatprep.subr.mxu0 0.0
        %4864 = vmatpush1.xpose.msra.mxu0 0.0
        %4865 = vmatprep.subr.mxu0 0.0
        %4866 = vmatpush1.xpose.msra.mxu0 0.0
        %4867 = vmatprep.subr.mxu0 0.0
        %4868 = vmatpush1.xpose.msra.mxu0 0.0
        %4869 = vmatprep.subr.mxu0 0.0
        %4870 = vmatpush1.xpose.msra.mxu0 0.0
        %4871 = vmatprep.subr.mxu0 0.0
        %4872 = vmatpush1.xpose.msra.mxu0 0.0
        %4873 = vmatprep.subr.mxu0 0.0
        %4874 = vmatpush1.xpose.msra.mxu0 0.0
        %4875 = vmatprep.subr.mxu0 0.0
        %4876 = vmatpush1.xpose.msra.mxu0 0.0
        %4877 = vmatprep.subr.mxu0 0.0
        %4878 = vmatpush1.xpose.msra.mxu0 0.0
        %4879 = vmatprep.subr.mxu0 0.0
        %4880 = vmatpush1.xpose.msra.mxu0 0.0
        %4881 = vmatprep.subr.mxu0 0.0
        %4882 = vmatpush1.xpose.msra.mxu0 0.0
        %4883 = vmatprep.subr.mxu0 0.0
        %4884 = vmatpush1.xpose.msra.mxu0 0.0
        %4885 = vmatprep.subr.mxu0 0.0
        %4886 = vmatpush1.xpose.msra.mxu0 0.0
        %4887 = vmatprep.subr.mxu0 0.0
        %4888 = vmatpush1.xpose.msra.mxu0 0.0
        %4889 = vmatprep.subr.mxu0 0.0
        %4890 = vmatpush1.xpose.msra.mxu0 0.0
        %4891 = vmatprep.subr.mxu0 0.0
        %4892 = vmatpush1.xpose.msra.mxu0 0.0
        %4893 = vmatprep.subr.mxu0 0.0
        %4894 = vmatpush1.xpose.msra.mxu0 0.0
        %4895 = vmatprep.subr.mxu0 0.0
        %4896 = vmatpush1.xpose.msra.mxu0 0.0
        %4897 = vmatprep.subr.mxu0 0.0
        %4898 = vmatpush1.xpose.msra.mxu0 0.0
        %4899 = vmatprep.subr.mxu0 0.0
        %4900 = vmatpush1.xpose.msra.mxu0 0.0
        %4901 = vmatprep.subr.mxu0 0.0
        %4902 = vmatpush1.xpose.msra.mxu0 0.0
        %4903 = vmatprep.subr.mxu0 0.0
        %4904 = vmatpush1.xpose.msra.mxu0 0.0
        %4905 = vmatprep.subr.mxu0 0.0
        %4906 = vmatpush1.xpose.msra.mxu0 0.0
        %4907 = vmatprep.subr.mxu0 0.0
        %4908 = vmatpush1.xpose.msra.mxu0 0.0
        %4909 = vmatprep.mubr.f32.mxu0 0.0
        %4910 = vmatmul.mubr.f32.gmra.mrb[0].mxu0 %v4833
        %v4911 = vpop.f32.mrb[0].mxu0
        %v4912 = vadd.f32 0.0, %v4911
        %v4913 = vpop.f32.mrb[0].mxu0
        %4914 = vmatprep.mubr.f32.mxu0 0.0
        %4915 = vmatmul.mubr.f32.gmra.mrb[0].mxu0 %v4835
        %v4916 = vpop.f32.mrb[0].mxu0
        %v4917 = vadd.f32 0.0, %v4916
        %v4918 = vpop.f32.mrb[0].mxu0
        %4919 = vmatprep.mubr.f32.mxu0 0.0
        %4920 = vmatmul.mubr.f32.gmra.mrb[0].mxu0 %v4837
        %v4921 = vpop.f32.mrb[0].mxu0
        %v4922 = vadd.f32 0.0, %v4921
        %v4923 = vpop.f32.mrb[0].mxu0
        %4924 = vdwg.mxu0
        %v4925 = vmul.f32 %v4912, 0.35355338
        %v4926 = vmul.f32 %v4917, 0.35355338
        %v4927 = vmul.f32 %v4922, 0.35355338
        %v4928 = vadd.f32 %v4925, %v643
        %v4929 = vadd.f32 %v4926, %v643
        %v4930 = vadd.f32 %v4927, %v643
        %v4931 = vsel %vm1017, %v4928, -inf
        %4932 = vmax.xlane.f32.xlu0 %v4931
        %v4933 = vpop.xlane.xlu0 %4932
        %v4934 = vsel %vm1017, %v4929, -inf
        %4935 = vmax.xlane.f32.xlu0 %v4934
        %v4936 = vpop.xlane.xlu0 %4935
        %v4937 = vsel %vm1017, %v4930, -inf
        %4938 = vmax.xlane.f32.xlu0 %v4937
        %v4939 = vpop.xlane.xlu0 %4938
        %v4940 = vsub.f32 %v4928, %v4933
        %v4941 = vsub.f32 %v4929, %v4936
        %v4942 = vsub.f32 %v4930, %v4939
        %v4943 = vmul.f32 %v4940, 1.442695
        %v4944 = vpow.pop %v4943
        %v4945 = vmul.f32 %v4941, 1.442695
        %v4946 = vpow.pop %v4945
        %v4947 = vmul.f32 %v4942, 1.442695
        %v4948 = vpow.pop %v4947
        %v4949 = vsel %vm1017, %v4944, 0.0
        %4950 = vadd.xlane.f32.xlu0 %v4949
        %v4951 = vpop.xlane.xlu0 %4950
        %v4952 = vsel %vm1017, %v4946, 0.0
        %4953 = vadd.xlane.f32.xlu0 %v4952
        %v4954 = vpop.xlane.xlu0 %4953
        %v4955 = vsel %vm1017, %v4948, 0.0
        %4956 = vadd.xlane.f32.xlu0 %v4955
        %v4957 = vpop.xlane.xlu0 %4956
        %v4958 = vrcp.pop %v4951
        %v4959 = vmul.f32 %v4944, %v4958
        %v4960 = vrcp.pop %v4954
        %v4961 = vmul.f32 %v4946, %v4960
        %v4962 = vrcp.pop %v4957
        %v4963 = vmul.f32 %v4948, %v4962
        %4964 = vrot.lane.b32.xlu0 %v4055, 40
        %v4965 = vpop.permute.xlu0 %4964
        %4966 = vrot.lane.b32.xlu0 %v4060, 40
        %v4967 = vpop.permute.xlu0 %4966
        %4968 = vrot.lane.b32.xlu0 %v4065, 40
        %v4969 = vpop.permute.xlu0 %4968
        %v4974 = vsel %vm1017, %v4959, 0
        %v4977 = vsel %vm1017, %v4961, 0
        %v4980 = vsel %vm1017, %v4963, 0
        %4982 = vmatprep.subr.mxu0 0.0
        %4983 = vmatpush1.msra.mxu0 %v4965
        %4984 = vmatprep.subr.mxu0 0.0
        %4985 = vmatpush1.msra.mxu0 %v4967
        %4986 = vmatprep.subr.mxu0 0.0
        %4987 = vmatpush1.msra.mxu0 %v4969
        %4988 = vmatprep.subr.mxu0 0.0
        %4989 = vmatpush1.msra.mxu0 0.0
        %4990 = vmatprep.subr.mxu0 0.0
        %4991 = vmatpush1.msra.mxu0 0.0
        %4992 = vmatprep.subr.mxu0 0.0
        %4993 = vmatpush1.msra.mxu0 0.0
        %4994 = vmatprep.subr.mxu0 0.0
        %4995 = vmatpush1.msra.mxu0 0.0
        %4996 = vmatprep.subr.mxu0 0.0
        %4997 = vmatpush1.msra.mxu0 0.0
        %4998 = vmatprep.subr.mxu0 0.0
        %4999 = vmatpush1.msra.mxu0 0.0
        %5000 = vmatprep.subr.mxu0 0.0
        %5001 = vmatpush1.msra.mxu0 0.0
        %5002 = vmatprep.subr.mxu0 0.0
        %5003 = vmatpush1.msra.mxu0 0.0
        %5004 = vmatprep.subr.mxu0 0.0
        %5005 = vmatpush1.msra.mxu0 0.0
        %5006 = vmatprep.subr.mxu0 0.0
        %5007 = vmatpush1.msra.mxu0 0.0
        %5008 = vmatprep.subr.mxu0 0.0
        %5009 = vmatpush1.msra.mxu0 0.0
        %5010 = vmatprep.subr.mxu0 0.0
        %5011 = vmatpush1.msra.mxu0 0.0
        %5012 = vmatprep.subr.mxu0 0.0
        %5013 = vmatpush1.msra.mxu0 0.0
        %5014 = vmatprep.subr.mxu0 0.0
        %5015 = vmatpush1.msra.mxu0 0.0
        %5016 = vmatprep.subr.mxu0 0.0
        %5017 = vmatpush1.msra.mxu0 0.0
        %5018 = vmatprep.subr.mxu0 0.0
        %5019 = vmatpush1.msra.mxu0 0.0
        %5020 = vmatprep.subr.mxu0 0.0
        %5021 = vmatpush1.msra.mxu0 0.0
        %5022 = vmatprep.subr.mxu0 0.0
        %5023 = vmatpush1.msra.mxu0 0.0
        %5024 = vmatprep.subr.mxu0 0.0
        %5025 = vmatpush1.msra.mxu0 0.0
        %5026 = vmatprep.subr.mxu0 0.0
        %5027 = vmatpush1.msra.mxu0 0.0
        %5028 = vmatprep.subr.mxu0 0.0
        %5029 = vmatpush1.msra.mxu0 0.0
        %5030 = vmatprep.subr.mxu0 0.0
        %5031 = vmatpush1.msra.mxu0 0.0
        %5032 = vmatprep.subr.mxu0 0.0
        %5033 = vmatpush1.msra.mxu0 0.0
        %5034 = vmatprep.subr.mxu0 0.0
        %5035 = vmatpush1.msra.mxu0 0.0
        %5036 = vmatprep.subr.mxu0 0.0
        %5037 = vmatpush1.msra.mxu0 0.0
        %5038 = vmatprep.subr.mxu0 0.0
        %5039 = vmatpush1.msra.mxu0 0.0
        %5040 = vmatprep.subr.mxu0 0.0
        %5041 = vmatpush1.msra.mxu0 0.0
        %5042 = vmatprep.subr.mxu0 0.0
        %5043 = vmatpush1.msra.mxu0 0.0
        %5044 = vmatprep.subr.mxu0 0.0
        %5045 = vmatpush1.msra.mxu0 0.0
        %5046 = vmatprep.mubr.f32.mxu0 0.0
        %5047 = vmatmul.mubr.f32.gmra.mrb[0].mxu0 %v4974
        %v5048 = vpop.f32.mrb[0].mxu0
        %v5049 = vadd.f32 0.0, %v5048
        %v5050 = vpop.f32.mrb[0].mxu0
        %5051 = vmatprep.mubr.f32.mxu0 0.0
        %5052 = vmatmul.mubr.f32.gmra.mrb[0].mxu0 %v4977
        %v5053 = vpop.f32.mrb[0].mxu0
        %v5054 = vadd.f32 0.0, %v5053
        %v5055 = vpop.f32.mrb[0].mxu0
        %5056 = vmatprep.mubr.f32.mxu0 0.0
        %5057 = vmatmul.mubr.f32.gmra.mrb[0].mxu0 %v4980
        %v5058 = vpop.f32.mrb[0].mxu0
        %v5059 = vadd.f32 0.0, %v5058
        %v5060 = vpop.f32.mrb[0].mxu0
        %5061 = vdwg.mxu0
        %5065 = vrot.lane.b32.xlu0 %v5049, 24
        %v5066 = vpop.permute.xlu0 %5065
        %5067 = vrot.lane.b32.xlu0 %v5054, 24
        %v5068 = vpop.permute.xlu0 %5067
        %5069 = vrot.lane.b32.xlu0 %v5059, 24
        %v5070 = vpop.permute.xlu0 %5069
        %5074 = vst.msk [vmem:[#allocation2] sm:$0xff] %vm1919, %v5066
        %5075 = vst.msk [vmem:[#allocation2 + $0x8] sm:$0xff] %vm1919, %v5068
        %5076 = vst.msk [vmem:[#allocation2 + $0x10] sm:$0xff] %vm1919, %v5070
        %v5077 = vld [vmem:[#allocation2] sm:$0xff]
        %v5078 = vld [vmem:[#allocation2 + $0x8] sm:$0xff]
        %v5079 = vld [vmem:[#allocation2 + $0x10] sm:$0xff]
        %s5080 = scalar_lea.vmem %s7, 64
        %v5081 = vld [vmem:[%s5080] sm:$0xff]
        %v5082 = vld [vmem:[%s5080 + $0x8] sm:$0xff]
        %v5083 = vld [vmem:[%s5080 + $0x10] sm:$0xff]
        %v5084 = vld [vmem:[%s5080 + $0x18] sm:$0xff]
        %s5085 = scalar_lea.vmem %s8, 2
        %v5086 = vld [vmem:[%s5085] sm:$0x1]
        %v5088 = vlaneseq
        %v5089 = vshrl.u32 %v5088, 7
        %v5090 = vsub.s32 0, %v5089
        %v5091 = vrot.slane %v5086, %v5090
        %v5094 = vsel %vm750, %v5077, 0
        %v5097 = vsel %vm750, %v5078, 0
        %v5100 = vsel %vm750, %v5079, 0
        %5102 = vmatprep.subr.mxu0 0.0
        %5103 = vmatpush1.msra.mxu0 %v5081
        %5104 = vmatprep.subr.mxu0 0.0
        %5105 = vmatpush1.msra.mxu0 %v5082
        %5106 = vmatprep.subr.mxu0 0.0
        %5107 = vmatpush1.msra.mxu0 %v5083
        %5108 = vmatprep.subr.mxu0 0.0
        %5109 = vmatpush1.msra.mxu0 %v5084
        %5110 = vmatprep.subr.mxu0 0.0
        %5111 = vmatpush1.msra.mxu0 0.0
        %5112 = vmatprep.subr.mxu0 0.0
        %5113 = vmatpush1.msra.mxu0 0.0
        %5114 = vmatprep.subr.mxu0 0.0
        %5115 = vmatpush1.msra.mxu0 0.0
        %5116 = vmatprep.subr.mxu0 0.0
        %5117 = vmatpush1.msra.mxu0 0.0
        %5118 = vmatprep.subr.mxu0 0.0
        %5119 = vmatpush1.msra.mxu0 0.0
        %5120 = vmatprep.subr.mxu0 0.0
        %5121 = vmatpush1.msra.mxu0 0.0
        %5122 = vmatprep.subr.mxu0 0.0
        %5123 = vmatpush1.msra.mxu0 0.0
        %5124 = vmatprep.subr.mxu0 0.0
        %5125 = vmatpush1.msra.mxu0 0.0
        %5126 = vmatprep.subr.mxu0 0.0
        %5127 = vmatpush1.msra.mxu0 0.0
        %5128 = vmatprep.subr.mxu0 0.0
        %5129 = vmatpush1.msra.mxu0 0.0
        %5130 = vmatprep.subr.mxu0 0.0
        %5131 = vmatpush1.msra.mxu0 0.0
        %5132 = vmatprep.subr.mxu0 0.0
        %5133 = vmatpush1.msra.mxu0 0.0
        %5134 = vmatprep.subr.mxu0 0.0
        %5135 = vmatpush1.msra.mxu0 0.0
        %5136 = vmatprep.subr.mxu0 0.0
        %5137 = vmatpush1.msra.mxu0 0.0
        %5138 = vmatprep.subr.mxu0 0.0
        %5139 = vmatpush1.msra.mxu0 0.0
        %5140 = vmatprep.subr.mxu0 0.0
        %5141 = vmatpush1.msra.mxu0 0.0
        %5142 = vmatprep.subr.mxu0 0.0
        %5143 = vmatpush1.msra.mxu0 0.0
        %5144 = vmatprep.subr.mxu0 0.0
        %5145 = vmatpush1.msra.mxu0 0.0
        %5146 = vmatprep.subr.mxu0 0.0
        %5147 = vmatpush1.msra.mxu0 0.0
        %5148 = vmatprep.subr.mxu0 0.0
        %5149 = vmatpush1.msra.mxu0 0.0
        %5150 = vmatprep.subr.mxu0 0.0
        %5151 = vmatpush1.msra.mxu0 0.0
        %5152 = vmatprep.subr.mxu0 0.0
        %5153 = vmatpush1.msra.mxu0 0.0
        %5154 = vmatprep.subr.mxu0 0.0
        %5155 = vmatpush1.msra.mxu0 0.0
        %5156 = vmatprep.subr.mxu0 0.0
        %5157 = vmatpush1.msra.mxu0 0.0
        %5158 = vmatprep.subr.mxu0 0.0
        %5159 = vmatpush1.msra.mxu0 0.0
        %5160 = vmatprep.subr.mxu0 0.0
        %5161 = vmatpush1.msra.mxu0 0.0
        %5162 = vmatprep.subr.mxu0 0.0
        %5163 = vmatpush1.msra.mxu0 0.0
        %5164 = vmatprep.subr.mxu0 0.0
        %5165 = vmatpush1.msra.mxu0 0.0
        %5166 = vmatprep.mubr.f32.mxu0 0.0
        %5167 = vmatmul.mubr.f32.gmra.mrb[0].mxu0 %v5094
        %v5168 = vpop.f32.mrb[0].mxu0
        %v5169 = vadd.f32 %v5091, %v5168
        %v5170 = vpop.f32.mrb[0].mxu0
        %5171 = vmatprep.mubr.f32.mxu0 0.0
        %5172 = vmatmul.mubr.f32.gmra.mrb[0].mxu0 %v5097
        %v5173 = vpop.f32.mrb[0].mxu0
        %v5174 = vadd.f32 %v5091, %v5173
        %v5175 = vpop.f32.mrb[0].mxu0
        %5176 = vmatprep.mubr.f32.mxu0 0.0
        %5177 = vmatmul.mubr.f32.gmra.mrb[0].mxu0 %v5100
        %v5178 = vpop.f32.mrb[0].mxu0
        %v5179 = vadd.f32 %v5091, %v5178
        %v5180 = vpop.f32.mrb[0].mxu0
        %5181 = vdwg.mxu0
        %v5182 = vadd.f32 %v3899, %v5169
        %v5183 = vadd.f32 %v3900, %v5174
        %v5184 = vadd.f32 %v3901, %v5179
        %s5185 = scalar_lea.vmem %s9, 2
        %v5186 = vld [vmem:[%s5185] sm:$0x1]
        %s5187 = scalar_lea.vmem %s10, 2
        %v5188 = vld [vmem:[%s5187] sm:$0x1]
        %v5189 = vsel %vm750, %v5182, 0.0
        %5190 = vadd.xlane.f32.xlu0 %v5189
        %v5191 = vpop.xlane.xlu0 %5190
        %v5192 = vsel %vm750, %v5183, 0.0
        %5193 = vadd.xlane.f32.xlu0 %v5192
        %v5194 = vpop.xlane.xlu0 %5193
        %v5195 = vsel %vm750, %v5184, 0.0
        %5196 = vadd.xlane.f32.xlu0 %v5195
        %v5197 = vpop.xlane.xlu0 %5196
        %v5198 = vmul.f32 %v5191, %v760
        %v5199 = vmul.f32 %v5194, %v760
        %v5200 = vmul.f32 %v5197, %v760
        %v5201 = vsub.f32 %v5182, %v5198
        %v5202 = vsub.f32 %v5183, %v5199
        %v5203 = vsub.f32 %v5184, %v5200
        %v5204 = vmul.f32 %v5201, %v5201
        %v5205 = vmul.f32 %v5202, %v5202
        %v5206 = vmul.f32 %v5203, %v5203
        %v5207 = vsel %vm750, %v5204, 0.0
        %5208 = vadd.xlane.f32.xlu0 %v5207
        %v5209 = vpop.xlane.xlu0 %5208
        %v5210 = vsel %vm750, %v5205, 0.0
        %5211 = vadd.xlane.f32.xlu0 %v5210
        %v5212 = vpop.xlane.xlu0 %5211
        %v5213 = vsel %vm750, %v5206, 0.0
        %5214 = vadd.xlane.f32.xlu0 %v5213
        %v5215 = vpop.xlane.xlu0 %5214
        %v5216 = vmul.f32 %v5209, %v760
        %v5217 = vmul.f32 %v5212, %v760
        %v5218 = vmul.f32 %v5215, %v760
        %v5219 = vadd.f32 %v5216, 1e-06
        %v5220 = vadd.f32 %v5217, 1e-06
        %v5221 = vadd.f32 %v5218, 1e-06
        %v5222 = vrsqrt.pop %v5219
        %v5223 = vrsqrt.pop %v5220
        %v5224 = vrsqrt.pop %v5221
        %v5225 = vmul.f32 %v5201, %v5222
        %v5226 = vmul.f32 %v5202, %v5223
        %v5227 = vmul.f32 %v5203, %v5224
        %v5229 = vlaneseq
        %v5230 = vshrl.u32 %v5229, 7
        %v5231 = vsub.s32 0, %v5230
        %v5232 = vrot.slane %v5186, %v5231
        %v5234 = vmul.f32 %v5225, %v5232
        %v5235 = vmul.f32 %v5226, %v5232
        %v5236 = vmul.f32 %v5227, %v5232
        %v5238 = vlaneseq
        %v5239 = vshrl.u32 %v5238, 7
        %v5240 = vsub.s32 0, %v5239
        %v5241 = vrot.slane %v5188, %v5240
        %v5243 = vadd.f32 %v5234, %v5241
        %v5244 = vadd.f32 %v5235, %v5241
        %v5245 = vadd.f32 %v5236, %v5241
        %s5246 = scalar_lea.vmem %s11, 64
        %v5247 = vld [vmem:[%s5246] sm:$0xff]
        %v5248 = vld [vmem:[%s5246 + $0x8] sm:$0xff]
        %v5249 = vld [vmem:[%s5246 + $0x10] sm:$0xff]
        %v5250 = vld [vmem:[%s5246 + $0x18] sm:$0xff]
        %s5251 = scalar_lea.vmem %s12, 2
        %v5252 = vld [vmem:[%s5251] sm:$0x1]
        %v5254 = vlaneseq
        %v5255 = vshrl.u32 %v5254, 7
        %v5256 = vsub.s32 0, %v5255
        %v5257 = vrot.slane %v5252, %v5256
        %v5260 = vsel %vm750, %v5243, 0
        %v5263 = vsel %vm750, %v5244, 0
        %v5266 = vsel %vm750, %v5245, 0
        %5268 = vmatprep.subr.mxu0 0.0
        %5269 = vmatpush1.msra.mxu0 %v5247
        %5270 = vmatprep.subr.mxu0 0.0
        %5271 = vmatpush1.msra.mxu0 %v5248
        %5272 = vmatprep.subr.mxu0 0.0
        %5273 = vmatpush1.msra.mxu0 %v5249
        %5274 = vmatprep.subr.mxu0 0.0
        %5275 = vmatpush1.msra.mxu0 %v5250
        %5276 = vmatprep.subr.mxu0 0.0
        %5277 = vmatpush1.msra.mxu0 0.0
        %5278 = vmatprep.subr.mxu0 0.0
        %5279 = vmatpush1.msra.mxu0 0.0
        %5280 = vmatprep.subr.mxu0 0.0
        %5281 = vmatpush1.msra.mxu0 0.0
        %5282 = vmatprep.subr.mxu0 0.0
        %5283 = vmatpush1.msra.mxu0 0.0
        %5284 = vmatprep.subr.mxu0 0.0
        %5285 = vmatpush1.msra.mxu0 0.0
        %5286 = vmatprep.subr.mxu0 0.0
        %5287 = vmatpush1.msra.mxu0 0.0
        %5288 = vmatprep.subr.mxu0 0.0
        %5289 = vmatpush1.msra.mxu0 0.0
        %5290 = vmatprep.subr.mxu0 0.0
        %5291 = vmatpush1.msra.mxu0 0.0
        %5292 = vmatprep.subr.mxu0 0.0
        %5293 = vmatpush1.msra.mxu0 0.0
        %5294 = vmatprep.subr.mxu0 0.0
        %5295 = vmatpush1.msra.mxu0 0.0
        %5296 = vmatprep.subr.mxu0 0.0
        %5297 = vmatpush1.msra.mxu0 0.0
        %5298 = vmatprep.subr.mxu0 0.0
        %5299 = vmatpush1.msra.mxu0 0.0
        %5300 = vmatprep.subr.mxu0 0.0
        %5301 = vmatpush1.msra.mxu0 0.0
        %5302 = vmatprep.subr.mxu0 0.0
        %5303 = vmatpush1.msra.mxu0 0.0
        %5304 = vmatprep.subr.mxu0 0.0
        %5305 = vmatpush1.msra.mxu0 0.0
        %5306 = vmatprep.subr.mxu0 0.0
        %5307 = vmatpush1.msra.mxu0 0.0
        %5308 = vmatprep.subr.mxu0 0.0
        %5309 = vmatpush1.msra.mxu0 0.0
        %5310 = vmatprep.subr.mxu0 0.0
        %5311 = vmatpush1.msra.mxu0 0.0
        %5312 = vmatprep.subr.mxu0 0.0
        %5313 = vmatpush1.msra.mxu0 0.0
        %5314 = vmatprep.subr.mxu0 0.0
        %5315 = vmatpush1.msra.mxu0 0.0
        %5316 = vmatprep.subr.mxu0 0.0
        %5317 = vmatpush1.msra.mxu0 0.0
        %5318 = vmatprep.subr.mxu0 0.0
        %5319 = vmatpush1.msra.mxu0 0.0
        %5320 = vmatprep.subr.mxu0 0.0
        %5321 = vmatpush1.msra.mxu0 0.0
        %5322 = vmatprep.subr.mxu0 0.0
        %5323 = vmatpush1.msra.mxu0 0.0
        %5324 = vmatprep.subr.mxu0 0.0
        %5325 = vmatpush1.msra.mxu0 0.0
        %5326 = vmatprep.subr.mxu0 0.0
        %5327 = vmatpush1.msra.mxu0 0.0
        %5328 = vmatprep.subr.mxu0 0.0
        %5329 = vmatpush1.msra.mxu0 0.0
        %5330 = vmatprep.subr.mxu0 0.0
        %5331 = vmatpush1.msra.mxu0 0.0
        %5332 = vmatprep.mubr.f32.mxu0 0.0
        %5333 = vmatmul.mubr.f32.gmra.mrb[0].mxu0 %v5260
        %v5334 = vpop.f32.mrb[0].mxu0
        %v5335 = vadd.f32 %v5257, %v5334
        %v5336 = vpop.f32.mrb[0].mxu0
        %5337 = vmatprep.mubr.f32.mxu0 0.0
        %5338 = vmatmul.mubr.f32.gmra.mrb[0].mxu0 %v5263
        %v5339 = vpop.f32.mrb[0].mxu0
        %v5340 = vadd.f32 %v5257, %v5339
        %v5341 = vpop.f32.mrb[0].mxu0
        %5342 = vmatprep.mubr.f32.mxu0 0.0
        %5343 = vmatmul.mubr.f32.gmra.mrb[0].mxu0 %v5266
        %v5344 = vpop.f32.mrb[0].mxu0
        %v5345 = vadd.f32 %v5257, %v5344
        %v5346 = vpop.f32.mrb[0].mxu0
        %5347 = vdwg.mxu0
        %v5348 = vmul.f32 %v5335, %v5335
        %v5349 = vmul.f32 %v5340, %v5340
        %v5350 = vmul.f32 %v5345, %v5345
        %v5351 = vmul.f32 %v5335, %v5348
        %v5352 = vmul.f32 %v5340, %v5349
        %v5353 = vmul.f32 %v5345, %v5350
        %v5354 = vmul.f32 %v5351, 0.044715
        %v5355 = vmul.f32 %v5352, 0.044715
        %v5356 = vmul.f32 %v5353, 0.044715
        %v5357 = vadd.f32 %v5335, %v5354
        %v5358 = vadd.f32 %v5340, %v5355
        %v5359 = vadd.f32 %v5345, %v5356
        %v5360 = vmul.f32 %v5357, 0.7978846
        %v5361 = vmul.f32 %v5358, 0.7978846
        %v5362 = vmul.f32 %v5359, 0.7978846
        %v5363 = vtanh.pop %v5360
        %v5364 = vtanh.pop %v5361
        %v5365 = vtanh.pop %v5362
        %v5366 = vadd.f32 %v5363, 1.0
        %v5367 = vadd.f32 %v5364, 1.0
        %v5368 = vadd.f32 %v5365, 1.0
        %v5369 = vmul.f32 %v5366, 0.5
        %v5370 = vmul.f32 %v5367, 0.5
        %v5371 = vmul.f32 %v5368, 0.5
        %v5372 = vmul.f32 %v5335, %v5369
        %v5373 = vmul.f32 %v5340, %v5370
        %v5374 = vmul.f32 %v5345, %v5371
        %s5375 = scalar_lea.vmem %s13, 256
        %v5376 = vld [vmem:[%s5375] sm:$0xff]
        %v5377 = vld [vmem:[%s5375 + $0x8] sm:$0xff]
        %v5378 = vld [vmem:[%s5375 + $0x10] sm:$0xff]
        %v5379 = vld [vmem:[%s5375 + $0x18] sm:$0xff]
        %v5380 = vld [vmem:[%s5375 + $0x20] sm:$0xff]
        %v5381 = vld [vmem:[%s5375 + $0x28] sm:$0xff]
        %v5382 = vld [vmem:[%s5375 + $0x30] sm:$0xff]
        %v5383 = vld [vmem:[%s5375 + $0x38] sm:$0xff]
        %v5384 = vld [vmem:[%s5375 + $0x40] sm:$0xff]
        %v5385 = vld [vmem:[%s5375 + $0x48] sm:$0xff]
        %v5386 = vld [vmem:[%s5375 + $0x50] sm:$0xff]
        %v5387 = vld [vmem:[%s5375 + $0x58] sm:$0xff]
        %v5388 = vld [vmem:[%s5375 + $0x60] sm:$0xff]
        %v5389 = vld [vmem:[%s5375 + $0x68] sm:$0xff]
        %v5390 = vld [vmem:[%s5375 + $0x70] sm:$0xff]
        %v5391 = vld [vmem:[%s5375 + $0x78] sm:$0xff]
        %s5392 = scalar_lea.vmem %s14, 2
        %v5393 = vld [vmem:[%s5392] sm:$0x1]
        %v5395 = vlaneseq
        %v5396 = vshrl.u32 %v5395, 7
        %v5397 = vsub.s32 0, %v5396
        %v5398 = vrot.slane %v5393, %v5397
        %5400 = vmatprep.subr.mxu0 0.0
        %5401 = vmatpush1.msra.mxu0 %v5376
        %5402 = vmatprep.subr.mxu0 0.0
        %5403 = vmatpush1.msra.mxu0 %v5377
        %5404 = vmatprep.subr.mxu0 0.0
        %5405 = vmatpush1.msra.mxu0 %v5378
        %5406 = vmatprep.subr.mxu0 0.0
        %5407 = vmatpush1.msra.mxu0 %v5379
        %5408 = vmatprep.subr.mxu0 0.0
        %5409 = vmatpush1.msra.mxu0 %v5380
        %5410 = vmatprep.subr.mxu0 0.0
        %5411 = vmatpush1.msra.mxu0 %v5381
        %5412 = vmatprep.subr.mxu0 0.0
        %5413 = vmatpush1.msra.mxu0 %v5382
        %5414 = vmatprep.subr.mxu0 0.0
        %5415 = vmatpush1.msra.mxu0 %v5383
        %5416 = vmatprep.subr.mxu0 0.0
        %5417 = vmatpush1.msra.mxu0 %v5384
        %5418 = vmatprep.subr.mxu0 0.0
        %5419 = vmatpush1.msra.mxu0 %v5385
        %5420 = vmatprep.subr.mxu0 0.0
        %5421 = vmatpush1.msra.mxu0 %v5386
        %5422 = vmatprep.subr.mxu0 0.0
        %5423 = vmatpush1.msra.mxu0 %v5387
        %5424 = vmatprep.subr.mxu0 0.0
        %5425 = vmatpush1.msra.mxu0 %v5388
        %5426 = vmatprep.subr.mxu0 0.0
        %5427 = vmatpush1.msra.mxu0 %v5389
        %5428 = vmatprep.subr.mxu0 0.0
        %5429 = vmatpush1.msra.mxu0 %v5390
        %5430 = vmatprep.subr.mxu0 0.0
        %5431 = vmatpush1.msra.mxu0 %v5391
        %5432 = vmatprep.subr.mxu0 0.0
        %5433 = vmatpush1.msra.mxu0 0.0
        %5434 = vmatprep.subr.mxu0 0.0
        %5435 = vmatpush1.msra.mxu0 0.0
        %5436 = vmatprep.subr.mxu0 0.0
        %5437 = vmatpush1.msra.mxu0 0.0
        %5438 = vmatprep.subr.mxu0 0.0
        %5439 = vmatpush1.msra.mxu0 0.0
        %5440 = vmatprep.subr.mxu0 0.0
        %5441 = vmatpush1.msra.mxu0 0.0
        %5442 = vmatprep.subr.mxu0 0.0
        %5443 = vmatpush1.msra.mxu0 0.0
        %5444 = vmatprep.subr.mxu0 0.0
        %5445 = vmatpush1.msra.mxu0 0.0
        %5446 = vmatprep.subr.mxu0 0.0
        %5447 = vmatpush1.msra.mxu0 0.0
        %5448 = vmatprep.subr.mxu0 0.0
        %5449 = vmatpush1.msra.mxu0 0.0
        %5450 = vmatprep.subr.mxu0 0.0
        %5451 = vmatpush1.msra.mxu0 0.0
        %5452 = vmatprep.subr.mxu0 0.0
        %5453 = vmatpush1.msra.mxu0 0.0
        %5454 = vmatprep.subr.mxu0 0.0
        %5455 = vmatpush1.msra.mxu0 0.0
        %5456 = vmatprep.subr.mxu0 0.0
        %5457 = vmatpush1.msra.mxu0 0.0
        %5458 = vmatprep.subr.mxu0 0.0
        %5459 = vmatpush1.msra.mxu0 0.0
        %5460 = vmatprep.subr.mxu0 0.0
        %5461 = vmatpush1.msra.mxu0 0.0
        %5462 = vmatprep.subr.mxu0 0.0
        %5463 = vmatpush1.msra.mxu0 0.0
        %5464 = vmatprep.mubr.f32.mxu0 0.0
        %5465 = vmatmul.mubr.f32.gmra.mrb[0].mxu0 %v5372
        %v5466 = vpop.f32.mrb[0].mxu0
        %v5467 = vadd.f32 %v5398, %v5466
        %v5468 = vpop.f32.mrb[0].mxu0
        %5469 = vmatprep.mubr.f32.mxu0 0.0
        %5470 = vmatmul.mubr.f32.gmra.mrb[0].mxu0 %v5373
        %v5471 = vpop.f32.mrb[0].mxu0
        %v5472 = vadd.f32 %v5398, %v5471
        %v5473 = vpop.f32.mrb[0].mxu0
        %5474 = vmatprep.mubr.f32.mxu0 0.0
        %5475 = vmatmul.mubr.f32.gmra.mrb[0].mxu0 %v5374
        %v5476 = vpop.f32.mrb[0].mxu0
        %v5477 = vadd.f32 %v5398, %v5476
        %v5478 = vpop.f32.mrb[0].mxu0
        %5479 = vdwg.mxu0
        %v5480 = vadd.f32 %v5182, %v5467
        %v5481 = vadd.f32 %v5183, %v5472
        %v5482 = vadd.f32 %v5184, %v5477
        %s5483 = scalar_lea.vmem %s3, 3
        %v5484 = vld [vmem:[%s5483] sm:$0x1]
        %s5485 = scalar_lea.vmem %s4, 3
        %v5486 = vld [vmem:[%s5485] sm:$0x1]
        %v5487 = vsel %vm750, %v5480, 0.0
        %5488 = vadd.xlane.f32.xlu0 %v5487
        %v5489 = vpop.xlane.xlu0 %5488
        %v5490 = vsel %vm750, %v5481, 0.0
        %5491 = vadd.xlane.f32.xlu0 %v5490
        %v5492 = vpop.xlane.xlu0 %5491
        %v5493 = vsel %vm750, %v5482, 0.0
        %5494 = vadd.xlane.f32.xlu0 %v5493
        %v5495 = vpop.xlane.xlu0 %5494
        %v5496 = vmul.f32 %v5489, %v760
        %v5497 = vmul.f32 %v5492, %v760
        %v5498 = vmul.f32 %v5495, %v760
        %v5499 = vsub.f32 %v5480, %v5496
        %v5500 = vsub.f32 %v5481, %v5497
        %v5501 = vsub.f32 %v5482, %v5498
        %v5502 = vmul.f32 %v5499, %v5499
        %v5503 = vmul.f32 %v5500, %v5500
        %v5504 = vmul.f32 %v5501, %v5501
        %v5505 = vsel %vm750, %v5502, 0.0
        %5506 = vadd.xlane.f32.xlu0 %v5505
        %v5507 = vpop.xlane.xlu0 %5506
        %v5508 = vsel %vm750, %v5503, 0.0
        %5509 = vadd.xlane.f32.xlu0 %v5508
        %v5510 = vpop.xlane.xlu0 %5509
        %v5511 = vsel %vm750, %v5504, 0.0
        %5512 = vadd.xlane.f32.xlu0 %v5511
        %v5513 = vpop.xlane.xlu0 %5512
        %v5514 = vmul.f32 %v5507, %v760
        %v5515 = vmul.f32 %v5510, %v760
        %v5516 = vmul.f32 %v5513, %v760
        %v5517 = vadd.f32 %v5514, 1e-06
        %v5518 = vadd.f32 %v5515, 1e-06
        %v5519 = vadd.f32 %v5516, 1e-06
        %v5520 = vrsqrt.pop %v5517
        %v5521 = vrsqrt.pop %v5518
        %v5522 = vrsqrt.pop %v5519
        %v5523 = vmul.f32 %v5499, %v5520
        %v5524 = vmul.f32 %v5500, %v5521
        %v5525 = vmul.f32 %v5501, %v5522
        %v5527 = vlaneseq
        %v5528 = vshrl.u32 %v5527, 7
        %v5529 = vsub.s32 0, %v5528
        %v5530 = vrot.slane %v5484, %v5529
        %v5532 = vmul.f32 %v5523, %v5530
        %v5533 = vmul.f32 %v5524, %v5530
        %v5534 = vmul.f32 %v5525, %v5530
        %v5536 = vlaneseq
        %v5537 = vshrl.u32 %v5536, 7
        %v5538 = vsub.s32 0, %v5537
        %v5539 = vrot.slane %v5486, %v5538
        %v5541 = vadd.f32 %v5532, %v5539
        %v5542 = vadd.f32 %v5533, %v5539
        %v5543 = vadd.f32 %v5534, %v5539
        %s5544 = scalar_lea.vmem %s5, 96
        %v5545 = vld [vmem:[%s5544] sm:$0xff]
        %v5546 = vld [vmem:[%s5544 + $0x8] sm:$0xff]
        %v5547 = vld [vmem:[%s5544 + $0x10] sm:$0xff]
        %v5548 = vld [vmem:[%s5544 + $0x18] sm:$0xff]
        %s5549 = scalar_lea.vmem %s6, 3
        %v5550 = vld [vmem:[%s5549] sm:$0x1]
        %v5552 = vlaneseq
        %v5553 = vshrl.u32 %v5552, 7
        %v5554 = vsub.s32 0, %v5553
        %v5555 = vrot.slane %v5550, %v5554
        %v5558 = vsel %vm750, %v5541, 0
        %v5561 = vsel %vm750, %v5542, 0
        %v5564 = vsel %vm750, %v5543, 0
        %5566 = vmatprep.subr.mxu0 0.0
        %5567 = vmatpush1.msra.mxu0 %v5545
        %5568 = vmatprep.subr.mxu0 0.0
        %5569 = vmatpush1.msra.mxu0 %v5546
        %5570 = vmatprep.subr.mxu0 0.0
        %5571 = vmatpush1.msra.mxu0 %v5547
        %5572 = vmatprep.subr.mxu0 0.0
        %5573 = vmatpush1.msra.mxu0 %v5548
        %5574 = vmatprep.subr.mxu0 0.0
        %5575 = vmatpush1.msra.mxu0 0.0
        %5576 = vmatprep.subr.mxu0 0.0
        %5577 = vmatpush1.msra.mxu0 0.0
        %5578 = vmatprep.subr.mxu0 0.0
        %5579 = vmatpush1.msra.mxu0 0.0
        %5580 = vmatprep.subr.mxu0 0.0
        %5581 = vmatpush1.msra.mxu0 0.0
        %5582 = vmatprep.subr.mxu0 0.0
        %5583 = vmatpush1.msra.mxu0 0.0
        %5584 = vmatprep.subr.mxu0 0.0
        %5585 = vmatpush1.msra.mxu0 0.0
        %5586 = vmatprep.subr.mxu0 0.0
        %5587 = vmatpush1.msra.mxu0 0.0
        %5588 = vmatprep.subr.mxu0 0.0
        %5589 = vmatpush1.msra.mxu0 0.0
        %5590 = vmatprep.subr.mxu0 0.0
        %5591 = vmatpush1.msra.mxu0 0.0
        %5592 = vmatprep.subr.mxu0 0.0
        %5593 = vmatpush1.msra.mxu0 0.0
        %5594 = vmatprep.subr.mxu0 0.0
        %5595 = vmatpush1.msra.mxu0 0.0
        %5596 = vmatprep.subr.mxu0 0.0
        %5597 = vmatpush1.msra.mxu0 0.0
        %5598 = vmatprep.subr.mxu0 0.0
        %5599 = vmatpush1.msra.mxu0 0.0
        %5600 = vmatprep.subr.mxu0 0.0
        %5601 = vmatpush1.msra.mxu0 0.0
        %5602 = vmatprep.subr.mxu0 0.0
        %5603 = vmatpush1.msra.mxu0 0.0
        %5604 = vmatprep.subr.mxu0 0.0
        %5605 = vmatpush1.msra.mxu0 0.0
        %5606 = vmatprep.subr.mxu0 0.0
        %5607 = vmatpush1.msra.mxu0 0.0
        %5608 = vmatprep.subr.mxu0 0.0
        %5609 = vmatpush1.msra.mxu0 0.0
        %5610 = vmatprep.subr.mxu0 0.0
        %5611 = vmatpush1.msra.mxu0 0.0
        %5612 = vmatprep.subr.mxu0 0.0
        %5613 = vmatpush1.msra.mxu0 0.0
        %5614 = vmatprep.subr.mxu0 0.0
        %5615 = vmatpush1.msra.mxu0 0.0
        %5616 = vmatprep.subr.mxu0 0.0
        %5617 = vmatpush1.msra.mxu0 0.0
        %5618 = vmatprep.subr.mxu0 0.0
        %5619 = vmatpush1.msra.mxu0 0.0
        %5620 = vmatprep.subr.mxu0 0.0
        %5621 = vmatpush1.msra.mxu0 0.0
        %5622 = vmatprep.subr.mxu0 0.0
        %5623 = vmatpush1.msra.mxu0 0.0
        %5624 = vmatprep.subr.mxu0 0.0
        %5625 = vmatpush1.msra.mxu0 0.0
        %5626 = vmatprep.subr.mxu0 0.0
        %5627 = vmatpush1.msra.mxu0 0.0
        %5628 = vmatprep.subr.mxu0 0.0
        %5629 = vmatpush1.msra.mxu0 0.0
        %5630 = vmatprep.mubr.f32.mxu0 0.0
        %5631 = vmatmul.mubr.f32.gmra.mrb[0].mxu0 %v5558
        %v5632 = vpop.f32.mrb[0].mxu0
        %v5633 = vadd.f32 %v5555, %v5632
        %v5634 = vpop.f32.mrb[0].mxu0
        %5635 = vmatprep.mubr.f32.mxu0 0.0
        %5636 = vmatmul.mubr.f32.gmra.mrb[0].mxu0 %v5561
        %v5637 = vpop.f32.mrb[0].mxu0
        %v5638 = vadd.f32 %v5555, %v5637
        %v5639 = vpop.f32.mrb[0].mxu0
        %5640 = vmatprep.mubr.f32.mxu0 0.0
        %5641 = vmatmul.mubr.f32.gmra.mrb[0].mxu0 %v5564
        %v5642 = vpop.f32.mrb[0].mxu0
        %v5643 = vadd.f32 %v5555, %v5642
        %v5644 = vpop.f32.mrb[0].mxu0
        %5645 = vdwg.mxu0
        %5649 = vrot.lane.b32.xlu0 %v5633, 96
        %v5650 = vpop.permute.xlu0 %5649
        %5651 = vrot.lane.b32.xlu0 %v5638, 96
        %v5652 = vpop.permute.xlu0 %5651
        %5653 = vrot.lane.b32.xlu0 %v5643, 96
        %v5654 = vpop.permute.xlu0 %5653
        %v5655 = vsel %vm918, %v5633, 0
        %v5657 = vsel %vm918, %v5638, 0
        %v5659 = vsel %vm918, %v5643, 0
        %v5661 = vsel %vm918, %v5650, 0
        %v5663 = vsel %vm918, %v5652, 0
        %v5665 = vsel %vm918, %v5654, 0
        %5667 = vmatprep.subr.mxu0 0.0
        %5668 = vmatpush1.xpose.msra.mxu0 %v5661
        %5669 = vmatprep.subr.mxu0 0.0
        %5670 = vmatpush1.xpose.msra.mxu0 %v5663
        %5671 = vmatprep.subr.mxu0 0.0
        %5672 = vmatpush1.xpose.msra.mxu0 %v5665
        %5673 = vmatprep.subr.mxu0 0.0
        %5674 = vmatpush1.xpose.msra.mxu0 0.0
        %5675 = vmatprep.subr.mxu0 0.0
        %5676 = vmatpush1.xpose.msra.mxu0 0.0
        %5677 = vmatprep.subr.mxu0 0.0
        %5678 = vmatpush1.xpose.msra.mxu0 0.0
        %5679 = vmatprep.subr.mxu0 0.0
        %5680 = vmatpush1.xpose.msra.mxu0 0.0
        %5681 = vmatprep.subr.mxu0 0.0
        %5682 = vmatpush1.xpose.msra.mxu0 0.0
        %5683 = vmatprep.subr.mxu0 0.0
        %5684 = vmatpush1.xpose.msra.mxu0 0.0
        %5685 = vmatprep.subr.mxu0 0.0
        %5686 = vmatpush1.xpose.msra.mxu0 0.0
        %5687 = vmatprep.subr.mxu0 0.0
        %5688 = vmatpush1.xpose.msra.mxu0 0.0
        %5689 = vmatprep.subr.mxu0 0.0
        %5690 = vmatpush1.xpose.msra.mxu0 0.0
        %5691 = vmatprep.subr.mxu0 0.0
        %5692 = vmatpush1.xpose.msra.mxu0 0.0
        %5693 = vmatprep.subr.mxu0 0.0
        %5694 = vmatpush1.xpose.msra.mxu0 0.0
        %5695 = vmatprep.subr.mxu0 0.0
        %5696 = vmatpush1.xpose.msra.mxu0 0.0
        %5697 = vmatprep.subr.mxu0 0.0
        %5698 = vmatpush1.xpose.msra.mxu0 0.0
        %5699 = vmatprep.subr.mxu0 0.0
        %5700 = vmatpush1.xpose.msra.mxu0 0.0
        %5701 = vmatprep.subr.mxu0 0.0
        %5702 = vmatpush1.xpose.msra.mxu0 0.0
        %5703 = vmatprep.subr.mxu0 0.0
        %5704 = vmatpush1.xpose.msra.mxu0 0.0
        %5705 = vmatprep.subr.mxu0 0.0
        %5706 = vmatpush1.xpose.msra.mxu0 0.0
        %5707 = vmatprep.subr.mxu0 0.0
        %5708 = vmatpush1.xpose.msra.mxu0 0.0
        %5709 = vmatprep.subr.mxu0 0.0
        %5710 = vmatpush1.xpose.msra.mxu0 0.0
        %5711 = vmatprep.subr.mxu0 0.0
        %5712 = vmatpush1.xpose.msra.mxu0 0.0
        %5713 = vmatprep.subr.mxu0 0.0
        %5714 = vmatpush1.xpose.msra.mxu0 0.0
        %5715 = vmatprep.subr.mxu0 0.0
        %5716 = vmatpush1.xpose.msra.mxu0 0.0
        %5717 = vmatprep.subr.mxu0 0.0
        %5718 = vmatpush1.xpose.msra.mxu0 0.0
        %5719 = vmatprep.subr.mxu0 0.0
        %5720 = vmatpush1.xpose.msra.mxu0 0.0
        %5721 = vmatprep.subr.mxu0 0.0
        %5722 = vmatpush1.xpose.msra.mxu0 0.0
        %5723 = vmatprep.subr.mxu0 0.0
        %5724 = vmatpush1.xpose.msra.mxu0 0.0
        %5725 = vmatprep.subr.mxu0 0.0
        %5726 = vmatpush1.xpose.msra.mxu0 0.0
        %5727 = vmatprep.subr.mxu0 0.0
        %5728 = vmatpush1.xpose.msra.mxu0 0.0
        %5729 = vmatprep.subr.mxu0 0.0
        %5730 = vmatpush1.xpose.msra.mxu0 0.0
        %5731 = vmatprep.mubr.f32.mxu0 0.0
        %5732 = vmatmul.mubr.f32.gmra.mrb[0].mxu0 %v5655
        %v5733 = vpop.f32.mrb[0].mxu0
        %v5734 = vadd.f32 0.0, %v5733
        %v5735 = vpop.f32.mrb[0].mxu0
        %5736 = vmatprep.mubr.f32.mxu0 0.0
        %5737 = vmatmul.mubr.f32.gmra.mrb[0].mxu0 %v5657
        %v5738 = vpop.f32.mrb[0].mxu0
        %v5739 = vadd.f32 0.0, %v5738
        %v5740 = vpop.f32.mrb[0].mxu0
        %5741 = vmatprep.mubr.f32.mxu0 0.0
        %5742 = vmatmul.mubr.f32.gmra.mrb[0].mxu0 %v5659
        %v5743 = vpop.f32.mrb[0].mxu0
        %v5744 = vadd.f32 0.0, %v5743
        %v5745 = vpop.f32.mrb[0].mxu0
        %5746 = vdwg.mxu0
        %v5747 = vmul.f32 %v5734, 0.35355338
        %v5748 = vmul.f32 %v5739, 0.35355338
        %v5749 = vmul.f32 %v5744, 0.35355338
        %v5750 = vadd.f32 %v5747, %v643
        %v5751 = vadd.f32 %v5748, %v643
        %v5752 = vadd.f32 %v5749, %v643
        %v5753 = vsel %vm1017, %v5750, -inf
        %5754 = vmax.xlane.f32.xlu0 %v5753
        %v5755 = vpop.xlane.xlu0 %5754
        %v5756 = vsel %vm1017, %v5751, -inf
        %5757 = vmax.xlane.f32.xlu0 %v5756
        %v5758 = vpop.xlane.xlu0 %5757
        %v5759 = vsel %vm1017, %v5752, -inf
        %5760 = vmax.xlane.f32.xlu0 %v5759
        %v5761 = vpop.xlane.xlu0 %5760
        %v5762 = vsub.f32 %v5750, %v5755
        %v5763 = vsub.f32 %v5751, %v5758
        %v5764 = vsub.f32 %v5752, %v5761
        %v5765 = vmul.f32 %v5762, 1.442695
        %v5766 = vpow.pop %v5765
        %v5767 = vmul.f32 %v5763, 1.442695
        %v5768 = vpow.pop %v5767
        %v5769 = vmul.f32 %v5764, 1.442695
        %v5770 = vpow.pop %v5769
        %v5771 = vsel %vm1017, %v5766, 0.0
        %5772 = vadd.xlane.f32.xlu0 %v5771
        %v5773 = vpop.xlane.xlu0 %5772
        %v5774 = vsel %vm1017, %v5768, 0.0
        %5775 = vadd.xlane.f32.xlu0 %v5774
        %v5776 = vpop.xlane.xlu0 %5775
        %v5777 = vsel %vm1017, %v5770, 0.0
        %5778 = vadd.xlane.f32.xlu0 %v5777
        %v5779 = vpop.xlane.xlu0 %5778
        %v5780 = vrcp.pop %v5773
        %v5781 = vmul.f32 %v5766, %v5780
        %v5782 = vrcp.pop %v5776
        %v5783 = vmul.f32 %v5768, %v5782
        %v5784 = vrcp.pop %v5779
        %v5785 = vmul.f32 %v5770, %v5784
        %5786 = vrot.lane.b32.xlu0 %v5633, 64
        %v5787 = vpop.permute.xlu0 %5786
        %5788 = vrot.lane.b32.xlu0 %v5638, 64
        %v5789 = vpop.permute.xlu0 %5788
        %5790 = vrot.lane.b32.xlu0 %v5643, 64
        %v5791 = vpop.permute.xlu0 %5790
        %v5796 = vsel %vm1017, %v5781, 0
        %v5799 = vsel %vm1017, %v5783, 0
        %v5802 = vsel %vm1017, %v5785, 0
        %5804 = vmatprep.subr.mxu0 0.0
        %5805 = vmatpush1.msra.mxu0 %v5787
        %5806 = vmatprep.subr.mxu0 0.0
        %5807 = vmatpush1.msra.mxu0 %v5789
        %5808 = vmatprep.subr.mxu0 0.0
        %5809 = vmatpush1.msra.mxu0 %v5791
        %5810 = vmatprep.subr.mxu0 0.0
        %5811 = vmatpush1.msra.mxu0 0.0
        %5812 = vmatprep.subr.mxu0 0.0
        %5813 = vmatpush1.msra.mxu0 0.0
        %5814 = vmatprep.subr.mxu0 0.0
        %5815 = vmatpush1.msra.mxu0 0.0
        %5816 = vmatprep.subr.mxu0 0.0
        %5817 = vmatpush1.msra.mxu0 0.0
        %5818 = vmatprep.subr.mxu0 0.0
        %5819 = vmatpush1.msra.mxu0 0.0
        %5820 = vmatprep.subr.mxu0 0.0
        %5821 = vmatpush1.msra.mxu0 0.0
        %5822 = vmatprep.subr.mxu0 0.0
        %5823 = vmatpush1.msra.mxu0 0.0
        %5824 = vmatprep.subr.mxu0 0.0
        %5825 = vmatpush1.msra.mxu0 0.0
        %5826 = vmatprep.subr.mxu0 0.0
        %5827 = vmatpush1.msra.mxu0 0.0
        %5828 = vmatprep.subr.mxu0 0.0
        %5829 = vmatpush1.msra.mxu0 0.0
        %5830 = vmatprep.subr.mxu0 0.0
        %5831 = vmatpush1.msra.mxu0 0.0
        %5832 = vmatprep.subr.mxu0 0.0
        %5833 = vmatpush1.msra.mxu0 0.0
        %5834 = vmatprep.subr.mxu0 0.0
        %5835 = vmatpush1.msra.mxu0 0.0
        %5836 = vmatprep.subr.mxu0 0.0
        %5837 = vmatpush1.msra.mxu0 0.0
        %5838 = vmatprep.subr.mxu0 0.0
        %5839 = vmatpush1.msra.mxu0 0.0
        %5840 = vmatprep.subr.mxu0 0.0
        %5841 = vmatpush1.msra.mxu0 0.0
        %5842 = vmatprep.subr.mxu0 0.0
        %5843 = vmatpush1.msra.mxu0 0.0
        %5844 = vmatprep.subr.mxu0 0.0
        %5845 = vmatpush1.msra.mxu0 0.0
        %5846 = vmatprep.subr.mxu0 0.0
        %5847 = vmatpush1.msra.mxu0 0.0
        %5848 = vmatprep.subr.mxu0 0.0
        %5849 = vmatpush1.msra.mxu0 0.0
        %5850 = vmatprep.subr.mxu0 0.0
        %5851 = vmatpush1.msra.mxu0 0.0
        %5852 = vmatprep.subr.mxu0 0.0
        %5853 = vmatpush1.msra.mxu0 0.0
        %5854 = vmatprep.subr.mxu0 0.0
        %5855 = vmatpush1.msra.mxu0 0.0
        %5856 = vmatprep.subr.mxu0 0.0
        %5857 = vmatpush1.msra.mxu0 0.0
        %5858 = vmatprep.subr.mxu0 0.0
        %5859 = vmatpush1.msra.mxu0 0.0
        %5860 = vmatprep.subr.mxu0 0.0
        %5861 = vmatpush1.msra.mxu0 0.0
        %5862 = vmatprep.subr.mxu0 0.0
        %5863 = vmatpush1.msra.mxu0 0.0
        %5864 = vmatprep.subr.mxu0 0.0
        %5865 = vmatpush1.msra.mxu0 0.0
        %5866 = vmatprep.subr.mxu0 0.0
        %5867 = vmatpush1.msra.mxu0 0.0
        %5868 = vmatprep.mubr.f32.mxu0 0.0
        %5869 = vmatmul.mubr.f32.gmra.mrb[0].mxu0 %v5796
        %v5870 = vpop.f32.mrb[0].mxu0
        %v5871 = vadd.f32 0.0, %v5870
        %v5872 = vpop.f32.mrb[0].mxu0
        %5873 = vmatprep.mubr.f32.mxu0 0.0
        %5874 = vmatmul.mubr.f32.gmra.mrb[0].mxu0 %v5799
        %v5875 = vpop.f32.mrb[0].mxu0
        %v5876 = vadd.f32 0.0, %v5875
        %v5877 = vpop.f32.mrb[0].mxu0
        %5878 = vmatprep.mubr.f32.mxu0 0.0
        %5879 = vmatmul.mubr.f32.gmra.mrb[0].mxu0 %v5802
        %v5880 = vpop.f32.mrb[0].mxu0
        %v5881 = vadd.f32 0.0, %v5880
        %v5882 = vpop.f32.mrb[0].mxu0
        %5883 = vdwg.mxu0
        %5884 = vst.msk [vmem:[#allocation2] sm:$0xff] %vm918, %v5871
        %5885 = vst.msk [vmem:[#allocation2 + $0x8] sm:$0xff] %vm918, %v5876
        %5886 = vst.msk [vmem:[#allocation2 + $0x10] sm:$0xff] %vm918, %v5881
        %5887 = vrot.lane.b32.xlu0 %v5633, 120
        %v5888 = vpop.permute.xlu0 %5887
        %5889 = vrot.lane.b32.xlu0 %v5638, 120
        %v5890 = vpop.permute.xlu0 %5889
        %5891 = vrot.lane.b32.xlu0 %v5643, 120
        %v5892 = vpop.permute.xlu0 %5891
        %5893 = vrot.lane.b32.xlu0 %v5633, 88
        %v5894 = vpop.permute.xlu0 %5893
        %5895 = vrot.lane.b32.xlu0 %v5638, 88
        %v5896 = vpop.permute.xlu0 %5895
        %5897 = vrot.lane.b32.xlu0 %v5643, 88
        %v5898 = vpop.permute.xlu0 %5897
        %v5899 = vsel %vm918, %v5888, 0
        %v5901 = vsel %vm918, %v5890, 0
        %v5903 = vsel %vm918, %v5892, 0
        %v5905 = vsel %vm918, %v5894, 0
        %v5907 = vsel %vm918, %v5896, 0
        %v5909 = vsel %vm918, %v5898, 0
        %5911 = vmatprep.subr.mxu0 0.0
        %5912 = vmatpush1.xpose.msra.mxu0 %v5905
        %5913 = vmatprep.subr.mxu0 0.0
        %5914 = vmatpush1.xpose.msra.mxu0 %v5907
        %5915 = vmatprep.subr.mxu0 0.0
        %5916 = vmatpush1.xpose.msra.mxu0 %v5909
        %5917 = vmatprep.subr.mxu0 0.0
        %5918 = vmatpush1.xpose.msra.mxu0 0.0
        %5919 = vmatprep.subr.mxu0 0.0
        %5920 = vmatpush1.xpose.msra.mxu0 0.0
        %5921 = vmatprep.subr.mxu0 0.0
        %5922 = vmatpush1.xpose.msra.mxu0 0.0
        %5923 = vmatprep.subr.mxu0 0.0
        %5924 = vmatpush1.xpose.msra.mxu0 0.0
        %5925 = vmatprep.subr.mxu0 0.0
        %5926 = vmatpush1.xpose.msra.mxu0 0.0
        %5927 = vmatprep.subr.mxu0 0.0
        %5928 = vmatpush1.xpose.msra.mxu0 0.0
        %5929 = vmatprep.subr.mxu0 0.0
        %5930 = vmatpush1.xpose.msra.mxu0 0.0
        %5931 = vmatprep.subr.mxu0 0.0
        %5932 = vmatpush1.xpose.msra.mxu0 0.0
        %5933 = vmatprep.subr.mxu0 0.0
        %5934 = vmatpush1.xpose.msra.mxu0 0.0
        %5935 = vmatprep.subr.mxu0 0.0
        %5936 = vmatpush1.xpose.msra.mxu0 0.0
        %5937 = vmatprep.subr.mxu0 0.0
        %5938 = vmatpush1.xpose.msra.mxu0 0.0
        %5939 = vmatprep.subr.mxu0 0.0
        %5940 = vmatpush1.xpose.msra.mxu0 0.0
        %5941 = vmatprep.subr.mxu0 0.0
        %5942 = vmatpush1.xpose.msra.mxu0 0.0
        %5943 = vmatprep.subr.mxu0 0.0
        %5944 = vmatpush1.xpose.msra.mxu0 0.0
        %5945 = vmatprep.subr.mxu0 0.0
        %5946 = vmatpush1.xpose.msra.mxu0 0.0
        %5947 = vmatprep.subr.mxu0 0.0
        %5948 = vmatpush1.xpose.msra.mxu0 0.0
        %5949 = vmatprep.subr.mxu0 0.0
        %5950 = vmatpush1.xpose.msra.mxu0 0.0
        %5951 = vmatprep.subr.mxu0 0.0
        %5952 = vmatpush1.xpose.msra.mxu0 0.0
        %5953 = vmatprep.subr.mxu0 0.0
        %5954 = vmatpush1.xpose.msra.mxu0 0.0
        %5955 = vmatprep.subr.mxu0 0.0
        %5956 = vmatpush1.xpose.msra.mxu0 0.0
        %5957 = vmatprep.subr.mxu0 0.0
        %5958 = vmatpush1.xpose.msra.mxu0 0.0
        %5959 = vmatprep.subr.mxu0 0.0
        %5960 = vmatpush1.xpose.msra.mxu0 0.0
        %5961 = vmatprep.subr.mxu0 0.0
        %5962 = vmatpush1.xpose.msra.mxu0 0.0
        %5963 = vmatprep.subr.mxu0 0.0
        %5964 = vmatpush1.xpose.msra.mxu0 0.0
        %5965 = vmatprep.subr.mxu0 0.0
        %5966 = vmatpush1.xpose.msra.mxu0 0.0
        %5967 = vmatprep.subr.mxu0 0.0
        %5968 = vmatpush1.xpose.msra.mxu0 0.0
        %5969 = vmatprep.subr.mxu0 0.0
        %5970 = vmatpush1.xpose.msra.mxu0 0.0
        %5971 = vmatprep.subr.mxu0 0.0
        %5972 = vmatpush1.xpose.msra.mxu0 0.0
        %5973 = vmatprep.subr.mxu0 0.0
        %5974 = vmatpush1.xpose.msra.mxu0 0.0
        %5975 = vmatprep.mubr.f32.mxu0 0.0
        %5976 = vmatmul.mubr.f32.gmra.mrb[0].mxu0 %v5899
        %v5977 = vpop.f32.mrb[0].mxu0
        %v5978 = vadd.f32 0.0, %v5977
        %v5979 = vpop.f32.mrb[0].mxu0
        %5980 = vmatprep.mubr.f32.mxu0 0.0
        %5981 = vmatmul.mubr.f32.gmra.mrb[0].mxu0 %v5901
        %v5982 = vpop.f32.mrb[0].mxu0
        %v5983 = vadd.f32 0.0, %v5982
        %v5984 = vpop.f32.mrb[0].mxu0
        %5985 = vmatprep.mubr.f32.mxu0 0.0
        %5986 = vmatmul.mubr.f32.gmra.mrb[0].mxu0 %v5903
        %v5987 = vpop.f32.mrb[0].mxu0
        %v5988 = vadd.f32 0.0, %v5987
        %v5989 = vpop.f32.mrb[0].mxu0
        %5990 = vdwg.mxu0
        %v5991 = vmul.f32 %v5978, 0.35355338
        %v5992 = vmul.f32 %v5983, 0.35355338
        %v5993 = vmul.f32 %v5988, 0.35355338
        %v5994 = vadd.f32 %v5991, %v643
        %v5995 = vadd.f32 %v5992, %v643
        %v5996 = vadd.f32 %v5993, %v643
        %v5997 = vsel %vm1017, %v5994, -inf
        %5998 = vmax.xlane.f32.xlu0 %v5997
        %v5999 = vpop.xlane.xlu0 %5998
        %v6000 = vsel %vm1017, %v5995, -inf
        %6001 = vmax.xlane.f32.xlu0 %v6000
        %v6002 = vpop.xlane.xlu0 %6001
        %v6003 = vsel %vm1017, %v5996, -inf
        %6004 = vmax.xlane.f32.xlu0 %v6003
        %v6005 = vpop.xlane.xlu0 %6004
        %v6006 = vsub.f32 %v5994, %v5999
        %v6007 = vsub.f32 %v5995, %v6002
        %v6008 = vsub.f32 %v5996, %v6005
        %v6009 = vmul.f32 %v6006, 1.442695
        %v6010 = vpow.pop %v6009
        %v6011 = vmul.f32 %v6007, 1.442695
        %v6012 = vpow.pop %v6011
        %v6013 = vmul.f32 %v6008, 1.442695
        %v6014 = vpow.pop %v6013
        %v6015 = vsel %vm1017, %v6010, 0.0
        %6016 = vadd.xlane.f32.xlu0 %v6015
        %v6017 = vpop.xlane.xlu0 %6016
        %v6018 = vsel %vm1017, %v6012, 0.0
        %6019 = vadd.xlane.f32.xlu0 %v6018
        %v6020 = vpop.xlane.xlu0 %6019
        %v6021 = vsel %vm1017, %v6014, 0.0
        %6022 = vadd.xlane.f32.xlu0 %v6021
        %v6023 = vpop.xlane.xlu0 %6022
        %v6024 = vrcp.pop %v6017
        %v6025 = vmul.f32 %v6010, %v6024
        %v6026 = vrcp.pop %v6020
        %v6027 = vmul.f32 %v6012, %v6026
        %v6028 = vrcp.pop %v6023
        %v6029 = vmul.f32 %v6014, %v6028
        %6030 = vrot.lane.b32.xlu0 %v5633, 56
        %v6031 = vpop.permute.xlu0 %6030
        %6032 = vrot.lane.b32.xlu0 %v5638, 56
        %v6033 = vpop.permute.xlu0 %6032
        %6034 = vrot.lane.b32.xlu0 %v5643, 56
        %v6035 = vpop.permute.xlu0 %6034
        %v6040 = vsel %vm1017, %v6025, 0
        %v6043 = vsel %vm1017, %v6027, 0
        %v6046 = vsel %vm1017, %v6029, 0
        %6048 = vmatprep.subr.mxu0 0.0
        %6049 = vmatpush1.msra.mxu0 %v6031
        %6050 = vmatprep.subr.mxu0 0.0
        %6051 = vmatpush1.msra.mxu0 %v6033
        %6052 = vmatprep.subr.mxu0 0.0
        %6053 = vmatpush1.msra.mxu0 %v6035
        %6054 = vmatprep.subr.mxu0 0.0
        %6055 = vmatpush1.msra.mxu0 0.0
        %6056 = vmatprep.subr.mxu0 0.0
        %6057 = vmatpush1.msra.mxu0 0.0
        %6058 = vmatprep.subr.mxu0 0.0
        %6059 = vmatpush1.msra.mxu0 0.0
        %6060 = vmatprep.subr.mxu0 0.0
        %6061 = vmatpush1.msra.mxu0 0.0
        %6062 = vmatprep.subr.mxu0 0.0
        %6063 = vmatpush1.msra.mxu0 0.0
        %6064 = vmatprep.subr.mxu0 0.0
        %6065 = vmatpush1.msra.mxu0 0.0
        %6066 = vmatprep.subr.mxu0 0.0
        %6067 = vmatpush1.msra.mxu0 0.0
        %6068 = vmatprep.subr.mxu0 0.0
        %6069 = vmatpush1.msra.mxu0 0.0
        %6070 = vmatprep.subr.mxu0 0.0
        %6071 = vmatpush1.msra.mxu0 0.0
        %6072 = vmatprep.subr.mxu0 0.0
        %6073 = vmatpush1.msra.mxu0 0.0
        %6074 = vmatprep.subr.mxu0 0.0
        %6075 = vmatpush1.msra.mxu0 0.0
        %6076 = vmatprep.subr.mxu0 0.0
        %6077 = vmatpush1.msra.mxu0 0.0
        %6078 = vmatprep.subr.mxu0 0.0
        %6079 = vmatpush1.msra.mxu0 0.0
        %6080 = vmatprep.subr.mxu0 0.0
        %6081 = vmatpush1.msra.mxu0 0.0
        %6082 = vmatprep.subr.mxu0 0.0
        %6083 = vmatpush1.msra.mxu0 0.0
        %6084 = vmatprep.subr.mxu0 0.0
        %6085 = vmatpush1.msra.mxu0 0.0
        %6086 = vmatprep.subr.mxu0 0.0
        %6087 = vmatpush1.msra.mxu0 0.0
        %6088 = vmatprep.subr.mxu0 0.0
        %6089 = vmatpush1.msra.mxu0 0.0
        %6090 = vmatprep.subr.mxu0 0.0
        %6091 = vmatpush1.msra.mxu0 0.0
        %6092 = vmatprep.subr.mxu0 0.0
        %6093 = vmatpush1.msra.mxu0 0.0
        %6094 = vmatprep.subr.mxu0 0.0
        %6095 = vmatpush1.msra.mxu0 0.0
        %6096 = vmatprep.subr.mxu0 0.0
        %6097 = vmatpush1.msra.mxu0 0.0
        %6098 = vmatprep.subr.mxu0 0.0
        %6099 = vmatpush1.msra.mxu0 0.0
        %6100 = vmatprep.subr.mxu0 0.0
        %6101 = vmatpush1.msra.mxu0 0.0
        %6102 = vmatprep.subr.mxu0 0.0
        %6103 = vmatpush1.msra.mxu0 0.0
        %6104 = vmatprep.subr.mxu0 0.0
        %6105 = vmatpush1.msra.mxu0 0.0
        %6106 = vmatprep.subr.mxu0 0.0
        %6107 = vmatpush1.msra.mxu0 0.0
        %6108 = vmatprep.subr.mxu0 0.0
        %6109 = vmatpush1.msra.mxu0 0.0
        %6110 = vmatprep.subr.mxu0 0.0
        %6111 = vmatpush1.msra.mxu0 0.0
        %6112 = vmatprep.mubr.f32.mxu0 0.0
        %6113 = vmatmul.mubr.f32.gmra.mrb[0].mxu0 %v6040
        %v6114 = vpop.f32.mrb[0].mxu0
        %v6115 = vadd.f32 0.0, %v6114
        %v6116 = vpop.f32.mrb[0].mxu0
        %6117 = vmatprep.mubr.f32.mxu0 0.0
        %6118 = vmatmul.mubr.f32.gmra.mrb[0].mxu0 %v6043
        %v6119 = vpop.f32.mrb[0].mxu0
        %v6120 = vadd.f32 0.0, %v6119
        %v6121 = vpop.f32.mrb[0].mxu0
        %6122 = vmatprep.mubr.f32.mxu0 0.0
        %6123 = vmatmul.mubr.f32.gmra.mrb[0].mxu0 %v6046
        %v6124 = vpop.f32.mrb[0].mxu0
        %v6125 = vadd.f32 0.0, %v6124
        %v6126 = vpop.f32.mrb[0].mxu0
        %6127 = vdwg.mxu0
        %6131 = vrot.lane.b32.xlu0 %v6115, 8
        %v6132 = vpop.permute.xlu0 %6131
        %6133 = vrot.lane.b32.xlu0 %v6120, 8
        %v6134 = vpop.permute.xlu0 %6133
        %6135 = vrot.lane.b32.xlu0 %v6125, 8
        %v6136 = vpop.permute.xlu0 %6135
        %6140 = vst.msk [vmem:[#allocation2] sm:$0xff] %vm1405, %v6132
        %6141 = vst.msk [vmem:[#allocation2 + $0x8] sm:$0xff] %vm1405, %v6134
        %6142 = vst.msk [vmem:[#allocation2 + $0x10] sm:$0xff] %vm1405, %v6136
        %6143 = vrot.lane.b32.xlu0 %v5633, 112
        %v6144 = vpop.permute.xlu0 %6143
        %6145 = vrot.lane.b32.xlu0 %v5638, 112
        %v6146 = vpop.permute.xlu0 %6145
        %6147 = vrot.lane.b32.xlu0 %v5643, 112
        %v6148 = vpop.permute.xlu0 %6147
        %6149 = vrot.lane.b32.xlu0 %v5633, 80
        %v6150 = vpop.permute.xlu0 %6149
        %6151 = vrot.lane.b32.xlu0 %v5638, 80
        %v6152 = vpop.permute.xlu0 %6151
        %6153 = vrot.lane.b32.xlu0 %v5643, 80
        %v6154 = vpop.permute.xlu0 %6153
        %v6155 = vsel %vm918, %v6144, 0
        %v6157 = vsel %vm918, %v6146, 0
        %v6159 = vsel %vm918, %v6148, 0
        %v6161 = vsel %vm918, %v6150, 0
        %v6163 = vsel %vm918, %v6152, 0
        %v6165 = vsel %vm918, %v6154, 0
        %6167 = vmatprep.subr.mxu0 0.0
        %6168 = vmatpush1.xpose.msra.mxu0 %v6161
        %6169 = vmatprep.subr.mxu0 0.0
        %6170 = vmatpush1.xpose.msra.mxu0 %v6163
        %6171 = vmatprep.subr.mxu0 0.0
        %6172 = vmatpush1.xpose.msra.mxu0 %v6165
        %6173 = vmatprep.subr.mxu0 0.0
        %6174 = vmatpush1.xpose.msra.mxu0 0.0
        %6175 = vmatprep.subr.mxu0 0.0
        %6176 = vmatpush1.xpose.msra.mxu0 0.0
        %6177 = vmatprep.subr.mxu0 0.0
        %6178 = vmatpush1.xpose.msra.mxu0 0.0
        %6179 = vmatprep.subr.mxu0 0.0
        %6180 = vmatpush1.xpose.msra.mxu0 0.0
        %6181 = vmatprep.subr.mxu0 0.0
        %6182 = vmatpush1.xpose.msra.mxu0 0.0
        %6183 = vmatprep.subr.mxu0 0.0
        %6184 = vmatpush1.xpose.msra.mxu0 0.0
        %6185 = vmatprep.subr.mxu0 0.0
        %6186 = vmatpush1.xpose.msra.mxu0 0.0
        %6187 = vmatprep.subr.mxu0 0.0
        %6188 = vmatpush1.xpose.msra.mxu0 0.0
        %6189 = vmatprep.subr.mxu0 0.0
        %6190 = vmatpush1.xpose.msra.mxu0 0.0
        %6191 = vmatprep.subr.mxu0 0.0
        %6192 = vmatpush1.xpose.msra.mxu0 0.0
        %6193 = vmatprep.subr.mxu0 0.0
        %6194 = vmatpush1.xpose.msra.mxu0 0.0
        %6195 = vmatprep.subr.mxu0 0.0
        %6196 = vmatpush1.xpose.msra.mxu0 0.0
        %6197 = vmatprep.subr.mxu0 0.0
        %6198 = vmatpush1.xpose.msra.mxu0 0.0
        %6199 = vmatprep.subr.mxu0 0.0
        %6200 = vmatpush1.xpose.msra.mxu0 0.0
        %6201 = vmatprep.subr.mxu0 0.0
        %6202 = vmatpush1.xpose.msra.mxu0 0.0
        %6203 = vmatprep.subr.mxu0 0.0
        %6204 = vmatpush1.xpose.msra.mxu0 0.0
        %6205 = vmatprep.subr.mxu0 0.0
        %6206 = vmatpush1.xpose.msra.mxu0 0.0
        %6207 = vmatprep.subr.mxu0 0.0
        %6208 = vmatpush1.xpose.msra.mxu0 0.0
        %6209 = vmatprep.subr.mxu0 0.0
        %6210 = vmatpush1.xpose.msra.mxu0 0.0
        %6211 = vmatprep.subr.mxu0 0.0
        %6212 = vmatpush1.xpose.msra.mxu0 0.0
        %6213 = vmatprep.subr.mxu0 0.0
        %6214 = vmatpush1.xpose.msra.mxu0 0.0
        %6215 = vmatprep.subr.mxu0 0.0
        %6216 = vmatpush1.xpose.msra.mxu0 0.0
        %6217 = vmatprep.subr.mxu0 0.0
        %6218 = vmatpush1.xpose.msra.mxu0 0.0
        %6219 = vmatprep.subr.mxu0 0.0
        %6220 = vmatpush1.xpose.msra.mxu0 0.0
        %6221 = vmatprep.subr.mxu0 0.0
        %6222 = vmatpush1.xpose.msra.mxu0 0.0
        %6223 = vmatprep.subr.mxu0 0.0
        %6224 = vmatpush1.xpose.msra.mxu0 0.0
        %6225 = vmatprep.subr.mxu0 0.0
        %6226 = vmatpush1.xpose.msra.mxu0 0.0
        %6227 = vmatprep.subr.mxu0 0.0
        %6228 = vmatpush1.xpose.msra.mxu0 0.0
        %6229 = vmatprep.subr.mxu0 0.0
        %6230 = vmatpush1.xpose.msra.mxu0 0.0
        %6231 = vmatprep.mubr.f32.mxu0 0.0
        %6232 = vmatmul.mubr.f32.gmra.mrb[0].mxu0 %v6155
        %v6233 = vpop.f32.mrb[0].mxu0
        %v6234 = vadd.f32 0.0, %v6233
        %v6235 = vpop.f32.mrb[0].mxu0
        %6236 = vmatprep.mubr.f32.mxu0 0.0
        %6237 = vmatmul.mubr.f32.gmra.mrb[0].mxu0 %v6157
        %v6238 = vpop.f32.mrb[0].mxu0
        %v6239 = vadd.f32 0.0, %v6238
        %v6240 = vpop.f32.mrb[0].mxu0
        %6241 = vmatprep.mubr.f32.mxu0 0.0
        %6242 = vmatmul.mubr.f32.gmra.mrb[0].mxu0 %v6159
        %v6243 = vpop.f32.mrb[0].mxu0
        %v6244 = vadd.f32 0.0, %v6243
        %v6245 = vpop.f32.mrb[0].mxu0
        %6246 = vdwg.mxu0
        %v6247 = vmul.f32 %v6234, 0.35355338
        %v6248 = vmul.f32 %v6239, 0.35355338
        %v6249 = vmul.f32 %v6244, 0.35355338
        %v6250 = vadd.f32 %v6247, %v643
        %v6251 = vadd.f32 %v6248, %v643
        %v6252 = vadd.f32 %v6249, %v643
        %v6253 = vsel %vm1017, %v6250, -inf
        %6254 = vmax.xlane.f32.xlu0 %v6253
        %v6255 = vpop.xlane.xlu0 %6254
        %v6256 = vsel %vm1017, %v6251, -inf
        %6257 = vmax.xlane.f32.xlu0 %v6256
        %v6258 = vpop.xlane.xlu0 %6257
        %v6259 = vsel %vm1017, %v6252, -inf
        %6260 = vmax.xlane.f32.xlu0 %v6259
        %v6261 = vpop.xlane.xlu0 %6260
        %v6262 = vsub.f32 %v6250, %v6255
        %v6263 = vsub.f32 %v6251, %v6258
        %v6264 = vsub.f32 %v6252, %v6261
        %v6265 = vmul.f32 %v6262, 1.442695
        %v6266 = vpow.pop %v6265
        %v6267 = vmul.f32 %v6263, 1.442695
        %v6268 = vpow.pop %v6267
        %v6269 = vmul.f32 %v6264, 1.442695
        %v6270 = vpow.pop %v6269
        %v6271 = vsel %vm1017, %v6266, 0.0
        %6272 = vadd.xlane.f32.xlu0 %v6271
        %v6273 = vpop.xlane.xlu0 %6272
        %v6274 = vsel %vm1017, %v6268, 0.0
        %6275 = vadd.xlane.f32.xlu0 %v6274
        %v6276 = vpop.xlane.xlu0 %6275
        %v6277 = vsel %vm1017, %v6270, 0.0
        %6278 = vadd.xlane.f32.xlu0 %v6277
        %v6279 = vpop.xlane.xlu0 %6278
        %v6280 = vrcp.pop %v6273
        %v6281 = vmul.f32 %v6266, %v6280
        %v6282 = vrcp.pop %v6276
        %v6283 = vmul.f32 %v6268, %v6282
        %v6284 = vrcp.pop %v6279
        %v6285 = vmul.f32 %v6270, %v6284
        %6286 = vrot.lane.b32.xlu0 %v5633, 48
        %v6287 = vpop.permute.xlu0 %6286
        %6288 = vrot.lane.b32.xlu0 %v5638, 48
        %v6289 = vpop.permute.xlu0 %6288
        %6290 = vrot.lane.b32.xlu0 %v5643, 48
        %v6291 = vpop.permute.xlu0 %6290
        %v6296 = vsel %vm1017, %v6281, 0
        %v6299 = vsel %vm1017, %v6283, 0
        %v6302 = vsel %vm1017, %v6285, 0
        %6304 = vmatprep.subr.mxu0 0.0
        %6305 = vmatpush1.msra.mxu0 %v6287
        %6306 = vmatprep.subr.mxu0 0.0
        %6307 = vmatpush1.msra.mxu0 %v6289
        %6308 = vmatprep.subr.mxu0 0.0
        %6309 = vmatpush1.msra.mxu0 %v6291
        %6310 = vmatprep.subr.mxu0 0.0
        %6311 = vmatpush1.msra.mxu0 0.0
        %6312 = vmatprep.subr.mxu0 0.0
        %6313 = vmatpush1.msra.mxu0 0.0
        %6314 = vmatprep.subr.mxu0 0.0
        %6315 = vmatpush1.msra.mxu0 0.0
        %6316 = vmatprep.subr.mxu0 0.0
        %6317 = vmatpush1.msra.mxu0 0.0
        %6318 = vmatprep.subr.mxu0 0.0
        %6319 = vmatpush1.msra.mxu0 0.0
        %6320 = vmatprep.subr.mxu0 0.0
        %6321 = vmatpush1.msra.mxu0 0.0
        %6322 = vmatprep.subr.mxu0 0.0
        %6323 = vmatpush1.msra.mxu0 0.0
        %6324 = vmatprep.subr.mxu0 0.0
        %6325 = vmatpush1.msra.mxu0 0.0
        %6326 = vmatprep.subr.mxu0 0.0
        %6327 = vmatpush1.msra.mxu0 0.0
        %6328 = vmatprep.subr.mxu0 0.0
        %6329 = vmatpush1.msra.mxu0 0.0
        %6330 = vmatprep.subr.mxu0 0.0
        %6331 = vmatpush1.msra.mxu0 0.0
        %6332 = vmatprep.subr.mxu0 0.0
        %6333 = vmatpush1.msra.mxu0 0.0
        %6334 = vmatprep.subr.mxu0 0.0
        %6335 = vmatpush1.msra.mxu0 0.0
        %6336 = vmatprep.subr.mxu0 0.0
        %6337 = vmatpush1.msra.mxu0 0.0
        %6338 = vmatprep.subr.mxu0 0.0
        %6339 = vmatpush1.msra.mxu0 0.0
        %6340 = vmatprep.subr.mxu0 0.0
        %6341 = vmatpush1.msra.mxu0 0.0
        %6342 = vmatprep.subr.mxu0 0.0
        %6343 = vmatpush1.msra.mxu0 0.0
        %6344 = vmatprep.subr.mxu0 0.0
        %6345 = vmatpush1.msra.mxu0 0.0
        %6346 = vmatprep.subr.mxu0 0.0
        %6347 = vmatpush1.msra.mxu0 0.0
        %6348 = vmatprep.subr.mxu0 0.0
        %6349 = vmatpush1.msra.mxu0 0.0
        %6350 = vmatprep.subr.mxu0 0.0
        %6351 = vmatpush1.msra.mxu0 0.0
        %6352 = vmatprep.subr.mxu0 0.0
        %6353 = vmatpush1.msra.mxu0 0.0
        %6354 = vmatprep.subr.mxu0 0.0
        %6355 = vmatpush1.msra.mxu0 0.0
        %6356 = vmatprep.subr.mxu0 0.0
        %6357 = vmatpush1.msra.mxu0 0.0
        %6358 = vmatprep.subr.mxu0 0.0
        %6359 = vmatpush1.msra.mxu0 0.0
        %6360 = vmatprep.subr.mxu0 0.0
        %6361 = vmatpush1.msra.mxu0 0.0
        %6362 = vmatprep.subr.mxu0 0.0
        %6363 = vmatpush1.msra.mxu0 0.0
        %6364 = vmatprep.subr.mxu0 0.0
        %6365 = vmatpush1.msra.mxu0 0.0
        %6366 = vmatprep.subr.mxu0 0.0
        %6367 = vmatpush1.msra.mxu0 0.0
        %6368 = vmatprep.mubr.f32.mxu0 0.0
        %6369 = vmatmul.mubr.f32.gmra.mrb[0].mxu0 %v6296
        %v6370 = vpop.f32.mrb[0].mxu0
        %v6371 = vadd.f32 0.0, %v6370
        %v6372 = vpop.f32.mrb[0].mxu0
        %6373 = vmatprep.mubr.f32.mxu0 0.0
        %6374 = vmatmul.mubr.f32.gmra.mrb[0].mxu0 %v6299
        %v6375 = vpop.f32.mrb[0].mxu0
        %v6376 = vadd.f32 0.0, %v6375
        %v6377 = vpop.f32.mrb[0].mxu0
        %6378 = vmatprep.mubr.f32.mxu0 0.0
        %6379 = vmatmul.mubr.f32.gmra.mrb[0].mxu0 %v6302
        %v6380 = vpop.f32.mrb[0].mxu0
        %v6381 = vadd.f32 0.0, %v6380
        %v6382 = vpop.f32.mrb[0].mxu0
        %6383 = vdwg.mxu0
        %6387 = vrot.lane.b32.xlu0 %v6371, 16
        %v6388 = vpop.permute.xlu0 %6387
        %6389 = vrot.lane.b32.xlu0 %v6376, 16
        %v6390 = vpop.permute.xlu0 %6389
        %6391 = vrot.lane.b32.xlu0 %v6381, 16
        %v6392 = vpop.permute.xlu0 %6391
        %6396 = vst.msk [vmem:[#allocation2] sm:$0xff] %vm1662, %v6388
        %6397 = vst.msk [vmem:[#allocation2 + $0x8] sm:$0xff] %vm1662, %v6390
        %6398 = vst.msk [vmem:[#allocation2 + $0x10] sm:$0xff] %vm1662, %v6392
        %6399 = vrot.lane.b32.xlu0 %v5633, 104
        %v6400 = vpop.permute.xlu0 %6399
        %6401 = vrot.lane.b32.xlu0 %v5638, 104
        %v6402 = vpop.permute.xlu0 %6401
        %6403 = vrot.lane.b32.xlu0 %v5643, 104
        %v6404 = vpop.permute.xlu0 %6403
        %6405 = vrot.lane.b32.xlu0 %v5633, 72
        %v6406 = vpop.permute.xlu0 %6405
        %6407 = vrot.lane.b32.xlu0 %v5638, 72
        %v6408 = vpop.permute.xlu0 %6407
        %6409 = vrot.lane.b32.xlu0 %v5643, 72
        %v6410 = vpop.permute.xlu0 %6409
        %v6411 = vsel %vm918, %v6400, 0
        %v6413 = vsel %vm918, %v6402, 0
        %v6415 = vsel %vm918, %v6404, 0
        %v6417 = vsel %vm918, %v6406, 0
        %v6419 = vsel %vm918, %v6408, 0
        %v6421 = vsel %vm918, %v6410, 0
        %6423 = vmatprep.subr.mxu0 0.0
        %6424 = vmatpush1.xpose.msra.mxu0 %v6417
        %6425 = vmatprep.subr.mxu0 0.0
        %6426 = vmatpush1.xpose.msra.mxu0 %v6419
        %6427 = vmatprep.subr.mxu0 0.0
        %6428 = vmatpush1.xpose.msra.mxu0 %v6421
        %6429 = vmatprep.subr.mxu0 0.0
        %6430 = vmatpush1.xpose.msra.mxu0 0.0
        %6431 = vmatprep.subr.mxu0 0.0
        %6432 = vmatpush1.xpose.msra.mxu0 0.0
        %6433 = vmatprep.subr.mxu0 0.0
        %6434 = vmatpush1.xpose.msra.mxu0 0.0
        %6435 = vmatprep.subr.mxu0 0.0
        %6436 = vmatpush1.xpose.msra.mxu0 0.0
        %6437 = vmatprep.subr.mxu0 0.0
        %6438 = vmatpush1.xpose.msra.mxu0 0.0
        %6439 = vmatprep.subr.mxu0 0.0
        %6440 = vmatpush1.xpose.msra.mxu0 0.0
        %6441 = vmatprep.subr.mxu0 0.0
        %6442 = vmatpush1.xpose.msra.mxu0 0.0
        %6443 = vmatprep.subr.mxu0 0.0
        %6444 = vmatpush1.xpose.msra.mxu0 0.0
        %6445 = vmatprep.subr.mxu0 0.0
        %6446 = vmatpush1.xpose.msra.mxu0 0.0
        %6447 = vmatprep.subr.mxu0 0.0
        %6448 = vmatpush1.xpose.msra.mxu0 0.0
        %6449 = vmatprep.subr.mxu0 0.0
        %6450 = vmatpush1.xpose.msra.mxu0 0.0
        %6451 = vmatprep.subr.mxu0 0.0
        %6452 = vmatpush1.xpose.msra.mxu0 0.0
        %6453 = vmatprep.subr.mxu0 0.0
        %6454 = vmatpush1.xpose.msra.mxu0 0.0
        %6455 = vmatprep.subr.mxu0 0.0
        %6456 = vmatpush1.xpose.msra.mxu0 0.0
        %6457 = vmatprep.subr.mxu0 0.0
        %6458 = vmatpush1.xpose.msra.mxu0 0.0
        %6459 = vmatprep.subr.mxu0 0.0
        %6460 = vmatpush1.xpose.msra.mxu0 0.0
        %6461 = vmatprep.subr.mxu0 0.0
        %6462 = vmatpush1.xpose.msra.mxu0 0.0
        %6463 = vmatprep.subr.mxu0 0.0
        %6464 = vmatpush1.xpose.msra.mxu0 0.0
        %6465 = vmatprep.subr.mxu0 0.0
        %6466 = vmatpush1.xpose.msra.mxu0 0.0
        %6467 = vmatprep.subr.mxu0 0.0
        %6468 = vmatpush1.xpose.msra.mxu0 0.0
        %6469 = vmatprep.subr.mxu0 0.0
        %6470 = vmatpush1.xpose.msra.mxu0 0.0
        %6471 = vmatprep.subr.mxu0 0.0
        %6472 = vmatpush1.xpose.msra.mxu0 0.0
        %6473 = vmatprep.subr.mxu0 0.0
        %6474 = vmatpush1.xpose.msra.mxu0 0.0
        %6475 = vmatprep.subr.mxu0 0.0
        %6476 = vmatpush1.xpose.msra.mxu0 0.0
        %6477 = vmatprep.subr.mxu0 0.0
        %6478 = vmatpush1.xpose.msra.mxu0 0.0
        %6479 = vmatprep.subr.mxu0 0.0
        %6480 = vmatpush1.xpose.msra.mxu0 0.0
        %6481 = vmatprep.subr.mxu0 0.0
        %6482 = vmatpush1.xpose.msra.mxu0 0.0
        %6483 = vmatprep.subr.mxu0 0.0
        %6484 = vmatpush1.xpose.msra.mxu0 0.0
        %6485 = vmatprep.subr.mxu0 0.0
        %6486 = vmatpush1.xpose.msra.mxu0 0.0
        %6487 = vmatprep.mubr.f32.mxu0 0.0
        %6488 = vmatmul.mubr.f32.gmra.mrb[0].mxu0 %v6411
        %v6489 = vpop.f32.mrb[0].mxu0
        %v6490 = vadd.f32 0.0, %v6489
        %v6491 = vpop.f32.mrb[0].mxu0
        %6492 = vmatprep.mubr.f32.mxu0 0.0
        %6493 = vmatmul.mubr.f32.gmra.mrb[0].mxu0 %v6413
        %v6494 = vpop.f32.mrb[0].mxu0
        %v6495 = vadd.f32 0.0, %v6494
        %v6496 = vpop.f32.mrb[0].mxu0
        %6497 = vmatprep.mubr.f32.mxu0 0.0
        %6498 = vmatmul.mubr.f32.gmra.mrb[0].mxu0 %v6415
        %v6499 = vpop.f32.mrb[0].mxu0
        %v6500 = vadd.f32 0.0, %v6499
        %v6501 = vpop.f32.mrb[0].mxu0
        %6502 = vdwg.mxu0
        %v6503 = vmul.f32 %v6490, 0.35355338
        %v6504 = vmul.f32 %v6495, 0.35355338
        %v6505 = vmul.f32 %v6500, 0.35355338
        %v6506 = vadd.f32 %v6503, %v643
        %v6507 = vadd.f32 %v6504, %v643
        %v6508 = vadd.f32 %v6505, %v643
        %v6509 = vsel %vm1017, %v6506, -inf
        %6510 = vmax.xlane.f32.xlu0 %v6509
        %v6511 = vpop.xlane.xlu0 %6510
        %v6512 = vsel %vm1017, %v6507, -inf
        %6513 = vmax.xlane.f32.xlu0 %v6512
        %v6514 = vpop.xlane.xlu0 %6513
        %v6515 = vsel %vm1017, %v6508, -inf
        %6516 = vmax.xlane.f32.xlu0 %v6515
        %v6517 = vpop.xlane.xlu0 %6516
        %v6518 = vsub.f32 %v6506, %v6511
        %v6519 = vsub.f32 %v6507, %v6514
        %v6520 = vsub.f32 %v6508, %v6517
        %v6521 = vmul.f32 %v6518, 1.442695
        %v6522 = vpow.pop %v6521
        %v6523 = vmul.f32 %v6519, 1.442695
        %v6524 = vpow.pop %v6523
        %v6525 = vmul.f32 %v6520, 1.442695
        %v6526 = vpow.pop %v6525
        %v6527 = vsel %vm1017, %v6522, 0.0
        %6528 = vadd.xlane.f32.xlu0 %v6527
        %v6529 = vpop.xlane.xlu0 %6528
        %v6530 = vsel %vm1017, %v6524, 0.0
        %6531 = vadd.xlane.f32.xlu0 %v6530
        %v6532 = vpop.xlane.xlu0 %6531
        %v6533 = vsel %vm1017, %v6526, 0.0
        %6534 = vadd.xlane.f32.xlu0 %v6533
        %v6535 = vpop.xlane.xlu0 %6534
        %v6536 = vrcp.pop %v6529
        %v6537 = vmul.f32 %v6522, %v6536
        %v6538 = vrcp.pop %v6532
        %v6539 = vmul.f32 %v6524, %v6538
        %v6540 = vrcp.pop %v6535
        %v6541 = vmul.f32 %v6526, %v6540
        %6542 = vrot.lane.b32.xlu0 %v5633, 40
        %v6543 = vpop.permute.xlu0 %6542
        %6544 = vrot.lane.b32.xlu0 %v5638, 40
        %v6545 = vpop.permute.xlu0 %6544
        %6546 = vrot.lane.b32.xlu0 %v5643, 40
        %v6547 = vpop.permute.xlu0 %6546
        %v6552 = vsel %vm1017, %v6537, 0
        %v6555 = vsel %vm1017, %v6539, 0
        %v6558 = vsel %vm1017, %v6541, 0
        %6560 = vmatprep.subr.mxu0 0.0
        %6561 = vmatpush1.msra.mxu0 %v6543
        %6562 = vmatprep.subr.mxu0 0.0
        %6563 = vmatpush1.msra.mxu0 %v6545
        %6564 = vmatprep.subr.mxu0 0.0
        %6565 = vmatpush1.msra.mxu0 %v6547
        %6566 = vmatprep.subr.mxu0 0.0
        %6567 = vmatpush1.msra.mxu0 0.0
        %6568 = vmatprep.subr.mxu0 0.0
        %6569 = vmatpush1.msra.mxu0 0.0
        %6570 = vmatprep.subr.mxu0 0.0
        %6571 = vmatpush1.msra.mxu0 0.0
        %6572 = vmatprep.subr.mxu0 0.0
        %6573 = vmatpush1.msra.mxu0 0.0
        %6574 = vmatprep.subr.mxu0 0.0
        %6575 = vmatpush1.msra.mxu0 0.0
        %6576 = vmatprep.subr.mxu0 0.0
        %6577 = vmatpush1.msra.mxu0 0.0
        %6578 = vmatprep.subr.mxu0 0.0
        %6579 = vmatpush1.msra.mxu0 0.0
        %6580 = vmatprep.subr.mxu0 0.0
        %6581 = vmatpush1.msra.mxu0 0.0
        %6582 = vmatprep.subr.mxu0 0.0
        %6583 = vmatpush1.msra.mxu0 0.0
        %6584 = vmatprep.subr.mxu0 0.0
        %6585 = vmatpush1.msra.mxu0 0.0
        %6586 = vmatprep.subr.mxu0 0.0
        %6587 = vmatpush1.msra.mxu0 0.0
        %6588 = vmatprep.subr.mxu0 0.0
        %6589 = vmatpush1.msra.mxu0 0.0
        %6590 = vmatprep.subr.mxu0 0.0
        %6591 = vmatpush1.msra.mxu0 0.0
        %6592 = vmatprep.subr.mxu0 0.0
        %6593 = vmatpush1.msra.mxu0 0.0
        %6594 = vmatprep.subr.mxu0 0.0
        %6595 = vmatpush1.msra.mxu0 0.0
        %6596 = vmatprep.subr.mxu0 0.0
        %6597 = vmatpush1.msra.mxu0 0.0
        %6598 = vmatprep.subr.mxu0 0.0
        %6599 = vmatpush1.msra.mxu0 0.0
        %6600 = vmatprep.subr.mxu0 0.0
        %6601 = vmatpush1.msra.mxu0 0.0
        %6602 = vmatprep.subr.mxu0 0.0
        %6603 = vmatpush1.msra.mxu0 0.0
        %6604 = vmatprep.subr.mxu0 0.0
        %6605 = vmatpush1.msra.mxu0 0.0
        %6606 = vmatprep.subr.mxu0 0.0
        %6607 = vmatpush1.msra.mxu0 0.0
        %6608 = vmatprep.subr.mxu0 0.0
        %6609 = vmatpush1.msra.mxu0 0.0
        %6610 = vmatprep.subr.mxu0 0.0
        %6611 = vmatpush1.msra.mxu0 0.0
        %6612 = vmatprep.subr.mxu0 0.0
        %6613 = vmatpush1.msra.mxu0 0.0
        %6614 = vmatprep.subr.mxu0 0.0
        %6615 = vmatpush1.msra.mxu0 0.0
        %6616 = vmatprep.subr.mxu0 0.0
        %6617 = vmatpush1.msra.mxu0 0.0
        %6618 = vmatprep.subr.mxu0 0.0
        %6619 = vmatpush1.msra.mxu0 0.0
        %6620 = vmatprep.subr.mxu0 0.0
        %6621 = vmatpush1.msra.mxu0 0.0
        %6622 = vmatprep.subr.mxu0 0.0
        %6623 = vmatpush1.msra.mxu0 0.0
        %6624 = vmatprep.mubr.f32.mxu0 0.0
        %6625 = vmatmul.mubr.f32.gmra.mrb[0].mxu0 %v6552
        %v6626 = vpop.f32.mrb[0].mxu0
        %v6627 = vadd.f32 0.0, %v6626
        %v6628 = vpop.f32.mrb[0].mxu0
        %6629 = vmatprep.mubr.f32.mxu0 0.0
        %6630 = vmatmul.mubr.f32.gmra.mrb[0].mxu0 %v6555
        %v6631 = vpop.f32.mrb[0].mxu0
        %v6632 = vadd.f32 0.0, %v6631
        %v6633 = vpop.f32.mrb[0].mxu0
        %6634 = vmatprep.mubr.f32.mxu0 0.0
        %6635 = vmatmul.mubr.f32.gmra.mrb[0].mxu0 %v6558
        %v6636 = vpop.f32.mrb[0].mxu0
        %v6637 = vadd.f32 0.0, %v6636
        %v6638 = vpop.f32.mrb[0].mxu0
        %6639 = vdwg.mxu0
        %6643 = vrot.lane.b32.xlu0 %v6627, 24
        %v6644 = vpop.permute.xlu0 %6643
        %6645 = vrot.lane.b32.xlu0 %v6632, 24
        %v6646 = vpop.permute.xlu0 %6645
        %6647 = vrot.lane.b32.xlu0 %v6637, 24
        %v6648 = vpop.permute.xlu0 %6647
        %6652 = vst.msk [vmem:[#allocation2] sm:$0xff] %vm1919, %v6644
        %6653 = vst.msk [vmem:[#allocation2 + $0x8] sm:$0xff] %vm1919, %v6646
        %6654 = vst.msk [vmem:[#allocation2 + $0x10] sm:$0xff] %vm1919, %v6648
        %v6655 = vld [vmem:[#allocation2] sm:$0xff]
        %v6656 = vld [vmem:[#allocation2 + $0x8] sm:$0xff]
        %v6657 = vld [vmem:[#allocation2 + $0x10] sm:$0xff]
        %s6658 = scalar_lea.vmem %s7, 96
        %v6659 = vld [vmem:[%s6658] sm:$0xff]
        %v6660 = vld [vmem:[%s6658 + $0x8] sm:$0xff]
        %v6661 = vld [vmem:[%s6658 + $0x10] sm:$0xff]
        %v6662 = vld [vmem:[%s6658 + $0x18] sm:$0xff]
        %s6663 = scalar_lea.vmem %s8, 3
        %v6664 = vld [vmem:[%s6663] sm:$0x1]
        %v6666 = vlaneseq
        %v6667 = vshrl.u32 %v6666, 7
        %v6668 = vsub.s32 0, %v6667
        %v6669 = vrot.slane %v6664, %v6668
        %v6672 = vsel %vm750, %v6655, 0
        %v6675 = vsel %vm750, %v6656, 0
        %v6678 = vsel %vm750, %v6657, 0
        %6680 = vmatprep.subr.mxu0 0.0
        %6681 = vmatpush1.msra.mxu0 %v6659
        %6682 = vmatprep.subr.mxu0 0.0
        %6683 = vmatpush1.msra.mxu0 %v6660
        %6684 = vmatprep.subr.mxu0 0.0
        %6685 = vmatpush1.msra.mxu0 %v6661
        %6686 = vmatprep.subr.mxu0 0.0
        %6687 = vmatpush1.msra.mxu0 %v6662
        %6688 = vmatprep.subr.mxu0 0.0
        %6689 = vmatpush1.msra.mxu0 0.0
        %6690 = vmatprep.subr.mxu0 0.0
        %6691 = vmatpush1.msra.mxu0 0.0
        %6692 = vmatprep.subr.mxu0 0.0
        %6693 = vmatpush1.msra.mxu0 0.0
        %6694 = vmatprep.subr.mxu0 0.0
        %6695 = vmatpush1.msra.mxu0 0.0
        %6696 = vmatprep.subr.mxu0 0.0
        %6697 = vmatpush1.msra.mxu0 0.0
        %6698 = vmatprep.subr.mxu0 0.0
        %6699 = vmatpush1.msra.mxu0 0.0
        %6700 = vmatprep.subr.mxu0 0.0
        %6701 = vmatpush1.msra.mxu0 0.0
        %6702 = vmatprep.subr.mxu0 0.0
        %6703 = vmatpush1.msra.mxu0 0.0
        %6704 = vmatprep.subr.mxu0 0.0
        %6705 = vmatpush1.msra.mxu0 0.0
        %6706 = vmatprep.subr.mxu0 0.0
        %6707 = vmatpush1.msra.mxu0 0.0
        %6708 = vmatprep.subr.mxu0 0.0
        %6709 = vmatpush1.msra.mxu0 0.0
        %6710 = vmatprep.subr.mxu0 0.0
        %6711 = vmatpush1.msra.mxu0 0.0
        %6712 = vmatprep.subr.mxu0 0.0
        %6713 = vmatpush1.msra.mxu0 0.0
        %6714 = vmatprep.subr.mxu0 0.0
        %6715 = vmatpush1.msra.mxu0 0.0
        %6716 = vmatprep.subr.mxu0 0.0
        %6717 = vmatpush1.msra.mxu0 0.0
        %6718 = vmatprep.subr.mxu0 0.0
        %6719 = vmatpush1.msra.mxu0 0.0
        %6720 = vmatprep.subr.mxu0 0.0
        %6721 = vmatpush1.msra.mxu0 0.0
        %6722 = vmatprep.subr.mxu0 0.0
        %6723 = vmatpush1.msra.mxu0 0.0
        %6724 = vmatprep.subr.mxu0 0.0
        %6725 = vmatpush1.msra.mxu0 0.0
        %6726 = vmatprep.subr.mxu0 0.0
        %6727 = vmatpush1.msra.mxu0 0.0
        %6728 = vmatprep.subr.mxu0 0.0
        %6729 = vmatpush1.msra.mxu0 0.0
        %6730 = vmatprep.subr.mxu0 0.0
        %6731 = vmatpush1.msra.mxu0 0.0
        %6732 = vmatprep.subr.mxu0 0.0
        %6733 = vmatpush1.msra.mxu0 0.0
        %6734 = vmatprep.subr.mxu0 0.0
        %6735 = vmatpush1.msra.mxu0 0.0
        %6736 = vmatprep.subr.mxu0 0.0
        %6737 = vmatpush1.msra.mxu0 0.0
        %6738 = vmatprep.subr.mxu0 0.0
        %6739 = vmatpush1.msra.mxu0 0.0
        %6740 = vmatprep.subr.mxu0 0.0
        %6741 = vmatpush1.msra.mxu0 0.0
        %6742 = vmatprep.subr.mxu0 0.0
        %6743 = vmatpush1.msra.mxu0 0.0
        %6744 = vmatprep.mubr.f32.mxu0 0.0
        %6745 = vmatmul.mubr.f32.gmra.mrb[0].mxu0 %v6672
        %v6746 = vpop.f32.mrb[0].mxu0
        %v6747 = vadd.f32 %v6669, %v6746
        %v6748 = vpop.f32.mrb[0].mxu0
        %6749 = vmatprep.mubr.f32.mxu0 0.0
        %6750 = vmatmul.mubr.f32.gmra.mrb[0].mxu0 %v6675
        %v6751 = vpop.f32.mrb[0].mxu0
        %v6752 = vadd.f32 %v6669, %v6751
        %v6753 = vpop.f32.mrb[0].mxu0
        %6754 = vmatprep.mubr.f32.mxu0 0.0
        %6755 = vmatmul.mubr.f32.gmra.mrb[0].mxu0 %v6678
        %v6756 = vpop.f32.mrb[0].mxu0
        %v6757 = vadd.f32 %v6669, %v6756
        %v6758 = vpop.f32.mrb[0].mxu0
        %6759 = vdwg.mxu0
        %v6760 = vadd.f32 %v5480, %v6747
        %v6761 = vadd.f32 %v5481, %v6752
        %v6762 = vadd.f32 %v5482, %v6757
        %s6763 = scalar_lea.vmem %s9, 3
        %v6764 = vld [vmem:[%s6763] sm:$0x1]
        %s6765 = scalar_lea.vmem %s10, 3
        %v6766 = vld [vmem:[%s6765] sm:$0x1]
        %v6767 = vsel %vm750, %v6760, 0.0
        %6768 = vadd.xlane.f32.xlu0 %v6767
        %v6769 = vpop.xlane.xlu0 %6768
        %v6770 = vsel %vm750, %v6761, 0.0
        %6771 = vadd.xlane.f32.xlu0 %v6770
        %v6772 = vpop.xlane.xlu0 %6771
        %v6773 = vsel %vm750, %v6762, 0.0
        %6774 = vadd.xlane.f32.xlu0 %v6773
        %v6775 = vpop.xlane.xlu0 %6774
        %v6776 = vmul.f32 %v6769, %v760
        %v6777 = vmul.f32 %v6772, %v760
        %v6778 = vmul.f32 %v6775, %v760
        %v6779 = vsub.f32 %v6760, %v6776
        %v6780 = vsub.f32 %v6761, %v6777
        %v6781 = vsub.f32 %v6762, %v6778
        %v6782 = vmul.f32 %v6779, %v6779
        %v6783 = vmul.f32 %v6780, %v6780
        %v6784 = vmul.f32 %v6781, %v6781
        %v6785 = vsel %vm750, %v6782, 0.0
        %6786 = vadd.xlane.f32.xlu0 %v6785
        %v6787 = vpop.xlane.xlu0 %6786
        %v6788 = vsel %vm750, %v6783, 0.0
        %6789 = vadd.xlane.f32.xlu0 %v6788
        %v6790 = vpop.xlane.xlu0 %6789
        %v6791 = vsel %vm750, %v6784, 0.0
        %6792 = vadd.xlane.f32.xlu0 %v6791
        %v6793 = vpop.xlane.xlu0 %6792
        %v6794 = vmul.f32 %v6787, %v760
        %v6795 = vmul.f32 %v6790, %v760
        %v6796 = vmul.f32 %v6793, %v760
        %v6797 = vadd.f32 %v6794, 1e-06
        %v6798 = vadd.f32 %v6795, 1e-06
        %v6799 = vadd.f32 %v6796, 1e-06
        %v6800 = vrsqrt.pop %v6797
        %v6801 = vrsqrt.pop %v6798
        %v6802 = vrsqrt.pop %v6799
        %v6803 = vmul.f32 %v6779, %v6800
        %v6804 = vmul.f32 %v6780, %v6801
        %v6805 = vmul.f32 %v6781, %v6802
        %v6807 = vlaneseq
        %v6808 = vshrl.u32 %v6807, 7
        %v6809 = vsub.s32 0, %v6808
        %v6810 = vrot.slane %v6764, %v6809
        %v6812 = vmul.f32 %v6803, %v6810
        %v6813 = vmul.f32 %v6804, %v6810
        %v6814 = vmul.f32 %v6805, %v6810
        %v6816 = vlaneseq
        %v6817 = vshrl.u32 %v6816, 7
        %v6818 = vsub.s32 0, %v6817
        %v6819 = vrot.slane %v6766, %v6818
        %v6821 = vadd.f32 %v6812, %v6819
        %v6822 = vadd.f32 %v6813, %v6819
        %v6823 = vadd.f32 %v6814, %v6819
        %s6824 = scalar_lea.vmem %s11, 96
        %v6825 = vld [vmem:[%s6824] sm:$0xff]
        %v6826 = vld [vmem:[%s6824 + $0x8] sm:$0xff]
        %v6827 = vld [vmem:[%s6824 + $0x10] sm:$0xff]
        %v6828 = vld [vmem:[%s6824 + $0x18] sm:$0xff]
        %s6829 = scalar_lea.vmem %s12, 3
        %v6830 = vld [vmem:[%s6829] sm:$0x1]
        %v6832 = vlaneseq
        %v6833 = vshrl.u32 %v6832, 7
        %v6834 = vsub.s32 0, %v6833
        %v6835 = vrot.slane %v6830, %v6834
        %v6838 = vsel %vm750, %v6821, 0
        %v6841 = vsel %vm750, %v6822, 0
        %v6844 = vsel %vm750, %v6823, 0
        %6846 = vmatprep.subr.mxu0 0.0
        %6847 = vmatpush1.msra.mxu0 %v6825
        %6848 = vmatprep.subr.mxu0 0.0
        %6849 = vmatpush1.msra.mxu0 %v6826
        %6850 = vmatprep.subr.mxu0 0.0
        %6851 = vmatpush1.msra.mxu0 %v6827
        %6852 = vmatprep.subr.mxu0 0.0
        %6853 = vmatpush1.msra.mxu0 %v6828
        %6854 = vmatprep.subr.mxu0 0.0
        %6855 = vmatpush1.msra.mxu0 0.0
        %6856 = vmatprep.subr.mxu0 0.0
        %6857 = vmatpush1.msra.mxu0 0.0
        %6858 = vmatprep.subr.mxu0 0.0
        %6859 = vmatpush1.msra.mxu0 0.0
        %6860 = vmatprep.subr.mxu0 0.0
        %6861 = vmatpush1.msra.mxu0 0.0
        %6862 = vmatprep.subr.mxu0 0.0
        %6863 = vmatpush1.msra.mxu0 0.0
        %6864 = vmatprep.subr.mxu0 0.0
        %6865 = vmatpush1.msra.mxu0 0.0
        %6866 = vmatprep.subr.mxu0 0.0
        %6867 = vmatpush1.msra.mxu0 0.0
        %6868 = vmatprep.subr.mxu0 0.0
        %6869 = vmatpush1.msra.mxu0 0.0
        %6870 = vmatprep.subr.mxu0 0.0
        %6871 = vmatpush1.msra.mxu0 0.0
        %6872 = vmatprep.subr.mxu0 0.0
        %6873 = vmatpush1.msra.mxu0 0.0
        %6874 = vmatprep.subr.mxu0 0.0
        %6875 = vmatpush1.msra.mxu0 0.0
        %6876 = vmatprep.subr.mxu0 0.0
        %6877 = vmatpush1.msra.mxu0 0.0
        %6878 = vmatprep.subr.mxu0 0.0
        %6879 = vmatpush1.msra.mxu0 0.0
        %6880 = vmatprep.subr.mxu0 0.0
        %6881 = vmatpush1.msra.mxu0 0.0
        %6882 = vmatprep.subr.mxu0 0.0
        %6883 = vmatpush1.msra.mxu0 0.0
        %6884 = vmatprep.subr.mxu0 0.0
        %6885 = vmatpush1.msra.mxu0 0.0
        %6886 = vmatprep.subr.mxu0 0.0
        %6887 = vmatpush1.msra.mxu0 0.0
        %6888 = vmatprep.subr.mxu0 0.0
        %6889 = vmatpush1.msra.mxu0 0.0
        %6890 = vmatprep.subr.mxu0 0.0
        %6891 = vmatpush1.msra.mxu0 0.0
        %6892 = vmatprep.subr.mxu0 0.0
        %6893 = vmatpush1.msra.mxu0 0.0
        %6894 = vmatprep.subr.mxu0 0.0
        %6895 = vmatpush1.msra.mxu0 0.0
        %6896 = vmatprep.subr.mxu0 0.0
        %6897 = vmatpush1.msra.mxu0 0.0
        %6898 = vmatprep.subr.mxu0 0.0
        %6899 = vmatpush1.msra.mxu0 0.0
        %6900 = vmatprep.subr.mxu0 0.0
        %6901 = vmatpush1.msra.mxu0 0.0
        %6902 = vmatprep.subr.mxu0 0.0
        %6903 = vmatpush1.msra.mxu0 0.0
        %6904 = vmatprep.subr.mxu0 0.0
        %6905 = vmatpush1.msra.mxu0 0.0
        %6906 = vmatprep.subr.mxu0 0.0
        %6907 = vmatpush1.msra.mxu0 0.0
        %6908 = vmatprep.subr.mxu0 0.0
        %6909 = vmatpush1.msra.mxu0 0.0
        %6910 = vmatprep.mubr.f32.mxu0 0.0
        %6911 = vmatmul.mubr.f32.gmra.mrb[0].mxu0 %v6838
        %v6912 = vpop.f32.mrb[0].mxu0
        %v6913 = vadd.f32 %v6835, %v6912
        %v6914 = vpop.f32.mrb[0].mxu0
        %6915 = vmatprep.mubr.f32.mxu0 0.0
        %6916 = vmatmul.mubr.f32.gmra.mrb[0].mxu0 %v6841
        %v6917 = vpop.f32.mrb[0].mxu0
        %v6918 = vadd.f32 %v6835, %v6917
        %v6919 = vpop.f32.mrb[0].mxu0
        %6920 = vmatprep.mubr.f32.mxu0 0.0
        %6921 = vmatmul.mubr.f32.gmra.mrb[0].mxu0 %v6844
        %v6922 = vpop.f32.mrb[0].mxu0
        %v6923 = vadd.f32 %v6835, %v6922
        %v6924 = vpop.f32.mrb[0].mxu0
        %6925 = vdwg.mxu0
        %v6926 = vmul.f32 %v6913, %v6913
        %v6927 = vmul.f32 %v6918, %v6918
        %v6928 = vmul.f32 %v6923, %v6923
        %v6929 = vmul.f32 %v6913, %v6926
        %v6930 = vmul.f32 %v6918, %v6927
        %v6931 = vmul.f32 %v6923, %v6928
        %v6932 = vmul.f32 %v6929, 0.044715
        %v6933 = vmul.f32 %v6930, 0.044715
        %v6934 = vmul.f32 %v6931, 0.044715
        %v6935 = vadd.f32 %v6913, %v6932
        %v6936 = vadd.f32 %v6918, %v6933
        %v6937 = vadd.f32 %v6923, %v6934
        %v6938 = vmul.f32 %v6935, 0.7978846
        %v6939 = vmul.f32 %v6936, 0.7978846
        %v6940 = vmul.f32 %v6937, 0.7978846
        %v6941 = vtanh.pop %v6938
        %v6942 = vtanh.pop %v6939
        %v6943 = vtanh.pop %v6940
        %v6944 = vadd.f32 %v6941, 1.0
        %v6945 = vadd.f32 %v6942, 1.0
        %v6946 = vadd.f32 %v6943, 1.0
        %v6947 = vmul.f32 %v6944, 0.5
        %v6948 = vmul.f32 %v6945, 0.5
        %v6949 = vmul.f32 %v6946, 0.5
        %v6950 = vmul.f32 %v6913, %v6947
        %v6951 = vmul.f32 %v6918, %v6948
        %v6952 = vmul.f32 %v6923, %v6949
        %s6953 = scalar_lea.vmem %s13, 384
        %v6954 = vld [vmem:[%s6953] sm:$0xff]
        %v6955 = vld [vmem:[%s6953 + $0x8] sm:$0xff]
        %v6956 = vld [vmem:[%s6953 + $0x10] sm:$0xff]
        %v6957 = vld [vmem:[%s6953 + $0x18] sm:$0xff]
        %v6958 = vld [vmem:[%s6953 + $0x20] sm:$0xff]
        %v6959 = vld [vmem:[%s6953 + $0x28] sm:$0xff]
        %v6960 = vld [vmem:[%s6953 + $0x30] sm:$0xff]
        %v6961 = vld [vmem:[%s6953 + $0x38] sm:$0xff]
        %v6962 = vld [vmem:[%s6953 + $0x40] sm:$0xff]
        %v6963 = vld [vmem:[%s6953 + $0x48] sm:$0xff]
        %v6964 = vld [vmem:[%s6953 + $0x50] sm:$0xff]
        %v6965 = vld [vmem:[%s6953 + $0x58] sm:$0xff]
        %v6966 = vld [vmem:[%s6953 + $0x60] sm:$0xff]
        %v6967 = vld [vmem:[%s6953 + $0x68] sm:$0xff]
        %v6968 = vld [vmem:[%s6953 + $0x70] sm:$0xff]
        %v6969 = vld [vmem:[%s6953 + $0x78] sm:$0xff]
        %s6970 = scalar_lea.vmem %s14, 3
        %v6971 = vld [vmem:[%s6970] sm:$0x1]
        %v6973 = vlaneseq
        %v6974 = vshrl.u32 %v6973, 7
        %v6975 = vsub.s32 0, %v6974
        %v6976 = vrot.slane %v6971, %v6975
        %6978 = vmatprep.subr.mxu0 0.0
        %6979 = vmatpush1.msra.mxu0 %v6954
        %6980 = vmatprep.subr.mxu0 0.0
        %6981 = vmatpush1.msra.mxu0 %v6955
        %6982 = vmatprep.subr.mxu0 0.0
        %6983 = vmatpush1.msra.mxu0 %v6956
        %6984 = vmatprep.subr.mxu0 0.0
        %6985 = vmatpush1.msra.mxu0 %v6957
        %6986 = vmatprep.subr.mxu0 0.0
        %6987 = vmatpush1.msra.mxu0 %v6958
        %6988 = vmatprep.subr.mxu0 0.0
        %6989 = vmatpush1.msra.mxu0 %v6959
        %6990 = vmatprep.subr.mxu0 0.0
        %6991 = vmatpush1.msra.mxu0 %v6960
        %6992 = vmatprep.subr.mxu0 0.0
        %6993 = vmatpush1.msra.mxu0 %v6961
        %6994 = vmatprep.subr.mxu0 0.0
        %6995 = vmatpush1.msra.mxu0 %v6962
        %6996 = vmatprep.subr.mxu0 0.0
        %6997 = vmatpush1.msra.mxu0 %v6963
        %6998 = vmatprep.subr.mxu0 0.0
        %6999 = vmatpush1.msra.mxu0 %v6964
        %7000 = vmatprep.subr.mxu0 0.0
        %7001 = vmatpush1.msra.mxu0 %v6965
        %7002 = vmatprep.subr.mxu0 0.0
        %7003 = vmatpush1.msra.mxu0 %v6966
        %7004 = vmatprep.subr.mxu0 0.0
        %7005 = vmatpush1.msra.mxu0 %v6967
        %7006 = vmatprep.subr.mxu0 0.0
        %7007 = vmatpush1.msra.mxu0 %v6968
        %7008 = vmatprep.subr.mxu0 0.0
        %7009 = vmatpush1.msra.mxu0 %v6969
        %7010 = vmatprep.subr.mxu0 0.0
        %7011 = vmatpush1.msra.mxu0 0.0
        %7012 = vmatprep.subr.mxu0 0.0
        %7013 = vmatpush1.msra.mxu0 0.0
        %7014 = vmatprep.subr.mxu0 0.0
        %7015 = vmatpush1.msra.mxu0 0.0
        %7016 = vmatprep.subr.mxu0 0.0
        %7017 = vmatpush1.msra.mxu0 0.0
        %7018 = vmatprep.subr.mxu0 0.0
        %7019 = vmatpush1.msra.mxu0 0.0
        %7020 = vmatprep.subr.mxu0 0.0
        %7021 = vmatpush1.msra.mxu0 0.0
        %7022 = vmatprep.subr.mxu0 0.0
        %7023 = vmatpush1.msra.mxu0 0.0
        %7024 = vmatprep.subr.mxu0 0.0
        %7025 = vmatpush1.msra.mxu0 0.0
        %7026 = vmatprep.subr.mxu0 0.0
        %7027 = vmatpush1.msra.mxu0 0.0
        %7028 = vmatprep.subr.mxu0 0.0
        %7029 = vmatpush1.msra.mxu0 0.0
        %7030 = vmatprep.subr.mxu0 0.0
        %7031 = vmatpush1.msra.mxu0 0.0
        %7032 = vmatprep.subr.mxu0 0.0
        %7033 = vmatpush1.msra.mxu0 0.0
        %7034 = vmatprep.subr.mxu0 0.0
        %7035 = vmatpush1.msra.mxu0 0.0
        %7036 = vmatprep.subr.mxu0 0.0
        %7037 = vmatpush1.msra.mxu0 0.0
        %7038 = vmatprep.subr.mxu0 0.0
        %7039 = vmatpush1.msra.mxu0 0.0
        %7040 = vmatprep.subr.mxu0 0.0
        %7041 = vmatpush1.msra.mxu0 0.0
        %7042 = vmatprep.mubr.f32.mxu0 0.0
        %7043 = vmatmul.mubr.f32.gmra.mrb[0].mxu0 %v6950
        %v7044 = vpop.f32.mrb[0].mxu0
        %v7045 = vadd.f32 %v6976, %v7044
        %v7046 = vpop.f32.mrb[0].mxu0
        %7047 = vmatprep.mubr.f32.mxu0 0.0
        %7048 = vmatmul.mubr.f32.gmra.mrb[0].mxu0 %v6951
        %v7049 = vpop.f32.mrb[0].mxu0
        %v7050 = vadd.f32 %v6976, %v7049
        %v7051 = vpop.f32.mrb[0].mxu0
        %7052 = vmatprep.mubr.f32.mxu0 0.0
        %7053 = vmatmul.mubr.f32.gmra.mrb[0].mxu0 %v6952
        %v7054 = vpop.f32.mrb[0].mxu0
        %v7055 = vadd.f32 %v6976, %v7054
        %v7056 = vpop.f32.mrb[0].mxu0
        %7057 = vdwg.mxu0
        %v7058 = vadd.f32 %v6760, %v7045
        %v7059 = vadd.f32 %v6761, %v7050
        %v7060 = vadd.f32 %v6762, %v7055
        %7061 = vst.msk [vmem:[%s639 + $0x30] sm:$0xff] %vm750, %v7058
        %7062 = vst.msk [vmem:[%s639 + $0x38] sm:$0xff] %vm750, %v7059
        %7063 = vst.msk [vmem:[%s639 + $0x40] sm:$0xff] %vm750, %v7060
        %v7064 = vld [vmem:[%s15] sm:$0x1]
        %v7065 = vld [vmem:[%s16] sm:$0x1]
        %v7066 = vsel %vm750, %v7058, 0.0
        %7067 = vadd.xlane.f32.xlu0 %v7066
        %v7068 = vpop.xlane.xlu0 %7067
        %v7069 = vsel %vm750, %v7059, 0.0
        %7070 = vadd.xlane.f32.xlu0 %v7069
        %v7071 = vpop.xlane.xlu0 %7070
        %v7072 = vsel %vm750, %v7060, 0.0
        %7073 = vadd.xlane.f32.xlu0 %v7072
        %v7074 = vpop.xlane.xlu0 %7073
        %v7075 = vmul.f32 %v7068, %v760
        %v7076 = vmul.f32 %v7071, %v760
        %v7077 = vmul.f32 %v7074, %v760
        %v7078 = vsub.f32 %v7058, %v7075
        %v7079 = vsub.f32 %v7059, %v7076
        %v7080 = vsub.f32 %v7060, %v7077
        %v7081 = vmul.f32 %v7078, %v7078
        %v7082 = vmul.f32 %v7079, %v7079
        %v7083 = vmul.f32 %v7080, %v7080
        %v7084 = vsel %vm750, %v7081, 0.0
        %7085 = vadd.xlane.f32.xlu0 %v7084
        %v7086 = vpop.xlane.xlu0 %7085
        %v7087 = vsel %vm750, %v7082, 0.0
        %7088 = vadd.xlane.f32.xlu0 %v7087
        %v7089 = vpop.xlane.xlu0 %7088
        %v7090 = vsel %vm750, %v7083, 0.0
        %7091 = vadd.xlane.f32.xlu0 %v7090
        %v7092 = vpop.xlane.xlu0 %7091
        %v7093 = vmul.f32 %v7086, %v760
        %v7094 = vmul.f32 %v7089, %v760
        %v7095 = vmul.f32 %v7092, %v760
        %v7096 = vadd.f32 %v7093, 1e-06
        %v7097 = vadd.f32 %v7094, 1e-06
        %v7098 = vadd.f32 %v7095, 1e-06
        %v7099 = vrsqrt.pop %v7096
        %v7100 = vrsqrt.pop %v7097
        %v7101 = vrsqrt.pop %v7098
        %v7102 = vmul.f32 %v7078, %v7099
        %v7103 = vmul.f32 %v7079, %v7100
        %v7104 = vmul.f32 %v7080, %v7101
        %v7106 = vlaneseq
        %v7107 = vshrl.u32 %v7106, 7
        %v7108 = vsub.s32 0, %v7107
        %v7109 = vrot.slane %v7064, %v7108
        %v7111 = vmul.f32 %v7102, %v7109
        %v7112 = vmul.f32 %v7103, %v7109
        %v7113 = vmul.f32 %v7104, %v7109
        %v7115 = vlaneseq
        %v7116 = vshrl.u32 %v7115, 7
        %v7117 = vsub.s32 0, %v7116
        %v7118 = vrot.slane %v7065, %v7117
        %v7120 = vadd.f32 %v7111, %v7118
        %v7121 = vadd.f32 %v7112, %v7118
        %v7122 = vadd.f32 %v7113, %v7118
        %v7123 = vld [vmem:[%s17] sm:$0xff]
        %v7124 = vld [vmem:[%s17 + $0x8] sm:$0xff]
        %v7125 = vld [vmem:[%s17 + $0x10] sm:$0xff]
        %v7126 = vld [vmem:[%s17 + $0x18] sm:$0xff]
        %v7127 = vld [vmem:[%s18] sm:$0x1]
        %v7129 = vlaneseq
        %v7130 = vshrl.u32 %v7129, 7
        %v7131 = vsub.s32 0, %v7130
        %v7132 = vrot.slane %v7127, %v7131
        %v7135 = vsel %vm750, %v7120, 0
        %v7138 = vsel %vm750, %v7121, 0
        %v7141 = vsel %vm750, %v7122, 0
        %7143 = vmatprep.subr.mxu0 0.0
        %7144 = vmatpush1.msra.mxu0 %v7123
        %7145 = vmatprep.subr.mxu0 0.0
        %7146 = vmatpush1.msra.mxu0 %v7124
        %7147 = vmatprep.subr.mxu0 0.0
        %7148 = vmatpush1.msra.mxu0 %v7125
        %7149 = vmatprep.subr.mxu0 0.0
        %7150 = vmatpush1.msra.mxu0 %v7126
        %7151 = vmatprep.subr.mxu0 0.0
        %7152 = vmatpush1.msra.mxu0 0.0
        %7153 = vmatprep.subr.mxu0 0.0
        %7154 = vmatpush1.msra.mxu0 0.0
        %7155 = vmatprep.subr.mxu0 0.0
        %7156 = vmatpush1.msra.mxu0 0.0
        %7157 = vmatprep.subr.mxu0 0.0
        %7158 = vmatpush1.msra.mxu0 0.0
        %7159 = vmatprep.subr.mxu0 0.0
        %7160 = vmatpush1.msra.mxu0 0.0
        %7161 = vmatprep.subr.mxu0 0.0
        %7162 = vmatpush1.msra.mxu0 0.0
        %7163 = vmatprep.subr.mxu0 0.0
        %7164 = vmatpush1.msra.mxu0 0.0
        %7165 = vmatprep.subr.mxu0 0.0
        %7166 = vmatpush1.msra.mxu0 0.0
        %7167 = vmatprep.subr.mxu0 0.0
        %7168 = vmatpush1.msra.mxu0 0.0
        %7169 = vmatprep.subr.mxu0 0.0
        %7170 = vmatpush1.msra.mxu0 0.0
        %7171 = vmatprep.subr.mxu0 0.0
        %7172 = vmatpush1.msra.mxu0 0.0
        %7173 = vmatprep.subr.mxu0 0.0
        %7174 = vmatpush1.msra.mxu0 0.0
        %7175 = vmatprep.subr.mxu0 0.0
        %7176 = vmatpush1.msra.mxu0 0.0
        %7177 = vmatprep.subr.mxu0 0.0
        %7178 = vmatpush1.msra.mxu0 0.0
        %7179 = vmatprep.subr.mxu0 0.0
        %7180 = vmatpush1.msra.mxu0 0.0
        %7181 = vmatprep.subr.mxu0 0.0
        %7182 = vmatpush1.msra.mxu0 0.0
        %7183 = vmatprep.subr.mxu0 0.0
        %7184 = vmatpush1.msra.mxu0 0.0
        %7185 = vmatprep.subr.mxu0 0.0
        %7186 = vmatpush1.msra.mxu0 0.0
        %7187 = vmatprep.subr.mxu0 0.0
        %7188 = vmatpush1.msra.mxu0 0.0
        %7189 = vmatprep.subr.mxu0 0.0
        %7190 = vmatpush1.msra.mxu0 0.0
        %7191 = vmatprep.subr.mxu0 0.0
        %7192 = vmatpush1.msra.mxu0 0.0
        %7193 = vmatprep.subr.mxu0 0.0
        %7194 = vmatpush1.msra.mxu0 0.0
        %7195 = vmatprep.subr.mxu0 0.0
        %7196 = vmatpush1.msra.mxu0 0.0
        %7197 = vmatprep.subr.mxu0 0.0
        %7198 = vmatpush1.msra.mxu0 0.0
        %7199 = vmatprep.subr.mxu0 0.0
        %7200 = vmatpush1.msra.mxu0 0.0
        %7201 = vmatprep.subr.mxu0 0.0
        %7202 = vmatpush1.msra.mxu0 0.0
        %7203 = vmatprep.subr.mxu0 0.0
        %7204 = vmatpush1.msra.mxu0 0.0
        %7205 = vmatprep.subr.mxu0 0.0
        %7206 = vmatpush1.msra.mxu0 0.0
        %7207 = vmatprep.mubr.f32.mxu0 0.0
        %7208 = vmatmul.mubr.f32.gmra.mrb[0].mxu0 %v7135
        %v7209 = vpop.f32.mrb[0].mxu0
        %v7210 = vadd.f32 %v7132, %v7209
        %v7211 = vpop.f32.mrb[0].mxu0
        %7212 = vmatprep.mubr.f32.mxu0 0.0
        %7213 = vmatmul.mubr.f32.gmra.mrb[0].mxu0 %v7138
        %v7214 = vpop.f32.mrb[0].mxu0
        %v7215 = vpop.f32.mrb[0].mxu0
        %7216 = vmatprep.mubr.f32.mxu0 0.0
        %7217 = vmatmul.mubr.f32.gmra.mrb[0].mxu0 %v7141
        %v7218 = vpop.f32.mrb[0].mxu0
        %v7219 = vpop.f32.mrb[0].mxu0
        %7220 = vdwg.mxu0
        %vm7221 = vcmask 253952
        %7222 = vst.msk [vmem:[%s622] sm:$0x1] %vm7221, %v7210
        %s7223 = sand.u32 %s447, 1
        %s7224 = scalar_lea.sflag [#allocation4], %s7223
        %s7225 = sand.u32 %s447, 1
        %s7226 = scalar_lea.vmem [#allocation3], %s7225
        %p7227 = scmp.lt.s32.totalorder %s35, 1
        %s7228 = scalar_select %p7227, %s35, 1
        %s7229 = smul.addr %s7228, 9
        %s7230 = smul.addr %s7229, 8
        %s7231 = scalar_lea.vmem %s20, %s7230
        // Predicated region
        $region97: #{forward.1} parent=95 // pred_check
          %p7232 = pneg %p457
        $region98: #{forward.1} parent=95 // pred_check_branch
          %7234 = sbr.rel (%p7232) target = $region100
        $region99: #{forward.1} parent=95 // pred_region
          %s7236 = ssub.s32 16, 16
          %7237 = vsyncadd %s7224, %s7236
          %s7238 = smul.addr %s35, 16
          %s7239 = scalar_lea.hbm %s19, %s7238
          %s7241 = sshll.u32 %s7226, 4
          %s7242 = int_to_ptr.vmem [resolvable:$true] %s7241
          %7244 = dma.vmem_to_hbm [thread:$0]  %s7242, 16, %s7239, %s7224
        $region100: #{forward.1} parent=95 // pred_fallthru
          _
        // Predicated region
        $region101: #{forward.1} parent=95 // pred_check
          %p7245 = pneg %p483
        $region102: #{forward.1} parent=95 // pred_check_branch
          %7247 = sbr.rel (%p7245) target = $region104
        $region103: #{forward.1} parent=95 // pred_region
          _
        $region104: #{forward.1} parent=95 // pred_fallthru
          _
      $region96: #{forward.1} parent=5 // pred_fallthru
        _
      %p7248 = scmp.le.s32.totalorder 2, %s30
      // Predicated region
      $region105: #{forward.1} parent=5 // pred_check
        %p7249 = pneg %p7248
      $region106: #{forward.1} parent=5 // pred_check_branch
        %7251 = sbr.rel (%p7249) target = $region108
      $region107: #{forward.1} parent=5 // pred_region
        %s7252 = ssub.s32 %s30, 2
        // Predicated region
        $region109: #{forward.1} parent=107 // pred_check
          %p7253 = pneg %p463
        $region110: #{forward.1} parent=107 // pred_check_branch
          %7255 = sbr.rel (%p7253) target = $region112
        $region111: #{forward.1} parent=107 // pred_region
          %s7256 = sand.u32 %s448, 1
          %s7257 = scalar_lea.sflag [#allocation4], %s7256
          %s7258 = sand.u32 %s448, 1
          %s7259 = scalar_lea.vmem [#allocation3], %s7258
          %7260 = dma.done %s7257, 16
        $region112: #{forward.1} parent=107 // pred_fallthru
          _
        // Predicated region
        $region113: #{forward.1} parent=107 // pred_check
          %p7261 = pneg %p489
        $region114: #{forward.1} parent=107 // pred_check_branch
          %7263 = sbr.rel (%p7261) target = $region116
        $region115: #{forward.1} parent=107 // pred_region
          %p7264 = scmp.lt.s32.totalorder %s36, 1
          %s7265 = scalar_select %p7264, %s36, 1
          %s7266 = smul.addr %s7265, 9
          %s7267 = smul.addr %s7266, 8
          %s7268 = scalar_lea.vmem %s20, %s7267
        $region116: #{forward.1} parent=107 // pred_fallthru
          _
      $region108: #{forward.1} parent=5 // pred_fallthru
        _
    $region6: #{forward.1} parent=1 // loop_footer
      %s34 = sadd.s32 1, %s30
    $region7: #{forward.1} parent=1 // loop_footer_branch
      %29 = sbr.rel target = $region3
    $region8: #{forward.1} parent=1 // loop_exit
      _
    %7269 = vsyncpa [#allocation4], 1
    %s7270 = scalar_lea.sflag [#allocation4], 1
    %7271 = vsyncpa %s7270, 1

</llo_original>
